<compile_context>
chip_gen: v5e
topology: v5e:2x2
jax: 0.10.0
libtpu: 0.0.40
codegen_flags: <defaults>
</compile_context>

<pallas_src>
import functools

import jax
import jax.numpy as jnp
from jax.experimental import pallas as pl
from jax.experimental.pallas import tpu as pltpu

CONV1_F, CONV2_F, CONV3_F, CONV4_F, FC1_OUT = 128, 128, 256, 512, 256
V_NODES = 13


def _round_up(a, m):
    return (a + m - 1) // m * m


# ------------------------------ fused kernel ------------------------------- #

def _fused_forward_kernel(x_ref, w1_ref, b1_ref, w2_ref, b2_ref, w3_ref, b3_ref,
                          w4_ref, b4_ref, wfc_ref, bfc_ref, o_ref, *, K, T4):
    NB, TP, KP = x_ref.shape            # TP = time, padded to a multiple of 8

    # ---- conv1 + ReLU: per-timestep linear map over the padded (V*C) plane.
    h = jnp.dot(x_ref[...].reshape(NB * TP, KP), w1_ref[...],
                preferred_element_type=jnp.float32)
    h = jnp.maximum(h + b1_ref[...], 0.0)                    # (NB*TP, 128) f32

    def conv_relu(h2d, w_ref, b_ref):
        c_in = h2d.shape[-1]
        h3d = h2d.astype(jnp.bfloat16).reshape(NB, TP, c_in)
        # Pad the time axis with one aligned 8-row zero block so every tap is a
        # full-TP-row window (shift done once per tap; rows past the valid time
        # range hold junk that is never read downstream).
        h_pad = jnp.concatenate(
            [h3d, jnp.zeros((NB, 8, c_in), jnp.bfloat16)], axis=1)
        taps = [h_pad[:, k:k + TP, :] for k in range(K)]
        im2col = jnp.concatenate(taps, axis=-1).reshape(NB * TP, K * c_in)
        y = jnp.dot(im2col, w_ref[...], preferred_element_type=jnp.float32)
        return jnp.maximum(y + b_ref[...], 0.0)              # (NB*TP, c_out) f32

    h = conv_relu(h, w2_ref, b2_ref)     # 128 -> 128
    h = conv_relu(h, w3_ref, b3_ref)     # 128 -> 256
    h = conv_relu(h, w4_ref, b4_ref)     # 256 -> 512

    # ---- fc1 + ReLU: wfc was pre-permuted to time-major (t, c) row order, so
    # the PyTorch (channel, time) flatten becomes T4 accumulated matmuls.
    c4 = CONV4_F
    h3d = h.astype(jnp.bfloat16).reshape(NB, TP, c4)
    acc = jnp.zeros((NB, FC1_OUT), jnp.float32)
    for t in range(T4):
        acc = acc + jnp.dot(h3d[:, t, :], wfc_ref[t * c4:(t + 1) * c4, :],
                            preferred_element_type=jnp.float32)
    o_ref[...] = jnp.maximum(acc + bfc_ref[...], 0.0).astype(o_ref.dtype)


# ---------------------------- one-time weight prep -------------------------- #

def prepare_params(params, in_channels, input_timesteps, temporal_kernel=3):
    """Weight relayout / padding / bf16 cast, hoisted out of the hot path."""
    K = temporal_kernel
    assert K - 1 <= 8, "temporal kernel larger than the 8-row pad block"
    VC = V_NODES * in_channels
    KP = _round_up(VC, 128)                       # pad conv1 contraction to lanes
    T4 = input_timesteps - 3 * (K - 1)

    w1 = params['w1'].reshape(CONV1_F, VC).T                        # (V*C, 128)
    w1 = jnp.zeros((KP, CONV1_F), jnp.float32).at[:VC, :].set(w1)

    def conv_w(w):  # (Cout, Cin, K) -> (K*Cin, Cout) in im2col tap-major order
        co, ci, k = w.shape
        return jnp.transpose(w, (2, 1, 0)).reshape(k * ci, co)

    # PyTorch flatten order is (channel, time): reorder wfc rows to (time, channel).
    wfc = jnp.transpose(params['wfc'].reshape(FC1_OUT, CONV4_F, T4),
                        (2, 1, 0)).reshape(T4 * CONV4_F, FC1_OUT)

    bf16 = lambda a: a.astype(jnp.bfloat16)
    f32row = lambda a: a.reshape(1, -1).astype(jnp.float32)
    return {
        'K': K, 'KP': KP, 'T4': T4,
        'w1': bf16(w1), 'b1': f32row(params['b1']),
        'w2': bf16(conv_w(params['w2'])), 'b2': f32row(params['b2']),
        'w3': bf16(conv_w(params['w3'])), 'b3': f32row(params['b3']),
        'w4': bf16(conv_w(params['w4'])), 'b4': f32row(params['b4']),
        'wfc': bf16(wfc), 'bfc': f32row(params['bfc']),
    }


# ------------------------------- forward glue ------------------------------- #

def cnn_custom_4_forward(x, prep, *, block_n=8):
    """x: (N, in_channels, T, V, M) with V == 13, M == 1.  Returns (N, 256) f32."""
    N, C, T, V, M = x.shape
    assert V == V_NODES and M == 1, "Conv3d(1, 128, (1, 13, C)) requires V=13, M=1"
    K, KP, T4 = prep['K'], prep['KP'], prep['T4']
    assert T4 == T - 3 * (K - 1), "input_timesteps mismatch with prepared fc weight"

    # (N, C, T, V, 1) -> channels-last (N, T, V*C); zero-pad the joint/channel
    # plane to KP lanes and the time axis to a multiple of 8; cast to bf16.
    xp = jnp.transpose(x[..., 0], (0, 2, 3, 1)).reshape(N, T, V * C)
    TP = _round_up(T, 8)
    xp = jnp.pad(xp, ((0, 0), (0, TP - T), (0, KP - V * C))).astype(jnp.bfloat16)

    NB = block_n if N >= block_n else N            # batch rows per grid step
    NPAD = _round_up(N, NB)
    if NPAD != N:
        xp = jnp.pad(xp, ((0, NPAD - N), (0, 0), (0, 0)))

    kernel = functools.partial(_fused_forward_kernel, K=K, T4=T4)
    out = pl.pallas_call(
        kernel,
        out_shape=jax.ShapeDtypeStruct((NPAD, FC1_OUT), jnp.float32),
        grid=(NPAD // NB,),
        in_specs=[
            pl.BlockSpec((NB, TP, KP), lambda i: (i, 0, 0)),
            pl.BlockSpec((KP, CONV1_F), lambda i: (0, 0)),
            pl.BlockSpec((1, CONV1_F), lambda i: (0, 0)),
            pl.BlockSpec((K * CONV1_F, CONV2_F), lambda i: (0, 0)),
            pl.BlockSpec((1, CONV2_F), lambda i: (0, 0)),
            pl.BlockSpec((K * CONV2_F, CONV3_F), lambda i: (0, 0)),
            pl.BlockSpec((1, CONV3_F), lambda i: (0, 0)),
            pl.BlockSpec((K * CONV3_F, CONV4_F), lambda i: (0, 0)),
            pl.BlockSpec((1, CONV4_F), lambda i: (0, 0)),
            pl.BlockSpec((T4 * CONV4_F, FC1_OUT), lambda i: (0, 0)),
            pl.BlockSpec((1, FC1_OUT), lambda i: (0, 0)),
        ],
        out_specs=pl.BlockSpec((NB, FC1_OUT), lambda i: (i, 0)),
        compiler_params=pltpu.CompilerParams(
            dimension_semantics=("parallel",),
            vmem_limit_bytes=48 * 1024 * 1024),
    )(xp, prep['w1'], prep['b1'], prep['w2'], prep['b2'], prep['w3'], prep['b3'],
      prep['w4'], prep['b4'], prep['wfc'], prep['bfc'])
    return out[:N]


# ------------------------- pure-JAX reference check ------------------------- #

def reference_forward(x, params):
    N, C, T, V, M = x.shape
    hp = jax.lax.Precision.HIGHEST
    xp = jnp.transpose(x, (0, 4, 2, 3, 1)).reshape(N, T, V * C)
    w1 = params['w1'].reshape(CONV1_F, V * C)
    y = jax.nn.relu(jnp.einsum('ntk,fk->ntf', xp, w1, precision=hp) + params['b1'])
    h = jnp.transpose(y, (0, 2, 1))                          # (N, 128, T)
    for wn, bn in (('w2', 'b2'), ('w3', 'b3'), ('w4', 'b4')):
        h = jax.lax.conv_general_dilated(
            h, params[wn], window_strides=(1,), padding='VALID',
            dimension_numbers=('NCH', 'OIH', 'NCH'), precision=hp)
        h = jax.nn.relu(h + params[bn][None, :, None])
    flat = h.reshape(N, -1)
    return jax.nn.relu(jnp.dot(flat, params['wfc'].T, precision=hp) + params['bfc'])


# ----------------------------------- main ----------------------------------- #

if __name__ == "__main__":
    # Small shapes consistent with the module: V must be 13, M must be 1.
    N, C, T, V, M = 2, 3, 16, 13, 1
    K = 3                                                    # temporal_kernel_size
    T4 = T - 3 * (K - 1)
    num_features = T4 * CONV4_F                              # (timesteps-3(k-1))*512

    key = jax.random.PRNGKey(0)
    ks = jax.random.split(key, 11)
    s = 0.05
    params = {
        'w1': s * jax.random.normal(ks[0], (CONV1_F, 1, 1, V, C), jnp.float32),
        'b1': s * jax.random.normal(ks[1], (CONV1_F,), jnp.float32),
        'w2': s * jax.random.normal(ks[2], (CONV2_F, CONV1_F, K), jnp.float32),
        'b2': s * jax.random.normal(ks[3], (CONV2_F,), jnp.float32),
        'w3': s * jax.random.normal(ks[4], (CONV3_F, CONV2_F, K), jnp.float32),
        'b3': s * jax.random.normal(ks[5], (CONV3_F,), jnp.float32),
        'w4': s * jax.random.normal(ks[6], (CONV4_F, CONV3_F, K), jnp.float32),
        'b4': s * jax.random.normal(ks[7], (CONV4_F,), jnp.float32),
        'wfc': s * jax.random.normal(ks[8], (FC1_OUT, num_features), jnp.float32),
        'bfc': s * jax.random.normal(ks[9], (FC1_OUT,), jnp.float32),
    }
    x = jax.random.normal(ks[10], (N, C, T, V, M), jnp.float32)

    prep = prepare_params(params, in_channels=C, input_timesteps=T, temporal_kernel=K)
    forward = jax.jit(lambda xx: cnn_custom_4_forward(xx, prep))

    out = jax.block_until_ready(forward(x))
    ref = reference_forward(x, params)

    assert out.shape == (N, FC1_OUT), out.shape
    max_err = float(jnp.max(jnp.abs(out - ref)))
    assert jnp.allclose(out, ref, rtol=2e-2, atol=2e-2), max_err   # bf16 MXU, f32 accum
    print("KERNEL_OK")
</pallas_src>

<mosaic_0001>
module attributes {stable_mosaic.version = 11 : i64} {
  func.func @_fused_forward_kernel(%arg0: i32, %arg1: memref<2x16x128xbf16, #tpu.memory_space<vmem>>, %arg2: memref<128x128xbf16, #tpu.memory_space<vmem>>, %arg3: memref<1x128xf32, #tpu.memory_space<vmem>>, %arg4: memref<384x128xbf16, #tpu.memory_space<vmem>>, %arg5: memref<1x128xf32, #tpu.memory_space<vmem>>, %arg6: memref<384x256xbf16, #tpu.memory_space<vmem>>, %arg7: memref<1x256xf32, #tpu.memory_space<vmem>>, %arg8: memref<768x512xbf16, #tpu.memory_space<vmem>>, %arg9: memref<1x512xf32, #tpu.memory_space<vmem>>, %arg10: memref<5120x256xbf16, #tpu.memory_space<vmem>>, %arg11: memref<1x256xf32, #tpu.memory_space<vmem>>, %arg12: memref<2x256xf32, #tpu.memory_space<vmem>>) attributes {dimension_semantics = [#tpu.dimension_semantics<parallel>], iteration_bounds = array<i64: 1>, scalar_prefetch = 0 : i64, scratch_operands = 0 : i64, tpu.core_type = #tpu.core_type<tc>, window_params = [{transform_indices = @transform_0, window_bounds = array<i64: 2, 16, 128>}, {pipeline_mode = #tpu.pipeline_mode<synchronous>, transform_indices = @transform_1, window_bounds = array<i64: 128, 128>}, {pipeline_mode = #tpu.pipeline_mode<synchronous>, transform_indices = @transform_2, window_bounds = array<i64: 1, 128>}, {pipeline_mode = #tpu.pipeline_mode<synchronous>, transform_indices = @transform_3, window_bounds = array<i64: 384, 128>}, {pipeline_mode = #tpu.pipeline_mode<synchronous>, transform_indices = @transform_4, window_bounds = array<i64: 1, 128>}, {pipeline_mode = #tpu.pipeline_mode<synchronous>, transform_indices = @transform_5, window_bounds = array<i64: 384, 256>}, {pipeline_mode = #tpu.pipeline_mode<synchronous>, transform_indices = @transform_6, window_bounds = array<i64: 1, 256>}, {pipeline_mode = #tpu.pipeline_mode<synchronous>, transform_indices = @transform_7, window_bounds = array<i64: 768, 512>}, {pipeline_mode = #tpu.pipeline_mode<synchronous>, transform_indices = @transform_8, window_bounds = array<i64: 1, 512>}, {pipeline_mode = #tpu.pipeline_mode<synchronous>, transform_indices = @transform_9, window_bounds = array<i64: 5120, 256>}, {pipeline_mode = #tpu.pipeline_mode<synchronous>, transform_indices = @transform_10, window_bounds = array<i64: 1, 256>}, {transform_indices = @transform_11, window_bounds = array<i64: 2, 256>}]} {
    %c0 = arith.constant 0 : index
    %c0_0 = arith.constant 0 : index
    %c0_1 = arith.constant 0 : index
    %0 = vector.load %arg1[%c0, %c0_0, %c0_1] : memref<2x16x128xbf16, #tpu.memory_space<vmem>>, vector<2x16x128xbf16>
    %1 = vector.shape_cast %0 : vector<2x16x128xbf16> to vector<32x128xbf16>
    %c0_2 = arith.constant 0 : index
    %c0_3 = arith.constant 0 : index
    %2 = vector.load %arg2[%c0_2, %c0_3] : memref<128x128xbf16, #tpu.memory_space<vmem>>, vector<128x128xbf16>
    %cst = arith.constant dense<0.000000e+00> : vector<32x128xf32>
    %3 = tpu.matmul %1, %2, %cst {dimension_numbers = #tpu.dot_dimension_numbers<[1], [0], [0], [1], [0, 0, 1, 1], [], []>} : vector<32x128xbf16>, vector<128x128xbf16>, vector<32x128xf32> -> vector<32x128xf32>
    %c0_4 = arith.constant 0 : index
    %c0_5 = arith.constant 0 : index
    %4 = vector.load %arg3[%c0_4, %c0_5] : memref<1x128xf32, #tpu.memory_space<vmem>>, vector<1x128xf32>
    %5 = vector.broadcast %4 : vector<1x128xf32> to vector<32x128xf32>
    %6 = arith.addf %3, %5 : vector<32x128xf32>
    %cst_6 = arith.constant 0.000000e+00 : f32
    %7 = vector.broadcast %cst_6 : f32 to vector<32x128xf32>
    %8 = arith.maximumf %6, %7 : vector<32x128xf32>
    %9 = arith.truncf %8 : vector<32x128xf32> to vector<32x128xbf16>
    %10 = vector.shape_cast %9 : vector<32x128xbf16> to vector<2x16x128xbf16>
    %cst_7 = arith.constant 0.000000e+00 : bf16
    %11 = vector.broadcast %cst_7 : bf16 to vector<2x8x128xbf16>
    %12 = tpu.concatenate %10, %11 in 1 : vector<2x16x128xbf16>, vector<2x8x128xbf16> -> vector<2x24x128xbf16>
    %13 = vector.extract_strided_slice %12 {offsets = [0, 0, 0], sizes = [2, 16, 128], strides = [1, 1, 1]} : vector<2x24x128xbf16> to vector<2x16x128xbf16>
    %14 = vector.extract_strided_slice %12 {offsets = [0, 1, 0], sizes = [2, 16, 128], strides = [1, 1, 1]} : vector<2x24x128xbf16> to vector<2x16x128xbf16>
    %15 = vector.extract_strided_slice %12 {offsets = [0, 2, 0], sizes = [2, 16, 128], strides = [1, 1, 1]} : vector<2x24x128xbf16> to vector<2x16x128xbf16>
    %16 = tpu.concatenate %13, %14, %15 in 2 : vector<2x16x128xbf16>, vector<2x16x128xbf16>, vector<2x16x128xbf16> -> vector<2x16x384xbf16>
    %17 = vector.shape_cast %16 : vector<2x16x384xbf16> to vector<32x384xbf16>
    %c0_8 = arith.constant 0 : index
    %c0_9 = arith.constant 0 : index
    %18 = vector.load %arg4[%c0_8, %c0_9] : memref<384x128xbf16, #tpu.memory_space<vmem>>, vector<384x128xbf16>
    %cst_10 = arith.constant dense<0.000000e+00> : vector<32x128xf32>
    %19 = tpu.matmul %17, %18, %cst_10 {dimension_numbers = #tpu.dot_dimension_numbers<[1], [0], [0], [1], [0, 0, 1, 1], [], []>} : vector<32x384xbf16>, vector<384x128xbf16>, vector<32x128xf32> -> vector<32x128xf32>
    %c0_11 = arith.constant 0 : index
    %c0_12 = arith.constant 0 : index
    %20 = vector.load %arg5[%c0_11, %c0_12] : memref<1x128xf32, #tpu.memory_space<vmem>>, vector<1x128xf32>
    %21 = vector.broadcast %20 : vector<1x128xf32> to vector<32x128xf32>
    %22 = arith.addf %19, %21 : vector<32x128xf32>
    %cst_13 = arith.constant 0.000000e+00 : f32
    %23 = vector.broadcast %cst_13 : f32 to vector<32x128xf32>
    %24 = arith.maximumf %22, %23 : vector<32x128xf32>
    %25 = arith.truncf %24 : vector<32x128xf32> to vector<32x128xbf16>
    %26 = vector.shape_cast %25 : vector<32x128xbf16> to vector<2x16x128xbf16>
    %cst_14 = arith.constant 0.000000e+00 : bf16
    %27 = vector.broadcast %cst_14 : bf16 to vector<2x8x128xbf16>
    %28 = tpu.concatenate %26, %27 in 1 : vector<2x16x128xbf16>, vector<2x8x128xbf16> -> vector<2x24x128xbf16>
    %29 = vector.extract_strided_slice %28 {offsets = [0, 0, 0], sizes = [2, 16, 128], strides = [1, 1, 1]} : vector<2x24x128xbf16> to vector<2x16x128xbf16>
    %30 = vector.extract_strided_slice %28 {offsets = [0, 1, 0], sizes = [2, 16, 128], strides = [1, 1, 1]} : vector<2x24x128xbf16> to vector<2x16x128xbf16>
    %31 = vector.extract_strided_slice %28 {offsets = [0, 2, 0], sizes = [2, 16, 128], strides = [1, 1, 1]} : vector<2x24x128xbf16> to vector<2x16x128xbf16>
    %32 = tpu.concatenate %29, %30, %31 in 2 : vector<2x16x128xbf16>, vector<2x16x128xbf16>, vector<2x16x128xbf16> -> vector<2x16x384xbf16>
    %33 = vector.shape_cast %32 : vector<2x16x384xbf16> to vector<32x384xbf16>
    %c0_15 = arith.constant 0 : index
    %c0_16 = arith.constant 0 : index
    %34 = vector.load %arg6[%c0_15, %c0_16] : memref<384x256xbf16, #tpu.memory_space<vmem>>, vector<384x256xbf16>
    %cst_17 = arith.constant dense<0.000000e+00> : vector<32x256xf32>
    %35 = tpu.matmul %33, %34, %cst_17 {dimension_numbers = #tpu.dot_dimension_numbers<[1], [0], [0], [1], [0, 0, 1, 1], [], []>} : vector<32x384xbf16>, vector<384x256xbf16>, vector<32x256xf32> -> vector<32x256xf32>
    %c0_18 = arith.constant 0 : index
    %c0_19 = arith.constant 0 : index
    %36 = vector.load %arg7[%c0_18, %c0_19] : memref<1x256xf32, #tpu.memory_space<vmem>>, vector<1x256xf32>
    %37 = vector.broadcast %36 : vector<1x256xf32> to vector<32x256xf32>
    %38 = arith.addf %35, %37 : vector<32x256xf32>
    %cst_20 = arith.constant 0.000000e+00 : f32
    %39 = vector.broadcast %cst_20 : f32 to vector<32x256xf32>
    %40 = arith.maximumf %38, %39 : vector<32x256xf32>
    %41 = arith.truncf %40 : vector<32x256xf32> to vector<32x256xbf16>
    %42 = vector.shape_cast %41 : vector<32x256xbf16> to vector<2x16x256xbf16>
    %cst_21 = arith.constant 0.000000e+00 : bf16
    %43 = vector.broadcast %cst_21 : bf16 to vector<2x8x256xbf16>
    %44 = tpu.concatenate %42, %43 in 1 : vector<2x16x256xbf16>, vector<2x8x256xbf16> -> vector<2x24x256xbf16>
    %45 = vector.extract_strided_slice %44 {offsets = [0, 0, 0], sizes = [2, 16, 256], strides = [1, 1, 1]} : vector<2x24x256xbf16> to vector<2x16x256xbf16>
    %46 = vector.extract_strided_slice %44 {offsets = [0, 1, 0], sizes = [2, 16, 256], strides = [1, 1, 1]} : vector<2x24x256xbf16> to vector<2x16x256xbf16>
    %47 = vector.extract_strided_slice %44 {offsets = [0, 2, 0], sizes = [2, 16, 256], strides = [1, 1, 1]} : vector<2x24x256xbf16> to vector<2x16x256xbf16>
    %48 = tpu.concatenate %45, %46, %47 in 2 : vector<2x16x256xbf16>, vector<2x16x256xbf16>, vector<2x16x256xbf16> -> vector<2x16x768xbf16>
    %49 = vector.shape_cast %48 : vector<2x16x768xbf16> to vector<32x768xbf16>
    %c0_22 = arith.constant 0 : index
    %c0_23 = arith.constant 0 : index
    %50 = vector.load %arg8[%c0_22, %c0_23] : memref<768x512xbf16, #tpu.memory_space<vmem>>, vector<768x512xbf16>
    %cst_24 = arith.constant dense<0.000000e+00> : vector<32x512xf32>
    %51 = tpu.matmul %49, %50, %cst_24 {dimension_numbers = #tpu.dot_dimension_numbers<[1], [0], [0], [1], [0, 0, 1, 1], [], []>} : vector<32x768xbf16>, vector<768x512xbf16>, vector<32x512xf32> -> vector<32x512xf32>
    %c0_25 = arith.constant 0 : index
    %c0_26 = arith.constant 0 : index
    %52 = vector.load %arg9[%c0_25, %c0_26] : memref<1x512xf32, #tpu.memory_space<vmem>>, vector<1x512xf32>
    %53 = vector.broadcast %52 : vector<1x512xf32> to vector<32x512xf32>
    %54 = arith.addf %51, %53 : vector<32x512xf32>
    %cst_27 = arith.constant 0.000000e+00 : f32
    %55 = vector.broadcast %cst_27 : f32 to vector<32x512xf32>
    %56 = arith.maximumf %54, %55 : vector<32x512xf32>
    %57 = arith.truncf %56 : vector<32x512xf32> to vector<32x512xbf16>
    %58 = vector.shape_cast %57 : vector<32x512xbf16> to vector<2x16x512xbf16>
    %cst_28 = arith.constant 0.000000e+00 : f32
    %59 = vector.broadcast %cst_28 : f32 to vector<2x256xf32>
    %60 = vector.extract_strided_slice %58 {offsets = [0, 0, 0], sizes = [2, 1, 512], strides = [1, 1, 1]} : vector<2x16x512xbf16> to vector<2x1x512xbf16>
    %61 = vector.shape_cast %60 : vector<2x1x512xbf16> to vector<2x512xbf16>
    %c0_29 = arith.constant 0 : index
    %c0_30 = arith.constant 0 : index
    %62 = vector.load %arg10[%c0_29, %c0_30] : memref<5120x256xbf16, #tpu.memory_space<vmem>>, vector<512x256xbf16>
    %cst_31 = arith.constant dense<0.000000e+00> : vector<2x256xf32>
    %63 = tpu.matmul %61, %62, %cst_31 {dimension_numbers = #tpu.dot_dimension_numbers<[1], [0], [0], [1], [0, 0, 1, 1], [], []>} : vector<2x512xbf16>, vector<512x256xbf16>, vector<2x256xf32> -> vector<2x256xf32>
    %64 = arith.addf %59, %63 : vector<2x256xf32>
    %65 = vector.extract_strided_slice %58 {offsets = [0, 1, 0], sizes = [2, 1, 512], strides = [1, 1, 1]} : vector<2x16x512xbf16> to vector<2x1x512xbf16>
    %66 = vector.shape_cast %65 : vector<2x1x512xbf16> to vector<2x512xbf16>
    %c512 = arith.constant 512 : index
    %c0_32 = arith.constant 0 : index
    %67 = vector.load %arg10[%c512, %c0_32] : memref<5120x256xbf16, #tpu.memory_space<vmem>>, vector<512x256xbf16>
    %cst_33 = arith.constant dense<0.000000e+00> : vector<2x256xf32>
    %68 = tpu.matmul %66, %67, %cst_33 {dimension_numbers = #tpu.dot_dimension_numbers<[1], [0], [0], [1], [0, 0, 1, 1], [], []>} : vector<2x512xbf16>, vector<512x256xbf16>, vector<2x256xf32> -> vector<2x256xf32>
    %69 = arith.addf %64, %68 : vector<2x256xf32>
    %70 = vector.extract_strided_slice %58 {offsets = [0, 2, 0], sizes = [2, 1, 512], strides = [1, 1, 1]} : vector<2x16x512xbf16> to vector<2x1x512xbf16>
    %71 = vector.shape_cast %70 : vector<2x1x512xbf16> to vector<2x512xbf16>
    %c1024 = arith.constant 1024 : index
    %c0_34 = arith.constant 0 : index
    %72 = vector.load %arg10[%c1024, %c0_34] : memref<5120x256xbf16, #tpu.memory_space<vmem>>, vector<512x256xbf16>
    %cst_35 = arith.constant dense<0.000000e+00> : vector<2x256xf32>
    %73 = tpu.matmul %71, %72, %cst_35 {dimension_numbers = #tpu.dot_dimension_numbers<[1], [0], [0], [1], [0, 0, 1, 1], [], []>} : vector<2x512xbf16>, vector<512x256xbf16>, vector<2x256xf32> -> vector<2x256xf32>
    %74 = arith.addf %69, %73 : vector<2x256xf32>
    %75 = vector.extract_strided_slice %58 {offsets = [0, 3, 0], sizes = [2, 1, 512], strides = [1, 1, 1]} : vector<2x16x512xbf16> to vector<2x1x512xbf16>
    %76 = vector.shape_cast %75 : vector<2x1x512xbf16> to vector<2x512xbf16>
    %c1536 = arith.constant 1536 : index
    %c0_36 = arith.constant 0 : index
    %77 = vector.load %arg10[%c1536, %c0_36] : memref<5120x256xbf16, #tpu.memory_space<vmem>>, vector<512x256xbf16>
    %cst_37 = arith.constant dense<0.000000e+00> : vector<2x256xf32>
    %78 = tpu.matmul %76, %77, %cst_37 {dimension_numbers = #tpu.dot_dimension_numbers<[1], [0], [0], [1], [0, 0, 1, 1], [], []>} : vector<2x512xbf16>, vector<512x256xbf16>, vector<2x256xf32> -> vector<2x256xf32>
    %79 = arith.addf %74, %78 : vector<2x256xf32>
    %80 = vector.extract_strided_slice %58 {offsets = [0, 4, 0], sizes = [2, 1, 512], strides = [1, 1, 1]} : vector<2x16x512xbf16> to vector<2x1x512xbf16>
    %81 = vector.shape_cast %80 : vector<2x1x512xbf16> to vector<2x512xbf16>
    %c2048 = arith.constant 2048 : index
    %c0_38 = arith.constant 0 : index
    %82 = vector.load %arg10[%c2048, %c0_38] : memref<5120x256xbf16, #tpu.memory_space<vmem>>, vector<512x256xbf16>
    %cst_39 = arith.constant dense<0.000000e+00> : vector<2x256xf32>
    %83 = tpu.matmul %81, %82, %cst_39 {dimension_numbers = #tpu.dot_dimension_numbers<[1], [0], [0], [1], [0, 0, 1, 1], [], []>} : vector<2x512xbf16>, vector<512x256xbf16>, vector<2x256xf32> -> vector<2x256xf32>
    %84 = arith.addf %79, %83 : vector<2x256xf32>
    %85 = vector.extract_strided_slice %58 {offsets = [0, 5, 0], sizes = [2, 1, 512], strides = [1, 1, 1]} : vector<2x16x512xbf16> to vector<2x1x512xbf16>
    %86 = vector.shape_cast %85 : vector<2x1x512xbf16> to vector<2x512xbf16>
    %c2560 = arith.constant 2560 : index
    %c0_40 = arith.constant 0 : index
    %87 = vector.load %arg10[%c2560, %c0_40] : memref<5120x256xbf16, #tpu.memory_space<vmem>>, vector<512x256xbf16>
    %cst_41 = arith.constant dense<0.000000e+00> : vector<2x256xf32>
    %88 = tpu.matmul %86, %87, %cst_41 {dimension_numbers = #tpu.dot_dimension_numbers<[1], [0], [0], [1], [0, 0, 1, 1], [], []>} : vector<2x512xbf16>, vector<512x256xbf16>, vector<2x256xf32> -> vector<2x256xf32>
    %89 = arith.addf %84, %88 : vector<2x256xf32>
    %90 = vector.extract_strided_slice %58 {offsets = [0, 6, 0], sizes = [2, 1, 512], strides = [1, 1, 1]} : vector<2x16x512xbf16> to vector<2x1x512xbf16>
    %91 = vector.shape_cast %90 : vector<2x1x512xbf16> to vector<2x512xbf16>
    %c3072 = arith.constant 3072 : index
    %c0_42 = arith.constant 0 : index
    %92 = vector.load %arg10[%c3072, %c0_42] : memref<5120x256xbf16, #tpu.memory_space<vmem>>, vector<512x256xbf16>
    %cst_43 = arith.constant dense<0.000000e+00> : vector<2x256xf32>
    %93 = tpu.matmul %91, %92, %cst_43 {dimension_numbers = #tpu.dot_dimension_numbers<[1], [0], [0], [1], [0, 0, 1, 1], [], []>} : vector<2x512xbf16>, vector<512x256xbf16>, vector<2x256xf32> -> vector<2x256xf32>
    %94 = arith.addf %89, %93 : vector<2x256xf32>
    %95 = vector.extract_strided_slice %58 {offsets = [0, 7, 0], sizes = [2, 1, 512], strides = [1, 1, 1]} : vector<2x16x512xbf16> to vector<2x1x512xbf16>
    %96 = vector.shape_cast %95 : vector<2x1x512xbf16> to vector<2x512xbf16>
    %c3584 = arith.constant 3584 : index
    %c0_44 = arith.constant 0 : index
    %97 = vector.load %arg10[%c3584, %c0_44] : memref<5120x256xbf16, #tpu.memory_space<vmem>>, vector<512x256xbf16>
    %cst_45 = arith.constant dense<0.000000e+00> : vector<2x256xf32>
    %98 = tpu.matmul %96, %97, %cst_45 {dimension_numbers = #tpu.dot_dimension_numbers<[1], [0], [0], [1], [0, 0, 1, 1], [], []>} : vector<2x512xbf16>, vector<512x256xbf16>, vector<2x256xf32> -> vector<2x256xf32>
    %99 = arith.addf %94, %98 : vector<2x256xf32>
    %100 = vector.extract_strided_slice %58 {offsets = [0, 8, 0], sizes = [2, 1, 512], strides = [1, 1, 1]} : vector<2x16x512xbf16> to vector<2x1x512xbf16>
    %101 = vector.shape_cast %100 : vector<2x1x512xbf16> to vector<2x512xbf16>
    %c4096 = arith.constant 4096 : index
    %c0_46 = arith.constant 0 : index
    %102 = vector.load %arg10[%c4096, %c0_46] : memref<5120x256xbf16, #tpu.memory_space<vmem>>, vector<512x256xbf16>
    %cst_47 = arith.constant dense<0.000000e+00> : vector<2x256xf32>
    %103 = tpu.matmul %101, %102, %cst_47 {dimension_numbers = #tpu.dot_dimension_numbers<[1], [0], [0], [1], [0, 0, 1, 1], [], []>} : vector<2x512xbf16>, vector<512x256xbf16>, vector<2x256xf32> -> vector<2x256xf32>
    %104 = arith.addf %99, %103 : vector<2x256xf32>
    %105 = vector.extract_strided_slice %58 {offsets = [0, 9, 0], sizes = [2, 1, 512], strides = [1, 1, 1]} : vector<2x16x512xbf16> to vector<2x1x512xbf16>
    %106 = vector.shape_cast %105 : vector<2x1x512xbf16> to vector<2x512xbf16>
    %c4608 = arith.constant 4608 : index
    %c0_48 = arith.constant 0 : index
    %107 = vector.load %arg10[%c4608, %c0_48] : memref<5120x256xbf16, #tpu.memory_space<vmem>>, vector<512x256xbf16>
    %cst_49 = arith.constant dense<0.000000e+00> : vector<2x256xf32>
    %108 = tpu.matmul %106, %107, %cst_49 {dimension_numbers = #tpu.dot_dimension_numbers<[1], [0], [0], [1], [0, 0, 1, 1], [], []>} : vector<2x512xbf16>, vector<512x256xbf16>, vector<2x256xf32> -> vector<2x256xf32>
    %109 = arith.addf %104, %108 : vector<2x256xf32>
    %c0_50 = arith.constant 0 : index
    %c0_51 = arith.constant 0 : index
    %110 = vector.load %arg11[%c0_50, %c0_51] : memref<1x256xf32, #tpu.memory_space<vmem>>, vector<1x256xf32>
    %111 = vector.broadcast %110 : vector<1x256xf32> to vector<2x256xf32>
    %112 = arith.addf %109, %111 : vector<2x256xf32>
    %cst_52 = arith.constant 0.000000e+00 : f32
    %113 = vector.broadcast %cst_52 : f32 to vector<2x256xf32>
    %114 = arith.maximumf %112, %113 : vector<2x256xf32>
    %c0_53 = arith.constant 0 : index
    %c0_54 = arith.constant 0 : index
    %115 = vector.load %arg12[%c0_53, %c0_54] : memref<2x256xf32, #tpu.memory_space<vmem>>, vector<2x256xf32>
    tpu.vector_store %arg12[%c0_53, %c0_54], %114 {strides = array<i32>} : memref<2x256xf32, #tpu.memory_space<vmem>>, vector<2x256xf32>,
    return
  }
  func.func @transform_0(%arg0: i32) -> (i32, i32, i32) {
    %c0_i32 = arith.constant 0 : i32
    %c0_i32_0 = arith.constant 0 : i32
    %c0_i32_1 = arith.constant 0 : i32
    return %arg0, %c0_i32, %c0_i32_0 : i32, i32, i32
  }
  func.func @transform_1(%arg0: i32) -> (i32, i32) {
    %c0_i32 = arith.constant 0 : i32
    %c0_i32_0 = arith.constant 0 : i32
    %c0_i32_1 = arith.constant 0 : i32
    return %c0_i32, %c0_i32_0 : i32, i32
  }
  func.func @transform_2(%arg0: i32) -> (i32, i32) {
    %c0_i32 = arith.constant 0 : i32
    %c0_i32_0 = arith.constant 0 : i32
    %c0_i32_1 = arith.constant 0 : i32
    return %c0_i32, %c0_i32_0 : i32, i32
  }
  func.func @transform_3(%arg0: i32) -> (i32, i32) {
    %c0_i32 = arith.constant 0 : i32
    %c0_i32_0 = arith.constant 0 : i32
    %c0_i32_1 = arith.constant 0 : i32
    return %c0_i32, %c0_i32_0 : i32, i32
  }
  func.func @transform_4(%arg0: i32) -> (i32, i32) {
    %c0_i32 = arith.constant 0 : i32
    %c0_i32_0 = arith.constant 0 : i32
    %c0_i32_1 = arith.constant 0 : i32
    return %c0_i32, %c0_i32_0 : i32, i32
  }
  func.func @transform_5(%arg0: i32) -> (i32, i32) {
    %c0_i32 = arith.constant 0 : i32
    %c0_i32_0 = arith.constant 0 : i32
    %c0_i32_1 = arith.constant 0 : i32
    return %c0_i32, %c0_i32_0 : i32, i32
  }
  func.func @transform_6(%arg0: i32) -> (i32, i32) {
    %c0_i32 = arith.constant 0 : i32
    %c0_i32_0 = arith.constant 0 : i32
    %c0_i32_1 = arith.constant 0 : i32
    return %c0_i32, %c0_i32_0 : i32, i32
  }
  func.func @transform_7(%arg0: i32) -> (i32, i32) {
    %c0_i32 = arith.constant 0 : i32
    %c0_i32_0 = arith.constant 0 : i32
    %c0_i32_1 = arith.constant 0 : i32
    return %c0_i32, %c0_i32_0 : i32, i32
  }
  func.func @transform_8(%arg0: i32) -> (i32, i32) {
    %c0_i32 = arith.constant 0 : i32
    %c0_i32_0 = arith.constant 0 : i32
    %c0_i32_1 = arith.constant 0 : i32
    return %c0_i32, %c0_i32_0 : i32, i32
  }
  func.func @transform_9(%arg0: i32) -> (i32, i32) {
    %c0_i32 = arith.constant 0 : i32
    %c0_i32_0 = arith.constant 0 : i32
    %c0_i32_1 = arith.constant 0 : i32
    return %c0_i32, %c0_i32_0 : i32, i32
  }
  func.func @transform_10(%arg0: i32) -> (i32, i32) {
    %c0_i32 = arith.constant 0 : i32
    %c0_i32_0 = arith.constant 0 : i32
    %c0_i32_1 = arith.constant 0 : i32
    return %c0_i32, %c0_i32_0 : i32, i32
  }
  func.func @transform_11(%arg0: i32) -> (i32, i32) {
    %c0_i32 = arith.constant 0 : i32
    %c0_i32_0 = arith.constant 0 : i32
    return %arg0, %c0_i32 : i32, i32
  }
}

</mosaic_0001>

<llo_original>
// kernel: _lambda_.1
$region0: #{_lambda_.1}
  #allocation0 [shape = 'u32[]', space=smem, size = 0x4, offset = 0x4, fixed_abs, tag = 'smem constant byte address 0x4 - core index']
  #allocation1 [shape = 'u32[72,128]{1,0:T(1,128)}', space=vmem, size = 0x9000, scoped, tag = 'internal scratch']
  %s0 = inlined_call_operand.vmem [shape: bf16[2,16,128], index: 0, kind: input, shape index: {}]
  %s1 = inlined_call_operand.hbm [shape: bf16[128,128], index: 1, kind: input, shape index: {}]
  %s2 = inlined_call_operand.hbm [shape: f32[1,128], index: 2, kind: input, shape index: {}]
  %s3 = inlined_call_operand.hbm [shape: bf16[384,128], index: 3, kind: input, shape index: {}]
  %s4 = inlined_call_operand.hbm [shape: f32[1,128], index: 4, kind: input, shape index: {}]
  %s5 = inlined_call_operand.hbm [shape: bf16[384,256], index: 5, kind: input, shape index: {}]
  %s6 = inlined_call_operand.hbm [shape: f32[1,256], index: 6, kind: input, shape index: {}]
  %s7 = inlined_call_operand.hbm [shape: bf16[768,512], index: 7, kind: input, shape index: {}]
  %s8 = inlined_call_operand.hbm [shape: f32[1,512], index: 8, kind: input, shape index: {}]
  %s9 = inlined_call_operand.hbm [shape: bf16[5120,256], index: 9, kind: input, shape index: {}]
  %s10 = inlined_call_operand.hbm [shape: f32[1,256], index: 10, kind: input, shape index: {}]
  %s11 = inlined_call_operand.hbm [shape: f32[2,256], index: 11, kind: output, shape index: {}]
  %s12 = sld [smem:[#allocation0]]
  $region94: #{_lambda_.1} parent=0
    _
  %s14 = ssub.s32 1, %s12
  %s15 = scalar_select 0, %s14, %s12
  $region1: #{_lambda_.1} parent=0
    #allocation2 [shape = 'u8[32768]{0}', space=vmem, size = 0x8000, scoped, tag = 'input window, operand 1, single buffered']
    #allocation3 [shape = 's32[1]{0}', space=sflag, size = 0x4, scoped, tag = 'scoped memory for _lambda_.1']
    #allocation4 [shape = 's32[1]{0}', space=sflag, size = 0x4, scoped, tag = 'scoped memory for _lambda_.1']
    #allocation5 [shape = 'u8[512]{0}', space=vmem, size = 0x400, scoped, tag = 'input window, operand 2, single buffered']
    #allocation6 [shape = 's32[1]{0}', space=sflag, size = 0x4, scoped, tag = 'scoped memory for _lambda_.1']
    #allocation7 [shape = 'u8[98304]{0}', space=vmem, size = 0x18000, scoped, tag = 'input window, operand 3, single buffered']
    #allocation8 [shape = 'u8[512]{0}', space=vmem, size = 0x400, scoped, tag = 'input window, operand 4, single buffered']
    #allocation9 [shape = 's32[1]{0}', space=sflag, size = 0x4, scoped, tag = 'scoped memory for _lambda_.1']
    #allocation10 [shape = 'u8[196608]{0}', space=vmem, size = 0x30000, scoped, tag = 'input window, operand 5, single buffered']
    #allocation11 [shape = 'u8[1024]{0}', space=vmem, size = 0x400, scoped, tag = 'input window, operand 6, single buffered']
    #allocation12 [shape = 's32[1]{0}', space=sflag, size = 0x4, scoped, tag = 'scoped memory for _lambda_.1']
    #allocation13 [shape = 'u8[786432]{0}', space=vmem, size = 0xc0000, scoped, tag = 'input window, operand 7, single buffered']
    #allocation14 [shape = 'u8[2048]{0}', space=vmem, size = 0x800, scoped, tag = 'input window, operand 8, single buffered']
    #allocation15 [shape = 's32[1]{0}', space=sflag, size = 0x4, scoped, tag = 'scoped memory for _lambda_.1']
    #allocation16 [shape = 'u8[2621440]{0}', space=vmem, size = 0x280000, scoped, tag = 'input window, operand 9, single buffered']
    #allocation17 [shape = 'u8[1024]{0}', space=vmem, size = 0x400, scoped, tag = 'input window, operand 10, single buffered']
    #allocation18 [shape = 's32[1]{0}', space=sflag, size = 0x4, scoped, tag = 'scoped memory for _lambda_.1']
    #allocation19 [shape = 'u8[2048]{0}', space=vmem, size = 0x800, scoped, tag = 'output window, operand 0, single buffered']
    %16 = vsyncpa [#allocation3], 0
    %17 = vsyncpa [#allocation6], 0
    %18 = vsyncpa [#allocation9], 0
    %19 = vsyncpa [#allocation12], 0
    %20 = vsyncpa [#allocation15], 0
    %21 = vsyncpa [#allocation18], 0
    %22 = vsyncpa [#allocation4], 0
    // Predicated region
    $region2: #{_lambda_.1} parent=1 // pred_check
      _
    $region3: #{_lambda_.1} parent=1 // pred_check_branch
      %24 = sbr.rel (0) target = $region5
    $region4: #{_lambda_.1} parent=1 // pred_region
      _
    $region5: #{_lambda_.1} parent=1 // pred_fallthru
      _
    // Predicated region
    $region6: #{_lambda_.1} parent=1 // pred_check
      _
    $region7: #{_lambda_.1} parent=1 // pred_check_branch
      %26 = sbr.rel (0) target = $region9
    $region8: #{_lambda_.1} parent=1 // pred_region
      %28 = vsyncadd [#allocation3], 0
      %s29 = sshll.u32 %s1, 4
      %s30 = int_to_ptr.hbm [resolvable:$true] %s29
      %s31 = sshll.u32 [#allocation2], 4
      %s32 = int_to_ptr.vmem [resolvable:$true] %s31
      %37 = dma.hbm_to_vmem [thread:$0]  %s30, 1024, %s32, [#allocation3], 64, 64, 4
    $region9: #{_lambda_.1} parent=1 // pred_fallthru
      _
    // Predicated region
    $region10: #{_lambda_.1} parent=1 // pred_check
      _
    $region11: #{_lambda_.1} parent=1 // pred_check_branch
      %39 = sbr.rel (0) target = $region13
    $region12: #{_lambda_.1} parent=1 // pred_region
      %41 = vsyncadd [#allocation6], 0
      %s43 = sshll.u32 %s2, 4
      %s44 = int_to_ptr.hbm [resolvable:$true] %s43
      %s45 = sshll.u32 [#allocation5], 4
      %s46 = int_to_ptr.vmem [resolvable:$true] %s45
      %48 = dma.hbm_to_vmem [thread:$0]  %s44, 16, %s46, [#allocation6]
    $region13: #{_lambda_.1} parent=1 // pred_fallthru
      _
    // Predicated region
    $region14: #{_lambda_.1} parent=1 // pred_check
      _
    $region15: #{_lambda_.1} parent=1 // pred_check_branch
      %50 = sbr.rel (0) target = $region17
    $region16: #{_lambda_.1} parent=1 // pred_region
      %52 = vsyncadd [#allocation6], 0
      %s53 = sshll.u32 %s3, 4
      %s54 = int_to_ptr.hbm [resolvable:$true] %s53
      %s55 = sshll.u32 [#allocation7], 4
      %s56 = int_to_ptr.vmem [resolvable:$true] %s55
      %61 = dma.hbm_to_vmem [thread:$0]  %s54, 3072, %s56, [#allocation6], 64, 64, 4
    $region17: #{_lambda_.1} parent=1 // pred_fallthru
      _
    // Predicated region
    $region18: #{_lambda_.1} parent=1 // pred_check
      _
    $region19: #{_lambda_.1} parent=1 // pred_check_branch
      %63 = sbr.rel (0) target = $region21
    $region20: #{_lambda_.1} parent=1 // pred_region
      %65 = vsyncadd [#allocation9], 0
      %s67 = sshll.u32 %s4, 4
      %s68 = int_to_ptr.hbm [resolvable:$true] %s67
      %s69 = sshll.u32 [#allocation8], 4
      %s70 = int_to_ptr.vmem [resolvable:$true] %s69
      %72 = dma.hbm_to_vmem [thread:$0]  %s68, 16, %s70, [#allocation9]
    $region21: #{_lambda_.1} parent=1 // pred_fallthru
      _
    // Predicated region
    $region22: #{_lambda_.1} parent=1 // pred_check
      _
    $region23: #{_lambda_.1} parent=1 // pred_check_branch
      %74 = sbr.rel (0) target = $region25
    $region24: #{_lambda_.1} parent=1 // pred_region
      %76 = vsyncadd [#allocation9], 0
      %s77 = sshll.u32 %s5, 4
      %s78 = int_to_ptr.hbm [resolvable:$true] %s77
      %s79 = sshll.u32 [#allocation10], 4
      %s80 = int_to_ptr.vmem [resolvable:$true] %s79
      %85 = dma.hbm_to_vmem [thread:$0]  %s78, 6144, %s80, [#allocation9], 128, 128, 8
    $region25: #{_lambda_.1} parent=1 // pred_fallthru
      _
    // Predicated region
    $region26: #{_lambda_.1} parent=1 // pred_check
      _
    $region27: #{_lambda_.1} parent=1 // pred_check_branch
      %87 = sbr.rel (0) target = $region29
    $region28: #{_lambda_.1} parent=1 // pred_region
      %89 = vsyncadd [#allocation12], 0
      %s91 = sshll.u32 %s6, 4
      %s92 = int_to_ptr.hbm [resolvable:$true] %s91
      %s93 = sshll.u32 [#allocation11], 4
      %s94 = int_to_ptr.vmem [resolvable:$true] %s93
      %96 = dma.hbm_to_vmem [thread:$0]  %s92, 32, %s94, [#allocation12]
    $region29: #{_lambda_.1} parent=1 // pred_fallthru
      _
    // Predicated region
    $region30: #{_lambda_.1} parent=1 // pred_check
      _
    $region31: #{_lambda_.1} parent=1 // pred_check_branch
      %98 = sbr.rel (0) target = $region33
    $region32: #{_lambda_.1} parent=1 // pred_region
      %100 = vsyncadd [#allocation12], 0
      %s101 = sshll.u32 %s7, 4
      %s102 = int_to_ptr.hbm [resolvable:$true] %s101
      %s103 = sshll.u32 [#allocation13], 4
      %s104 = int_to_ptr.vmem [resolvable:$true] %s103
      %109 = dma.hbm_to_vmem [thread:$0]  %s102, 24576, %s104, [#allocation12], 256, 256, 16
    $region33: #{_lambda_.1} parent=1 // pred_fallthru
      _
    // Predicated region
    $region34: #{_lambda_.1} parent=1 // pred_check
      _
    $region35: #{_lambda_.1} parent=1 // pred_check_branch
      %111 = sbr.rel (0) target = $region37
    $region36: #{_lambda_.1} parent=1 // pred_region
      %113 = vsyncadd [#allocation15], 0
      %s115 = sshll.u32 %s8, 4
      %s116 = int_to_ptr.hbm [resolvable:$true] %s115
      %s117 = sshll.u32 [#allocation14], 4
      %s118 = int_to_ptr.vmem [resolvable:$true] %s117
      %120 = dma.hbm_to_vmem [thread:$0]  %s116, 64, %s118, [#allocation15]
    $region37: #{_lambda_.1} parent=1 // pred_fallthru
      _
    // Predicated region
    $region38: #{_lambda_.1} parent=1 // pred_check
      _
    $region39: #{_lambda_.1} parent=1 // pred_check_branch
      %122 = sbr.rel (0) target = $region41
    $region40: #{_lambda_.1} parent=1 // pred_region
      %124 = vsyncadd [#allocation15], 0
      %s125 = sshll.u32 %s9, 4
      %s126 = int_to_ptr.hbm [resolvable:$true] %s125
      %s127 = sshll.u32 [#allocation16], 4
      %s128 = int_to_ptr.vmem [resolvable:$true] %s127
      %133 = dma.hbm_to_vmem [thread:$0]  %s126, 81920, %s128, [#allocation15], 128, 128, 8
    $region41: #{_lambda_.1} parent=1 // pred_fallthru
      _
    // Predicated region
    $region42: #{_lambda_.1} parent=1 // pred_check
      _
    $region43: #{_lambda_.1} parent=1 // pred_check_branch
      %135 = sbr.rel (0) target = $region45
    $region44: #{_lambda_.1} parent=1 // pred_region
      %137 = vsyncadd [#allocation18], 0
      %s139 = sshll.u32 %s10, 4
      %s140 = int_to_ptr.hbm [resolvable:$true] %s139
      %s141 = sshll.u32 [#allocation17], 4
      %s142 = int_to_ptr.vmem [resolvable:$true] %s141
      %144 = dma.hbm_to_vmem [thread:$0]  %s140, 32, %s142, [#allocation18]
    $region45: #{_lambda_.1} parent=1 // pred_fallthru
      _
    // Predicated region
    $region46: #{_lambda_.1} parent=1 // pred_check
      _
    $region47: #{_lambda_.1} parent=1 // pred_check_branch
      %146 = sbr.rel (0) target = $region49
    $region48: #{_lambda_.1} parent=1 // pred_region
      %148 = dma.done [#allocation3], 1024
    $region49: #{_lambda_.1} parent=1 // pred_fallthru
      _
    // Predicated region
    $region50: #{_lambda_.1} parent=1 // pred_check
      _
    $region51: #{_lambda_.1} parent=1 // pred_check_branch
      %150 = sbr.rel (0) target = $region53
    $region52: #{_lambda_.1} parent=1 // pred_region
      %152 = dma.done [#allocation6], 16
    $region53: #{_lambda_.1} parent=1 // pred_fallthru
      _
    // Predicated region
    $region54: #{_lambda_.1} parent=1 // pred_check
      _
    $region55: #{_lambda_.1} parent=1 // pred_check_branch
      %154 = sbr.rel (0) target = $region57
    $region56: #{_lambda_.1} parent=1 // pred_region
      %156 = dma.done [#allocation6], 3072
    $region57: #{_lambda_.1} parent=1 // pred_fallthru
      _
    // Predicated region
    $region58: #{_lambda_.1} parent=1 // pred_check
      _
    $region59: #{_lambda_.1} parent=1 // pred_check_branch
      %158 = sbr.rel (0) target = $region61
    $region60: #{_lambda_.1} parent=1 // pred_region
      %160 = dma.done [#allocation9], 16
    $region61: #{_lambda_.1} parent=1 // pred_fallthru
      _
    // Predicated region
    $region62: #{_lambda_.1} parent=1 // pred_check
      _
    $region63: #{_lambda_.1} parent=1 // pred_check_branch
      %162 = sbr.rel (0) target = $region65
    $region64: #{_lambda_.1} parent=1 // pred_region
      %164 = dma.done [#allocation9], 6144
    $region65: #{_lambda_.1} parent=1 // pred_fallthru
      _
    // Predicated region
    $region66: #{_lambda_.1} parent=1 // pred_check
      _
    $region67: #{_lambda_.1} parent=1 // pred_check_branch
      %166 = sbr.rel (0) target = $region69
    $region68: #{_lambda_.1} parent=1 // pred_region
      %168 = dma.done [#allocation12], 32
    $region69: #{_lambda_.1} parent=1 // pred_fallthru
      _
    // Predicated region
    $region70: #{_lambda_.1} parent=1 // pred_check
      _
    $region71: #{_lambda_.1} parent=1 // pred_check_branch
      %170 = sbr.rel (0) target = $region73
    $region72: #{_lambda_.1} parent=1 // pred_region
      %172 = dma.done [#allocation12], 24576
    $region73: #{_lambda_.1} parent=1 // pred_fallthru
      _
    // Predicated region
    $region74: #{_lambda_.1} parent=1 // pred_check
      _
    $region75: #{_lambda_.1} parent=1 // pred_check_branch
      %174 = sbr.rel (0) target = $region77
    $region76: #{_lambda_.1} parent=1 // pred_region
      %176 = dma.done [#allocation15], 64
    $region77: #{_lambda_.1} parent=1 // pred_fallthru
      _
    // Predicated region
    $region78: #{_lambda_.1} parent=1 // pred_check
      _
    $region79: #{_lambda_.1} parent=1 // pred_check_branch
      %178 = sbr.rel (0) target = $region81
    $region80: #{_lambda_.1} parent=1 // pred_region
      %180 = dma.done [#allocation15], 81920
    $region81: #{_lambda_.1} parent=1 // pred_fallthru
      _
    // Predicated region
    $region82: #{_lambda_.1} parent=1 // pred_check
      _
    $region83: #{_lambda_.1} parent=1 // pred_check_branch
      %182 = sbr.rel (0) target = $region85
    $region84: #{_lambda_.1} parent=1 // pred_region
      %184 = dma.done [#allocation18], 32
    $region85: #{_lambda_.1} parent=1 // pred_fallthru
      _
    %v186 = vld [vmem:[%s0] sm:$0xf]
    %v187 = vld [vmem:[%s0 + $0x4] sm:$0xf]
    %v188 = vld [vmem:[%s0 + $0x8] sm:$0xf]
    %v189 = vld [vmem:[%s0 + $0xc] sm:$0xf]
    %v190 = vld [vmem:[#allocation2] sm:$0xf]
    %v191 = vld [vmem:[#allocation2 + $0x4] sm:$0xf]
    %v192 = vld [vmem:[#allocation2 + $0x8] sm:$0xf]
    %v193 = vld [vmem:[#allocation2 + $0xc] sm:$0xf]
    %v194 = vld [vmem:[#allocation2 + $0x10] sm:$0xf]
    %v195 = vld [vmem:[#allocation2 + $0x14] sm:$0xf]
    %v196 = vld [vmem:[#allocation2 + $0x18] sm:$0xf]
    %v197 = vld [vmem:[#allocation2 + $0x1c] sm:$0xf]
    %v198 = vld [vmem:[#allocation2 + $0x20] sm:$0xf]
    %v199 = vld [vmem:[#allocation2 + $0x24] sm:$0xf]
    %v200 = vld [vmem:[#allocation2 + $0x28] sm:$0xf]
    %v201 = vld [vmem:[#allocation2 + $0x2c] sm:$0xf]
    %v202 = vld [vmem:[#allocation2 + $0x30] sm:$0xf]
    %v203 = vld [vmem:[#allocation2 + $0x34] sm:$0xf]
    %v204 = vld [vmem:[#allocation2 + $0x38] sm:$0xf]
    %v205 = vld [vmem:[#allocation2 + $0x3c] sm:$0xf]
    %v206 = vld [vmem:[#allocation5] sm:$0x1]
    %v208 = vperm.slane %v206, 0
    %v214 = vunpack.c.l.b16 %v186
    %v215 = vunpack.c.l.b16 %v187
    %v216 = vunpack.c.l.b16 %v188
    %v217 = vunpack.c.l.b16 %v189
    %v218 = vpack.c.b16 %v215, %v214
    %v219 = vpack.c.b16 %v217, %v216
    %v238 = vunpack.c.l.b16 %v190
    %v239 = vunpack.c.l.b16 %v191
    %v240 = vunpack.c.l.b16 %v192
    %v241 = vunpack.c.l.b16 %v193
    %v242 = vunpack.c.l.b16 %v194
    %v243 = vunpack.c.l.b16 %v195
    %v244 = vunpack.c.l.b16 %v196
    %v245 = vunpack.c.l.b16 %v197
    %v246 = vunpack.c.l.b16 %v198
    %v247 = vunpack.c.l.b16 %v199
    %v248 = vunpack.c.l.b16 %v200
    %v249 = vunpack.c.l.b16 %v201
    %v250 = vunpack.c.l.b16 %v202
    %v251 = vunpack.c.l.b16 %v203
    %v252 = vunpack.c.l.b16 %v204
    %v253 = vunpack.c.l.b16 %v205
    %v254 = vpack.c.b16 %v239, %v238
    %v255 = vpack.c.b16 %v241, %v240
    %v256 = vpack.c.b16 %v243, %v242
    %v257 = vpack.c.b16 %v245, %v244
    %v258 = vpack.c.b16 %v247, %v246
    %v259 = vpack.c.b16 %v249, %v248
    %v260 = vpack.c.b16 %v251, %v250
    %v261 = vpack.c.b16 %v253, %v252
    %270 = vmatpush.bf16.msra.mxu0 %v261
    %271 = vmatpush.bf16.msra.mxu0 %v260
    %272 = vmatpush.bf16.msra.mxu0 %v259
    %273 = vmatpush.bf16.msra.mxu0 %v258
    %274 = vmatpush.bf16.msra.mxu0 %v257
    %275 = vmatpush.bf16.msra.mxu0 %v256
    %276 = vmatpush.bf16.msra.mxu0 %v255
    %277 = vmatpush.bf16.msra.mxu0 %v254
    %278 = vmatmul.bf16.gmra.mxu0 %v218
    %v279 = vpop.f32.mrf.mxu0
    %v280 = vadd.f32 %v208, %v279
    %v281 = vpop.f32.mrf.mxu0
    %v282 = vadd.f32 %v208, %v281
    %283 = vmatmul.bf16.gmra.mxu0 %v219
    %v284 = vpop.f32.mrf.mxu0
    %v285 = vadd.f32 %v208, %v284
    %v286 = vpop.f32.mrf.mxu0
    %v287 = vadd.f32 %v208, %v286
    %288 = vdwg.mxu0
    %v289 = vmax.f32 %v280, 0.0
    %v290 = vmax.f32 %v282, 0.0
    %v291 = vmax.f32 %v285, 0.0
    %v292 = vmax.f32 %v287, 0.0
    %v293 = vpack.c.bf16 %v289, %v289
    %v294 = vpack.c.bf16 %v290, %v290
    %v295 = vpack.c.bf16 %v291, %v291
    %v296 = vpack.c.bf16 %v292, %v292
    %v301 = vunpack.c.l.b16 %v293
    %v302 = vunpack.c.l.b16 %v294
    %v303 = vunpack.c.l.b16 %v295
    %v304 = vunpack.c.l.b16 %v296
    %v305 = vpack.c.b16 %v302, %v301
    %v306 = vpack.c.b16 %v304, %v303
    %vm309 = vsmask.f32 7424
    %v311 = vshrl.u32 %v305, 16
    %v313 = vshll.u32 %v305, 16
    %v315 = vrot.slane %v313, 1
    %v316 = vor.u32 %v311, %v315
    %v318 = vshll.u32 0, 16
    %v320 = vrot.slane %v318, 1
    %v321 = vsel %vm309, %v316, %v320
    %v323 = vshrl.u32 %v306, 16
    %v325 = vshll.u32 %v306, 16
    %v327 = vrot.slane %v325, 1
    %v328 = vor.u32 %v323, %v327
    %v329 = vsel %vm309, %v328, %v320
    %vm333 = vcmask 1046528
    %v334 = vrot.slane %v305, 1
    %v335 = vrot.slane 0, 1
    %v336 = vsel %vm333, %v334, %v335
    %v337 = vrot.slane %v306, 1
    %v338 = vsel %vm333, %v337, %v335
    %v341 = vld [vmem:[#allocation7] sm:$0xf]
    %v342 = vld [vmem:[#allocation7 + $0x4] sm:$0xf]
    %v343 = vld [vmem:[#allocation7 + $0x8] sm:$0xf]
    %v344 = vld [vmem:[#allocation7 + $0xc] sm:$0xf]
    %v345 = vld [vmem:[#allocation7 + $0x10] sm:$0xf]
    %v346 = vld [vmem:[#allocation7 + $0x14] sm:$0xf]
    %v347 = vld [vmem:[#allocation7 + $0x18] sm:$0xf]
    %v348 = vld [vmem:[#allocation7 + $0x1c] sm:$0xf]
    %v349 = vld [vmem:[#allocation7 + $0x20] sm:$0xf]
    %v350 = vld [vmem:[#allocation7 + $0x24] sm:$0xf]
    %v351 = vld [vmem:[#allocation7 + $0x28] sm:$0xf]
    %v352 = vld [vmem:[#allocation7 + $0x2c] sm:$0xf]
    %v353 = vld [vmem:[#allocation7 + $0x30] sm:$0xf]
    %v354 = vld [vmem:[#allocation7 + $0x34] sm:$0xf]
    %v355 = vld [vmem:[#allocation7 + $0x38] sm:$0xf]
    %v356 = vld [vmem:[#allocation7 + $0x3c] sm:$0xf]
    %v357 = vld [vmem:[#allocation7 + $0x40] sm:$0xf]
    %v358 = vld [vmem:[#allocation7 + $0x44] sm:$0xf]
    %v359 = vld [vmem:[#allocation7 + $0x48] sm:$0xf]
    %v360 = vld [vmem:[#allocation7 + $0x4c] sm:$0xf]
    %v361 = vld [vmem:[#allocation7 + $0x50] sm:$0xf]
    %v362 = vld [vmem:[#allocation7 + $0x54] sm:$0xf]
    %v363 = vld [vmem:[#allocation7 + $0x58] sm:$0xf]
    %v364 = vld [vmem:[#allocation7 + $0x5c] sm:$0xf]
    %v365 = vld [vmem:[#allocation7 + $0x60] sm:$0xf]
    %v366 = vld [vmem:[#allocation7 + $0x64] sm:$0xf]
    %v367 = vld [vmem:[#allocation7 + $0x68] sm:$0xf]
    %v368 = vld [vmem:[#allocation7 + $0x6c] sm:$0xf]
    %v369 = vld [vmem:[#allocation7 + $0x70] sm:$0xf]
    %v370 = vld [vmem:[#allocation7 + $0x74] sm:$0xf]
    %v371 = vld [vmem:[#allocation7 + $0x78] sm:$0xf]
    %v372 = vld [vmem:[#allocation7 + $0x7c] sm:$0xf]
    %v373 = vld [vmem:[#allocation7 + $0x80] sm:$0xf]
    %v374 = vld [vmem:[#allocation7 + $0x84] sm:$0xf]
    %v375 = vld [vmem:[#allocation7 + $0x88] sm:$0xf]
    %v376 = vld [vmem:[#allocation7 + $0x8c] sm:$0xf]
    %v377 = vld [vmem:[#allocation7 + $0x90] sm:$0xf]
    %v378 = vld [vmem:[#allocation7 + $0x94] sm:$0xf]
    %v379 = vld [vmem:[#allocation7 + $0x98] sm:$0xf]
    %v380 = vld [vmem:[#allocation7 + $0x9c] sm:$0xf]
    %v381 = vld [vmem:[#allocation7 + $0xa0] sm:$0xf]
    %v382 = vld [vmem:[#allocation7 + $0xa4] sm:$0xf]
    %v383 = vld [vmem:[#allocation7 + $0xa8] sm:$0xf]
    %v384 = vld [vmem:[#allocation7 + $0xac] sm:$0xf]
    %v385 = vld [vmem:[#allocation7 + $0xb0] sm:$0xf]
    %v386 = vld [vmem:[#allocation7 + $0xb4] sm:$0xf]
    %v387 = vld [vmem:[#allocation7 + $0xb8] sm:$0xf]
    %v388 = vld [vmem:[#allocation7 + $0xbc] sm:$0xf]
    %v389 = vld [vmem:[#allocation8] sm:$0x1]
    %v391 = vperm.slane %v389, 0
    %v441 = vunpack.c.l.b16 %v341
    %v442 = vunpack.c.l.b16 %v342
    %v443 = vunpack.c.l.b16 %v343
    %v444 = vunpack.c.l.b16 %v344
    %v445 = vunpack.c.l.b16 %v345
    %v446 = vunpack.c.l.b16 %v346
    %v447 = vunpack.c.l.b16 %v347
    %v448 = vunpack.c.l.b16 %v348
    %v449 = vunpack.c.l.b16 %v349
    %v450 = vunpack.c.l.b16 %v350
    %v451 = vunpack.c.l.b16 %v351
    %v452 = vunpack.c.l.b16 %v352
    %v453 = vunpack.c.l.b16 %v353
    %v454 = vunpack.c.l.b16 %v354
    %v455 = vunpack.c.l.b16 %v355
    %v456 = vunpack.c.l.b16 %v356
    %v457 = vunpack.c.l.b16 %v357
    %v458 = vunpack.c.l.b16 %v358
    %v459 = vunpack.c.l.b16 %v359
    %v460 = vunpack.c.l.b16 %v360
    %v461 = vunpack.c.l.b16 %v361
    %v462 = vunpack.c.l.b16 %v362
    %v463 = vunpack.c.l.b16 %v363
    %v464 = vunpack.c.l.b16 %v364
    %v465 = vunpack.c.l.b16 %v365
    %v466 = vunpack.c.l.b16 %v366
    %v467 = vunpack.c.l.b16 %v367
    %v468 = vunpack.c.l.b16 %v368
    %v469 = vunpack.c.l.b16 %v369
    %v470 = vunpack.c.l.b16 %v370
    %v471 = vunpack.c.l.b16 %v371
    %v472 = vunpack.c.l.b16 %v372
    %v473 = vunpack.c.l.b16 %v373
    %v474 = vunpack.c.l.b16 %v374
    %v475 = vunpack.c.l.b16 %v375
    %v476 = vunpack.c.l.b16 %v376
    %v477 = vunpack.c.l.b16 %v377
    %v478 = vunpack.c.l.b16 %v378
    %v479 = vunpack.c.l.b16 %v379
    %v480 = vunpack.c.l.b16 %v380
    %v481 = vunpack.c.l.b16 %v381
    %v482 = vunpack.c.l.b16 %v382
    %v483 = vunpack.c.l.b16 %v383
    %v484 = vunpack.c.l.b16 %v384
    %v485 = vunpack.c.l.b16 %v385
    %v486 = vunpack.c.l.b16 %v386
    %v487 = vunpack.c.l.b16 %v387
    %v488 = vunpack.c.l.b16 %v388
    %v489 = vpack.c.b16 %v442, %v441
    %v490 = vpack.c.b16 %v444, %v443
    %v491 = vpack.c.b16 %v446, %v445
    %v492 = vpack.c.b16 %v448, %v447
    %v493 = vpack.c.b16 %v450, %v449
    %v494 = vpack.c.b16 %v452, %v451
    %v495 = vpack.c.b16 %v454, %v453
    %v496 = vpack.c.b16 %v456, %v455
    %v497 = vpack.c.b16 %v458, %v457
    %v498 = vpack.c.b16 %v460, %v459
    %v499 = vpack.c.b16 %v462, %v461
    %v500 = vpack.c.b16 %v464, %v463
    %v501 = vpack.c.b16 %v466, %v465
    %v502 = vpack.c.b16 %v468, %v467
    %v503 = vpack.c.b16 %v470, %v469
    %v504 = vpack.c.b16 %v472, %v471
    %v505 = vpack.c.b16 %v474, %v473
    %v506 = vpack.c.b16 %v476, %v475
    %v507 = vpack.c.b16 %v478, %v477
    %v508 = vpack.c.b16 %v480, %v479
    %v509 = vpack.c.b16 %v482, %v481
    %v510 = vpack.c.b16 %v484, %v483
    %v511 = vpack.c.b16 %v486, %v485
    %v512 = vpack.c.b16 %v488, %v487
    %537 = vmatpush.bf16.msra.mxu0 %v496
    %538 = vmatpush.bf16.msra.mxu0 %v495
    %539 = vmatpush.bf16.msra.mxu0 %v494
    %540 = vmatpush.bf16.msra.mxu0 %v493
    %541 = vmatpush.bf16.msra.mxu0 %v492
    %542 = vmatpush.bf16.msra.mxu0 %v491
    %543 = vmatpush.bf16.msra.mxu0 %v490
    %544 = vmatpush.bf16.msra.mxu0 %v489
    %545 = vmatmul.bf16.gmra.mxu0 %v305
    %v546 = vpop.f32.mrf.mxu0
    %v547 = vadd.f32 %v391, %v546
    %v548 = vpop.f32.mrf.mxu0
    %v549 = vadd.f32 %v391, %v548
    %550 = vmatmul.bf16.gmra.mxu0 %v306
    %v551 = vpop.f32.mrf.mxu0
    %v552 = vadd.f32 %v391, %v551
    %v553 = vpop.f32.mrf.mxu0
    %v554 = vadd.f32 %v391, %v553
    %555 = vdwg.mxu0
    %556 = vmatpush.bf16.msra.mxu0 %v504
    %557 = vmatpush.bf16.msra.mxu0 %v503
    %558 = vmatpush.bf16.msra.mxu0 %v502
    %559 = vmatpush.bf16.msra.mxu0 %v501
    %560 = vmatpush.bf16.msra.mxu0 %v500
    %561 = vmatpush.bf16.msra.mxu0 %v499
    %562 = vmatpush.bf16.msra.mxu0 %v498
    %563 = vmatpush.bf16.msra.mxu0 %v497
    %564 = vmatmul.bf16.gmra.mxu0 %v321
    %v565 = vpop.f32.mrf.mxu0
    %v566 = vadd.f32 %v547, %v565
    %v567 = vpop.f32.mrf.mxu0
    %v568 = vadd.f32 %v549, %v567
    %569 = vmatmul.bf16.gmra.mxu0 %v329
    %v570 = vpop.f32.mrf.mxu0
    %v571 = vadd.f32 %v552, %v570
    %v572 = vpop.f32.mrf.mxu0
    %v573 = vadd.f32 %v554, %v572
    %574 = vdwg.mxu0
    %575 = vmatpush.bf16.msra.mxu0 %v512
    %576 = vmatpush.bf16.msra.mxu0 %v511
    %577 = vmatpush.bf16.msra.mxu0 %v510
    %578 = vmatpush.bf16.msra.mxu0 %v509
    %579 = vmatpush.bf16.msra.mxu0 %v508
    %580 = vmatpush.bf16.msra.mxu0 %v507
    %581 = vmatpush.bf16.msra.mxu0 %v506
    %582 = vmatpush.bf16.msra.mxu0 %v505
    %583 = vmatmul.bf16.gmra.mxu0 %v336
    %v584 = vpop.f32.mrf.mxu0
    %v585 = vadd.f32 %v566, %v584
    %v586 = vpop.f32.mrf.mxu0
    %v587 = vadd.f32 %v568, %v586
    %588 = vmatmul.bf16.gmra.mxu0 %v338
    %v589 = vpop.f32.mrf.mxu0
    %v590 = vadd.f32 %v571, %v589
    %v591 = vpop.f32.mrf.mxu0
    %v592 = vadd.f32 %v573, %v591
    %593 = vdwg.mxu0
    %v594 = vmax.f32 %v585, 0.0
    %v595 = vmax.f32 %v587, 0.0
    %v596 = vmax.f32 %v590, 0.0
    %v597 = vmax.f32 %v592, 0.0
    %v598 = vpack.c.bf16 %v594, %v594
    %v599 = vpack.c.bf16 %v595, %v595
    %v600 = vpack.c.bf16 %v596, %v596
    %v601 = vpack.c.bf16 %v597, %v597
    %v606 = vunpack.c.l.b16 %v598
    %v607 = vunpack.c.l.b16 %v599
    %v608 = vunpack.c.l.b16 %v600
    %v609 = vunpack.c.l.b16 %v601
    %v610 = vpack.c.b16 %v607, %v606
    %v611 = vpack.c.b16 %v609, %v608
    %v615 = vshrl.u32 %v610, 16
    %v617 = vshll.u32 %v610, 16
    %v619 = vrot.slane %v617, 1
    %v620 = vor.u32 %v615, %v619
    %v621 = vsel %vm309, %v620, %v320
    %v623 = vshrl.u32 %v611, 16
    %v625 = vshll.u32 %v611, 16
    %v627 = vrot.slane %v625, 1
    %v628 = vor.u32 %v623, %v627
    %v629 = vsel %vm309, %v628, %v320
    %v632 = vrot.slane %v610, 1
    %v633 = vsel %vm333, %v632, %v335
    %v634 = vrot.slane %v611, 1
    %v635 = vsel %vm333, %v634, %v335
    %v638 = vld [vmem:[#allocation10] sm:$0xff]
    %v639 = vld [vmem:[#allocation10 + $0x8] sm:$0xff]
    %v640 = vld [vmem:[#allocation10 + $0x10] sm:$0xff]
    %v641 = vld [vmem:[#allocation10 + $0x18] sm:$0xff]
    %v642 = vld [vmem:[#allocation10 + $0x20] sm:$0xff]
    %v643 = vld [vmem:[#allocation10 + $0x28] sm:$0xff]
    %v644 = vld [vmem:[#allocation10 + $0x30] sm:$0xff]
    %v645 = vld [vmem:[#allocation10 + $0x38] sm:$0xff]
    %v646 = vld [vmem:[#allocation10 + $0x40] sm:$0xff]
    %v647 = vld [vmem:[#allocation10 + $0x48] sm:$0xff]
    %v648 = vld [vmem:[#allocation10 + $0x50] sm:$0xff]
    %v649 = vld [vmem:[#allocation10 + $0x58] sm:$0xff]
    %v650 = vld [vmem:[#allocation10 + $0x60] sm:$0xff]
    %v651 = vld [vmem:[#allocation10 + $0x68] sm:$0xff]
    %v652 = vld [vmem:[#allocation10 + $0x70] sm:$0xff]
    %v653 = vld [vmem:[#allocation10 + $0x78] sm:$0xff]
    %v654 = vld [vmem:[#allocation10 + $0x80] sm:$0xff]
    %v655 = vld [vmem:[#allocation10 + $0x88] sm:$0xff]
    %v656 = vld [vmem:[#allocation10 + $0x90] sm:$0xff]
    %v657 = vld [vmem:[#allocation10 + $0x98] sm:$0xff]
    %v658 = vld [vmem:[#allocation10 + $0xa0] sm:$0xff]
    %v659 = vld [vmem:[#allocation10 + $0xa8] sm:$0xff]
    %v660 = vld [vmem:[#allocation10 + $0xb0] sm:$0xff]
    %v661 = vld [vmem:[#allocation10 + $0xb8] sm:$0xff]
    %v662 = vld [vmem:[#allocation10 + $0xc0] sm:$0xff]
    %v663 = vld [vmem:[#allocation10 + $0xc8] sm:$0xff]
    %v664 = vld [vmem:[#allocation10 + $0xd0] sm:$0xff]
    %v665 = vld [vmem:[#allocation10 + $0xd8] sm:$0xff]
    %v666 = vld [vmem:[#allocation10 + $0xe0] sm:$0xff]
    %v667 = vld [vmem:[#allocation10 + $0xe8] sm:$0xff]
    %v668 = vld [vmem:[#allocation10 + $0xf0] sm:$0xff]
    %v669 = vld [vmem:[#allocation10 + $0xf8] sm:$0xff]
    %v670 = vld [vmem:[#allocation10 + $0x100] sm:$0xff]
    %v671 = vld [vmem:[#allocation10 + $0x108] sm:$0xff]
    %v672 = vld [vmem:[#allocation10 + $0x110] sm:$0xff]
    %v673 = vld [vmem:[#allocation10 + $0x118] sm:$0xff]
    %v674 = vld [vmem:[#allocation10 + $0x120] sm:$0xff]
    %v675 = vld [vmem:[#allocation10 + $0x128] sm:$0xff]
    %v676 = vld [vmem:[#allocation10 + $0x130] sm:$0xff]
    %v677 = vld [vmem:[#allocation10 + $0x138] sm:$0xff]
    %v678 = vld [vmem:[#allocation10 + $0x140] sm:$0xff]
    %v679 = vld [vmem:[#allocation10 + $0x148] sm:$0xff]
    %v680 = vld [vmem:[#allocation10 + $0x150] sm:$0xff]
    %v681 = vld [vmem:[#allocation10 + $0x158] sm:$0xff]
    %v682 = vld [vmem:[#allocation10 + $0x160] sm:$0xff]
    %v683 = vld [vmem:[#allocation10 + $0x168] sm:$0xff]
    %v684 = vld [vmem:[#allocation10 + $0x170] sm:$0xff]
    %v685 = vld [vmem:[#allocation10 + $0x178] sm:$0xff]
    %v686 = vld [vmem:[#allocation11] sm:$0x3]
    %v688 = vperm.slane %v686, 0
    %v689 = vperm.slane %v686, 1
    %v740 = vunpack.c.l.b16 %v638
    %v741 = vunpack.c.h.b16 %v638
    %v742 = vunpack.c.l.b16 %v639
    %v743 = vunpack.c.h.b16 %v639
    %v744 = vunpack.c.l.b16 %v640
    %v745 = vunpack.c.h.b16 %v640
    %v746 = vunpack.c.l.b16 %v641
    %v747 = vunpack.c.h.b16 %v641
    %v748 = vunpack.c.l.b16 %v642
    %v749 = vunpack.c.h.b16 %v642
    %v750 = vunpack.c.l.b16 %v643
    %v751 = vunpack.c.h.b16 %v643
    %v752 = vunpack.c.l.b16 %v644
    %v753 = vunpack.c.h.b16 %v644
    %v754 = vunpack.c.l.b16 %v645
    %v755 = vunpack.c.h.b16 %v645
    %v756 = vunpack.c.l.b16 %v646
    %v757 = vunpack.c.h.b16 %v646
    %v758 = vunpack.c.l.b16 %v647
    %v759 = vunpack.c.h.b16 %v647
    %v760 = vunpack.c.l.b16 %v648
    %v761 = vunpack.c.h.b16 %v648
    %v762 = vunpack.c.l.b16 %v649
    %v763 = vunpack.c.h.b16 %v649
    %v764 = vunpack.c.l.b16 %v650
    %v765 = vunpack.c.h.b16 %v650
    %v766 = vunpack.c.l.b16 %v651
    %v767 = vunpack.c.h.b16 %v651
    %v768 = vunpack.c.l.b16 %v652
    %v769 = vunpack.c.h.b16 %v652
    %v770 = vunpack.c.l.b16 %v653
    %v771 = vunpack.c.h.b16 %v653
    %v772 = vunpack.c.l.b16 %v654
    %v773 = vunpack.c.h.b16 %v654
    %v774 = vunpack.c.l.b16 %v655
    %v775 = vunpack.c.h.b16 %v655
    %v776 = vunpack.c.l.b16 %v656
    %v777 = vunpack.c.h.b16 %v656
    %v778 = vunpack.c.l.b16 %v657
    %v779 = vunpack.c.h.b16 %v657
    %v780 = vunpack.c.l.b16 %v658
    %v781 = vunpack.c.h.b16 %v658
    %v782 = vunpack.c.l.b16 %v659
    %v783 = vunpack.c.h.b16 %v659
    %v784 = vunpack.c.l.b16 %v660
    %v785 = vunpack.c.h.b16 %v660
    %v786 = vunpack.c.l.b16 %v661
    %v787 = vunpack.c.h.b16 %v661
    %v788 = vunpack.c.l.b16 %v662
    %v789 = vunpack.c.h.b16 %v662
    %v790 = vunpack.c.l.b16 %v663
    %v791 = vunpack.c.h.b16 %v663
    %v792 = vunpack.c.l.b16 %v664
    %v793 = vunpack.c.h.b16 %v664
    %v794 = vunpack.c.l.b16 %v665
    %v795 = vunpack.c.h.b16 %v665
    %v796 = vunpack.c.l.b16 %v666
    %v797 = vunpack.c.h.b16 %v666
    %v798 = vunpack.c.l.b16 %v667
    %v799 = vunpack.c.h.b16 %v667
    %v800 = vunpack.c.l.b16 %v668
    %v801 = vunpack.c.h.b16 %v668
    %v802 = vunpack.c.l.b16 %v669
    %v803 = vunpack.c.h.b16 %v669
    %v804 = vunpack.c.l.b16 %v670
    %v805 = vunpack.c.h.b16 %v670
    %v806 = vunpack.c.l.b16 %v671
    %v807 = vunpack.c.h.b16 %v671
    %v808 = vunpack.c.l.b16 %v672
    %v809 = vunpack.c.h.b16 %v672
    %v810 = vunpack.c.l.b16 %v673
    %v811 = vunpack.c.h.b16 %v673
    %v812 = vunpack.c.l.b16 %v674
    %v813 = vunpack.c.h.b16 %v674
    %v814 = vunpack.c.l.b16 %v675
    %v815 = vunpack.c.h.b16 %v675
    %v816 = vunpack.c.l.b16 %v676
    %v817 = vunpack.c.h.b16 %v676
    %v818 = vunpack.c.l.b16 %v677
    %v819 = vunpack.c.h.b16 %v677
    %v820 = vunpack.c.l.b16 %v678
    %v821 = vunpack.c.h.b16 %v678
    %v822 = vunpack.c.l.b16 %v679
    %v823 = vunpack.c.h.b16 %v679
    %v824 = vunpack.c.l.b16 %v680
    %v825 = vunpack.c.h.b16 %v680
    %v826 = vunpack.c.l.b16 %v681
    %v827 = vunpack.c.h.b16 %v681
    %v828 = vunpack.c.l.b16 %v682
    %v829 = vunpack.c.h.b16 %v682
    %v830 = vunpack.c.l.b16 %v683
    %v831 = vunpack.c.h.b16 %v683
    %v832 = vunpack.c.l.b16 %v684
    %v833 = vunpack.c.h.b16 %v684
    %v834 = vunpack.c.l.b16 %v685
    %v835 = vunpack.c.h.b16 %v685
    %v836 = vpack.c.b16 %v742, %v740
    %v837 = vpack.c.b16 %v743, %v741
    %v838 = vpack.c.b16 %v746, %v744
    %v839 = vpack.c.b16 %v747, %v745
    %v840 = vpack.c.b16 %v750, %v748
    %v841 = vpack.c.b16 %v751, %v749
    %v842 = vpack.c.b16 %v754, %v752
    %v843 = vpack.c.b16 %v755, %v753
    %v844 = vpack.c.b16 %v758, %v756
    %v845 = vpack.c.b16 %v759, %v757
    %v846 = vpack.c.b16 %v762, %v760
    %v847 = vpack.c.b16 %v763, %v761
    %v848 = vpack.c.b16 %v766, %v764
    %v849 = vpack.c.b16 %v767, %v765
    %v850 = vpack.c.b16 %v770, %v768
    %v851 = vpack.c.b16 %v771, %v769
    %v852 = vpack.c.b16 %v774, %v772
    %v853 = vpack.c.b16 %v775, %v773
    %v854 = vpack.c.b16 %v778, %v776
    %v855 = vpack.c.b16 %v779, %v777
    %v856 = vpack.c.b16 %v782, %v780
    %v857 = vpack.c.b16 %v783, %v781
    %v858 = vpack.c.b16 %v786, %v784
    %v859 = vpack.c.b16 %v787, %v785
    %v860 = vpack.c.b16 %v790, %v788
    %v861 = vpack.c.b16 %v791, %v789
    %v862 = vpack.c.b16 %v794, %v792
    %v863 = vpack.c.b16 %v795, %v793
    %v864 = vpack.c.b16 %v798, %v796
    %v865 = vpack.c.b16 %v799, %v797
    %v866 = vpack.c.b16 %v802, %v800
    %v867 = vpack.c.b16 %v803, %v801
    %v868 = vpack.c.b16 %v806, %v804
    %v869 = vpack.c.b16 %v807, %v805
    %v870 = vpack.c.b16 %v810, %v808
    %v871 = vpack.c.b16 %v811, %v809
    %v872 = vpack.c.b16 %v814, %v812
    %v873 = vpack.c.b16 %v815, %v813
    %v874 = vpack.c.b16 %v818, %v816
    %v875 = vpack.c.b16 %v819, %v817
    %v876 = vpack.c.b16 %v822, %v820
    %v877 = vpack.c.b16 %v823, %v821
    %v878 = vpack.c.b16 %v826, %v824
    %v879 = vpack.c.b16 %v827, %v825
    %v880 = vpack.c.b16 %v830, %v828
    %v881 = vpack.c.b16 %v831, %v829
    %v882 = vpack.c.b16 %v834, %v832
    %v883 = vpack.c.b16 %v835, %v833
    %932 = vmatpush.bf16.msra.mxu0 %v850
    %933 = vmatpush.bf16.msra.mxu0 %v848
    %934 = vmatpush.bf16.msra.mxu0 %v846
    %935 = vmatpush.bf16.msra.mxu0 %v844
    %936 = vmatpush.bf16.msra.mxu0 %v842
    %937 = vmatpush.bf16.msra.mxu0 %v840
    %938 = vmatpush.bf16.msra.mxu0 %v838
    %939 = vmatpush.bf16.msra.mxu0 %v836
    %940 = vmatmul.bf16.gmra.mxu0 %v610
    %v941 = vpop.f32.mrf.mxu0
    %v942 = vadd.f32 %v688, %v941
    %v943 = vpop.f32.mrf.mxu0
    %v944 = vadd.f32 %v688, %v943
    %945 = vmatmul.bf16.gmra.mxu0 %v611
    %v946 = vpop.f32.mrf.mxu0
    %v947 = vadd.f32 %v688, %v946
    %v948 = vpop.f32.mrf.mxu0
    %v949 = vadd.f32 %v688, %v948
    %950 = vdwg.mxu0
    %951 = vmatpush.bf16.msra.mxu0 %v866
    %952 = vmatpush.bf16.msra.mxu0 %v864
    %953 = vmatpush.bf16.msra.mxu0 %v862
    %954 = vmatpush.bf16.msra.mxu0 %v860
    %955 = vmatpush.bf16.msra.mxu0 %v858
    %956 = vmatpush.bf16.msra.mxu0 %v856
    %957 = vmatpush.bf16.msra.mxu0 %v854
    %958 = vmatpush.bf16.msra.mxu0 %v852
    %959 = vmatmul.bf16.gmra.mxu0 %v621
    %v960 = vpop.f32.mrf.mxu0
    %v961 = vadd.f32 %v942, %v960
    %v962 = vpop.f32.mrf.mxu0
    %v963 = vadd.f32 %v944, %v962
    %964 = vmatmul.bf16.gmra.mxu0 %v629
    %v965 = vpop.f32.mrf.mxu0
    %v966 = vadd.f32 %v947, %v965
    %v967 = vpop.f32.mrf.mxu0
    %v968 = vadd.f32 %v949, %v967
    %969 = vdwg.mxu0
    %970 = vmatpush.bf16.msra.mxu0 %v882
    %971 = vmatpush.bf16.msra.mxu0 %v880
    %972 = vmatpush.bf16.msra.mxu0 %v878
    %973 = vmatpush.bf16.msra.mxu0 %v876
    %974 = vmatpush.bf16.msra.mxu0 %v874
    %975 = vmatpush.bf16.msra.mxu0 %v872
    %976 = vmatpush.bf16.msra.mxu0 %v870
    %977 = vmatpush.bf16.msra.mxu0 %v868
    %978 = vmatmul.bf16.gmra.mxu0 %v633
    %v979 = vpop.f32.mrf.mxu0
    %v980 = vadd.f32 %v961, %v979
    %v981 = vpop.f32.mrf.mxu0
    %v982 = vadd.f32 %v963, %v981
    %983 = vmatmul.bf16.gmra.mxu0 %v635
    %v984 = vpop.f32.mrf.mxu0
    %v985 = vadd.f32 %v966, %v984
    %v986 = vpop.f32.mrf.mxu0
    %v987 = vadd.f32 %v968, %v986
    %988 = vdwg.mxu0
    %989 = vmatpush.bf16.msra.mxu0 %v851
    %990 = vmatpush.bf16.msra.mxu0 %v849
    %991 = vmatpush.bf16.msra.mxu0 %v847
    %992 = vmatpush.bf16.msra.mxu0 %v845
    %993 = vmatpush.bf16.msra.mxu0 %v843
    %994 = vmatpush.bf16.msra.mxu0 %v841
    %995 = vmatpush.bf16.msra.mxu0 %v839
    %996 = vmatpush.bf16.msra.mxu0 %v837
    %997 = vmatmul.bf16.gmra.mxu0 %v610
    %v998 = vpop.f32.mrf.mxu0
    %v999 = vadd.f32 %v689, %v998
    %v1000 = vpop.f32.mrf.mxu0
    %v1001 = vadd.f32 %v689, %v1000
    %1002 = vmatmul.bf16.gmra.mxu0 %v611
    %v1003 = vpop.f32.mrf.mxu0
    %v1004 = vadd.f32 %v689, %v1003
    %v1005 = vpop.f32.mrf.mxu0
    %v1006 = vadd.f32 %v689, %v1005
    %1007 = vdwg.mxu0
    %1008 = vmatpush.bf16.msra.mxu0 %v867
    %1009 = vmatpush.bf16.msra.mxu0 %v865
    %1010 = vmatpush.bf16.msra.mxu0 %v863
    %1011 = vmatpush.bf16.msra.mxu0 %v861
    %1012 = vmatpush.bf16.msra.mxu0 %v859
    %1013 = vmatpush.bf16.msra.mxu0 %v857
    %1014 = vmatpush.bf16.msra.mxu0 %v855
    %1015 = vmatpush.bf16.msra.mxu0 %v853
    %1016 = vmatmul.bf16.gmra.mxu0 %v621
    %v1017 = vpop.f32.mrf.mxu0
    %v1018 = vadd.f32 %v999, %v1017
    %v1019 = vpop.f32.mrf.mxu0
    %v1020 = vadd.f32 %v1001, %v1019
    %1021 = vmatmul.bf16.gmra.mxu0 %v629
    %v1022 = vpop.f32.mrf.mxu0
    %v1023 = vadd.f32 %v1004, %v1022
    %v1024 = vpop.f32.mrf.mxu0
    %v1025 = vadd.f32 %v1006, %v1024
    %1026 = vdwg.mxu0
    %1027 = vmatpush.bf16.msra.mxu0 %v883
    %1028 = vmatpush.bf16.msra.mxu0 %v881
    %1029 = vmatpush.bf16.msra.mxu0 %v879
    %1030 = vmatpush.bf16.msra.mxu0 %v877
    %1031 = vmatpush.bf16.msra.mxu0 %v875
    %1032 = vmatpush.bf16.msra.mxu0 %v873
    %1033 = vmatpush.bf16.msra.mxu0 %v871
    %1034 = vmatpush.bf16.msra.mxu0 %v869
    %1035 = vmatmul.bf16.gmra.mxu0 %v633
    %v1036 = vpop.f32.mrf.mxu0
    %v1037 = vadd.f32 %v1018, %v1036
    %v1038 = vpop.f32.mrf.mxu0
    %v1039 = vadd.f32 %v1020, %v1038
    %1040 = vmatmul.bf16.gmra.mxu0 %v635
    %v1041 = vpop.f32.mrf.mxu0
    %v1042 = vadd.f32 %v1023, %v1041
    %v1043 = vpop.f32.mrf.mxu0
    %v1044 = vadd.f32 %v1025, %v1043
    %1045 = vdwg.mxu0
    %v1046 = vmax.f32 %v980, 0.0
    %v1047 = vmax.f32 %v1037, 0.0
    %v1048 = vmax.f32 %v982, 0.0
    %v1049 = vmax.f32 %v1039, 0.0
    %v1050 = vmax.f32 %v985, 0.0
    %v1051 = vmax.f32 %v1042, 0.0
    %v1052 = vmax.f32 %v987, 0.0
    %v1053 = vmax.f32 %v1044, 0.0
    %v1054 = vpack.c.bf16 %v1047, %v1046
    %v1055 = vpack.c.bf16 %v1049, %v1048
    %v1056 = vpack.c.bf16 %v1051, %v1050
    %v1057 = vpack.c.bf16 %v1053, %v1052
    %v1062 = vunpack.c.l.b16 %v1054
    %v1063 = vunpack.c.h.b16 %v1054
    %v1064 = vunpack.c.l.b16 %v1055
    %v1065 = vunpack.c.h.b16 %v1055
    %v1066 = vunpack.c.l.b16 %v1056
    %v1067 = vunpack.c.h.b16 %v1056
    %v1068 = vunpack.c.l.b16 %v1057
    %v1069 = vunpack.c.h.b16 %v1057
    %v1070 = vpack.c.b16 %v1064, %v1062
    %v1071 = vpack.c.b16 %v1065, %v1063
    %v1072 = vpack.c.b16 %v1068, %v1066
    %v1073 = vpack.c.b16 %v1069, %v1067
    %v1079 = vshrl.u32 %v1070, 16
    %v1081 = vshll.u32 %v1070, 16
    %v1083 = vrot.slane %v1081, 1
    %v1084 = vor.u32 %v1079, %v1083
    %v1085 = vsel %vm309, %v1084, %v320
    %v1087 = vshrl.u32 %v1071, 16
    %v1089 = vshll.u32 %v1071, 16
    %v1091 = vrot.slane %v1089, 1
    %v1092 = vor.u32 %v1087, %v1091
    %v1093 = vsel %vm309, %v1092, %v320
    %v1095 = vshrl.u32 %v1072, 16
    %v1097 = vshll.u32 %v1072, 16
    %v1099 = vrot.slane %v1097, 1
    %v1100 = vor.u32 %v1095, %v1099
    %v1101 = vsel %vm309, %v1100, %v320
    %v1103 = vshrl.u32 %v1073, 16
    %v1105 = vshll.u32 %v1073, 16
    %v1107 = vrot.slane %v1105, 1
    %v1108 = vor.u32 %v1103, %v1107
    %v1109 = vsel %vm309, %v1108, %v320
    %v1114 = vrot.slane %v1070, 1
    %v1115 = vsel %vm333, %v1114, %v335
    %v1116 = vrot.slane %v1071, 1
    %v1117 = vsel %vm333, %v1116, %v335
    %v1118 = vrot.slane %v1072, 1
    %v1119 = vsel %vm333, %v1118, %v335
    %v1120 = vrot.slane %v1073, 1
    %v1121 = vsel %vm333, %v1120, %v335
    %v1126 = vld [vmem:[#allocation13] sm:$0xff]
    %v1127 = vld [vmem:[#allocation13 + $0x8] sm:$0xff]
    %v1128 = vld [vmem:[#allocation13 + $0x10] sm:$0xff]
    %v1129 = vld [vmem:[#allocation13 + $0x18] sm:$0xff]
    %v1130 = vld [vmem:[#allocation13 + $0x20] sm:$0xff]
    %v1131 = vld [vmem:[#allocation13 + $0x28] sm:$0xff]
    %v1132 = vld [vmem:[#allocation13 + $0x30] sm:$0xff]
    %v1133 = vld [vmem:[#allocation13 + $0x38] sm:$0xff]
    %v1134 = vld [vmem:[#allocation13 + $0x40] sm:$0xff]
    %v1135 = vld [vmem:[#allocation13 + $0x48] sm:$0xff]
    %v1136 = vld [vmem:[#allocation13 + $0x50] sm:$0xff]
    %v1137 = vld [vmem:[#allocation13 + $0x58] sm:$0xff]
    %v1138 = vld [vmem:[#allocation13 + $0x60] sm:$0xff]
    %v1139 = vld [vmem:[#allocation13 + $0x68] sm:$0xff]
    %v1140 = vld [vmem:[#allocation13 + $0x70] sm:$0xff]
    %v1141 = vld [vmem:[#allocation13 + $0x78] sm:$0xff]
    %v1142 = vld [vmem:[#allocation13 + $0x80] sm:$0xff]
    %v1143 = vld [vmem:[#allocation13 + $0x88] sm:$0xff]
    %v1144 = vld [vmem:[#allocation13 + $0x90] sm:$0xff]
    %v1145 = vld [vmem:[#allocation13 + $0x98] sm:$0xff]
    %v1146 = vld [vmem:[#allocation13 + $0xa0] sm:$0xff]
    %v1147 = vld [vmem:[#allocation13 + $0xa8] sm:$0xff]
    %v1148 = vld [vmem:[#allocation13 + $0xb0] sm:$0xff]
    %v1149 = vld [vmem:[#allocation13 + $0xb8] sm:$0xff]
    %v1150 = vld [vmem:[#allocation13 + $0xc0] sm:$0xff]
    %v1151 = vld [vmem:[#allocation13 + $0xc8] sm:$0xff]
    %v1152 = vld [vmem:[#allocation13 + $0xd0] sm:$0xff]
    %v1153 = vld [vmem:[#allocation13 + $0xd8] sm:$0xff]
    %v1154 = vld [vmem:[#allocation13 + $0xe0] sm:$0xff]
    %v1155 = vld [vmem:[#allocation13 + $0xe8] sm:$0xff]
    %v1156 = vld [vmem:[#allocation13 + $0xf0] sm:$0xff]
    %v1157 = vld [vmem:[#allocation13 + $0xf8] sm:$0xff]
    %v1158 = vld [vmem:[#allocation13 + $0x100] sm:$0xff]
    %v1159 = vld [vmem:[#allocation13 + $0x108] sm:$0xff]
    %v1160 = vld [vmem:[#allocation13 + $0x110] sm:$0xff]
    %v1161 = vld [vmem:[#allocation13 + $0x118] sm:$0xff]
    %v1162 = vld [vmem:[#allocation13 + $0x120] sm:$0xff]
    %v1163 = vld [vmem:[#allocation13 + $0x128] sm:$0xff]
    %v1164 = vld [vmem:[#allocation13 + $0x130] sm:$0xff]
    %v1165 = vld [vmem:[#allocation13 + $0x138] sm:$0xff]
    %v1166 = vld [vmem:[#allocation13 + $0x140] sm:$0xff]
    %v1167 = vld [vmem:[#allocation13 + $0x148] sm:$0xff]
    %v1168 = vld [vmem:[#allocation13 + $0x150] sm:$0xff]
    %v1169 = vld [vmem:[#allocation13 + $0x158] sm:$0xff]
    %v1170 = vld [vmem:[#allocation13 + $0x160] sm:$0xff]
    %v1171 = vld [vmem:[#allocation13 + $0x168] sm:$0xff]
    %v1172 = vld [vmem:[#allocation13 + $0x170] sm:$0xff]
    %v1173 = vld [vmem:[#allocation13 + $0x178] sm:$0xff]
    %v1174 = vld [vmem:[#allocation13 + $0x180] sm:$0xff]
    %v1175 = vld [vmem:[#allocation13 + $0x188] sm:$0xff]
    %v1176 = vld [vmem:[#allocation13 + $0x190] sm:$0xff]
    %v1177 = vld [vmem:[#allocation13 + $0x198] sm:$0xff]
    %v1178 = vld [vmem:[#allocation13 + $0x1a0] sm:$0xff]
    %v1179 = vld [vmem:[#allocation13 + $0x1a8] sm:$0xff]
    %v1180 = vld [vmem:[#allocation13 + $0x1b0] sm:$0xff]
    %v1181 = vld [vmem:[#allocation13 + $0x1b8] sm:$0xff]
    %v1182 = vld [vmem:[#allocation13 + $0x1c0] sm:$0xff]
    %v1183 = vld [vmem:[#allocation13 + $0x1c8] sm:$0xff]
    %v1184 = vld [vmem:[#allocation13 + $0x1d0] sm:$0xff]
    %v1185 = vld [vmem:[#allocation13 + $0x1d8] sm:$0xff]
    %v1186 = vld [vmem:[#allocation13 + $0x1e0] sm:$0xff]
    %v1187 = vld [vmem:[#allocation13 + $0x1e8] sm:$0xff]
    %v1188 = vld [vmem:[#allocation13 + $0x1f0] sm:$0xff]
    %v1189 = vld [vmem:[#allocation13 + $0x1f8] sm:$0xff]
    %v1190 = vld [vmem:[#allocation13 + $0x200] sm:$0xff]
    %v1191 = vld [vmem:[#allocation13 + $0x208] sm:$0xff]
    %v1192 = vld [vmem:[#allocation13 + $0x210] sm:$0xff]
    %v1193 = vld [vmem:[#allocation13 + $0x218] sm:$0xff]
    %v1194 = vld [vmem:[#allocation13 + $0x220] sm:$0xff]
    %v1195 = vld [vmem:[#allocation13 + $0x228] sm:$0xff]
    %v1196 = vld [vmem:[#allocation13 + $0x230] sm:$0xff]
    %v1197 = vld [vmem:[#allocation13 + $0x238] sm:$0xff]
    %v1198 = vld [vmem:[#allocation13 + $0x240] sm:$0xff]
    %v1199 = vld [vmem:[#allocation13 + $0x248] sm:$0xff]
    %v1200 = vld [vmem:[#allocation13 + $0x250] sm:$0xff]
    %v1201 = vld [vmem:[#allocation13 + $0x258] sm:$0xff]
    %v1202 = vld [vmem:[#allocation13 + $0x260] sm:$0xff]
    %v1203 = vld [vmem:[#allocation13 + $0x268] sm:$0xff]
    %v1204 = vld [vmem:[#allocation13 + $0x270] sm:$0xff]
    %v1205 = vld [vmem:[#allocation13 + $0x278] sm:$0xff]
    %v1206 = vld [vmem:[#allocation13 + $0x280] sm:$0xff]
    %v1207 = vld [vmem:[#allocation13 + $0x288] sm:$0xff]
    %v1208 = vld [vmem:[#allocation13 + $0x290] sm:$0xff]
    %v1209 = vld [vmem:[#allocation13 + $0x298] sm:$0xff]
    %v1210 = vld [vmem:[#allocation13 + $0x2a0] sm:$0xff]
    %v1211 = vld [vmem:[#allocation13 + $0x2a8] sm:$0xff]
    %v1212 = vld [vmem:[#allocation13 + $0x2b0] sm:$0xff]
    %v1213 = vld [vmem:[#allocation13 + $0x2b8] sm:$0xff]
    %v1214 = vld [vmem:[#allocation13 + $0x2c0] sm:$0xff]
    %v1215 = vld [vmem:[#allocation13 + $0x2c8] sm:$0xff]
    %v1216 = vld [vmem:[#allocation13 + $0x2d0] sm:$0xff]
    %v1217 = vld [vmem:[#allocation13 + $0x2d8] sm:$0xff]
    %v1218 = vld [vmem:[#allocation13 + $0x2e0] sm:$0xff]
    %v1219 = vld [vmem:[#allocation13 + $0x2e8] sm:$0xff]
    %v1220 = vld [vmem:[#allocation13 + $0x2f0] sm:$0xff]
    %v1221 = vld [vmem:[#allocation13 + $0x2f8] sm:$0xff]
    %v1222 = vld [vmem:[#allocation13 + $0x300] sm:$0xff]
    %v1223 = vld [vmem:[#allocation13 + $0x308] sm:$0xff]
    %v1224 = vld [vmem:[#allocation13 + $0x310] sm:$0xff]
    %v1225 = vld [vmem:[#allocation13 + $0x318] sm:$0xff]
    %v1226 = vld [vmem:[#allocation13 + $0x320] sm:$0xff]
    %v1227 = vld [vmem:[#allocation13 + $0x328] sm:$0xff]
    %v1228 = vld [vmem:[#allocation13 + $0x330] sm:$0xff]
    %v1229 = vld [vmem:[#allocation13 + $0x338] sm:$0xff]
    %v1230 = vld [vmem:[#allocation13 + $0x340] sm:$0xff]
    %v1231 = vld [vmem:[#allocation13 + $0x348] sm:$0xff]
    %v1232 = vld [vmem:[#allocation13 + $0x350] sm:$0xff]
    %v1233 = vld [vmem:[#allocation13 + $0x358] sm:$0xff]
    %v1234 = vld [vmem:[#allocation13 + $0x360] sm:$0xff]
    %v1235 = vld [vmem:[#allocation13 + $0x368] sm:$0xff]
    %v1236 = vld [vmem:[#allocation13 + $0x370] sm:$0xff]
    %v1237 = vld [vmem:[#allocation13 + $0x378] sm:$0xff]
    %v1238 = vld [vmem:[#allocation13 + $0x380] sm:$0xff]
    %v1239 = vld [vmem:[#allocation13 + $0x388] sm:$0xff]
    %v1240 = vld [vmem:[#allocation13 + $0x390] sm:$0xff]
    %v1241 = vld [vmem:[#allocation13 + $0x398] sm:$0xff]
    %v1242 = vld [vmem:[#allocation13 + $0x3a0] sm:$0xff]
    %v1243 = vld [vmem:[#allocation13 + $0x3a8] sm:$0xff]
    %v1244 = vld [vmem:[#allocation13 + $0x3b0] sm:$0xff]
    %v1245 = vld [vmem:[#allocation13 + $0x3b8] sm:$0xff]
    %v1246 = vld [vmem:[#allocation13 + $0x3c0] sm:$0xff]
    %v1247 = vld [vmem:[#allocation13 + $0x3c8] sm:$0xff]
    %v1248 = vld [vmem:[#allocation13 + $0x3d0] sm:$0xff]
    %v1249 = vld [vmem:[#allocation13 + $0x3d8] sm:$0xff]
    %v1250 = vld [vmem:[#allocation13 + $0x3e0] sm:$0xff]
    %v1251 = vld [vmem:[#allocation13 + $0x3e8] sm:$0xff]
    %v1252 = vld [vmem:[#allocation13 + $0x3f0] sm:$0xff]
    %v1253 = vld [vmem:[#allocation13 + $0x3f8] sm:$0xff]
    %v1254 = vld [vmem:[#allocation13 + $0x400] sm:$0xff]
    %v1255 = vld [vmem:[#allocation13 + $0x408] sm:$0xff]
    %v1256 = vld [vmem:[#allocation13 + $0x410] sm:$0xff]
    %v1257 = vld [vmem:[#allocation13 + $0x418] sm:$0xff]
    %v1258 = vld [vmem:[#allocation13 + $0x420] sm:$0xff]
    %v1259 = vld [vmem:[#allocation13 + $0x428] sm:$0xff]
    %v1260 = vld [vmem:[#allocation13 + $0x430] sm:$0xff]
    %v1261 = vld [vmem:[#allocation13 + $0x438] sm:$0xff]
    %v1262 = vld [vmem:[#allocation13 + $0x440] sm:$0xff]
    %v1263 = vld [vmem:[#allocation13 + $0x448] sm:$0xff]
    %v1264 = vld [vmem:[#allocation13 + $0x450] sm:$0xff]
    %v1265 = vld [vmem:[#allocation13 + $0x458] sm:$0xff]
    %v1266 = vld [vmem:[#allocation13 + $0x460] sm:$0xff]
    %v1267 = vld [vmem:[#allocation13 + $0x468] sm:$0xff]
    %v1268 = vld [vmem:[#allocation13 + $0x470] sm:$0xff]
    %v1269 = vld [vmem:[#allocation13 + $0x478] sm:$0xff]
    %v1270 = vld [vmem:[#allocation13 + $0x480] sm:$0xff]
    %v1271 = vld [vmem:[#allocation13 + $0x488] sm:$0xff]
    %v1272 = vld [vmem:[#allocation13 + $0x490] sm:$0xff]
    %v1273 = vld [vmem:[#allocation13 + $0x498] sm:$0xff]
    %v1274 = vld [vmem:[#allocation13 + $0x4a0] sm:$0xff]
    %v1275 = vld [vmem:[#allocation13 + $0x4a8] sm:$0xff]
    %v1276 = vld [vmem:[#allocation13 + $0x4b0] sm:$0xff]
    %v1277 = vld [vmem:[#allocation13 + $0x4b8] sm:$0xff]
    %v1278 = vld [vmem:[#allocation13 + $0x4c0] sm:$0xff]
    %v1279 = vld [vmem:[#allocation13 + $0x4c8] sm:$0xff]
    %v1280 = vld [vmem:[#allocation13 + $0x4d0] sm:$0xff]
    %v1281 = vld [vmem:[#allocation13 + $0x4d8] sm:$0xff]
    %v1282 = vld [vmem:[#allocation13 + $0x4e0] sm:$0xff]
    %v1283 = vld [vmem:[#allocation13 + $0x4e8] sm:$0xff]
    %v1284 = vld [vmem:[#allocation13 + $0x4f0] sm:$0xff]
    %v1285 = vld [vmem:[#allocation13 + $0x4f8] sm:$0xff]
    %v1286 = vld [vmem:[#allocation13 + $0x500] sm:$0xff]
    %v1287 = vld [vmem:[#allocation13 + $0x508] sm:$0xff]
    %v1288 = vld [vmem:[#allocation13 + $0x510] sm:$0xff]
    %v1289 = vld [vmem:[#allocation13 + $0x518] sm:$0xff]
    %v1290 = vld [vmem:[#allocation13 + $0x520] sm:$0xff]
    %v1291 = vld [vmem:[#allocation13 + $0x528] sm:$0xff]
    %v1292 = vld [vmem:[#allocation13 + $0x530] sm:$0xff]
    %v1293 = vld [vmem:[#allocation13 + $0x538] sm:$0xff]
    %v1294 = vld [vmem:[#allocation13 + $0x540] sm:$0xff]
    %v1295 = vld [vmem:[#allocation13 + $0x548] sm:$0xff]
    %v1296 = vld [vmem:[#allocation13 + $0x550] sm:$0xff]
    %v1297 = vld [vmem:[#allocation13 + $0x558] sm:$0xff]
    %v1298 = vld [vmem:[#allocation13 + $0x560] sm:$0xff]
    %v1299 = vld [vmem:[#allocation13 + $0x568] sm:$0xff]
    %v1300 = vld [vmem:[#allocation13 + $0x570] sm:$0xff]
    %v1301 = vld [vmem:[#allocation13 + $0x578] sm:$0xff]
    %v1302 = vld [vmem:[#allocation13 + $0x580] sm:$0xff]
    %v1303 = vld [vmem:[#allocation13 + $0x588] sm:$0xff]
    %v1304 = vld [vmem:[#allocation13 + $0x590] sm:$0xff]
    %v1305 = vld [vmem:[#allocation13 + $0x598] sm:$0xff]
    %v1306 = vld [vmem:[#allocation13 + $0x5a0] sm:$0xff]
    %v1307 = vld [vmem:[#allocation13 + $0x5a8] sm:$0xff]
    %v1308 = vld [vmem:[#allocation13 + $0x5b0] sm:$0xff]
    %v1309 = vld [vmem:[#allocation13 + $0x5b8] sm:$0xff]
    %v1310 = vld [vmem:[#allocation13 + $0x5c0] sm:$0xff]
    %v1311 = vld [vmem:[#allocation13 + $0x5c8] sm:$0xff]
    %v1312 = vld [vmem:[#allocation13 + $0x5d0] sm:$0xff]
    %v1313 = vld [vmem:[#allocation13 + $0x5d8] sm:$0xff]
    %v1314 = vld [vmem:[#allocation13 + $0x5e0] sm:$0xff]
    %v1315 = vld [vmem:[#allocation13 + $0x5e8] sm:$0xff]
    %v1316 = vld [vmem:[#allocation13 + $0x5f0] sm:$0xff]
    %v1317 = vld [vmem:[#allocation13 + $0x5f8] sm:$0xff]
    %v1318 = vld [vmem:[#allocation14] sm:$0xf]
    %v1320 = vperm.slane %v1318, 0
    %v1321 = vperm.slane %v1318, 1
    %v1322 = vperm.slane %v1318, 2
    %v1323 = vperm.slane %v1318, 3
    %v1520 = vunpack.c.l.b16 %v1126
    %v1521 = vunpack.c.h.b16 %v1126
    %v1522 = vunpack.c.l.b16 %v1127
    %v1523 = vunpack.c.h.b16 %v1127
    %v1524 = vunpack.c.l.b16 %v1128
    %v1525 = vunpack.c.h.b16 %v1128
    %v1526 = vunpack.c.l.b16 %v1129
    %v1527 = vunpack.c.h.b16 %v1129
    %v1528 = vunpack.c.l.b16 %v1130
    %v1529 = vunpack.c.h.b16 %v1130
    %v1530 = vunpack.c.l.b16 %v1131
    %v1531 = vunpack.c.h.b16 %v1131
    %v1532 = vunpack.c.l.b16 %v1132
    %v1533 = vunpack.c.h.b16 %v1132
    %v1534 = vunpack.c.l.b16 %v1133
    %v1535 = vunpack.c.h.b16 %v1133
    %v1536 = vunpack.c.l.b16 %v1134
    %v1537 = vunpack.c.h.b16 %v1134
    %v1538 = vunpack.c.l.b16 %v1135
    %v1539 = vunpack.c.h.b16 %v1135
    %v1540 = vunpack.c.l.b16 %v1136
    %v1541 = vunpack.c.h.b16 %v1136
    %v1542 = vunpack.c.l.b16 %v1137
    %v1543 = vunpack.c.h.b16 %v1137
    %v1544 = vunpack.c.l.b16 %v1138
    %v1545 = vunpack.c.h.b16 %v1138
    %v1546 = vunpack.c.l.b16 %v1139
    %v1547 = vunpack.c.h.b16 %v1139
    %v1548 = vunpack.c.l.b16 %v1140
    %v1549 = vunpack.c.h.b16 %v1140
    %v1550 = vunpack.c.l.b16 %v1141
    %v1551 = vunpack.c.h.b16 %v1141
    %v1552 = vunpack.c.l.b16 %v1142
    %v1553 = vunpack.c.h.b16 %v1142
    %v1554 = vunpack.c.l.b16 %v1143
    %v1555 = vunpack.c.h.b16 %v1143
    %v1556 = vunpack.c.l.b16 %v1144
    %v1557 = vunpack.c.h.b16 %v1144
    %v1558 = vunpack.c.l.b16 %v1145
    %v1559 = vunpack.c.h.b16 %v1145
    %v1560 = vunpack.c.l.b16 %v1146
    %v1561 = vunpack.c.h.b16 %v1146
    %v1562 = vunpack.c.l.b16 %v1147
    %v1563 = vunpack.c.h.b16 %v1147
    %v1564 = vunpack.c.l.b16 %v1148
    %v1565 = vunpack.c.h.b16 %v1148
    %v1566 = vunpack.c.l.b16 %v1149
    %v1567 = vunpack.c.h.b16 %v1149
    %v1568 = vunpack.c.l.b16 %v1150
    %v1569 = vunpack.c.h.b16 %v1150
    %v1570 = vunpack.c.l.b16 %v1151
    %v1571 = vunpack.c.h.b16 %v1151
    %v1572 = vunpack.c.l.b16 %v1152
    %v1573 = vunpack.c.h.b16 %v1152
    %v1574 = vunpack.c.l.b16 %v1153
    %v1575 = vunpack.c.h.b16 %v1153
    %v1576 = vunpack.c.l.b16 %v1154
    %v1577 = vunpack.c.h.b16 %v1154
    %v1578 = vunpack.c.l.b16 %v1155
    %v1579 = vunpack.c.h.b16 %v1155
    %v1580 = vunpack.c.l.b16 %v1156
    %v1581 = vunpack.c.h.b16 %v1156
    %v1582 = vunpack.c.l.b16 %v1157
    %v1583 = vunpack.c.h.b16 %v1157
    %v1584 = vunpack.c.l.b16 %v1158
    %v1585 = vunpack.c.h.b16 %v1158
    %v1586 = vunpack.c.l.b16 %v1159
    %v1587 = vunpack.c.h.b16 %v1159
    %v1588 = vunpack.c.l.b16 %v1160
    %v1589 = vunpack.c.h.b16 %v1160
    %v1590 = vunpack.c.l.b16 %v1161
    %v1591 = vunpack.c.h.b16 %v1161
    %v1592 = vunpack.c.l.b16 %v1162
    %v1593 = vunpack.c.h.b16 %v1162
    %v1594 = vunpack.c.l.b16 %v1163
    %v1595 = vunpack.c.h.b16 %v1163
    %v1596 = vunpack.c.l.b16 %v1164
    %v1597 = vunpack.c.h.b16 %v1164
    %v1598 = vunpack.c.l.b16 %v1165
    %v1599 = vunpack.c.h.b16 %v1165
    %v1600 = vunpack.c.l.b16 %v1166
    %v1601 = vunpack.c.h.b16 %v1166
    %v1602 = vunpack.c.l.b16 %v1167
    %v1603 = vunpack.c.h.b16 %v1167
    %v1604 = vunpack.c.l.b16 %v1168
    %v1605 = vunpack.c.h.b16 %v1168
    %v1606 = vunpack.c.l.b16 %v1169
    %v1607 = vunpack.c.h.b16 %v1169
    %v1608 = vunpack.c.l.b16 %v1170
    %v1609 = vunpack.c.h.b16 %v1170
    %v1610 = vunpack.c.l.b16 %v1171
    %v1611 = vunpack.c.h.b16 %v1171
    %v1612 = vunpack.c.l.b16 %v1172
    %v1613 = vunpack.c.h.b16 %v1172
    %v1614 = vunpack.c.l.b16 %v1173
    %v1615 = vunpack.c.h.b16 %v1173
    %v1616 = vunpack.c.l.b16 %v1174
    %v1617 = vunpack.c.h.b16 %v1174
    %v1618 = vunpack.c.l.b16 %v1175
    %v1619 = vunpack.c.h.b16 %v1175
    %v1620 = vunpack.c.l.b16 %v1176
    %v1621 = vunpack.c.h.b16 %v1176
    %v1622 = vunpack.c.l.b16 %v1177
    %v1623 = vunpack.c.h.b16 %v1177
    %v1624 = vunpack.c.l.b16 %v1178
    %v1625 = vunpack.c.h.b16 %v1178
    %v1626 = vunpack.c.l.b16 %v1179
    %v1627 = vunpack.c.h.b16 %v1179
    %v1628 = vunpack.c.l.b16 %v1180
    %v1629 = vunpack.c.h.b16 %v1180
    %v1630 = vunpack.c.l.b16 %v1181
    %v1631 = vunpack.c.h.b16 %v1181
    %v1632 = vunpack.c.l.b16 %v1182
    %v1633 = vunpack.c.h.b16 %v1182
    %v1634 = vunpack.c.l.b16 %v1183
    %v1635 = vunpack.c.h.b16 %v1183
    %v1636 = vunpack.c.l.b16 %v1184
    %v1637 = vunpack.c.h.b16 %v1184
    %v1638 = vunpack.c.l.b16 %v1185
    %v1639 = vunpack.c.h.b16 %v1185
    %v1640 = vunpack.c.l.b16 %v1186
    %v1641 = vunpack.c.h.b16 %v1186
    %v1642 = vunpack.c.l.b16 %v1187
    %v1643 = vunpack.c.h.b16 %v1187
    %v1644 = vunpack.c.l.b16 %v1188
    %v1645 = vunpack.c.h.b16 %v1188
    %v1646 = vunpack.c.l.b16 %v1189
    %v1647 = vunpack.c.h.b16 %v1189
    %v1648 = vunpack.c.l.b16 %v1190
    %v1649 = vunpack.c.h.b16 %v1190
    %v1650 = vunpack.c.l.b16 %v1191
    %v1651 = vunpack.c.h.b16 %v1191
    %v1652 = vunpack.c.l.b16 %v1192
    %v1653 = vunpack.c.h.b16 %v1192
    %v1654 = vunpack.c.l.b16 %v1193
    %v1655 = vunpack.c.h.b16 %v1193
    %v1656 = vunpack.c.l.b16 %v1194
    %v1657 = vunpack.c.h.b16 %v1194
    %v1658 = vunpack.c.l.b16 %v1195
    %v1659 = vunpack.c.h.b16 %v1195
    %v1660 = vunpack.c.l.b16 %v1196
    %v1661 = vunpack.c.h.b16 %v1196
    %v1662 = vunpack.c.l.b16 %v1197
    %v1663 = vunpack.c.h.b16 %v1197
    %v1664 = vunpack.c.l.b16 %v1198
    %v1665 = vunpack.c.h.b16 %v1198
    %v1666 = vunpack.c.l.b16 %v1199
    %v1667 = vunpack.c.h.b16 %v1199
    %v1668 = vunpack.c.l.b16 %v1200
    %v1669 = vunpack.c.h.b16 %v1200
    %v1670 = vunpack.c.l.b16 %v1201
    %v1671 = vunpack.c.h.b16 %v1201
    %v1672 = vunpack.c.l.b16 %v1202
    %v1673 = vunpack.c.h.b16 %v1202
    %v1674 = vunpack.c.l.b16 %v1203
    %v1675 = vunpack.c.h.b16 %v1203
    %v1676 = vunpack.c.l.b16 %v1204
    %v1677 = vunpack.c.h.b16 %v1204
    %v1678 = vunpack.c.l.b16 %v1205
    %v1679 = vunpack.c.h.b16 %v1205
    %v1680 = vunpack.c.l.b16 %v1206
    %v1681 = vunpack.c.h.b16 %v1206
    %v1682 = vunpack.c.l.b16 %v1207
    %v1683 = vunpack.c.h.b16 %v1207
    %v1684 = vunpack.c.l.b16 %v1208
    %v1685 = vunpack.c.h.b16 %v1208
    %v1686 = vunpack.c.l.b16 %v1209
    %v1687 = vunpack.c.h.b16 %v1209
    %v1688 = vunpack.c.l.b16 %v1210
    %v1689 = vunpack.c.h.b16 %v1210
    %v1690 = vunpack.c.l.b16 %v1211
    %v1691 = vunpack.c.h.b16 %v1211
    %v1692 = vunpack.c.l.b16 %v1212
    %v1693 = vunpack.c.h.b16 %v1212
    %v1694 = vunpack.c.l.b16 %v1213
    %v1695 = vunpack.c.h.b16 %v1213
    %v1696 = vunpack.c.l.b16 %v1214
    %v1697 = vunpack.c.h.b16 %v1214
    %v1698 = vunpack.c.l.b16 %v1215
    %v1699 = vunpack.c.h.b16 %v1215
    %v1700 = vunpack.c.l.b16 %v1216
    %v1701 = vunpack.c.h.b16 %v1216
    %v1702 = vunpack.c.l.b16 %v1217
    %v1703 = vunpack.c.h.b16 %v1217
    %v1704 = vunpack.c.l.b16 %v1218
    %v1705 = vunpack.c.h.b16 %v1218
    %v1706 = vunpack.c.l.b16 %v1219
    %v1707 = vunpack.c.h.b16 %v1219
    %v1708 = vunpack.c.l.b16 %v1220
    %v1709 = vunpack.c.h.b16 %v1220
    %v1710 = vunpack.c.l.b16 %v1221
    %v1711 = vunpack.c.h.b16 %v1221
    %v1712 = vunpack.c.l.b16 %v1222
    %v1713 = vunpack.c.h.b16 %v1222
    %v1714 = vunpack.c.l.b16 %v1223
    %v1715 = vunpack.c.h.b16 %v1223
    %v1716 = vunpack.c.l.b16 %v1224
    %v1717 = vunpack.c.h.b16 %v1224
    %v1718 = vunpack.c.l.b16 %v1225
    %v1719 = vunpack.c.h.b16 %v1225
    %v1720 = vunpack.c.l.b16 %v1226
    %v1721 = vunpack.c.h.b16 %v1226
    %v1722 = vunpack.c.l.b16 %v1227
    %v1723 = vunpack.c.h.b16 %v1227
    %v1724 = vunpack.c.l.b16 %v1228
    %v1725 = vunpack.c.h.b16 %v1228
    %v1726 = vunpack.c.l.b16 %v1229
    %v1727 = vunpack.c.h.b16 %v1229
    %v1728 = vunpack.c.l.b16 %v1230
    %v1729 = vunpack.c.h.b16 %v1230
    %v1730 = vunpack.c.l.b16 %v1231
    %v1731 = vunpack.c.h.b16 %v1231
    %v1732 = vunpack.c.l.b16 %v1232
    %v1733 = vunpack.c.h.b16 %v1232
    %v1734 = vunpack.c.l.b16 %v1233
    %v1735 = vunpack.c.h.b16 %v1233
    %v1736 = vunpack.c.l.b16 %v1234
    %v1737 = vunpack.c.h.b16 %v1234
    %v1738 = vunpack.c.l.b16 %v1235
    %v1739 = vunpack.c.h.b16 %v1235
    %v1740 = vunpack.c.l.b16 %v1236
    %v1741 = vunpack.c.h.b16 %v1236
    %v1742 = vunpack.c.l.b16 %v1237
    %v1743 = vunpack.c.h.b16 %v1237
    %v1744 = vunpack.c.l.b16 %v1238
    %v1745 = vunpack.c.h.b16 %v1238
    %v1746 = vunpack.c.l.b16 %v1239
    %v1747 = vunpack.c.h.b16 %v1239
    %v1748 = vunpack.c.l.b16 %v1240
    %v1749 = vunpack.c.h.b16 %v1240
    %v1750 = vunpack.c.l.b16 %v1241
    %v1751 = vunpack.c.h.b16 %v1241
    %v1752 = vunpack.c.l.b16 %v1242
    %v1753 = vunpack.c.h.b16 %v1242
    %v1754 = vunpack.c.l.b16 %v1243
    %v1755 = vunpack.c.h.b16 %v1243
    %v1756 = vunpack.c.l.b16 %v1244
    %v1757 = vunpack.c.h.b16 %v1244
    %v1758 = vunpack.c.l.b16 %v1245
    %v1759 = vunpack.c.h.b16 %v1245
    %v1760 = vunpack.c.l.b16 %v1246
    %v1761 = vunpack.c.h.b16 %v1246
    %v1762 = vunpack.c.l.b16 %v1247
    %v1763 = vunpack.c.h.b16 %v1247
    %v1764 = vunpack.c.l.b16 %v1248
    %v1765 = vunpack.c.h.b16 %v1248
    %v1766 = vunpack.c.l.b16 %v1249
    %v1767 = vunpack.c.h.b16 %v1249
    %v1768 = vunpack.c.l.b16 %v1250
    %v1769 = vunpack.c.h.b16 %v1250
    %v1770 = vunpack.c.l.b16 %v1251
    %v1771 = vunpack.c.h.b16 %v1251
    %v1772 = vunpack.c.l.b16 %v1252
    %v1773 = vunpack.c.h.b16 %v1252
    %v1774 = vunpack.c.l.b16 %v1253
    %v1775 = vunpack.c.h.b16 %v1253
    %v1776 = vunpack.c.l.b16 %v1254
    %v1777 = vunpack.c.h.b16 %v1254
    %v1778 = vunpack.c.l.b16 %v1255
    %v1779 = vunpack.c.h.b16 %v1255
    %v1780 = vunpack.c.l.b16 %v1256
    %v1781 = vunpack.c.h.b16 %v1256
    %v1782 = vunpack.c.l.b16 %v1257
    %v1783 = vunpack.c.h.b16 %v1257
    %v1784 = vunpack.c.l.b16 %v1258
    %v1785 = vunpack.c.h.b16 %v1258
    %v1786 = vunpack.c.l.b16 %v1259
    %v1787 = vunpack.c.h.b16 %v1259
    %v1788 = vunpack.c.l.b16 %v1260
    %v1789 = vunpack.c.h.b16 %v1260
    %v1790 = vunpack.c.l.b16 %v1261
    %v1791 = vunpack.c.h.b16 %v1261
    %v1792 = vunpack.c.l.b16 %v1262
    %v1793 = vunpack.c.h.b16 %v1262
    %v1794 = vunpack.c.l.b16 %v1263
    %v1795 = vunpack.c.h.b16 %v1263
    %v1796 = vunpack.c.l.b16 %v1264
    %v1797 = vunpack.c.h.b16 %v1264
    %v1798 = vunpack.c.l.b16 %v1265
    %v1799 = vunpack.c.h.b16 %v1265
    %v1800 = vunpack.c.l.b16 %v1266
    %v1801 = vunpack.c.h.b16 %v1266
    %v1802 = vunpack.c.l.b16 %v1267
    %v1803 = vunpack.c.h.b16 %v1267
    %v1804 = vunpack.c.l.b16 %v1268
    %v1805 = vunpack.c.h.b16 %v1268
    %v1806 = vunpack.c.l.b16 %v1269
    %v1807 = vunpack.c.h.b16 %v1269
    %v1808 = vunpack.c.l.b16 %v1270
    %v1809 = vunpack.c.h.b16 %v1270
    %v1810 = vunpack.c.l.b16 %v1271
    %v1811 = vunpack.c.h.b16 %v1271
    %v1812 = vunpack.c.l.b16 %v1272
    %v1813 = vunpack.c.h.b16 %v1272
    %v1814 = vunpack.c.l.b16 %v1273
    %v1815 = vunpack.c.h.b16 %v1273
    %v1816 = vunpack.c.l.b16 %v1274
    %v1817 = vunpack.c.h.b16 %v1274
    %v1818 = vunpack.c.l.b16 %v1275
    %v1819 = vunpack.c.h.b16 %v1275
    %v1820 = vunpack.c.l.b16 %v1276
    %v1821 = vunpack.c.h.b16 %v1276
    %v1822 = vunpack.c.l.b16 %v1277
    %v1823 = vunpack.c.h.b16 %v1277
    %v1824 = vunpack.c.l.b16 %v1278
    %v1825 = vunpack.c.h.b16 %v1278
    %v1826 = vunpack.c.l.b16 %v1279
    %v1827 = vunpack.c.h.b16 %v1279
    %v1828 = vunpack.c.l.b16 %v1280
    %v1829 = vunpack.c.h.b16 %v1280
    %v1830 = vunpack.c.l.b16 %v1281
    %v1831 = vunpack.c.h.b16 %v1281
    %v1832 = vunpack.c.l.b16 %v1282
    %v1833 = vunpack.c.h.b16 %v1282
    %v1834 = vunpack.c.l.b16 %v1283
    %v1835 = vunpack.c.h.b16 %v1283
    %v1836 = vunpack.c.l.b16 %v1284
    %v1837 = vunpack.c.h.b16 %v1284
    %v1838 = vunpack.c.l.b16 %v1285
    %v1839 = vunpack.c.h.b16 %v1285
    %v1840 = vunpack.c.l.b16 %v1286
    %v1841 = vunpack.c.h.b16 %v1286
    %v1842 = vunpack.c.l.b16 %v1287
    %v1843 = vunpack.c.h.b16 %v1287
    %v1844 = vunpack.c.l.b16 %v1288
    %v1845 = vunpack.c.h.b16 %v1288
    %v1846 = vunpack.c.l.b16 %v1289
    %v1847 = vunpack.c.h.b16 %v1289
    %v1848 = vunpack.c.l.b16 %v1290
    %v1849 = vunpack.c.h.b16 %v1290
    %v1850 = vunpack.c.l.b16 %v1291
    %v1851 = vunpack.c.h.b16 %v1291
    %v1852 = vunpack.c.l.b16 %v1292
    %v1853 = vunpack.c.h.b16 %v1292
    %v1854 = vunpack.c.l.b16 %v1293
    %v1855 = vunpack.c.h.b16 %v1293
    %v1856 = vunpack.c.l.b16 %v1294
    %v1857 = vunpack.c.h.b16 %v1294
    %v1858 = vunpack.c.l.b16 %v1295
    %v1859 = vunpack.c.h.b16 %v1295
    %v1860 = vunpack.c.l.b16 %v1296
    %v1861 = vunpack.c.h.b16 %v1296
    %v1862 = vunpack.c.l.b16 %v1297
    %v1863 = vunpack.c.h.b16 %v1297
    %v1864 = vunpack.c.l.b16 %v1298
    %v1865 = vunpack.c.h.b16 %v1298
    %v1866 = vunpack.c.l.b16 %v1299
    %v1867 = vunpack.c.h.b16 %v1299
    %v1868 = vunpack.c.l.b16 %v1300
    %v1869 = vunpack.c.h.b16 %v1300
    %v1870 = vunpack.c.l.b16 %v1301
    %v1871 = vunpack.c.h.b16 %v1301
    %v1872 = vunpack.c.l.b16 %v1302
    %v1873 = vunpack.c.h.b16 %v1302
    %v1874 = vunpack.c.l.b16 %v1303
    %v1875 = vunpack.c.h.b16 %v1303
    %v1876 = vunpack.c.l.b16 %v1304
    %v1877 = vunpack.c.h.b16 %v1304
    %v1878 = vunpack.c.l.b16 %v1305
    %v1879 = vunpack.c.h.b16 %v1305
    %v1880 = vunpack.c.l.b16 %v1306
    %v1881 = vunpack.c.h.b16 %v1306
    %v1882 = vunpack.c.l.b16 %v1307
    %v1883 = vunpack.c.h.b16 %v1307
    %v1884 = vunpack.c.l.b16 %v1308
    %v1885 = vunpack.c.h.b16 %v1308
    %v1886 = vunpack.c.l.b16 %v1309
    %v1887 = vunpack.c.h.b16 %v1309
    %v1888 = vunpack.c.l.b16 %v1310
    %v1889 = vunpack.c.h.b16 %v1310
    %v1890 = vunpack.c.l.b16 %v1311
    %v1891 = vunpack.c.h.b16 %v1311
    %v1892 = vunpack.c.l.b16 %v1312
    %v1893 = vunpack.c.h.b16 %v1312
    %v1894 = vunpack.c.l.b16 %v1313
    %v1895 = vunpack.c.h.b16 %v1313
    %v1896 = vunpack.c.l.b16 %v1314
    %v1897 = vunpack.c.h.b16 %v1314
    %v1898 = vunpack.c.l.b16 %v1315
    %v1899 = vunpack.c.h.b16 %v1315
    %v1900 = vunpack.c.l.b16 %v1316
    %v1901 = vunpack.c.h.b16 %v1316
    %v1902 = vunpack.c.l.b16 %v1317
    %v1903 = vunpack.c.h.b16 %v1317
    %v1904 = vpack.c.b16 %v1524, %v1520
    %v1905 = vpack.c.b16 %v1525, %v1521
    %v1906 = vpack.c.b16 %v1526, %v1522
    %v1907 = vpack.c.b16 %v1527, %v1523
    %v1908 = vpack.c.b16 %v1532, %v1528
    %v1909 = vpack.c.b16 %v1533, %v1529
    %v1910 = vpack.c.b16 %v1534, %v1530
    %v1911 = vpack.c.b16 %v1535, %v1531
    %v1912 = vpack.c.b16 %v1540, %v1536
    %v1913 = vpack.c.b16 %v1541, %v1537
    %v1914 = vpack.c.b16 %v1542, %v1538
    %v1915 = vpack.c.b16 %v1543, %v1539
    %v1916 = vpack.c.b16 %v1548, %v1544
    %v1917 = vpack.c.b16 %v1549, %v1545
    %v1918 = vpack.c.b16 %v1550, %v1546
    %v1919 = vpack.c.b16 %v1551, %v1547
    %v1920 = vpack.c.b16 %v1556, %v1552
    %v1921 = vpack.c.b16 %v1557, %v1553
    %v1922 = vpack.c.b16 %v1558, %v1554
    %v1923 = vpack.c.b16 %v1559, %v1555
    %v1924 = vpack.c.b16 %v1564, %v1560
    %v1925 = vpack.c.b16 %v1565, %v1561
    %v1926 = vpack.c.b16 %v1566, %v1562
    %v1927 = vpack.c.b16 %v1567, %v1563
    %v1928 = vpack.c.b16 %v1572, %v1568
    %v1929 = vpack.c.b16 %v1573, %v1569
    %v1930 = vpack.c.b16 %v1574, %v1570
    %v1931 = vpack.c.b16 %v1575, %v1571
    %v1932 = vpack.c.b16 %v1580, %v1576
    %v1933 = vpack.c.b16 %v1581, %v1577
    %v1934 = vpack.c.b16 %v1582, %v1578
    %v1935 = vpack.c.b16 %v1583, %v1579
    %v1936 = vpack.c.b16 %v1588, %v1584
    %v1937 = vpack.c.b16 %v1589, %v1585
    %v1938 = vpack.c.b16 %v1590, %v1586
    %v1939 = vpack.c.b16 %v1591, %v1587
    %v1940 = vpack.c.b16 %v1596, %v1592
    %v1941 = vpack.c.b16 %v1597, %v1593
    %v1942 = vpack.c.b16 %v1598, %v1594
    %v1943 = vpack.c.b16 %v1599, %v1595
    %v1944 = vpack.c.b16 %v1604, %v1600
    %v1945 = vpack.c.b16 %v1605, %v1601
    %v1946 = vpack.c.b16 %v1606, %v1602
    %v1947 = vpack.c.b16 %v1607, %v1603
    %v1948 = vpack.c.b16 %v1612, %v1608
    %v1949 = vpack.c.b16 %v1613, %v1609
    %v1950 = vpack.c.b16 %v1614, %v1610
    %v1951 = vpack.c.b16 %v1615, %v1611
    %v1952 = vpack.c.b16 %v1620, %v1616
    %v1953 = vpack.c.b16 %v1621, %v1617
    %v1954 = vpack.c.b16 %v1622, %v1618
    %v1955 = vpack.c.b16 %v1623, %v1619
    %v1956 = vpack.c.b16 %v1628, %v1624
    %v1957 = vpack.c.b16 %v1629, %v1625
    %v1958 = vpack.c.b16 %v1630, %v1626
    %v1959 = vpack.c.b16 %v1631, %v1627
    %v1960 = vpack.c.b16 %v1636, %v1632
    %v1961 = vpack.c.b16 %v1637, %v1633
    %v1962 = vpack.c.b16 %v1638, %v1634
    %v1963 = vpack.c.b16 %v1639, %v1635
    %v1964 = vpack.c.b16 %v1644, %v1640
    %v1965 = vpack.c.b16 %v1645, %v1641
    %v1966 = vpack.c.b16 %v1646, %v1642
    %v1967 = vpack.c.b16 %v1647, %v1643
    %v1968 = vpack.c.b16 %v1652, %v1648
    %v1969 = vpack.c.b16 %v1653, %v1649
    %v1970 = vpack.c.b16 %v1654, %v1650
    %v1971 = vpack.c.b16 %v1655, %v1651
    %v1972 = vpack.c.b16 %v1660, %v1656
    %v1973 = vpack.c.b16 %v1661, %v1657
    %v1974 = vpack.c.b16 %v1662, %v1658
    %v1975 = vpack.c.b16 %v1663, %v1659
    %v1976 = vpack.c.b16 %v1668, %v1664
    %v1977 = vpack.c.b16 %v1669, %v1665
    %v1978 = vpack.c.b16 %v1670, %v1666
    %v1979 = vpack.c.b16 %v1671, %v1667
    %v1980 = vpack.c.b16 %v1676, %v1672
    %v1981 = vpack.c.b16 %v1677, %v1673
    %v1982 = vpack.c.b16 %v1678, %v1674
    %v1983 = vpack.c.b16 %v1679, %v1675
    %v1984 = vpack.c.b16 %v1684, %v1680
    %v1985 = vpack.c.b16 %v1685, %v1681
    %v1986 = vpack.c.b16 %v1686, %v1682
    %v1987 = vpack.c.b16 %v1687, %v1683
    %v1988 = vpack.c.b16 %v1692, %v1688
    %v1989 = vpack.c.b16 %v1693, %v1689
    %v1990 = vpack.c.b16 %v1694, %v1690
    %v1991 = vpack.c.b16 %v1695, %v1691
    %v1992 = vpack.c.b16 %v1700, %v1696
    %v1993 = vpack.c.b16 %v1701, %v1697
    %v1994 = vpack.c.b16 %v1702, %v1698
    %v1995 = vpack.c.b16 %v1703, %v1699
    %v1996 = vpack.c.b16 %v1708, %v1704
    %v1997 = vpack.c.b16 %v1709, %v1705
    %v1998 = vpack.c.b16 %v1710, %v1706
    %v1999 = vpack.c.b16 %v1711, %v1707
    %v2000 = vpack.c.b16 %v1716, %v1712
    %v2001 = vpack.c.b16 %v1717, %v1713
    %v2002 = vpack.c.b16 %v1718, %v1714
    %v2003 = vpack.c.b16 %v1719, %v1715
    %v2004 = vpack.c.b16 %v1724, %v1720
    %v2005 = vpack.c.b16 %v1725, %v1721
    %v2006 = vpack.c.b16 %v1726, %v1722
    %v2007 = vpack.c.b16 %v1727, %v1723
    %v2008 = vpack.c.b16 %v1732, %v1728
    %v2009 = vpack.c.b16 %v1733, %v1729
    %v2010 = vpack.c.b16 %v1734, %v1730
    %v2011 = vpack.c.b16 %v1735, %v1731
    %v2012 = vpack.c.b16 %v1740, %v1736
    %v2013 = vpack.c.b16 %v1741, %v1737
    %v2014 = vpack.c.b16 %v1742, %v1738
    %v2015 = vpack.c.b16 %v1743, %v1739
    %v2016 = vpack.c.b16 %v1748, %v1744
    %v2017 = vpack.c.b16 %v1749, %v1745
    %v2018 = vpack.c.b16 %v1750, %v1746
    %v2019 = vpack.c.b16 %v1751, %v1747
    %v2020 = vpack.c.b16 %v1756, %v1752
    %v2021 = vpack.c.b16 %v1757, %v1753
    %v2022 = vpack.c.b16 %v1758, %v1754
    %v2023 = vpack.c.b16 %v1759, %v1755
    %v2024 = vpack.c.b16 %v1764, %v1760
    %v2025 = vpack.c.b16 %v1765, %v1761
    %v2026 = vpack.c.b16 %v1766, %v1762
    %v2027 = vpack.c.b16 %v1767, %v1763
    %v2028 = vpack.c.b16 %v1772, %v1768
    %v2029 = vpack.c.b16 %v1773, %v1769
    %v2030 = vpack.c.b16 %v1774, %v1770
    %v2031 = vpack.c.b16 %v1775, %v1771
    %v2032 = vpack.c.b16 %v1780, %v1776
    %v2033 = vpack.c.b16 %v1781, %v1777
    %v2034 = vpack.c.b16 %v1782, %v1778
    %v2035 = vpack.c.b16 %v1783, %v1779
    %v2036 = vpack.c.b16 %v1788, %v1784
    %v2037 = vpack.c.b16 %v1789, %v1785
    %v2038 = vpack.c.b16 %v1790, %v1786
    %v2039 = vpack.c.b16 %v1791, %v1787
    %v2040 = vpack.c.b16 %v1796, %v1792
    %v2041 = vpack.c.b16 %v1797, %v1793
    %v2042 = vpack.c.b16 %v1798, %v1794
    %v2043 = vpack.c.b16 %v1799, %v1795
    %v2044 = vpack.c.b16 %v1804, %v1800
    %v2045 = vpack.c.b16 %v1805, %v1801
    %v2046 = vpack.c.b16 %v1806, %v1802
    %v2047 = vpack.c.b16 %v1807, %v1803
    %v2048 = vpack.c.b16 %v1812, %v1808
    %v2049 = vpack.c.b16 %v1813, %v1809
    %v2050 = vpack.c.b16 %v1814, %v1810
    %v2051 = vpack.c.b16 %v1815, %v1811
    %v2052 = vpack.c.b16 %v1820, %v1816
    %v2053 = vpack.c.b16 %v1821, %v1817
    %v2054 = vpack.c.b16 %v1822, %v1818
    %v2055 = vpack.c.b16 %v1823, %v1819
    %v2056 = vpack.c.b16 %v1828, %v1824
    %v2057 = vpack.c.b16 %v1829, %v1825
    %v2058 = vpack.c.b16 %v1830, %v1826
    %v2059 = vpack.c.b16 %v1831, %v1827
    %v2060 = vpack.c.b16 %v1836, %v1832
    %v2061 = vpack.c.b16 %v1837, %v1833
    %v2062 = vpack.c.b16 %v1838, %v1834
    %v2063 = vpack.c.b16 %v1839, %v1835
    %v2064 = vpack.c.b16 %v1844, %v1840
    %v2065 = vpack.c.b16 %v1845, %v1841
    %v2066 = vpack.c.b16 %v1846, %v1842
    %v2067 = vpack.c.b16 %v1847, %v1843
    %v2068 = vpack.c.b16 %v1852, %v1848
    %v2069 = vpack.c.b16 %v1853, %v1849
    %v2070 = vpack.c.b16 %v1854, %v1850
    %v2071 = vpack.c.b16 %v1855, %v1851
    %v2072 = vpack.c.b16 %v1860, %v1856
    %v2073 = vpack.c.b16 %v1861, %v1857
    %v2074 = vpack.c.b16 %v1862, %v1858
    %v2075 = vpack.c.b16 %v1863, %v1859
    %v2076 = vpack.c.b16 %v1868, %v1864
    %v2077 = vpack.c.b16 %v1869, %v1865
    %v2078 = vpack.c.b16 %v1870, %v1866
    %v2079 = vpack.c.b16 %v1871, %v1867
    %v2080 = vpack.c.b16 %v1876, %v1872
    %v2081 = vpack.c.b16 %v1877, %v1873
    %v2082 = vpack.c.b16 %v1878, %v1874
    %v2083 = vpack.c.b16 %v1879, %v1875
    %v2084 = vpack.c.b16 %v1884, %v1880
    %v2085 = vpack.c.b16 %v1885, %v1881
    %v2086 = vpack.c.b16 %v1886, %v1882
    %v2087 = vpack.c.b16 %v1887, %v1883
    %v2088 = vpack.c.b16 %v1892, %v1888
    %v2089 = vpack.c.b16 %v1893, %v1889
    %v2090 = vpack.c.b16 %v1894, %v1890
    %v2091 = vpack.c.b16 %v1895, %v1891
    %v2092 = vpack.c.b16 %v1900, %v1896
    %v2093 = vpack.c.b16 %v1901, %v1897
    %v2094 = vpack.c.b16 %v1902, %v1898
    %v2095 = vpack.c.b16 %v1903, %v1899
    %2288 = vmatpush.bf16.msra.mxu0 %v1932
    %2289 = vmatpush.bf16.msra.mxu0 %v1928
    %2290 = vmatpush.bf16.msra.mxu0 %v1924
    %2291 = vmatpush.bf16.msra.mxu0 %v1920
    %2292 = vmatpush.bf16.msra.mxu0 %v1916
    %2293 = vmatpush.bf16.msra.mxu0 %v1912
    %2294 = vmatpush.bf16.msra.mxu0 %v1908
    %2295 = vmatpush.bf16.msra.mxu0 %v1904
    %2296 = vmatmul.bf16.gmra.mxu0 %v1070
    %v2297 = vpop.f32.mrf.mxu0
    %v2298 = vadd.f32 %v1320, %v2297
    %v2299 = vpop.f32.mrf.mxu0
    %v2300 = vadd.f32 %v1320, %v2299
    %2301 = vmatmul.bf16.gmra.mxu0 %v1072
    %v2302 = vpop.f32.mrf.mxu0
    %v2303 = vadd.f32 %v1320, %v2302
    %v2304 = vpop.f32.mrf.mxu0
    %v2305 = vadd.f32 %v1320, %v2304
    %2306 = vdwg.mxu0
    %2307 = vmatpush.bf16.msra.mxu0 %v1964
    %2308 = vmatpush.bf16.msra.mxu0 %v1960
    %2309 = vmatpush.bf16.msra.mxu0 %v1956
    %2310 = vmatpush.bf16.msra.mxu0 %v1952
    %2311 = vmatpush.bf16.msra.mxu0 %v1948
    %2312 = vmatpush.bf16.msra.mxu0 %v1944
    %2313 = vmatpush.bf16.msra.mxu0 %v1940
    %2314 = vmatpush.bf16.msra.mxu0 %v1936
    %2315 = vmatmul.bf16.gmra.mxu0 %v1071
    %v2316 = vpop.f32.mrf.mxu0
    %v2317 = vadd.f32 %v2298, %v2316
    %v2318 = vpop.f32.mrf.mxu0
    %v2319 = vadd.f32 %v2300, %v2318
    %2320 = vmatmul.bf16.gmra.mxu0 %v1073
    %v2321 = vpop.f32.mrf.mxu0
    %v2322 = vadd.f32 %v2303, %v2321
    %v2323 = vpop.f32.mrf.mxu0
    %v2324 = vadd.f32 %v2305, %v2323
    %2325 = vdwg.mxu0
    %2326 = vmatpush.bf16.msra.mxu0 %v1996
    %2327 = vmatpush.bf16.msra.mxu0 %v1992
    %2328 = vmatpush.bf16.msra.mxu0 %v1988
    %2329 = vmatpush.bf16.msra.mxu0 %v1984
    %2330 = vmatpush.bf16.msra.mxu0 %v1980
    %2331 = vmatpush.bf16.msra.mxu0 %v1976
    %2332 = vmatpush.bf16.msra.mxu0 %v1972
    %2333 = vmatpush.bf16.msra.mxu0 %v1968
    %2334 = vmatmul.bf16.gmra.mxu0 %v1085
    %v2335 = vpop.f32.mrf.mxu0
    %v2336 = vadd.f32 %v2317, %v2335
    %v2337 = vpop.f32.mrf.mxu0
    %v2338 = vadd.f32 %v2319, %v2337
    %2339 = vmatmul.bf16.gmra.mxu0 %v1101
    %v2340 = vpop.f32.mrf.mxu0
    %v2341 = vadd.f32 %v2322, %v2340
    %v2342 = vpop.f32.mrf.mxu0
    %v2343 = vadd.f32 %v2324, %v2342
    %2344 = vdwg.mxu0
    %2345 = vmatpush.bf16.msra.mxu0 %v2028
    %2346 = vmatpush.bf16.msra.mxu0 %v2024
    %2347 = vmatpush.bf16.msra.mxu0 %v2020
    %2348 = vmatpush.bf16.msra.mxu0 %v2016
    %2349 = vmatpush.bf16.msra.mxu0 %v2012
    %2350 = vmatpush.bf16.msra.mxu0 %v2008
    %2351 = vmatpush.bf16.msra.mxu0 %v2004
    %2352 = vmatpush.bf16.msra.mxu0 %v2000
    %2353 = vmatmul.bf16.gmra.mxu0 %v1093
    %v2354 = vpop.f32.mrf.mxu0
    %v2355 = vadd.f32 %v2336, %v2354
    %v2356 = vpop.f32.mrf.mxu0
    %v2357 = vadd.f32 %v2338, %v2356
    %2358 = vmatmul.bf16.gmra.mxu0 %v1109
    %v2359 = vpop.f32.mrf.mxu0
    %v2360 = vadd.f32 %v2341, %v2359
    %v2361 = vpop.f32.mrf.mxu0
    %v2362 = vadd.f32 %v2343, %v2361
    %2363 = vdwg.mxu0
    %2364 = vmatpush.bf16.msra.mxu0 %v2060
    %2365 = vmatpush.bf16.msra.mxu0 %v2056
    %2366 = vmatpush.bf16.msra.mxu0 %v2052
    %2367 = vmatpush.bf16.msra.mxu0 %v2048
    %2368 = vmatpush.bf16.msra.mxu0 %v2044
    %2369 = vmatpush.bf16.msra.mxu0 %v2040
    %2370 = vmatpush.bf16.msra.mxu0 %v2036
    %2371 = vmatpush.bf16.msra.mxu0 %v2032
    %2372 = vmatmul.bf16.gmra.mxu0 %v1115
    %v2373 = vpop.f32.mrf.mxu0
    %v2374 = vadd.f32 %v2355, %v2373
    %v2375 = vpop.f32.mrf.mxu0
    %v2376 = vadd.f32 %v2357, %v2375
    %2377 = vmatmul.bf16.gmra.mxu0 %v1119
    %v2378 = vpop.f32.mrf.mxu0
    %v2379 = vadd.f32 %v2360, %v2378
    %v2380 = vpop.f32.mrf.mxu0
    %v2381 = vadd.f32 %v2362, %v2380
    %2382 = vdwg.mxu0
    %2383 = vmatpush.bf16.msra.mxu0 %v2092
    %2384 = vmatpush.bf16.msra.mxu0 %v2088
    %2385 = vmatpush.bf16.msra.mxu0 %v2084
    %2386 = vmatpush.bf16.msra.mxu0 %v2080
    %2387 = vmatpush.bf16.msra.mxu0 %v2076
    %2388 = vmatpush.bf16.msra.mxu0 %v2072
    %2389 = vmatpush.bf16.msra.mxu0 %v2068
    %2390 = vmatpush.bf16.msra.mxu0 %v2064
    %2391 = vmatmul.bf16.gmra.mxu0 %v1117
    %v2392 = vpop.f32.mrf.mxu0
    %v2393 = vadd.f32 %v2374, %v2392
    %v2394 = vpop.f32.mrf.mxu0
    %v2395 = vadd.f32 %v2376, %v2394
    %2396 = vmatmul.bf16.gmra.mxu0 %v1121
    %v2397 = vpop.f32.mrf.mxu0
    %v2398 = vadd.f32 %v2379, %v2397
    %v2399 = vpop.f32.mrf.mxu0
    %v2400 = vadd.f32 %v2381, %v2399
    %2401 = vdwg.mxu0
    %2402 = vmatpush.bf16.msra.mxu0 %v1933
    %2403 = vmatpush.bf16.msra.mxu0 %v1929
    %2404 = vmatpush.bf16.msra.mxu0 %v1925
    %2405 = vmatpush.bf16.msra.mxu0 %v1921
    %2406 = vmatpush.bf16.msra.mxu0 %v1917
    %2407 = vmatpush.bf16.msra.mxu0 %v1913
    %2408 = vmatpush.bf16.msra.mxu0 %v1909
    %2409 = vmatpush.bf16.msra.mxu0 %v1905
    %2410 = vmatmul.bf16.gmra.mxu0 %v1070
    %v2411 = vpop.f32.mrf.mxu0
    %v2412 = vadd.f32 %v1321, %v2411
    %v2413 = vpop.f32.mrf.mxu0
    %v2414 = vadd.f32 %v1321, %v2413
    %2415 = vmatmul.bf16.gmra.mxu0 %v1072
    %v2416 = vpop.f32.mrf.mxu0
    %v2417 = vadd.f32 %v1321, %v2416
    %v2418 = vpop.f32.mrf.mxu0
    %v2419 = vadd.f32 %v1321, %v2418
    %2420 = vdwg.mxu0
    %2421 = vmatpush.bf16.msra.mxu0 %v1965
    %2422 = vmatpush.bf16.msra.mxu0 %v1961
    %2423 = vmatpush.bf16.msra.mxu0 %v1957
    %2424 = vmatpush.bf16.msra.mxu0 %v1953
    %2425 = vmatpush.bf16.msra.mxu0 %v1949
    %2426 = vmatpush.bf16.msra.mxu0 %v1945
    %2427 = vmatpush.bf16.msra.mxu0 %v1941
    %2428 = vmatpush.bf16.msra.mxu0 %v1937
    %2429 = vmatmul.bf16.gmra.mxu0 %v1071
    %v2430 = vpop.f32.mrf.mxu0
    %v2431 = vadd.f32 %v2412, %v2430
    %v2432 = vpop.f32.mrf.mxu0
    %v2433 = vadd.f32 %v2414, %v2432
    %2434 = vmatmul.bf16.gmra.mxu0 %v1073
    %v2435 = vpop.f32.mrf.mxu0
    %v2436 = vadd.f32 %v2417, %v2435
    %v2437 = vpop.f32.mrf.mxu0
    %v2438 = vadd.f32 %v2419, %v2437
    %2439 = vdwg.mxu0
    %2440 = vmatpush.bf16.msra.mxu0 %v1997
    %2441 = vmatpush.bf16.msra.mxu0 %v1993
    %2442 = vmatpush.bf16.msra.mxu0 %v1989
    %2443 = vmatpush.bf16.msra.mxu0 %v1985
    %2444 = vmatpush.bf16.msra.mxu0 %v1981
    %2445 = vmatpush.bf16.msra.mxu0 %v1977
    %2446 = vmatpush.bf16.msra.mxu0 %v1973
    %2447 = vmatpush.bf16.msra.mxu0 %v1969
    %2448 = vmatmul.bf16.gmra.mxu0 %v1085
    %v2449 = vpop.f32.mrf.mxu0
    %v2450 = vadd.f32 %v2431, %v2449
    %v2451 = vpop.f32.mrf.mxu0
    %v2452 = vadd.f32 %v2433, %v2451
    %2453 = vmatmul.bf16.gmra.mxu0 %v1101
    %v2454 = vpop.f32.mrf.mxu0
    %v2455 = vadd.f32 %v2436, %v2454
    %v2456 = vpop.f32.mrf.mxu0
    %v2457 = vadd.f32 %v2438, %v2456
    %2458 = vdwg.mxu0
    %2459 = vmatpush.bf16.msra.mxu0 %v2029
    %2460 = vmatpush.bf16.msra.mxu0 %v2025
    %2461 = vmatpush.bf16.msra.mxu0 %v2021
    %2462 = vmatpush.bf16.msra.mxu0 %v2017
    %2463 = vmatpush.bf16.msra.mxu0 %v2013
    %2464 = vmatpush.bf16.msra.mxu0 %v2009
    %2465 = vmatpush.bf16.msra.mxu0 %v2005
    %2466 = vmatpush.bf16.msra.mxu0 %v2001
    %2467 = vmatmul.bf16.gmra.mxu0 %v1093
    %v2468 = vpop.f32.mrf.mxu0
    %v2469 = vadd.f32 %v2450, %v2468
    %v2470 = vpop.f32.mrf.mxu0
    %v2471 = vadd.f32 %v2452, %v2470
    %2472 = vmatmul.bf16.gmra.mxu0 %v1109
    %v2473 = vpop.f32.mrf.mxu0
    %v2474 = vadd.f32 %v2455, %v2473
    %v2475 = vpop.f32.mrf.mxu0
    %v2476 = vadd.f32 %v2457, %v2475
    %2477 = vdwg.mxu0
    %2478 = vmatpush.bf16.msra.mxu0 %v2061
    %2479 = vmatpush.bf16.msra.mxu0 %v2057
    %2480 = vmatpush.bf16.msra.mxu0 %v2053
    %2481 = vmatpush.bf16.msra.mxu0 %v2049
    %2482 = vmatpush.bf16.msra.mxu0 %v2045
    %2483 = vmatpush.bf16.msra.mxu0 %v2041
    %2484 = vmatpush.bf16.msra.mxu0 %v2037
    %2485 = vmatpush.bf16.msra.mxu0 %v2033
    %2486 = vmatmul.bf16.gmra.mxu0 %v1115
    %v2487 = vpop.f32.mrf.mxu0
    %v2488 = vadd.f32 %v2469, %v2487
    %v2489 = vpop.f32.mrf.mxu0
    %v2490 = vadd.f32 %v2471, %v2489
    %2491 = vmatmul.bf16.gmra.mxu0 %v1119
    %v2492 = vpop.f32.mrf.mxu0
    %v2493 = vadd.f32 %v2474, %v2492
    %v2494 = vpop.f32.mrf.mxu0
    %v2495 = vadd.f32 %v2476, %v2494
    %2496 = vdwg.mxu0
    %2497 = vmatpush.bf16.msra.mxu0 %v2093
    %2498 = vmatpush.bf16.msra.mxu0 %v2089
    %2499 = vmatpush.bf16.msra.mxu0 %v2085
    %2500 = vmatpush.bf16.msra.mxu0 %v2081
    %2501 = vmatpush.bf16.msra.mxu0 %v2077
    %2502 = vmatpush.bf16.msra.mxu0 %v2073
    %2503 = vmatpush.bf16.msra.mxu0 %v2069
    %2504 = vmatpush.bf16.msra.mxu0 %v2065
    %2505 = vmatmul.bf16.gmra.mxu0 %v1117
    %v2506 = vpop.f32.mrf.mxu0
    %v2507 = vadd.f32 %v2488, %v2506
    %v2508 = vpop.f32.mrf.mxu0
    %v2509 = vadd.f32 %v2490, %v2508
    %2510 = vmatmul.bf16.gmra.mxu0 %v1121
    %v2511 = vpop.f32.mrf.mxu0
    %v2512 = vadd.f32 %v2493, %v2511
    %v2513 = vpop.f32.mrf.mxu0
    %v2514 = vadd.f32 %v2495, %v2513
    %2515 = vdwg.mxu0
    %2516 = vmatpush.bf16.msra.mxu0 %v1934
    %2517 = vmatpush.bf16.msra.mxu0 %v1930
    %2518 = vmatpush.bf16.msra.mxu0 %v1926
    %2519 = vmatpush.bf16.msra.mxu0 %v1922
    %2520 = vmatpush.bf16.msra.mxu0 %v1918
    %2521 = vmatpush.bf16.msra.mxu0 %v1914
    %2522 = vmatpush.bf16.msra.mxu0 %v1910
    %2523 = vmatpush.bf16.msra.mxu0 %v1906
    %2524 = vmatmul.bf16.gmra.mxu0 %v1070
    %v2525 = vpop.f32.mrf.mxu0
    %v2526 = vadd.f32 %v1322, %v2525
    %v2527 = vpop.f32.mrf.mxu0
    %v2528 = vadd.f32 %v1322, %v2527
    %2529 = vmatmul.bf16.gmra.mxu0 %v1072
    %v2530 = vpop.f32.mrf.mxu0
    %v2531 = vadd.f32 %v1322, %v2530
    %v2532 = vpop.f32.mrf.mxu0
    %v2533 = vadd.f32 %v1322, %v2532
    %2534 = vdwg.mxu0
    %2535 = vmatpush.bf16.msra.mxu0 %v1966
    %2536 = vmatpush.bf16.msra.mxu0 %v1962
    %2537 = vmatpush.bf16.msra.mxu0 %v1958
    %2538 = vmatpush.bf16.msra.mxu0 %v1954
    %2539 = vmatpush.bf16.msra.mxu0 %v1950
    %2540 = vmatpush.bf16.msra.mxu0 %v1946
    %2541 = vmatpush.bf16.msra.mxu0 %v1942
    %2542 = vmatpush.bf16.msra.mxu0 %v1938
    %2543 = vmatmul.bf16.gmra.mxu0 %v1071
    %v2544 = vpop.f32.mrf.mxu0
    %v2545 = vadd.f32 %v2526, %v2544
    %v2546 = vpop.f32.mrf.mxu0
    %v2547 = vadd.f32 %v2528, %v2546
    %2548 = vmatmul.bf16.gmra.mxu0 %v1073
    %v2549 = vpop.f32.mrf.mxu0
    %v2550 = vadd.f32 %v2531, %v2549
    %v2551 = vpop.f32.mrf.mxu0
    %v2552 = vadd.f32 %v2533, %v2551
    %2553 = vdwg.mxu0
    %2554 = vmatpush.bf16.msra.mxu0 %v1998
    %2555 = vmatpush.bf16.msra.mxu0 %v1994
    %2556 = vmatpush.bf16.msra.mxu0 %v1990
    %2557 = vmatpush.bf16.msra.mxu0 %v1986
    %2558 = vmatpush.bf16.msra.mxu0 %v1982
    %2559 = vmatpush.bf16.msra.mxu0 %v1978
    %2560 = vmatpush.bf16.msra.mxu0 %v1974
    %2561 = vmatpush.bf16.msra.mxu0 %v1970
    %2562 = vmatmul.bf16.gmra.mxu0 %v1085
    %v2563 = vpop.f32.mrf.mxu0
    %v2564 = vadd.f32 %v2545, %v2563
    %v2565 = vpop.f32.mrf.mxu0
    %v2566 = vadd.f32 %v2547, %v2565
    %2567 = vmatmul.bf16.gmra.mxu0 %v1101
    %v2568 = vpop.f32.mrf.mxu0
    %v2569 = vadd.f32 %v2550, %v2568
    %v2570 = vpop.f32.mrf.mxu0
    %v2571 = vadd.f32 %v2552, %v2570
    %2572 = vdwg.mxu0
    %2573 = vmatpush.bf16.msra.mxu0 %v2030
    %2574 = vmatpush.bf16.msra.mxu0 %v2026
    %2575 = vmatpush.bf16.msra.mxu0 %v2022
    %2576 = vmatpush.bf16.msra.mxu0 %v2018
    %2577 = vmatpush.bf16.msra.mxu0 %v2014
    %2578 = vmatpush.bf16.msra.mxu0 %v2010
    %2579 = vmatpush.bf16.msra.mxu0 %v2006
    %2580 = vmatpush.bf16.msra.mxu0 %v2002
    %2581 = vmatmul.bf16.gmra.mxu0 %v1093
    %v2582 = vpop.f32.mrf.mxu0
    %v2583 = vadd.f32 %v2564, %v2582
    %v2584 = vpop.f32.mrf.mxu0
    %v2585 = vadd.f32 %v2566, %v2584
    %2586 = vmatmul.bf16.gmra.mxu0 %v1109
    %v2587 = vpop.f32.mrf.mxu0
    %v2588 = vadd.f32 %v2569, %v2587
    %v2589 = vpop.f32.mrf.mxu0
    %v2590 = vadd.f32 %v2571, %v2589
    %2591 = vdwg.mxu0
    %2592 = vmatpush.bf16.msra.mxu0 %v2062
    %2593 = vmatpush.bf16.msra.mxu0 %v2058
    %2594 = vmatpush.bf16.msra.mxu0 %v2054
    %2595 = vmatpush.bf16.msra.mxu0 %v2050
    %2596 = vmatpush.bf16.msra.mxu0 %v2046
    %2597 = vmatpush.bf16.msra.mxu0 %v2042
    %2598 = vmatpush.bf16.msra.mxu0 %v2038
    %2599 = vmatpush.bf16.msra.mxu0 %v2034
    %2600 = vmatmul.bf16.gmra.mxu0 %v1115
    %v2601 = vpop.f32.mrf.mxu0
    %v2602 = vadd.f32 %v2583, %v2601
    %v2603 = vpop.f32.mrf.mxu0
    %v2604 = vadd.f32 %v2585, %v2603
    %2605 = vmatmul.bf16.gmra.mxu0 %v1119
    %v2606 = vpop.f32.mrf.mxu0
    %v2607 = vadd.f32 %v2588, %v2606
    %v2608 = vpop.f32.mrf.mxu0
    %v2609 = vadd.f32 %v2590, %v2608
    %2610 = vdwg.mxu0
    %2611 = vmatpush.bf16.msra.mxu0 %v2094
    %2612 = vmatpush.bf16.msra.mxu0 %v2090
    %2613 = vmatpush.bf16.msra.mxu0 %v2086
    %2614 = vmatpush.bf16.msra.mxu0 %v2082
    %2615 = vmatpush.bf16.msra.mxu0 %v2078
    %2616 = vmatpush.bf16.msra.mxu0 %v2074
    %2617 = vmatpush.bf16.msra.mxu0 %v2070
    %2618 = vmatpush.bf16.msra.mxu0 %v2066
    %2619 = vmatmul.bf16.gmra.mxu0 %v1117
    %v2620 = vpop.f32.mrf.mxu0
    %v2621 = vadd.f32 %v2602, %v2620
    %v2622 = vpop.f32.mrf.mxu0
    %v2623 = vadd.f32 %v2604, %v2622
    %2624 = vmatmul.bf16.gmra.mxu0 %v1121
    %v2625 = vpop.f32.mrf.mxu0
    %v2626 = vadd.f32 %v2607, %v2625
    %v2627 = vpop.f32.mrf.mxu0
    %v2628 = vadd.f32 %v2609, %v2627
    %2629 = vdwg.mxu0
    %2630 = vmatpush.bf16.msra.mxu0 %v1935
    %2631 = vmatpush.bf16.msra.mxu0 %v1931
    %2632 = vmatpush.bf16.msra.mxu0 %v1927
    %2633 = vmatpush.bf16.msra.mxu0 %v1923
    %2634 = vmatpush.bf16.msra.mxu0 %v1919
    %2635 = vmatpush.bf16.msra.mxu0 %v1915
    %2636 = vmatpush.bf16.msra.mxu0 %v1911
    %2637 = vmatpush.bf16.msra.mxu0 %v1907
    %2638 = vmatmul.bf16.gmra.mxu0 %v1070
    %v2639 = vpop.f32.mrf.mxu0
    %v2640 = vadd.f32 %v1323, %v2639
    %v2641 = vpop.f32.mrf.mxu0
    %v2642 = vadd.f32 %v1323, %v2641
    %2643 = vmatmul.bf16.gmra.mxu0 %v1072
    %v2644 = vpop.f32.mrf.mxu0
    %v2645 = vadd.f32 %v1323, %v2644
    %v2646 = vpop.f32.mrf.mxu0
    %v2647 = vadd.f32 %v1323, %v2646
    %2648 = vdwg.mxu0
    %2649 = vmatpush.bf16.msra.mxu0 %v1967
    %2650 = vmatpush.bf16.msra.mxu0 %v1963
    %2651 = vmatpush.bf16.msra.mxu0 %v1959
    %2652 = vmatpush.bf16.msra.mxu0 %v1955
    %2653 = vmatpush.bf16.msra.mxu0 %v1951
    %2654 = vmatpush.bf16.msra.mxu0 %v1947
    %2655 = vmatpush.bf16.msra.mxu0 %v1943
    %2656 = vmatpush.bf16.msra.mxu0 %v1939
    %2657 = vmatmul.bf16.gmra.mxu0 %v1071
    %v2658 = vpop.f32.mrf.mxu0
    %v2659 = vadd.f32 %v2640, %v2658
    %v2660 = vpop.f32.mrf.mxu0
    %v2661 = vadd.f32 %v2642, %v2660
    %2662 = vmatmul.bf16.gmra.mxu0 %v1073
    %v2663 = vpop.f32.mrf.mxu0
    %v2664 = vadd.f32 %v2645, %v2663
    %v2665 = vpop.f32.mrf.mxu0
    %v2666 = vadd.f32 %v2647, %v2665
    %2667 = vdwg.mxu0
    %2668 = vmatpush.bf16.msra.mxu0 %v1999
    %2669 = vmatpush.bf16.msra.mxu0 %v1995
    %2670 = vmatpush.bf16.msra.mxu0 %v1991
    %2671 = vmatpush.bf16.msra.mxu0 %v1987
    %2672 = vmatpush.bf16.msra.mxu0 %v1983
    %2673 = vmatpush.bf16.msra.mxu0 %v1979
    %2674 = vmatpush.bf16.msra.mxu0 %v1975
    %2675 = vmatpush.bf16.msra.mxu0 %v1971
    %2676 = vmatmul.bf16.gmra.mxu0 %v1085
    %v2677 = vpop.f32.mrf.mxu0
    %v2678 = vadd.f32 %v2659, %v2677
    %v2679 = vpop.f32.mrf.mxu0
    %v2680 = vadd.f32 %v2661, %v2679
    %2681 = vmatmul.bf16.gmra.mxu0 %v1101
    %v2682 = vpop.f32.mrf.mxu0
    %v2683 = vadd.f32 %v2664, %v2682
    %v2684 = vpop.f32.mrf.mxu0
    %v2685 = vadd.f32 %v2666, %v2684
    %2686 = vdwg.mxu0
    %2687 = vmatpush.bf16.msra.mxu0 %v2031
    %2688 = vmatpush.bf16.msra.mxu0 %v2027
    %2689 = vmatpush.bf16.msra.mxu0 %v2023
    %2690 = vmatpush.bf16.msra.mxu0 %v2019
    %2691 = vmatpush.bf16.msra.mxu0 %v2015
    %2692 = vmatpush.bf16.msra.mxu0 %v2011
    %2693 = vmatpush.bf16.msra.mxu0 %v2007
    %2694 = vmatpush.bf16.msra.mxu0 %v2003
    %2695 = vmatmul.bf16.gmra.mxu0 %v1093
    %v2696 = vpop.f32.mrf.mxu0
    %v2697 = vadd.f32 %v2678, %v2696
    %v2698 = vpop.f32.mrf.mxu0
    %v2699 = vadd.f32 %v2680, %v2698
    %2700 = vmatmul.bf16.gmra.mxu0 %v1109
    %v2701 = vpop.f32.mrf.mxu0
    %v2702 = vadd.f32 %v2683, %v2701
    %v2703 = vpop.f32.mrf.mxu0
    %v2704 = vadd.f32 %v2685, %v2703
    %2705 = vdwg.mxu0
    %2706 = vmatpush.bf16.msra.mxu0 %v2063
    %2707 = vmatpush.bf16.msra.mxu0 %v2059
    %2708 = vmatpush.bf16.msra.mxu0 %v2055
    %2709 = vmatpush.bf16.msra.mxu0 %v2051
    %2710 = vmatpush.bf16.msra.mxu0 %v2047
    %2711 = vmatpush.bf16.msra.mxu0 %v2043
    %2712 = vmatpush.bf16.msra.mxu0 %v2039
    %2713 = vmatpush.bf16.msra.mxu0 %v2035
    %2714 = vmatmul.bf16.gmra.mxu0 %v1115
    %v2715 = vpop.f32.mrf.mxu0
    %v2716 = vadd.f32 %v2697, %v2715
    %v2717 = vpop.f32.mrf.mxu0
    %v2718 = vadd.f32 %v2699, %v2717
    %2719 = vmatmul.bf16.gmra.mxu0 %v1119
    %v2720 = vpop.f32.mrf.mxu0
    %v2721 = vadd.f32 %v2702, %v2720
    %v2722 = vpop.f32.mrf.mxu0
    %v2723 = vadd.f32 %v2704, %v2722
    %2724 = vdwg.mxu0
    %2725 = vmatpush.bf16.msra.mxu0 %v2095
    %2726 = vmatpush.bf16.msra.mxu0 %v2091
    %2727 = vmatpush.bf16.msra.mxu0 %v2087
    %2728 = vmatpush.bf16.msra.mxu0 %v2083
    %2729 = vmatpush.bf16.msra.mxu0 %v2079
    %2730 = vmatpush.bf16.msra.mxu0 %v2075
    %2731 = vmatpush.bf16.msra.mxu0 %v2071
    %2732 = vmatpush.bf16.msra.mxu0 %v2067
    %2733 = vmatmul.bf16.gmra.mxu0 %v1117
    %v2734 = vpop.f32.mrf.mxu0
    %v2735 = vadd.f32 %v2716, %v2734
    %v2736 = vpop.f32.mrf.mxu0
    %v2737 = vadd.f32 %v2718, %v2736
    %2738 = vmatmul.bf16.gmra.mxu0 %v1121
    %v2739 = vpop.f32.mrf.mxu0
    %v2740 = vadd.f32 %v2721, %v2739
    %v2741 = vpop.f32.mrf.mxu0
    %v2742 = vadd.f32 %v2723, %v2741
    %2743 = vdwg.mxu0
    %v2744 = vmax.f32 %v2393, 0.0
    %v2745 = vmax.f32 %v2507, 0.0
    %v2746 = vmax.f32 %v2621, 0.0
    %v2747 = vmax.f32 %v2735, 0.0
    %v2748 = vmax.f32 %v2395, 0.0
    %v2749 = vmax.f32 %v2509, 0.0
    %v2750 = vmax.f32 %v2623, 0.0
    %v2751 = vmax.f32 %v2737, 0.0
    %v2752 = vmax.f32 %v2398, 0.0
    %v2753 = vmax.f32 %v2512, 0.0
    %v2754 = vmax.f32 %v2626, 0.0
    %v2755 = vmax.f32 %v2740, 0.0
    %v2756 = vmax.f32 %v2400, 0.0
    %v2757 = vmax.f32 %v2514, 0.0
    %v2758 = vmax.f32 %v2628, 0.0
    %v2759 = vmax.f32 %v2742, 0.0
    %v2760 = vpack.c.bf16 %v2745, %v2744
    %v2761 = vpack.c.bf16 %v2747, %v2746
    %v2762 = vpack.c.bf16 %v2749, %v2748
    %v2763 = vpack.c.bf16 %v2751, %v2750
    %v2764 = vpack.c.bf16 %v2753, %v2752
    %v2765 = vpack.c.bf16 %v2755, %v2754
    %v2766 = vpack.c.bf16 %v2757, %v2756
    %v2767 = vpack.c.bf16 %v2759, %v2758
    %v2768 = vld [vmem:[#allocation16] sm:$0xff]
    %v2769 = vld [vmem:[#allocation16 + $0x8] sm:$0xff]
    %v2770 = vld [vmem:[#allocation16 + $0x10] sm:$0xff]
    %v2771 = vld [vmem:[#allocation16 + $0x18] sm:$0xff]
    %v2772 = vld [vmem:[#allocation16 + $0x20] sm:$0xff]
    %v2773 = vld [vmem:[#allocation16 + $0x28] sm:$0xff]
    %v2774 = vld [vmem:[#allocation16 + $0x30] sm:$0xff]
    %v2775 = vld [vmem:[#allocation16 + $0x38] sm:$0xff]
    %v2776 = vld [vmem:[#allocation16 + $0x40] sm:$0xff]
    %v2777 = vld [vmem:[#allocation16 + $0x48] sm:$0xff]
    %v2778 = vld [vmem:[#allocation16 + $0x50] sm:$0xff]
    %v2779 = vld [vmem:[#allocation16 + $0x58] sm:$0xff]
    %v2780 = vld [vmem:[#allocation16 + $0x60] sm:$0xff]
    %v2781 = vld [vmem:[#allocation16 + $0x68] sm:$0xff]
    %v2782 = vld [vmem:[#allocation16 + $0x70] sm:$0xff]
    %v2783 = vld [vmem:[#allocation16 + $0x78] sm:$0xff]
    %v2784 = vld [vmem:[#allocation16 + $0x80] sm:$0xff]
    %v2785 = vld [vmem:[#allocation16 + $0x88] sm:$0xff]
    %v2786 = vld [vmem:[#allocation16 + $0x90] sm:$0xff]
    %v2787 = vld [vmem:[#allocation16 + $0x98] sm:$0xff]
    %v2788 = vld [vmem:[#allocation16 + $0xa0] sm:$0xff]
    %v2789 = vld [vmem:[#allocation16 + $0xa8] sm:$0xff]
    %v2790 = vld [vmem:[#allocation16 + $0xb0] sm:$0xff]
    %v2791 = vld [vmem:[#allocation16 + $0xb8] sm:$0xff]
    %v2792 = vld [vmem:[#allocation16 + $0xc0] sm:$0xff]
    %v2793 = vld [vmem:[#allocation16 + $0xc8] sm:$0xff]
    %v2794 = vld [vmem:[#allocation16 + $0xd0] sm:$0xff]
    %v2795 = vld [vmem:[#allocation16 + $0xd8] sm:$0xff]
    %v2796 = vld [vmem:[#allocation16 + $0xe0] sm:$0xff]
    %v2797 = vld [vmem:[#allocation16 + $0xe8] sm:$0xff]
    %v2798 = vld [vmem:[#allocation16 + $0xf0] sm:$0xff]
    %v2799 = vld [vmem:[#allocation16 + $0xf8] sm:$0xff]
    %v2800 = vld [vmem:[#allocation16 + $0x100] sm:$0xff]
    %v2801 = vld [vmem:[#allocation16 + $0x108] sm:$0xff]
    %v2802 = vld [vmem:[#allocation16 + $0x110] sm:$0xff]
    %v2803 = vld [vmem:[#allocation16 + $0x118] sm:$0xff]
    %v2804 = vld [vmem:[#allocation16 + $0x120] sm:$0xff]
    %v2805 = vld [vmem:[#allocation16 + $0x128] sm:$0xff]
    %v2806 = vld [vmem:[#allocation16 + $0x130] sm:$0xff]
    %v2807 = vld [vmem:[#allocation16 + $0x138] sm:$0xff]
    %v2808 = vld [vmem:[#allocation16 + $0x140] sm:$0xff]
    %v2809 = vld [vmem:[#allocation16 + $0x148] sm:$0xff]
    %v2810 = vld [vmem:[#allocation16 + $0x150] sm:$0xff]
    %v2811 = vld [vmem:[#allocation16 + $0x158] sm:$0xff]
    %v2812 = vld [vmem:[#allocation16 + $0x160] sm:$0xff]
    %v2813 = vld [vmem:[#allocation16 + $0x168] sm:$0xff]
    %v2814 = vld [vmem:[#allocation16 + $0x170] sm:$0xff]
    %v2815 = vld [vmem:[#allocation16 + $0x178] sm:$0xff]
    %v2816 = vld [vmem:[#allocation16 + $0x180] sm:$0xff]
    %v2817 = vld [vmem:[#allocation16 + $0x188] sm:$0xff]
    %v2818 = vld [vmem:[#allocation16 + $0x190] sm:$0xff]
    %v2819 = vld [vmem:[#allocation16 + $0x198] sm:$0xff]
    %v2820 = vld [vmem:[#allocation16 + $0x1a0] sm:$0xff]
    %v2821 = vld [vmem:[#allocation16 + $0x1a8] sm:$0xff]
    %v2822 = vld [vmem:[#allocation16 + $0x1b0] sm:$0xff]
    %v2823 = vld [vmem:[#allocation16 + $0x1b8] sm:$0xff]
    %v2824 = vld [vmem:[#allocation16 + $0x1c0] sm:$0xff]
    %v2825 = vld [vmem:[#allocation16 + $0x1c8] sm:$0xff]
    %v2826 = vld [vmem:[#allocation16 + $0x1d0] sm:$0xff]
    %v2827 = vld [vmem:[#allocation16 + $0x1d8] sm:$0xff]
    %v2828 = vld [vmem:[#allocation16 + $0x1e0] sm:$0xff]
    %v2829 = vld [vmem:[#allocation16 + $0x1e8] sm:$0xff]
    %v2830 = vld [vmem:[#allocation16 + $0x1f0] sm:$0xff]
    %v2831 = vld [vmem:[#allocation16 + $0x1f8] sm:$0xff]
    %v2832 = vld [vmem:[#allocation16 + $0x200] sm:$0xff]
    %v2833 = vld [vmem:[#allocation16 + $0x208] sm:$0xff]
    %v2834 = vld [vmem:[#allocation16 + $0x210] sm:$0xff]
    %v2835 = vld [vmem:[#allocation16 + $0x218] sm:$0xff]
    %v2836 = vld [vmem:[#allocation16 + $0x220] sm:$0xff]
    %v2837 = vld [vmem:[#allocation16 + $0x228] sm:$0xff]
    %v2838 = vld [vmem:[#allocation16 + $0x230] sm:$0xff]
    %v2839 = vld [vmem:[#allocation16 + $0x238] sm:$0xff]
    %v2840 = vld [vmem:[#allocation16 + $0x240] sm:$0xff]
    %v2841 = vld [vmem:[#allocation16 + $0x248] sm:$0xff]
    %v2842 = vld [vmem:[#allocation16 + $0x250] sm:$0xff]
    %v2843 = vld [vmem:[#allocation16 + $0x258] sm:$0xff]
    %v2844 = vld [vmem:[#allocation16 + $0x260] sm:$0xff]
    %v2845 = vld [vmem:[#allocation16 + $0x268] sm:$0xff]
    %v2846 = vld [vmem:[#allocation16 + $0x270] sm:$0xff]
    %v2847 = vld [vmem:[#allocation16 + $0x278] sm:$0xff]
    %v2848 = vld [vmem:[#allocation16 + $0x280] sm:$0xff]
    %v2849 = vld [vmem:[#allocation16 + $0x288] sm:$0xff]
    %v2850 = vld [vmem:[#allocation16 + $0x290] sm:$0xff]
    %v2851 = vld [vmem:[#allocation16 + $0x298] sm:$0xff]
    %v2852 = vld [vmem:[#allocation16 + $0x2a0] sm:$0xff]
    %v2853 = vld [vmem:[#allocation16 + $0x2a8] sm:$0xff]
    %v2854 = vld [vmem:[#allocation16 + $0x2b0] sm:$0xff]
    %v2855 = vld [vmem:[#allocation16 + $0x2b8] sm:$0xff]
    %v2856 = vld [vmem:[#allocation16 + $0x2c0] sm:$0xff]
    %v2857 = vld [vmem:[#allocation16 + $0x2c8] sm:$0xff]
    %v2858 = vld [vmem:[#allocation16 + $0x2d0] sm:$0xff]
    %v2859 = vld [vmem:[#allocation16 + $0x2d8] sm:$0xff]
    %v2860 = vld [vmem:[#allocation16 + $0x2e0] sm:$0xff]
    %v2861 = vld [vmem:[#allocation16 + $0x2e8] sm:$0xff]
    %v2862 = vld [vmem:[#allocation16 + $0x2f0] sm:$0xff]
    %v2863 = vld [vmem:[#allocation16 + $0x2f8] sm:$0xff]
    %v2864 = vld [vmem:[#allocation16 + $0x300] sm:$0xff]
    %v2865 = vld [vmem:[#allocation16 + $0x308] sm:$0xff]
    %v2866 = vld [vmem:[#allocation16 + $0x310] sm:$0xff]
    %v2867 = vld [vmem:[#allocation16 + $0x318] sm:$0xff]
    %v2868 = vld [vmem:[#allocation16 + $0x320] sm:$0xff]
    %v2869 = vld [vmem:[#allocation16 + $0x328] sm:$0xff]
    %v2870 = vld [vmem:[#allocation16 + $0x330] sm:$0xff]
    %v2871 = vld [vmem:[#allocation16 + $0x338] sm:$0xff]
    %v2872 = vld [vmem:[#allocation16 + $0x340] sm:$0xff]
    %v2873 = vld [vmem:[#allocation16 + $0x348] sm:$0xff]
    %v2874 = vld [vmem:[#allocation16 + $0x350] sm:$0xff]
    %v2875 = vld [vmem:[#allocation16 + $0x358] sm:$0xff]
    %v2876 = vld [vmem:[#allocation16 + $0x360] sm:$0xff]
    %v2877 = vld [vmem:[#allocation16 + $0x368] sm:$0xff]
    %v2878 = vld [vmem:[#allocation16 + $0x370] sm:$0xff]
    %v2879 = vld [vmem:[#allocation16 + $0x378] sm:$0xff]
    %v2880 = vld [vmem:[#allocation16 + $0x380] sm:$0xff]
    %v2881 = vld [vmem:[#allocation16 + $0x388] sm:$0xff]
    %v2882 = vld [vmem:[#allocation16 + $0x390] sm:$0xff]
    %v2883 = vld [vmem:[#allocation16 + $0x398] sm:$0xff]
    %v2884 = vld [vmem:[#allocation16 + $0x3a0] sm:$0xff]
    %v2885 = vld [vmem:[#allocation16 + $0x3a8] sm:$0xff]
    %v2886 = vld [vmem:[#allocation16 + $0x3b0] sm:$0xff]
    %v2887 = vld [vmem:[#allocation16 + $0x3b8] sm:$0xff]
    %v2888 = vld [vmem:[#allocation16 + $0x3c0] sm:$0xff]
    %v2889 = vld [vmem:[#allocation16 + $0x3c8] sm:$0xff]
    %v2890 = vld [vmem:[#allocation16 + $0x3d0] sm:$0xff]
    %v2891 = vld [vmem:[#allocation16 + $0x3d8] sm:$0xff]
    %v2892 = vld [vmem:[#allocation16 + $0x3e0] sm:$0xff]
    %v2893 = vld [vmem:[#allocation16 + $0x3e8] sm:$0xff]
    %v2894 = vld [vmem:[#allocation16 + $0x3f0] sm:$0xff]
    %v2895 = vld [vmem:[#allocation16 + $0x3f8] sm:$0xff]
    %v2900 = vunpack.c.l.b16 %v2760
    %v2901 = vunpack.c.h.b16 %v2760
    %v2902 = vunpack.c.l.b16 %v2761
    %v2903 = vunpack.c.h.b16 %v2761
    %v2904 = vunpack.c.l.b16 %v2764
    %v2905 = vunpack.c.h.b16 %v2764
    %v2906 = vunpack.c.l.b16 %v2765
    %v2907 = vunpack.c.h.b16 %v2765
    %v2908 = vpack.c.b16 %v2900, %v2900
    %v2909 = vpack.c.b16 %v2901, %v2901
    %v2910 = vpack.c.b16 %v2902, %v2902
    %v2911 = vpack.c.b16 %v2903, %v2903
    %v2912 = vpack.c.b16 %v2904, %v2904
    %v2913 = vpack.c.b16 %v2905, %v2905
    %v2914 = vpack.c.b16 %v2906, %v2906
    %v2915 = vpack.c.b16 %v2907, %v2907
    %v2916 = vunpack.c.l.b16 %v2908
    %v2917 = vunpack.c.l.b16 %v2909
    %v2918 = vunpack.c.l.b16 %v2910
    %v2919 = vunpack.c.l.b16 %v2911
    %v2920 = vunpack.c.l.b16 %v2912
    %v2921 = vunpack.c.l.b16 %v2913
    %v2922 = vunpack.c.l.b16 %v2914
    %v2923 = vunpack.c.l.b16 %v2915
    %v2924 = vrot.slane %v2916, 1
    %vm2925 = vcmask 1041409
    %v2926 = vsel %vm2925, %v2920, %v2924
    %v2927 = vrot.slane %v2917, 1
    %v2928 = vsel %vm2925, %v2921, %v2927
    %v2929 = vrot.slane %v2918, 1
    %v2930 = vsel %vm2925, %v2922, %v2929
    %v2931 = vrot.slane %v2919, 1
    %v2932 = vsel %vm2925, %v2923, %v2931
    %v2933 = vpack.c.b16 %v2926, %v2926
    %v2934 = vpack.c.b16 %v2928, %v2928
    %v2935 = vpack.c.b16 %v2930, %v2930
    %v2936 = vpack.c.b16 %v2932, %v2932
    %v3005 = vunpack.c.l.b16 %v2832
    %v3006 = vunpack.c.h.b16 %v2832
    %v3007 = vunpack.c.l.b16 %v2833
    %v3008 = vunpack.c.h.b16 %v2833
    %v3009 = vunpack.c.l.b16 %v2834
    %v3010 = vunpack.c.h.b16 %v2834
    %v3011 = vunpack.c.l.b16 %v2835
    %v3012 = vunpack.c.h.b16 %v2835
    %v3013 = vunpack.c.l.b16 %v2836
    %v3014 = vunpack.c.h.b16 %v2836
    %v3015 = vunpack.c.l.b16 %v2837
    %v3016 = vunpack.c.h.b16 %v2837
    %v3017 = vunpack.c.l.b16 %v2838
    %v3018 = vunpack.c.h.b16 %v2838
    %v3019 = vunpack.c.l.b16 %v2839
    %v3020 = vunpack.c.h.b16 %v2839
    %v3021 = vunpack.c.l.b16 %v2840
    %v3022 = vunpack.c.h.b16 %v2840
    %v3023 = vunpack.c.l.b16 %v2841
    %v3024 = vunpack.c.h.b16 %v2841
    %v3025 = vunpack.c.l.b16 %v2842
    %v3026 = vunpack.c.h.b16 %v2842
    %v3027 = vunpack.c.l.b16 %v2843
    %v3028 = vunpack.c.h.b16 %v2843
    %v3029 = vunpack.c.l.b16 %v2844
    %v3030 = vunpack.c.h.b16 %v2844
    %v3031 = vunpack.c.l.b16 %v2845
    %v3032 = vunpack.c.h.b16 %v2845
    %v3033 = vunpack.c.l.b16 %v2846
    %v3034 = vunpack.c.h.b16 %v2846
    %v3035 = vunpack.c.l.b16 %v2847
    %v3036 = vunpack.c.h.b16 %v2847
    %v3037 = vunpack.c.l.b16 %v2848
    %v3038 = vunpack.c.h.b16 %v2848
    %v3039 = vunpack.c.l.b16 %v2849
    %v3040 = vunpack.c.h.b16 %v2849
    %v3041 = vunpack.c.l.b16 %v2850
    %v3042 = vunpack.c.h.b16 %v2850
    %v3043 = vunpack.c.l.b16 %v2851
    %v3044 = vunpack.c.h.b16 %v2851
    %v3045 = vunpack.c.l.b16 %v2852
    %v3046 = vunpack.c.h.b16 %v2852
    %v3047 = vunpack.c.l.b16 %v2853
    %v3048 = vunpack.c.h.b16 %v2853
    %v3049 = vunpack.c.l.b16 %v2854
    %v3050 = vunpack.c.h.b16 %v2854
    %v3051 = vunpack.c.l.b16 %v2855
    %v3052 = vunpack.c.h.b16 %v2855
    %v3053 = vunpack.c.l.b16 %v2856
    %v3054 = vunpack.c.h.b16 %v2856
    %v3055 = vunpack.c.l.b16 %v2857
    %v3056 = vunpack.c.h.b16 %v2857
    %v3057 = vunpack.c.l.b16 %v2858
    %v3058 = vunpack.c.h.b16 %v2858
    %v3059 = vunpack.c.l.b16 %v2859
    %v3060 = vunpack.c.h.b16 %v2859
    %v3061 = vunpack.c.l.b16 %v2860
    %v3062 = vunpack.c.h.b16 %v2860
    %v3063 = vunpack.c.l.b16 %v2861
    %v3064 = vunpack.c.h.b16 %v2861
    %v3065 = vunpack.c.l.b16 %v2862
    %v3066 = vunpack.c.h.b16 %v2862
    %v3067 = vunpack.c.l.b16 %v2863
    %v3068 = vunpack.c.h.b16 %v2863
    %v3069 = vunpack.c.l.b16 %v2864
    %v3070 = vunpack.c.h.b16 %v2864
    %v3071 = vunpack.c.l.b16 %v2865
    %v3072 = vunpack.c.h.b16 %v2865
    %v3073 = vunpack.c.l.b16 %v2866
    %v3074 = vunpack.c.h.b16 %v2866
    %v3075 = vunpack.c.l.b16 %v2867
    %v3076 = vunpack.c.h.b16 %v2867
    %v3077 = vunpack.c.l.b16 %v2868
    %v3078 = vunpack.c.h.b16 %v2868
    %v3079 = vunpack.c.l.b16 %v2869
    %v3080 = vunpack.c.h.b16 %v2869
    %v3081 = vunpack.c.l.b16 %v2870
    %v3082 = vunpack.c.h.b16 %v2870
    %v3083 = vunpack.c.l.b16 %v2871
    %v3084 = vunpack.c.h.b16 %v2871
    %v3085 = vunpack.c.l.b16 %v2872
    %v3086 = vunpack.c.h.b16 %v2872
    %v3087 = vunpack.c.l.b16 %v2873
    %v3088 = vunpack.c.h.b16 %v2873
    %v3089 = vunpack.c.l.b16 %v2874
    %v3090 = vunpack.c.h.b16 %v2874
    %v3091 = vunpack.c.l.b16 %v2875
    %v3092 = vunpack.c.h.b16 %v2875
    %v3093 = vunpack.c.l.b16 %v2876
    %v3094 = vunpack.c.h.b16 %v2876
    %v3095 = vunpack.c.l.b16 %v2877
    %v3096 = vunpack.c.h.b16 %v2877
    %v3097 = vunpack.c.l.b16 %v2878
    %v3098 = vunpack.c.h.b16 %v2878
    %v3099 = vunpack.c.l.b16 %v2879
    %v3100 = vunpack.c.h.b16 %v2879
    %v3101 = vunpack.c.l.b16 %v2880
    %v3102 = vunpack.c.h.b16 %v2880
    %v3103 = vunpack.c.l.b16 %v2881
    %v3104 = vunpack.c.h.b16 %v2881
    %v3105 = vunpack.c.l.b16 %v2882
    %v3106 = vunpack.c.h.b16 %v2882
    %v3107 = vunpack.c.l.b16 %v2883
    %v3108 = vunpack.c.h.b16 %v2883
    %v3109 = vunpack.c.l.b16 %v2884
    %v3110 = vunpack.c.h.b16 %v2884
    %v3111 = vunpack.c.l.b16 %v2885
    %v3112 = vunpack.c.h.b16 %v2885
    %v3113 = vunpack.c.l.b16 %v2886
    %v3114 = vunpack.c.h.b16 %v2886
    %v3115 = vunpack.c.l.b16 %v2887
    %v3116 = vunpack.c.h.b16 %v2887
    %v3117 = vunpack.c.l.b16 %v2888
    %v3118 = vunpack.c.h.b16 %v2888
    %v3119 = vunpack.c.l.b16 %v2889
    %v3120 = vunpack.c.h.b16 %v2889
    %v3121 = vunpack.c.l.b16 %v2890
    %v3122 = vunpack.c.h.b16 %v2890
    %v3123 = vunpack.c.l.b16 %v2891
    %v3124 = vunpack.c.h.b16 %v2891
    %v3125 = vunpack.c.l.b16 %v2892
    %v3126 = vunpack.c.h.b16 %v2892
    %v3127 = vunpack.c.l.b16 %v2893
    %v3128 = vunpack.c.h.b16 %v2893
    %v3129 = vunpack.c.l.b16 %v2894
    %v3130 = vunpack.c.h.b16 %v2894
    %v3131 = vunpack.c.l.b16 %v2895
    %v3132 = vunpack.c.h.b16 %v2895
    %v3133 = vpack.c.b16 %v3007, %v3005
    %v3134 = vpack.c.b16 %v3008, %v3006
    %v3135 = vpack.c.b16 %v3011, %v3009
    %v3136 = vpack.c.b16 %v3012, %v3010
    %v3137 = vpack.c.b16 %v3015, %v3013
    %v3138 = vpack.c.b16 %v3016, %v3014
    %v3139 = vpack.c.b16 %v3019, %v3017
    %v3140 = vpack.c.b16 %v3020, %v3018
    %v3141 = vpack.c.b16 %v3023, %v3021
    %v3142 = vpack.c.b16 %v3024, %v3022
    %v3143 = vpack.c.b16 %v3027, %v3025
    %v3144 = vpack.c.b16 %v3028, %v3026
    %v3145 = vpack.c.b16 %v3031, %v3029
    %v3146 = vpack.c.b16 %v3032, %v3030
    %v3147 = vpack.c.b16 %v3035, %v3033
    %v3148 = vpack.c.b16 %v3036, %v3034
    %v3149 = vpack.c.b16 %v3039, %v3037
    %v3150 = vpack.c.b16 %v3040, %v3038
    %v3151 = vpack.c.b16 %v3043, %v3041
    %v3152 = vpack.c.b16 %v3044, %v3042
    %v3153 = vpack.c.b16 %v3047, %v3045
    %v3154 = vpack.c.b16 %v3048, %v3046
    %v3155 = vpack.c.b16 %v3051, %v3049
    %v3156 = vpack.c.b16 %v3052, %v3050
    %v3157 = vpack.c.b16 %v3055, %v3053
    %v3158 = vpack.c.b16 %v3056, %v3054
    %v3159 = vpack.c.b16 %v3059, %v3057
    %v3160 = vpack.c.b16 %v3060, %v3058
    %v3161 = vpack.c.b16 %v3063, %v3061
    %v3162 = vpack.c.b16 %v3064, %v3062
    %v3163 = vpack.c.b16 %v3067, %v3065
    %v3164 = vpack.c.b16 %v3068, %v3066
    %v3165 = vpack.c.b16 %v3071, %v3069
    %v3166 = vpack.c.b16 %v3072, %v3070
    %v3167 = vpack.c.b16 %v3075, %v3073
    %v3168 = vpack.c.b16 %v3076, %v3074
    %v3169 = vpack.c.b16 %v3079, %v3077
    %v3170 = vpack.c.b16 %v3080, %v3078
    %v3171 = vpack.c.b16 %v3083, %v3081
    %v3172 = vpack.c.b16 %v3084, %v3082
    %v3173 = vpack.c.b16 %v3087, %v3085
    %v3174 = vpack.c.b16 %v3088, %v3086
    %v3175 = vpack.c.b16 %v3091, %v3089
    %v3176 = vpack.c.b16 %v3092, %v3090
    %v3177 = vpack.c.b16 %v3095, %v3093
    %v3178 = vpack.c.b16 %v3096, %v3094
    %v3179 = vpack.c.b16 %v3099, %v3097
    %v3180 = vpack.c.b16 %v3100, %v3098
    %v3181 = vpack.c.b16 %v3103, %v3101
    %v3182 = vpack.c.b16 %v3104, %v3102
    %v3183 = vpack.c.b16 %v3107, %v3105
    %v3184 = vpack.c.b16 %v3108, %v3106
    %v3185 = vpack.c.b16 %v3111, %v3109
    %v3186 = vpack.c.b16 %v3112, %v3110
    %v3187 = vpack.c.b16 %v3115, %v3113
    %v3188 = vpack.c.b16 %v3116, %v3114
    %v3189 = vpack.c.b16 %v3119, %v3117
    %v3190 = vpack.c.b16 %v3120, %v3118
    %v3191 = vpack.c.b16 %v3123, %v3121
    %v3192 = vpack.c.b16 %v3124, %v3122
    %v3193 = vpack.c.b16 %v3127, %v3125
    %v3194 = vpack.c.b16 %v3128, %v3126
    %v3195 = vpack.c.b16 %v3131, %v3129
    %v3196 = vpack.c.b16 %v3132, %v3130
    %3261 = vmatpush.bf16.msra.mxu0 %v3147
    %3262 = vmatpush.bf16.msra.mxu0 %v3145
    %3263 = vmatpush.bf16.msra.mxu0 %v3143
    %3264 = vmatpush.bf16.msra.mxu0 %v3141
    %3265 = vmatpush.bf16.msra.mxu0 %v3139
    %3266 = vmatpush.bf16.msra.mxu0 %v3137
    %3267 = vmatpush.bf16.msra.mxu0 %v3135
    %3268 = vmatpush.bf16.msra.mxu0 %v3133
    %3269 = vmatmul.bf16.gmra.mxu0 %v2933
    %v3270 = vpop.f32.mrf.mxu0
    %v3271 = vadd.f32 0.0, %v3270
    %v3272 = vpop.f32.mrf.mxu0
    %3273 = vdwg.mxu0
    %3274 = vmatpush.bf16.msra.mxu0 %v3163
    %3275 = vmatpush.bf16.msra.mxu0 %v3161
    %3276 = vmatpush.bf16.msra.mxu0 %v3159
    %3277 = vmatpush.bf16.msra.mxu0 %v3157
    %3278 = vmatpush.bf16.msra.mxu0 %v3155
    %3279 = vmatpush.bf16.msra.mxu0 %v3153
    %3280 = vmatpush.bf16.msra.mxu0 %v3151
    %3281 = vmatpush.bf16.msra.mxu0 %v3149
    %3282 = vmatmul.bf16.gmra.mxu0 %v2934
    %v3283 = vpop.f32.mrf.mxu0
    %v3284 = vadd.f32 %v3271, %v3283
    %v3285 = vpop.f32.mrf.mxu0
    %3286 = vdwg.mxu0
    %3287 = vmatpush.bf16.msra.mxu0 %v3179
    %3288 = vmatpush.bf16.msra.mxu0 %v3177
    %3289 = vmatpush.bf16.msra.mxu0 %v3175
    %3290 = vmatpush.bf16.msra.mxu0 %v3173
    %3291 = vmatpush.bf16.msra.mxu0 %v3171
    %3292 = vmatpush.bf16.msra.mxu0 %v3169
    %3293 = vmatpush.bf16.msra.mxu0 %v3167
    %3294 = vmatpush.bf16.msra.mxu0 %v3165
    %3295 = vmatmul.bf16.gmra.mxu0 %v2935
    %v3296 = vpop.f32.mrf.mxu0
    %v3297 = vadd.f32 %v3284, %v3296
    %v3298 = vpop.f32.mrf.mxu0
    %3299 = vdwg.mxu0
    %3300 = vmatpush.bf16.msra.mxu0 %v3195
    %3301 = vmatpush.bf16.msra.mxu0 %v3193
    %3302 = vmatpush.bf16.msra.mxu0 %v3191
    %3303 = vmatpush.bf16.msra.mxu0 %v3189
    %3304 = vmatpush.bf16.msra.mxu0 %v3187
    %3305 = vmatpush.bf16.msra.mxu0 %v3185
    %3306 = vmatpush.bf16.msra.mxu0 %v3183
    %3307 = vmatpush.bf16.msra.mxu0 %v3181
    %3308 = vmatmul.bf16.gmra.mxu0 %v2936
    %v3309 = vpop.f32.mrf.mxu0
    %v3310 = vadd.f32 %v3297, %v3309
    %v3311 = vpop.f32.mrf.mxu0
    %3312 = vdwg.mxu0
    %3313 = vmatpush.bf16.msra.mxu0 %v3148
    %3314 = vmatpush.bf16.msra.mxu0 %v3146
    %3315 = vmatpush.bf16.msra.mxu0 %v3144
    %3316 = vmatpush.bf16.msra.mxu0 %v3142
    %3317 = vmatpush.bf16.msra.mxu0 %v3140
    %3318 = vmatpush.bf16.msra.mxu0 %v3138
    %3319 = vmatpush.bf16.msra.mxu0 %v3136
    %3320 = vmatpush.bf16.msra.mxu0 %v3134
    %3321 = vmatmul.bf16.gmra.mxu0 %v2933
    %v3322 = vpop.f32.mrf.mxu0
    %v3323 = vadd.f32 0.0, %v3322
    %v3324 = vpop.f32.mrf.mxu0
    %3325 = vdwg.mxu0
    %3326 = vmatpush.bf16.msra.mxu0 %v3164
    %3327 = vmatpush.bf16.msra.mxu0 %v3162
    %3328 = vmatpush.bf16.msra.mxu0 %v3160
    %3329 = vmatpush.bf16.msra.mxu0 %v3158
    %3330 = vmatpush.bf16.msra.mxu0 %v3156
    %3331 = vmatpush.bf16.msra.mxu0 %v3154
    %3332 = vmatpush.bf16.msra.mxu0 %v3152
    %3333 = vmatpush.bf16.msra.mxu0 %v3150
    %3334 = vmatmul.bf16.gmra.mxu0 %v2934
    %v3335 = vpop.f32.mrf.mxu0
    %v3336 = vadd.f32 %v3323, %v3335
    %v3337 = vpop.f32.mrf.mxu0
    %3338 = vdwg.mxu0
    %3339 = vmatpush.bf16.msra.mxu0 %v3180
    %3340 = vmatpush.bf16.msra.mxu0 %v3178
    %3341 = vmatpush.bf16.msra.mxu0 %v3176
    %3342 = vmatpush.bf16.msra.mxu0 %v3174
    %3343 = vmatpush.bf16.msra.mxu0 %v3172
    %3344 = vmatpush.bf16.msra.mxu0 %v3170
    %3345 = vmatpush.bf16.msra.mxu0 %v3168
    %3346 = vmatpush.bf16.msra.mxu0 %v3166
    %3347 = vmatmul.bf16.gmra.mxu0 %v2935
    %v3348 = vpop.f32.mrf.mxu0
    %v3349 = vadd.f32 %v3336, %v3348
    %v3350 = vpop.f32.mrf.mxu0
    %3351 = vdwg.mxu0
    %3352 = vmatpush.bf16.msra.mxu0 %v3196
    %3353 = vmatpush.bf16.msra.mxu0 %v3194
    %3354 = vmatpush.bf16.msra.mxu0 %v3192
    %3355 = vmatpush.bf16.msra.mxu0 %v3190
    %3356 = vmatpush.bf16.msra.mxu0 %v3188
    %3357 = vmatpush.bf16.msra.mxu0 %v3186
    %3358 = vmatpush.bf16.msra.mxu0 %v3184
    %3359 = vmatpush.bf16.msra.mxu0 %v3182
    %3360 = vmatmul.bf16.gmra.mxu0 %v2936
    %v3361 = vpop.f32.mrf.mxu0
    %v3362 = vadd.f32 %v3349, %v3361
    %v3363 = vpop.f32.mrf.mxu0
    %3364 = vdwg.mxu0
    %v3365 = vrot.slane %v2920, 7
    %v3366 = vsel %vm2925, %v3365, %v2916
    %v3367 = vrot.slane %v2921, 7
    %v3368 = vsel %vm2925, %v3367, %v2917
    %v3369 = vrot.slane %v2922, 7
    %v3370 = vsel %vm2925, %v3369, %v2918
    %v3371 = vrot.slane %v2923, 7
    %v3372 = vsel %vm2925, %v3371, %v2919
    %v3373 = vpack.c.b16 %v3366, %v3366
    %v3374 = vpack.c.b16 %v3368, %v3368
    %v3375 = vpack.c.b16 %v3370, %v3370
    %v3376 = vpack.c.b16 %v3372, %v3372
    %v3445 = vunpack.c.l.b16 %v2768
    %v3446 = vunpack.c.h.b16 %v2768
    %v3447 = vunpack.c.l.b16 %v2769
    %v3448 = vunpack.c.h.b16 %v2769
    %v3449 = vunpack.c.l.b16 %v2770
    %v3450 = vunpack.c.h.b16 %v2770
    %v3451 = vunpack.c.l.b16 %v2771
    %v3452 = vunpack.c.h.b16 %v2771
    %v3453 = vunpack.c.l.b16 %v2772
    %v3454 = vunpack.c.h.b16 %v2772
    %v3455 = vunpack.c.l.b16 %v2773
    %v3456 = vunpack.c.h.b16 %v2773
    %v3457 = vunpack.c.l.b16 %v2774
    %v3458 = vunpack.c.h.b16 %v2774
    %v3459 = vunpack.c.l.b16 %v2775
    %v3460 = vunpack.c.h.b16 %v2775
    %v3461 = vunpack.c.l.b16 %v2776
    %v3462 = vunpack.c.h.b16 %v2776
    %v3463 = vunpack.c.l.b16 %v2777
    %v3464 = vunpack.c.h.b16 %v2777
    %v3465 = vunpack.c.l.b16 %v2778
    %v3466 = vunpack.c.h.b16 %v2778
    %v3467 = vunpack.c.l.b16 %v2779
    %v3468 = vunpack.c.h.b16 %v2779
    %v3469 = vunpack.c.l.b16 %v2780
    %v3470 = vunpack.c.h.b16 %v2780
    %v3471 = vunpack.c.l.b16 %v2781
    %v3472 = vunpack.c.h.b16 %v2781
    %v3473 = vunpack.c.l.b16 %v2782
    %v3474 = vunpack.c.h.b16 %v2782
    %v3475 = vunpack.c.l.b16 %v2783
    %v3476 = vunpack.c.h.b16 %v2783
    %v3477 = vunpack.c.l.b16 %v2784
    %v3478 = vunpack.c.h.b16 %v2784
    %v3479 = vunpack.c.l.b16 %v2785
    %v3480 = vunpack.c.h.b16 %v2785
    %v3481 = vunpack.c.l.b16 %v2786
    %v3482 = vunpack.c.h.b16 %v2786
    %v3483 = vunpack.c.l.b16 %v2787
    %v3484 = vunpack.c.h.b16 %v2787
    %v3485 = vunpack.c.l.b16 %v2788
    %v3486 = vunpack.c.h.b16 %v2788
    %v3487 = vunpack.c.l.b16 %v2789
    %v3488 = vunpack.c.h.b16 %v2789
    %v3489 = vunpack.c.l.b16 %v2790
    %v3490 = vunpack.c.h.b16 %v2790
    %v3491 = vunpack.c.l.b16 %v2791
    %v3492 = vunpack.c.h.b16 %v2791
    %v3493 = vunpack.c.l.b16 %v2792
    %v3494 = vunpack.c.h.b16 %v2792
    %v3495 = vunpack.c.l.b16 %v2793
    %v3496 = vunpack.c.h.b16 %v2793
    %v3497 = vunpack.c.l.b16 %v2794
    %v3498 = vunpack.c.h.b16 %v2794
    %v3499 = vunpack.c.l.b16 %v2795
    %v3500 = vunpack.c.h.b16 %v2795
    %v3501 = vunpack.c.l.b16 %v2796
    %v3502 = vunpack.c.h.b16 %v2796
    %v3503 = vunpack.c.l.b16 %v2797
    %v3504 = vunpack.c.h.b16 %v2797
    %v3505 = vunpack.c.l.b16 %v2798
    %v3506 = vunpack.c.h.b16 %v2798
    %v3507 = vunpack.c.l.b16 %v2799
    %v3508 = vunpack.c.h.b16 %v2799
    %v3509 = vunpack.c.l.b16 %v2800
    %v3510 = vunpack.c.h.b16 %v2800
    %v3511 = vunpack.c.l.b16 %v2801
    %v3512 = vunpack.c.h.b16 %v2801
    %v3513 = vunpack.c.l.b16 %v2802
    %v3514 = vunpack.c.h.b16 %v2802
    %v3515 = vunpack.c.l.b16 %v2803
    %v3516 = vunpack.c.h.b16 %v2803
    %v3517 = vunpack.c.l.b16 %v2804
    %v3518 = vunpack.c.h.b16 %v2804
    %v3519 = vunpack.c.l.b16 %v2805
    %v3520 = vunpack.c.h.b16 %v2805
    %v3521 = vunpack.c.l.b16 %v2806
    %v3522 = vunpack.c.h.b16 %v2806
    %v3523 = vunpack.c.l.b16 %v2807
    %v3524 = vunpack.c.h.b16 %v2807
    %v3525 = vunpack.c.l.b16 %v2808
    %v3526 = vunpack.c.h.b16 %v2808
    %v3527 = vunpack.c.l.b16 %v2809
    %v3528 = vunpack.c.h.b16 %v2809
    %v3529 = vunpack.c.l.b16 %v2810
    %v3530 = vunpack.c.h.b16 %v2810
    %v3531 = vunpack.c.l.b16 %v2811
    %v3532 = vunpack.c.h.b16 %v2811
    %v3533 = vunpack.c.l.b16 %v2812
    %v3534 = vunpack.c.h.b16 %v2812
    %v3535 = vunpack.c.l.b16 %v2813
    %v3536 = vunpack.c.h.b16 %v2813
    %v3537 = vunpack.c.l.b16 %v2814
    %v3538 = vunpack.c.h.b16 %v2814
    %v3539 = vunpack.c.l.b16 %v2815
    %v3540 = vunpack.c.h.b16 %v2815
    %v3541 = vunpack.c.l.b16 %v2816
    %v3542 = vunpack.c.h.b16 %v2816
    %v3543 = vunpack.c.l.b16 %v2817
    %v3544 = vunpack.c.h.b16 %v2817
    %v3545 = vunpack.c.l.b16 %v2818
    %v3546 = vunpack.c.h.b16 %v2818
    %v3547 = vunpack.c.l.b16 %v2819
    %v3548 = vunpack.c.h.b16 %v2819
    %v3549 = vunpack.c.l.b16 %v2820
    %v3550 = vunpack.c.h.b16 %v2820
    %v3551 = vunpack.c.l.b16 %v2821
    %v3552 = vunpack.c.h.b16 %v2821
    %v3553 = vunpack.c.l.b16 %v2822
    %v3554 = vunpack.c.h.b16 %v2822
    %v3555 = vunpack.c.l.b16 %v2823
    %v3556 = vunpack.c.h.b16 %v2823
    %v3557 = vunpack.c.l.b16 %v2824
    %v3558 = vunpack.c.h.b16 %v2824
    %v3559 = vunpack.c.l.b16 %v2825
    %v3560 = vunpack.c.h.b16 %v2825
    %v3561 = vunpack.c.l.b16 %v2826
    %v3562 = vunpack.c.h.b16 %v2826
    %v3563 = vunpack.c.l.b16 %v2827
    %v3564 = vunpack.c.h.b16 %v2827
    %v3565 = vunpack.c.l.b16 %v2828
    %v3566 = vunpack.c.h.b16 %v2828
    %v3567 = vunpack.c.l.b16 %v2829
    %v3568 = vunpack.c.h.b16 %v2829
    %v3569 = vunpack.c.l.b16 %v2830
    %v3570 = vunpack.c.h.b16 %v2830
    %v3571 = vunpack.c.l.b16 %v2831
    %v3572 = vunpack.c.h.b16 %v2831
    %v3573 = vpack.c.b16 %v3447, %v3445
    %v3574 = vpack.c.b16 %v3448, %v3446
    %v3575 = vpack.c.b16 %v3451, %v3449
    %v3576 = vpack.c.b16 %v3452, %v3450
    %v3577 = vpack.c.b16 %v3455, %v3453
    %v3578 = vpack.c.b16 %v3456, %v3454
    %v3579 = vpack.c.b16 %v3459, %v3457
    %v3580 = vpack.c.b16 %v3460, %v3458
    %v3581 = vpack.c.b16 %v3463, %v3461
    %v3582 = vpack.c.b16 %v3464, %v3462
    %v3583 = vpack.c.b16 %v3467, %v3465
    %v3584 = vpack.c.b16 %v3468, %v3466
    %v3585 = vpack.c.b16 %v3471, %v3469
    %v3586 = vpack.c.b16 %v3472, %v3470
    %v3587 = vpack.c.b16 %v3475, %v3473
    %v3588 = vpack.c.b16 %v3476, %v3474
    %v3589 = vpack.c.b16 %v3479, %v3477
    %v3590 = vpack.c.b16 %v3480, %v3478
    %v3591 = vpack.c.b16 %v3483, %v3481
    %v3592 = vpack.c.b16 %v3484, %v3482
    %v3593 = vpack.c.b16 %v3487, %v3485
    %v3594 = vpack.c.b16 %v3488, %v3486
    %v3595 = vpack.c.b16 %v3491, %v3489
    %v3596 = vpack.c.b16 %v3492, %v3490
    %v3597 = vpack.c.b16 %v3495, %v3493
    %v3598 = vpack.c.b16 %v3496, %v3494
    %v3599 = vpack.c.b16 %v3499, %v3497
    %v3600 = vpack.c.b16 %v3500, %v3498
    %v3601 = vpack.c.b16 %v3503, %v3501
    %v3602 = vpack.c.b16 %v3504, %v3502
    %v3603 = vpack.c.b16 %v3507, %v3505
    %v3604 = vpack.c.b16 %v3508, %v3506
    %v3605 = vpack.c.b16 %v3511, %v3509
    %v3606 = vpack.c.b16 %v3512, %v3510
    %v3607 = vpack.c.b16 %v3515, %v3513
    %v3608 = vpack.c.b16 %v3516, %v3514
    %v3609 = vpack.c.b16 %v3519, %v3517
    %v3610 = vpack.c.b16 %v3520, %v3518
    %v3611 = vpack.c.b16 %v3523, %v3521
    %v3612 = vpack.c.b16 %v3524, %v3522
    %v3613 = vpack.c.b16 %v3527, %v3525
    %v3614 = vpack.c.b16 %v3528, %v3526
    %v3615 = vpack.c.b16 %v3531, %v3529
    %v3616 = vpack.c.b16 %v3532, %v3530
    %v3617 = vpack.c.b16 %v3535, %v3533
    %v3618 = vpack.c.b16 %v3536, %v3534
    %v3619 = vpack.c.b16 %v3539, %v3537
    %v3620 = vpack.c.b16 %v3540, %v3538
    %v3621 = vpack.c.b16 %v3543, %v3541
    %v3622 = vpack.c.b16 %v3544, %v3542
    %v3623 = vpack.c.b16 %v3547, %v3545
    %v3624 = vpack.c.b16 %v3548, %v3546
    %v3625 = vpack.c.b16 %v3551, %v3549
    %v3626 = vpack.c.b16 %v3552, %v3550
    %v3627 = vpack.c.b16 %v3555, %v3553
    %v3628 = vpack.c.b16 %v3556, %v3554
    %v3629 = vpack.c.b16 %v3559, %v3557
    %v3630 = vpack.c.b16 %v3560, %v3558
    %v3631 = vpack.c.b16 %v3563, %v3561
    %v3632 = vpack.c.b16 %v3564, %v3562
    %v3633 = vpack.c.b16 %v3567, %v3565
    %v3634 = vpack.c.b16 %v3568, %v3566
    %v3635 = vpack.c.b16 %v3571, %v3569
    %v3636 = vpack.c.b16 %v3572, %v3570
    %3701 = vmatpush.bf16.msra.mxu0 %v3587
    %3702 = vmatpush.bf16.msra.mxu0 %v3585
    %3703 = vmatpush.bf16.msra.mxu0 %v3583
    %3704 = vmatpush.bf16.msra.mxu0 %v3581
    %3705 = vmatpush.bf16.msra.mxu0 %v3579
    %3706 = vmatpush.bf16.msra.mxu0 %v3577
    %3707 = vmatpush.bf16.msra.mxu0 %v3575
    %3708 = vmatpush.bf16.msra.mxu0 %v3573
    %3709 = vmatmul.bf16.gmra.mxu0 %v3373
    %v3710 = vpop.f32.mrf.mxu0
    %v3711 = vadd.f32 %v3310, %v3710
    %v3712 = vpop.f32.mrf.mxu0
    %3713 = vdwg.mxu0
    %3714 = vmatpush.bf16.msra.mxu0 %v3603
    %3715 = vmatpush.bf16.msra.mxu0 %v3601
    %3716 = vmatpush.bf16.msra.mxu0 %v3599
    %3717 = vmatpush.bf16.msra.mxu0 %v3597
    %3718 = vmatpush.bf16.msra.mxu0 %v3595
    %3719 = vmatpush.bf16.msra.mxu0 %v3593
    %3720 = vmatpush.bf16.msra.mxu0 %v3591
    %3721 = vmatpush.bf16.msra.mxu0 %v3589
    %3722 = vmatmul.bf16.gmra.mxu0 %v3374
    %v3723 = vpop.f32.mrf.mxu0
    %v3724 = vadd.f32 %v3711, %v3723
    %v3725 = vpop.f32.mrf.mxu0
    %3726 = vdwg.mxu0
    %3727 = vmatpush.bf16.msra.mxu0 %v3619
    %3728 = vmatpush.bf16.msra.mxu0 %v3617
    %3729 = vmatpush.bf16.msra.mxu0 %v3615
    %3730 = vmatpush.bf16.msra.mxu0 %v3613
    %3731 = vmatpush.bf16.msra.mxu0 %v3611
    %3732 = vmatpush.bf16.msra.mxu0 %v3609
    %3733 = vmatpush.bf16.msra.mxu0 %v3607
    %3734 = vmatpush.bf16.msra.mxu0 %v3605
    %3735 = vmatmul.bf16.gmra.mxu0 %v3375
    %v3736 = vpop.f32.mrf.mxu0
    %v3737 = vadd.f32 %v3724, %v3736
    %v3738 = vpop.f32.mrf.mxu0
    %3739 = vdwg.mxu0
    %3740 = vmatpush.bf16.msra.mxu0 %v3635
    %3741 = vmatpush.bf16.msra.mxu0 %v3633
    %3742 = vmatpush.bf16.msra.mxu0 %v3631
    %3743 = vmatpush.bf16.msra.mxu0 %v3629
    %3744 = vmatpush.bf16.msra.mxu0 %v3627
    %3745 = vmatpush.bf16.msra.mxu0 %v3625
    %3746 = vmatpush.bf16.msra.mxu0 %v3623
    %3747 = vmatpush.bf16.msra.mxu0 %v3621
    %3748 = vmatmul.bf16.gmra.mxu0 %v3376
    %v3749 = vpop.f32.mrf.mxu0
    %v3750 = vadd.f32 %v3737, %v3749
    %v3751 = vpop.f32.mrf.mxu0
    %3752 = vdwg.mxu0
    %3753 = vmatpush.bf16.msra.mxu0 %v3588
    %3754 = vmatpush.bf16.msra.mxu0 %v3586
    %3755 = vmatpush.bf16.msra.mxu0 %v3584
    %3756 = vmatpush.bf16.msra.mxu0 %v3582
    %3757 = vmatpush.bf16.msra.mxu0 %v3580
    %3758 = vmatpush.bf16.msra.mxu0 %v3578
    %3759 = vmatpush.bf16.msra.mxu0 %v3576
    %3760 = vmatpush.bf16.msra.mxu0 %v3574
    %3761 = vmatmul.bf16.gmra.mxu0 %v3373
    %v3762 = vpop.f32.mrf.mxu0
    %v3763 = vadd.f32 %v3362, %v3762
    %v3764 = vpop.f32.mrf.mxu0
    %3765 = vdwg.mxu0
    %3766 = vmatpush.bf16.msra.mxu0 %v3604
    %3767 = vmatpush.bf16.msra.mxu0 %v3602
    %3768 = vmatpush.bf16.msra.mxu0 %v3600
    %3769 = vmatpush.bf16.msra.mxu0 %v3598
    %3770 = vmatpush.bf16.msra.mxu0 %v3596
    %3771 = vmatpush.bf16.msra.mxu0 %v3594
    %3772 = vmatpush.bf16.msra.mxu0 %v3592
    %3773 = vmatpush.bf16.msra.mxu0 %v3590
    %3774 = vmatmul.bf16.gmra.mxu0 %v3374
    %v3775 = vpop.f32.mrf.mxu0
    %v3776 = vadd.f32 %v3763, %v3775
    %v3777 = vpop.f32.mrf.mxu0
    %3778 = vdwg.mxu0
    %3779 = vmatpush.bf16.msra.mxu0 %v3620
    %3780 = vmatpush.bf16.msra.mxu0 %v3618
    %3781 = vmatpush.bf16.msra.mxu0 %v3616
    %3782 = vmatpush.bf16.msra.mxu0 %v3614
    %3783 = vmatpush.bf16.msra.mxu0 %v3612
    %3784 = vmatpush.bf16.msra.mxu0 %v3610
    %3785 = vmatpush.bf16.msra.mxu0 %v3608
    %3786 = vmatpush.bf16.msra.mxu0 %v3606
    %3787 = vmatmul.bf16.gmra.mxu0 %v3375
    %v3788 = vpop.f32.mrf.mxu0
    %v3789 = vadd.f32 %v3776, %v3788
    %v3790 = vpop.f32.mrf.mxu0
    %3791 = vdwg.mxu0
    %3792 = vmatpush.bf16.msra.mxu0 %v3636
    %3793 = vmatpush.bf16.msra.mxu0 %v3634
    %3794 = vmatpush.bf16.msra.mxu0 %v3632
    %3795 = vmatpush.bf16.msra.mxu0 %v3630
    %3796 = vmatpush.bf16.msra.mxu0 %v3628
    %3797 = vmatpush.bf16.msra.mxu0 %v3626
    %3798 = vmatpush.bf16.msra.mxu0 %v3624
    %3799 = vmatpush.bf16.msra.mxu0 %v3622
    %3800 = vmatmul.bf16.gmra.mxu0 %v3376
    %v3801 = vpop.f32.mrf.mxu0
    %v3802 = vadd.f32 %v3789, %v3801
    %v3803 = vpop.f32.mrf.mxu0
    %3804 = vdwg.mxu0
    %v3805 = vld [vmem:[#allocation16 + $0x400] sm:$0xff]
    %v3806 = vld [vmem:[#allocation16 + $0x408] sm:$0xff]
    %v3807 = vld [vmem:[#allocation16 + $0x410] sm:$0xff]
    %v3808 = vld [vmem:[#allocation16 + $0x418] sm:$0xff]
    %v3809 = vld [vmem:[#allocation16 + $0x420] sm:$0xff]
    %v3810 = vld [vmem:[#allocation16 + $0x428] sm:$0xff]
    %v3811 = vld [vmem:[#allocation16 + $0x430] sm:$0xff]
    %v3812 = vld [vmem:[#allocation16 + $0x438] sm:$0xff]
    %v3813 = vld [vmem:[#allocation16 + $0x440] sm:$0xff]
    %v3814 = vld [vmem:[#allocation16 + $0x448] sm:$0xff]
    %v3815 = vld [vmem:[#allocation16 + $0x450] sm:$0xff]
    %v3816 = vld [vmem:[#allocation16 + $0x458] sm:$0xff]
    %v3817 = vld [vmem:[#allocation16 + $0x460] sm:$0xff]
    %v3818 = vld [vmem:[#allocation16 + $0x468] sm:$0xff]
    %v3819 = vld [vmem:[#allocation16 + $0x470] sm:$0xff]
    %v3820 = vld [vmem:[#allocation16 + $0x478] sm:$0xff]
    %v3821 = vld [vmem:[#allocation16 + $0x480] sm:$0xff]
    %v3822 = vld [vmem:[#allocation16 + $0x488] sm:$0xff]
    %v3823 = vld [vmem:[#allocation16 + $0x490] sm:$0xff]
    %v3824 = vld [vmem:[#allocation16 + $0x498] sm:$0xff]
    %v3825 = vld [vmem:[#allocation16 + $0x4a0] sm:$0xff]
    %v3826 = vld [vmem:[#allocation16 + $0x4a8] sm:$0xff]
    %v3827 = vld [vmem:[#allocation16 + $0x4b0] sm:$0xff]
    %v3828 = vld [vmem:[#allocation16 + $0x4b8] sm:$0xff]
    %v3829 = vld [vmem:[#allocation16 + $0x4c0] sm:$0xff]
    %v3830 = vld [vmem:[#allocation16 + $0x4c8] sm:$0xff]
    %v3831 = vld [vmem:[#allocation16 + $0x4d0] sm:$0xff]
    %v3832 = vld [vmem:[#allocation16 + $0x4d8] sm:$0xff]
    %v3833 = vld [vmem:[#allocation16 + $0x4e0] sm:$0xff]
    %v3834 = vld [vmem:[#allocation16 + $0x4e8] sm:$0xff]
    %v3835 = vld [vmem:[#allocation16 + $0x4f0] sm:$0xff]
    %v3836 = vld [vmem:[#allocation16 + $0x4f8] sm:$0xff]
    %v3837 = vld [vmem:[#allocation16 + $0x500] sm:$0xff]
    %v3838 = vld [vmem:[#allocation16 + $0x508] sm:$0xff]
    %v3839 = vld [vmem:[#allocation16 + $0x510] sm:$0xff]
    %v3840 = vld [vmem:[#allocation16 + $0x518] sm:$0xff]
    %v3841 = vld [vmem:[#allocation16 + $0x520] sm:$0xff]
    %v3842 = vld [vmem:[#allocation16 + $0x528] sm:$0xff]
    %v3843 = vld [vmem:[#allocation16 + $0x530] sm:$0xff]
    %v3844 = vld [vmem:[#allocation16 + $0x538] sm:$0xff]
    %v3845 = vld [vmem:[#allocation16 + $0x540] sm:$0xff]
    %v3846 = vld [vmem:[#allocation16 + $0x548] sm:$0xff]
    %v3847 = vld [vmem:[#allocation16 + $0x550] sm:$0xff]
    %v3848 = vld [vmem:[#allocation16 + $0x558] sm:$0xff]
    %v3849 = vld [vmem:[#allocation16 + $0x560] sm:$0xff]
    %v3850 = vld [vmem:[#allocation16 + $0x568] sm:$0xff]
    %v3851 = vld [vmem:[#allocation16 + $0x570] sm:$0xff]
    %v3852 = vld [vmem:[#allocation16 + $0x578] sm:$0xff]
    %v3853 = vld [vmem:[#allocation16 + $0x580] sm:$0xff]
    %v3854 = vld [vmem:[#allocation16 + $0x588] sm:$0xff]
    %v3855 = vld [vmem:[#allocation16 + $0x590] sm:$0xff]
    %v3856 = vld [vmem:[#allocation16 + $0x598] sm:$0xff]
    %v3857 = vld [vmem:[#allocation16 + $0x5a0] sm:$0xff]
    %v3858 = vld [vmem:[#allocation16 + $0x5a8] sm:$0xff]
    %v3859 = vld [vmem:[#allocation16 + $0x5b0] sm:$0xff]
    %v3860 = vld [vmem:[#allocation16 + $0x5b8] sm:$0xff]
    %v3861 = vld [vmem:[#allocation16 + $0x5c0] sm:$0xff]
    %v3862 = vld [vmem:[#allocation16 + $0x5c8] sm:$0xff]
    %v3863 = vld [vmem:[#allocation16 + $0x5d0] sm:$0xff]
    %v3864 = vld [vmem:[#allocation16 + $0x5d8] sm:$0xff]
    %v3865 = vld [vmem:[#allocation16 + $0x5e0] sm:$0xff]
    %v3866 = vld [vmem:[#allocation16 + $0x5e8] sm:$0xff]
    %v3867 = vld [vmem:[#allocation16 + $0x5f0] sm:$0xff]
    %v3868 = vld [vmem:[#allocation16 + $0x5f8] sm:$0xff]
    %v3869 = vrot.slane %v2916, 2
    %v3870 = vrot.slane %v2920, 1
    %v3871 = vsel %vm2925, %v3870, %v3869
    %v3872 = vrot.slane %v2917, 2
    %v3873 = vrot.slane %v2921, 1
    %v3874 = vsel %vm2925, %v3873, %v3872
    %v3875 = vrot.slane %v2918, 2
    %v3876 = vrot.slane %v2922, 1
    %v3877 = vsel %vm2925, %v3876, %v3875
    %v3878 = vrot.slane %v2919, 2
    %v3879 = vrot.slane %v2923, 1
    %v3880 = vsel %vm2925, %v3879, %v3878
    %v3881 = vpack.c.b16 %v3871, %v3871
    %v3882 = vpack.c.b16 %v3874, %v3874
    %v3883 = vpack.c.b16 %v3877, %v3877
    %v3884 = vpack.c.b16 %v3880, %v3880
    %v3953 = vunpack.c.l.b16 %v3805
    %v3954 = vunpack.c.h.b16 %v3805
    %v3955 = vunpack.c.l.b16 %v3806
    %v3956 = vunpack.c.h.b16 %v3806
    %v3957 = vunpack.c.l.b16 %v3807
    %v3958 = vunpack.c.h.b16 %v3807
    %v3959 = vunpack.c.l.b16 %v3808
    %v3960 = vunpack.c.h.b16 %v3808
    %v3961 = vunpack.c.l.b16 %v3809
    %v3962 = vunpack.c.h.b16 %v3809
    %v3963 = vunpack.c.l.b16 %v3810
    %v3964 = vunpack.c.h.b16 %v3810
    %v3965 = vunpack.c.l.b16 %v3811
    %v3966 = vunpack.c.h.b16 %v3811
    %v3967 = vunpack.c.l.b16 %v3812
    %v3968 = vunpack.c.h.b16 %v3812
    %v3969 = vunpack.c.l.b16 %v3813
    %v3970 = vunpack.c.h.b16 %v3813
    %v3971 = vunpack.c.l.b16 %v3814
    %v3972 = vunpack.c.h.b16 %v3814
    %v3973 = vunpack.c.l.b16 %v3815
    %v3974 = vunpack.c.h.b16 %v3815
    %v3975 = vunpack.c.l.b16 %v3816
    %v3976 = vunpack.c.h.b16 %v3816
    %v3977 = vunpack.c.l.b16 %v3817
    %v3978 = vunpack.c.h.b16 %v3817
    %v3979 = vunpack.c.l.b16 %v3818
    %v3980 = vunpack.c.h.b16 %v3818
    %v3981 = vunpack.c.l.b16 %v3819
    %v3982 = vunpack.c.h.b16 %v3819
    %v3983 = vunpack.c.l.b16 %v3820
    %v3984 = vunpack.c.h.b16 %v3820
    %v3985 = vunpack.c.l.b16 %v3821
    %v3986 = vunpack.c.h.b16 %v3821
    %v3987 = vunpack.c.l.b16 %v3822
    %v3988 = vunpack.c.h.b16 %v3822
    %v3989 = vunpack.c.l.b16 %v3823
    %v3990 = vunpack.c.h.b16 %v3823
    %v3991 = vunpack.c.l.b16 %v3824
    %v3992 = vunpack.c.h.b16 %v3824
    %v3993 = vunpack.c.l.b16 %v3825
    %v3994 = vunpack.c.h.b16 %v3825
    %v3995 = vunpack.c.l.b16 %v3826
    %v3996 = vunpack.c.h.b16 %v3826
    %v3997 = vunpack.c.l.b16 %v3827
    %v3998 = vunpack.c.h.b16 %v3827
    %v3999 = vunpack.c.l.b16 %v3828
    %v4000 = vunpack.c.h.b16 %v3828
    %v4001 = vunpack.c.l.b16 %v3829
    %v4002 = vunpack.c.h.b16 %v3829
    %v4003 = vunpack.c.l.b16 %v3830
    %v4004 = vunpack.c.h.b16 %v3830
    %v4005 = vunpack.c.l.b16 %v3831
    %v4006 = vunpack.c.h.b16 %v3831
    %v4007 = vunpack.c.l.b16 %v3832
    %v4008 = vunpack.c.h.b16 %v3832
    %v4009 = vunpack.c.l.b16 %v3833
    %v4010 = vunpack.c.h.b16 %v3833
    %v4011 = vunpack.c.l.b16 %v3834
    %v4012 = vunpack.c.h.b16 %v3834
    %v4013 = vunpack.c.l.b16 %v3835
    %v4014 = vunpack.c.h.b16 %v3835
    %v4015 = vunpack.c.l.b16 %v3836
    %v4016 = vunpack.c.h.b16 %v3836
    %v4017 = vunpack.c.l.b16 %v3837
    %v4018 = vunpack.c.h.b16 %v3837
    %v4019 = vunpack.c.l.b16 %v3838
    %v4020 = vunpack.c.h.b16 %v3838
    %v4021 = vunpack.c.l.b16 %v3839
    %v4022 = vunpack.c.h.b16 %v3839
    %v4023 = vunpack.c.l.b16 %v3840
    %v4024 = vunpack.c.h.b16 %v3840
    %v4025 = vunpack.c.l.b16 %v3841
    %v4026 = vunpack.c.h.b16 %v3841
    %v4027 = vunpack.c.l.b16 %v3842
    %v4028 = vunpack.c.h.b16 %v3842
    %v4029 = vunpack.c.l.b16 %v3843
    %v4030 = vunpack.c.h.b16 %v3843
    %v4031 = vunpack.c.l.b16 %v3844
    %v4032 = vunpack.c.h.b16 %v3844
    %v4033 = vunpack.c.l.b16 %v3845
    %v4034 = vunpack.c.h.b16 %v3845
    %v4035 = vunpack.c.l.b16 %v3846
    %v4036 = vunpack.c.h.b16 %v3846
    %v4037 = vunpack.c.l.b16 %v3847
    %v4038 = vunpack.c.h.b16 %v3847
    %v4039 = vunpack.c.l.b16 %v3848
    %v4040 = vunpack.c.h.b16 %v3848
    %v4041 = vunpack.c.l.b16 %v3849
    %v4042 = vunpack.c.h.b16 %v3849
    %v4043 = vunpack.c.l.b16 %v3850
    %v4044 = vunpack.c.h.b16 %v3850
    %v4045 = vunpack.c.l.b16 %v3851
    %v4046 = vunpack.c.h.b16 %v3851
    %v4047 = vunpack.c.l.b16 %v3852
    %v4048 = vunpack.c.h.b16 %v3852
    %v4049 = vunpack.c.l.b16 %v3853
    %v4050 = vunpack.c.h.b16 %v3853
    %v4051 = vunpack.c.l.b16 %v3854
    %v4052 = vunpack.c.h.b16 %v3854
    %v4053 = vunpack.c.l.b16 %v3855
    %v4054 = vunpack.c.h.b16 %v3855
    %v4055 = vunpack.c.l.b16 %v3856
    %v4056 = vunpack.c.h.b16 %v3856
    %v4057 = vunpack.c.l.b16 %v3857
    %v4058 = vunpack.c.h.b16 %v3857
    %v4059 = vunpack.c.l.b16 %v3858
    %v4060 = vunpack.c.h.b16 %v3858
    %v4061 = vunpack.c.l.b16 %v3859
    %v4062 = vunpack.c.h.b16 %v3859
    %v4063 = vunpack.c.l.b16 %v3860
    %v4064 = vunpack.c.h.b16 %v3860
    %v4065 = vunpack.c.l.b16 %v3861
    %v4066 = vunpack.c.h.b16 %v3861
    %v4067 = vunpack.c.l.b16 %v3862
    %v4068 = vunpack.c.h.b16 %v3862
    %v4069 = vunpack.c.l.b16 %v3863
    %v4070 = vunpack.c.h.b16 %v3863
    %v4071 = vunpack.c.l.b16 %v3864
    %v4072 = vunpack.c.h.b16 %v3864
    %v4073 = vunpack.c.l.b16 %v3865
    %v4074 = vunpack.c.h.b16 %v3865
    %v4075 = vunpack.c.l.b16 %v3866
    %v4076 = vunpack.c.h.b16 %v3866
    %v4077 = vunpack.c.l.b16 %v3867
    %v4078 = vunpack.c.h.b16 %v3867
    %v4079 = vunpack.c.l.b16 %v3868
    %v4080 = vunpack.c.h.b16 %v3868
    %v4081 = vpack.c.b16 %v3955, %v3953
    %v4082 = vpack.c.b16 %v3956, %v3954
    %v4083 = vpack.c.b16 %v3959, %v3957
    %v4084 = vpack.c.b16 %v3960, %v3958
    %v4085 = vpack.c.b16 %v3963, %v3961
    %v4086 = vpack.c.b16 %v3964, %v3962
    %v4087 = vpack.c.b16 %v3967, %v3965
    %v4088 = vpack.c.b16 %v3968, %v3966
    %v4089 = vpack.c.b16 %v3971, %v3969
    %v4090 = vpack.c.b16 %v3972, %v3970
    %v4091 = vpack.c.b16 %v3975, %v3973
    %v4092 = vpack.c.b16 %v3976, %v3974
    %v4093 = vpack.c.b16 %v3979, %v3977
    %v4094 = vpack.c.b16 %v3980, %v3978
    %v4095 = vpack.c.b16 %v3983, %v3981
    %v4096 = vpack.c.b16 %v3984, %v3982
    %v4097 = vpack.c.b16 %v3987, %v3985
    %v4098 = vpack.c.b16 %v3988, %v3986
    %v4099 = vpack.c.b16 %v3991, %v3989
    %v4100 = vpack.c.b16 %v3992, %v3990
    %v4101 = vpack.c.b16 %v3995, %v3993
    %v4102 = vpack.c.b16 %v3996, %v3994
    %v4103 = vpack.c.b16 %v3999, %v3997
    %v4104 = vpack.c.b16 %v4000, %v3998
    %v4105 = vpack.c.b16 %v4003, %v4001
    %v4106 = vpack.c.b16 %v4004, %v4002
    %v4107 = vpack.c.b16 %v4007, %v4005
    %v4108 = vpack.c.b16 %v4008, %v4006
    %v4109 = vpack.c.b16 %v4011, %v4009
    %v4110 = vpack.c.b16 %v4012, %v4010
    %v4111 = vpack.c.b16 %v4015, %v4013
    %v4112 = vpack.c.b16 %v4016, %v4014
    %v4113 = vpack.c.b16 %v4019, %v4017
    %v4114 = vpack.c.b16 %v4020, %v4018
    %v4115 = vpack.c.b16 %v4023, %v4021
    %v4116 = vpack.c.b16 %v4024, %v4022
    %v4117 = vpack.c.b16 %v4027, %v4025
    %v4118 = vpack.c.b16 %v4028, %v4026
    %v4119 = vpack.c.b16 %v4031, %v4029
    %v4120 = vpack.c.b16 %v4032, %v4030
    %v4121 = vpack.c.b16 %v4035, %v4033
    %v4122 = vpack.c.b16 %v4036, %v4034
    %v4123 = vpack.c.b16 %v4039, %v4037
    %v4124 = vpack.c.b16 %v4040, %v4038
    %v4125 = vpack.c.b16 %v4043, %v4041
    %v4126 = vpack.c.b16 %v4044, %v4042
    %v4127 = vpack.c.b16 %v4047, %v4045
    %v4128 = vpack.c.b16 %v4048, %v4046
    %v4129 = vpack.c.b16 %v4051, %v4049
    %v4130 = vpack.c.b16 %v4052, %v4050
    %v4131 = vpack.c.b16 %v4055, %v4053
    %v4132 = vpack.c.b16 %v4056, %v4054
    %v4133 = vpack.c.b16 %v4059, %v4057
    %v4134 = vpack.c.b16 %v4060, %v4058
    %v4135 = vpack.c.b16 %v4063, %v4061
    %v4136 = vpack.c.b16 %v4064, %v4062
    %v4137 = vpack.c.b16 %v4067, %v4065
    %v4138 = vpack.c.b16 %v4068, %v4066
    %v4139 = vpack.c.b16 %v4071, %v4069
    %v4140 = vpack.c.b16 %v4072, %v4070
    %v4141 = vpack.c.b16 %v4075, %v4073
    %v4142 = vpack.c.b16 %v4076, %v4074
    %v4143 = vpack.c.b16 %v4079, %v4077
    %v4144 = vpack.c.b16 %v4080, %v4078
    %4209 = vmatpush.bf16.msra.mxu0 %v4095
    %4210 = vmatpush.bf16.msra.mxu0 %v4093
    %4211 = vmatpush.bf16.msra.mxu0 %v4091
    %4212 = vmatpush.bf16.msra.mxu0 %v4089
    %4213 = vmatpush.bf16.msra.mxu0 %v4087
    %4214 = vmatpush.bf16.msra.mxu0 %v4085
    %4215 = vmatpush.bf16.msra.mxu0 %v4083
    %4216 = vmatpush.bf16.msra.mxu0 %v4081
    %4217 = vmatmul.bf16.gmra.mxu0 %v3881
    %v4218 = vpop.f32.mrf.mxu0
    %v4219 = vadd.f32 0.0, %v4218
    %v4220 = vpop.f32.mrf.mxu0
    %4221 = vdwg.mxu0
    %4222 = vmatpush.bf16.msra.mxu0 %v4111
    %4223 = vmatpush.bf16.msra.mxu0 %v4109
    %4224 = vmatpush.bf16.msra.mxu0 %v4107
    %4225 = vmatpush.bf16.msra.mxu0 %v4105
    %4226 = vmatpush.bf16.msra.mxu0 %v4103
    %4227 = vmatpush.bf16.msra.mxu0 %v4101
    %4228 = vmatpush.bf16.msra.mxu0 %v4099
    %4229 = vmatpush.bf16.msra.mxu0 %v4097
    %4230 = vmatmul.bf16.gmra.mxu0 %v3882
    %v4231 = vpop.f32.mrf.mxu0
    %v4232 = vadd.f32 %v4219, %v4231
    %v4233 = vpop.f32.mrf.mxu0
    %4234 = vdwg.mxu0
    %4235 = vmatpush.bf16.msra.mxu0 %v4127
    %4236 = vmatpush.bf16.msra.mxu0 %v4125
    %4237 = vmatpush.bf16.msra.mxu0 %v4123
    %4238 = vmatpush.bf16.msra.mxu0 %v4121
    %4239 = vmatpush.bf16.msra.mxu0 %v4119
    %4240 = vmatpush.bf16.msra.mxu0 %v4117
    %4241 = vmatpush.bf16.msra.mxu0 %v4115
    %4242 = vmatpush.bf16.msra.mxu0 %v4113
    %4243 = vmatmul.bf16.gmra.mxu0 %v3883
    %v4244 = vpop.f32.mrf.mxu0
    %v4245 = vadd.f32 %v4232, %v4244
    %v4246 = vpop.f32.mrf.mxu0
    %4247 = vdwg.mxu0
    %4248 = vmatpush.bf16.msra.mxu0 %v4143
    %4249 = vmatpush.bf16.msra.mxu0 %v4141
    %4250 = vmatpush.bf16.msra.mxu0 %v4139
    %4251 = vmatpush.bf16.msra.mxu0 %v4137
    %4252 = vmatpush.bf16.msra.mxu0 %v4135
    %4253 = vmatpush.bf16.msra.mxu0 %v4133
    %4254 = vmatpush.bf16.msra.mxu0 %v4131
    %4255 = vmatpush.bf16.msra.mxu0 %v4129
    %4256 = vmatmul.bf16.gmra.mxu0 %v3884
    %v4257 = vpop.f32.mrf.mxu0
    %v4258 = vadd.f32 %v4245, %v4257
    %v4259 = vpop.f32.mrf.mxu0
    %4260 = vdwg.mxu0
    %4261 = vmatpush.bf16.msra.mxu0 %v4096
    %4262 = vmatpush.bf16.msra.mxu0 %v4094
    %4263 = vmatpush.bf16.msra.mxu0 %v4092
    %4264 = vmatpush.bf16.msra.mxu0 %v4090
    %4265 = vmatpush.bf16.msra.mxu0 %v4088
    %4266 = vmatpush.bf16.msra.mxu0 %v4086
    %4267 = vmatpush.bf16.msra.mxu0 %v4084
    %4268 = vmatpush.bf16.msra.mxu0 %v4082
    %4269 = vmatmul.bf16.gmra.mxu0 %v3881
    %v4270 = vpop.f32.mrf.mxu0
    %v4271 = vadd.f32 0.0, %v4270
    %v4272 = vpop.f32.mrf.mxu0
    %4273 = vdwg.mxu0
    %4274 = vmatpush.bf16.msra.mxu0 %v4112
    %4275 = vmatpush.bf16.msra.mxu0 %v4110
    %4276 = vmatpush.bf16.msra.mxu0 %v4108
    %4277 = vmatpush.bf16.msra.mxu0 %v4106
    %4278 = vmatpush.bf16.msra.mxu0 %v4104
    %4279 = vmatpush.bf16.msra.mxu0 %v4102
    %4280 = vmatpush.bf16.msra.mxu0 %v4100
    %4281 = vmatpush.bf16.msra.mxu0 %v4098
    %4282 = vmatmul.bf16.gmra.mxu0 %v3882
    %v4283 = vpop.f32.mrf.mxu0
    %v4284 = vadd.f32 %v4271, %v4283
    %v4285 = vpop.f32.mrf.mxu0
    %4286 = vdwg.mxu0
    %4287 = vmatpush.bf16.msra.mxu0 %v4128
    %4288 = vmatpush.bf16.msra.mxu0 %v4126
    %4289 = vmatpush.bf16.msra.mxu0 %v4124
    %4290 = vmatpush.bf16.msra.mxu0 %v4122
    %4291 = vmatpush.bf16.msra.mxu0 %v4120
    %4292 = vmatpush.bf16.msra.mxu0 %v4118
    %4293 = vmatpush.bf16.msra.mxu0 %v4116
    %4294 = vmatpush.bf16.msra.mxu0 %v4114
    %4295 = vmatmul.bf16.gmra.mxu0 %v3883
    %v4296 = vpop.f32.mrf.mxu0
    %v4297 = vadd.f32 %v4284, %v4296
    %v4298 = vpop.f32.mrf.mxu0
    %4299 = vdwg.mxu0
    %4300 = vmatpush.bf16.msra.mxu0 %v4144
    %4301 = vmatpush.bf16.msra.mxu0 %v4142
    %4302 = vmatpush.bf16.msra.mxu0 %v4140
    %4303 = vmatpush.bf16.msra.mxu0 %v4138
    %4304 = vmatpush.bf16.msra.mxu0 %v4136
    %4305 = vmatpush.bf16.msra.mxu0 %v4134
    %4306 = vmatpush.bf16.msra.mxu0 %v4132
    %4307 = vmatpush.bf16.msra.mxu0 %v4130
    %4308 = vmatmul.bf16.gmra.mxu0 %v3884
    %v4309 = vpop.f32.mrf.mxu0
    %v4310 = vadd.f32 %v4297, %v4309
    %v4311 = vpop.f32.mrf.mxu0
    %4312 = vdwg.mxu0
    %v4313 = vadd.f32 %v3750, %v4258
    %v4314 = vadd.f32 %v3802, %v4310
    %v4315 = vld [vmem:[#allocation16 + $0x600] sm:$0xff]
    %v4316 = vld [vmem:[#allocation16 + $0x608] sm:$0xff]
    %v4317 = vld [vmem:[#allocation16 + $0x610] sm:$0xff]
    %v4318 = vld [vmem:[#allocation16 + $0x618] sm:$0xff]
    %v4319 = vld [vmem:[#allocation16 + $0x620] sm:$0xff]
    %v4320 = vld [vmem:[#allocation16 + $0x628] sm:$0xff]
    %v4321 = vld [vmem:[#allocation16 + $0x630] sm:$0xff]
    %v4322 = vld [vmem:[#allocation16 + $0x638] sm:$0xff]
    %v4323 = vld [vmem:[#allocation16 + $0x640] sm:$0xff]
    %v4324 = vld [vmem:[#allocation16 + $0x648] sm:$0xff]
    %v4325 = vld [vmem:[#allocation16 + $0x650] sm:$0xff]
    %v4326 = vld [vmem:[#allocation16 + $0x658] sm:$0xff]
    %v4327 = vld [vmem:[#allocation16 + $0x660] sm:$0xff]
    %v4328 = vld [vmem:[#allocation16 + $0x668] sm:$0xff]
    %v4329 = vld [vmem:[#allocation16 + $0x670] sm:$0xff]
    %v4330 = vld [vmem:[#allocation16 + $0x678] sm:$0xff]
    %v4331 = vld [vmem:[#allocation16 + $0x680] sm:$0xff]
    %v4332 = vld [vmem:[#allocation16 + $0x688] sm:$0xff]
    %v4333 = vld [vmem:[#allocation16 + $0x690] sm:$0xff]
    %v4334 = vld [vmem:[#allocation16 + $0x698] sm:$0xff]
    %v4335 = vld [vmem:[#allocation16 + $0x6a0] sm:$0xff]
    %v4336 = vld [vmem:[#allocation16 + $0x6a8] sm:$0xff]
    %v4337 = vld [vmem:[#allocation16 + $0x6b0] sm:$0xff]
    %v4338 = vld [vmem:[#allocation16 + $0x6b8] sm:$0xff]
    %v4339 = vld [vmem:[#allocation16 + $0x6c0] sm:$0xff]
    %v4340 = vld [vmem:[#allocation16 + $0x6c8] sm:$0xff]
    %v4341 = vld [vmem:[#allocation16 + $0x6d0] sm:$0xff]
    %v4342 = vld [vmem:[#allocation16 + $0x6d8] sm:$0xff]
    %v4343 = vld [vmem:[#allocation16 + $0x6e0] sm:$0xff]
    %v4344 = vld [vmem:[#allocation16 + $0x6e8] sm:$0xff]
    %v4345 = vld [vmem:[#allocation16 + $0x6f0] sm:$0xff]
    %v4346 = vld [vmem:[#allocation16 + $0x6f8] sm:$0xff]
    %v4347 = vld [vmem:[#allocation16 + $0x700] sm:$0xff]
    %v4348 = vld [vmem:[#allocation16 + $0x708] sm:$0xff]
    %v4349 = vld [vmem:[#allocation16 + $0x710] sm:$0xff]
    %v4350 = vld [vmem:[#allocation16 + $0x718] sm:$0xff]
    %v4351 = vld [vmem:[#allocation16 + $0x720] sm:$0xff]
    %v4352 = vld [vmem:[#allocation16 + $0x728] sm:$0xff]
    %v4353 = vld [vmem:[#allocation16 + $0x730] sm:$0xff]
    %v4354 = vld [vmem:[#allocation16 + $0x738] sm:$0xff]
    %v4355 = vld [vmem:[#allocation16 + $0x740] sm:$0xff]
    %v4356 = vld [vmem:[#allocation16 + $0x748] sm:$0xff]
    %v4357 = vld [vmem:[#allocation16 + $0x750] sm:$0xff]
    %v4358 = vld [vmem:[#allocation16 + $0x758] sm:$0xff]
    %v4359 = vld [vmem:[#allocation16 + $0x760] sm:$0xff]
    %v4360 = vld [vmem:[#allocation16 + $0x768] sm:$0xff]
    %v4361 = vld [vmem:[#allocation16 + $0x770] sm:$0xff]
    %v4362 = vld [vmem:[#allocation16 + $0x778] sm:$0xff]
    %v4363 = vld [vmem:[#allocation16 + $0x780] sm:$0xff]
    %v4364 = vld [vmem:[#allocation16 + $0x788] sm:$0xff]
    %v4365 = vld [vmem:[#allocation16 + $0x790] sm:$0xff]
    %v4366 = vld [vmem:[#allocation16 + $0x798] sm:$0xff]
    %v4367 = vld [vmem:[#allocation16 + $0x7a0] sm:$0xff]
    %v4368 = vld [vmem:[#allocation16 + $0x7a8] sm:$0xff]
    %v4369 = vld [vmem:[#allocation16 + $0x7b0] sm:$0xff]
    %v4370 = vld [vmem:[#allocation16 + $0x7b8] sm:$0xff]
    %v4371 = vld [vmem:[#allocation16 + $0x7c0] sm:$0xff]
    %v4372 = vld [vmem:[#allocation16 + $0x7c8] sm:$0xff]
    %v4373 = vld [vmem:[#allocation16 + $0x7d0] sm:$0xff]
    %v4374 = vld [vmem:[#allocation16 + $0x7d8] sm:$0xff]
    %v4375 = vld [vmem:[#allocation16 + $0x7e0] sm:$0xff]
    %v4376 = vld [vmem:[#allocation16 + $0x7e8] sm:$0xff]
    %v4377 = vld [vmem:[#allocation16 + $0x7f0] sm:$0xff]
    %v4378 = vld [vmem:[#allocation16 + $0x7f8] sm:$0xff]
    %v4379 = vrot.slane %v2916, 3
    %v4380 = vrot.slane %v2920, 2
    %v4381 = vsel %vm2925, %v4380, %v4379
    %v4382 = vrot.slane %v2917, 3
    %v4383 = vrot.slane %v2921, 2
    %v4384 = vsel %vm2925, %v4383, %v4382
    %v4385 = vrot.slane %v2918, 3
    %v4386 = vrot.slane %v2922, 2
    %v4387 = vsel %vm2925, %v4386, %v4385
    %v4388 = vrot.slane %v2919, 3
    %v4389 = vrot.slane %v2923, 2
    %v4390 = vsel %vm2925, %v4389, %v4388
    %v4391 = vpack.c.b16 %v4381, %v4381
    %v4392 = vpack.c.b16 %v4384, %v4384
    %v4393 = vpack.c.b16 %v4387, %v4387
    %v4394 = vpack.c.b16 %v4390, %v4390
    %v4463 = vunpack.c.l.b16 %v4315
    %v4464 = vunpack.c.h.b16 %v4315
    %v4465 = vunpack.c.l.b16 %v4316
    %v4466 = vunpack.c.h.b16 %v4316
    %v4467 = vunpack.c.l.b16 %v4317
    %v4468 = vunpack.c.h.b16 %v4317
    %v4469 = vunpack.c.l.b16 %v4318
    %v4470 = vunpack.c.h.b16 %v4318
    %v4471 = vunpack.c.l.b16 %v4319
    %v4472 = vunpack.c.h.b16 %v4319
    %v4473 = vunpack.c.l.b16 %v4320
    %v4474 = vunpack.c.h.b16 %v4320
    %v4475 = vunpack.c.l.b16 %v4321
    %v4476 = vunpack.c.h.b16 %v4321
    %v4477 = vunpack.c.l.b16 %v4322
    %v4478 = vunpack.c.h.b16 %v4322
    %v4479 = vunpack.c.l.b16 %v4323
    %v4480 = vunpack.c.h.b16 %v4323
    %v4481 = vunpack.c.l.b16 %v4324
    %v4482 = vunpack.c.h.b16 %v4324
    %v4483 = vunpack.c.l.b16 %v4325
    %v4484 = vunpack.c.h.b16 %v4325
    %v4485 = vunpack.c.l.b16 %v4326
    %v4486 = vunpack.c.h.b16 %v4326
    %v4487 = vunpack.c.l.b16 %v4327
    %v4488 = vunpack.c.h.b16 %v4327
    %v4489 = vunpack.c.l.b16 %v4328
    %v4490 = vunpack.c.h.b16 %v4328
    %v4491 = vunpack.c.l.b16 %v4329
    %v4492 = vunpack.c.h.b16 %v4329
    %v4493 = vunpack.c.l.b16 %v4330
    %v4494 = vunpack.c.h.b16 %v4330
    %v4495 = vunpack.c.l.b16 %v4331
    %v4496 = vunpack.c.h.b16 %v4331
    %v4497 = vunpack.c.l.b16 %v4332
    %v4498 = vunpack.c.h.b16 %v4332
    %v4499 = vunpack.c.l.b16 %v4333
    %v4500 = vunpack.c.h.b16 %v4333
    %v4501 = vunpack.c.l.b16 %v4334
    %v4502 = vunpack.c.h.b16 %v4334
    %v4503 = vunpack.c.l.b16 %v4335
    %v4504 = vunpack.c.h.b16 %v4335
    %v4505 = vunpack.c.l.b16 %v4336
    %v4506 = vunpack.c.h.b16 %v4336
    %v4507 = vunpack.c.l.b16 %v4337
    %v4508 = vunpack.c.h.b16 %v4337
    %v4509 = vunpack.c.l.b16 %v4338
    %v4510 = vunpack.c.h.b16 %v4338
    %v4511 = vunpack.c.l.b16 %v4339
    %v4512 = vunpack.c.h.b16 %v4339
    %v4513 = vunpack.c.l.b16 %v4340
    %v4514 = vunpack.c.h.b16 %v4340
    %v4515 = vunpack.c.l.b16 %v4341
    %v4516 = vunpack.c.h.b16 %v4341
    %v4517 = vunpack.c.l.b16 %v4342
    %v4518 = vunpack.c.h.b16 %v4342
    %v4519 = vunpack.c.l.b16 %v4343
    %v4520 = vunpack.c.h.b16 %v4343
    %v4521 = vunpack.c.l.b16 %v4344
    %v4522 = vunpack.c.h.b16 %v4344
    %v4523 = vunpack.c.l.b16 %v4345
    %v4524 = vunpack.c.h.b16 %v4345
    %v4525 = vunpack.c.l.b16 %v4346
    %v4526 = vunpack.c.h.b16 %v4346
    %v4527 = vunpack.c.l.b16 %v4347
    %v4528 = vunpack.c.h.b16 %v4347
    %v4529 = vunpack.c.l.b16 %v4348
    %v4530 = vunpack.c.h.b16 %v4348
    %v4531 = vunpack.c.l.b16 %v4349
    %v4532 = vunpack.c.h.b16 %v4349
    %v4533 = vunpack.c.l.b16 %v4350
    %v4534 = vunpack.c.h.b16 %v4350
    %v4535 = vunpack.c.l.b16 %v4351
    %v4536 = vunpack.c.h.b16 %v4351
    %v4537 = vunpack.c.l.b16 %v4352
    %v4538 = vunpack.c.h.b16 %v4352
    %v4539 = vunpack.c.l.b16 %v4353
    %v4540 = vunpack.c.h.b16 %v4353
    %v4541 = vunpack.c.l.b16 %v4354
    %v4542 = vunpack.c.h.b16 %v4354
    %v4543 = vunpack.c.l.b16 %v4355
    %v4544 = vunpack.c.h.b16 %v4355
    %v4545 = vunpack.c.l.b16 %v4356
    %v4546 = vunpack.c.h.b16 %v4356
    %v4547 = vunpack.c.l.b16 %v4357
    %v4548 = vunpack.c.h.b16 %v4357
    %v4549 = vunpack.c.l.b16 %v4358
    %v4550 = vunpack.c.h.b16 %v4358
    %v4551 = vunpack.c.l.b16 %v4359
    %v4552 = vunpack.c.h.b16 %v4359
    %v4553 = vunpack.c.l.b16 %v4360
    %v4554 = vunpack.c.h.b16 %v4360
    %v4555 = vunpack.c.l.b16 %v4361
    %v4556 = vunpack.c.h.b16 %v4361
    %v4557 = vunpack.c.l.b16 %v4362
    %v4558 = vunpack.c.h.b16 %v4362
    %v4559 = vunpack.c.l.b16 %v4363
    %v4560 = vunpack.c.h.b16 %v4363
    %v4561 = vunpack.c.l.b16 %v4364
    %v4562 = vunpack.c.h.b16 %v4364
    %v4563 = vunpack.c.l.b16 %v4365
    %v4564 = vunpack.c.h.b16 %v4365
    %v4565 = vunpack.c.l.b16 %v4366
    %v4566 = vunpack.c.h.b16 %v4366
    %v4567 = vunpack.c.l.b16 %v4367
    %v4568 = vunpack.c.h.b16 %v4367
    %v4569 = vunpack.c.l.b16 %v4368
    %v4570 = vunpack.c.h.b16 %v4368
    %v4571 = vunpack.c.l.b16 %v4369
    %v4572 = vunpack.c.h.b16 %v4369
    %v4573 = vunpack.c.l.b16 %v4370
    %v4574 = vunpack.c.h.b16 %v4370
    %v4575 = vunpack.c.l.b16 %v4371
    %v4576 = vunpack.c.h.b16 %v4371
    %v4577 = vunpack.c.l.b16 %v4372
    %v4578 = vunpack.c.h.b16 %v4372
    %v4579 = vunpack.c.l.b16 %v4373
    %v4580 = vunpack.c.h.b16 %v4373
    %v4581 = vunpack.c.l.b16 %v4374
    %v4582 = vunpack.c.h.b16 %v4374
    %v4583 = vunpack.c.l.b16 %v4375
    %v4584 = vunpack.c.h.b16 %v4375
    %v4585 = vunpack.c.l.b16 %v4376
    %v4586 = vunpack.c.h.b16 %v4376
    %v4587 = vunpack.c.l.b16 %v4377
    %v4588 = vunpack.c.h.b16 %v4377
    %v4589 = vunpack.c.l.b16 %v4378
    %v4590 = vunpack.c.h.b16 %v4378
    %v4591 = vpack.c.b16 %v4465, %v4463
    %v4592 = vpack.c.b16 %v4466, %v4464
    %v4593 = vpack.c.b16 %v4469, %v4467
    %v4594 = vpack.c.b16 %v4470, %v4468
    %v4595 = vpack.c.b16 %v4473, %v4471
    %v4596 = vpack.c.b16 %v4474, %v4472
    %v4597 = vpack.c.b16 %v4477, %v4475
    %v4598 = vpack.c.b16 %v4478, %v4476
    %v4599 = vpack.c.b16 %v4481, %v4479
    %v4600 = vpack.c.b16 %v4482, %v4480
    %v4601 = vpack.c.b16 %v4485, %v4483
    %v4602 = vpack.c.b16 %v4486, %v4484
    %v4603 = vpack.c.b16 %v4489, %v4487
    %v4604 = vpack.c.b16 %v4490, %v4488
    %v4605 = vpack.c.b16 %v4493, %v4491
    %v4606 = vpack.c.b16 %v4494, %v4492
    %v4607 = vpack.c.b16 %v4497, %v4495
    %v4608 = vpack.c.b16 %v4498, %v4496
    %v4609 = vpack.c.b16 %v4501, %v4499
    %v4610 = vpack.c.b16 %v4502, %v4500
    %v4611 = vpack.c.b16 %v4505, %v4503
    %v4612 = vpack.c.b16 %v4506, %v4504
    %v4613 = vpack.c.b16 %v4509, %v4507
    %v4614 = vpack.c.b16 %v4510, %v4508
    %v4615 = vpack.c.b16 %v4513, %v4511
    %v4616 = vpack.c.b16 %v4514, %v4512
    %v4617 = vpack.c.b16 %v4517, %v4515
    %v4618 = vpack.c.b16 %v4518, %v4516
    %v4619 = vpack.c.b16 %v4521, %v4519
    %v4620 = vpack.c.b16 %v4522, %v4520
    %v4621 = vpack.c.b16 %v4525, %v4523
    %v4622 = vpack.c.b16 %v4526, %v4524
    %v4623 = vpack.c.b16 %v4529, %v4527
    %v4624 = vpack.c.b16 %v4530, %v4528
    %v4625 = vpack.c.b16 %v4533, %v4531
    %v4626 = vpack.c.b16 %v4534, %v4532
    %v4627 = vpack.c.b16 %v4537, %v4535
    %v4628 = vpack.c.b16 %v4538, %v4536
    %v4629 = vpack.c.b16 %v4541, %v4539
    %v4630 = vpack.c.b16 %v4542, %v4540
    %v4631 = vpack.c.b16 %v4545, %v4543
    %v4632 = vpack.c.b16 %v4546, %v4544
    %v4633 = vpack.c.b16 %v4549, %v4547
    %v4634 = vpack.c.b16 %v4550, %v4548
    %v4635 = vpack.c.b16 %v4553, %v4551
    %v4636 = vpack.c.b16 %v4554, %v4552
    %v4637 = vpack.c.b16 %v4557, %v4555
    %v4638 = vpack.c.b16 %v4558, %v4556
    %v4639 = vpack.c.b16 %v4561, %v4559
    %v4640 = vpack.c.b16 %v4562, %v4560
    %v4641 = vpack.c.b16 %v4565, %v4563
    %v4642 = vpack.c.b16 %v4566, %v4564
    %v4643 = vpack.c.b16 %v4569, %v4567
    %v4644 = vpack.c.b16 %v4570, %v4568
    %v4645 = vpack.c.b16 %v4573, %v4571
    %v4646 = vpack.c.b16 %v4574, %v4572
    %v4647 = vpack.c.b16 %v4577, %v4575
    %v4648 = vpack.c.b16 %v4578, %v4576
    %v4649 = vpack.c.b16 %v4581, %v4579
    %v4650 = vpack.c.b16 %v4582, %v4580
    %v4651 = vpack.c.b16 %v4585, %v4583
    %v4652 = vpack.c.b16 %v4586, %v4584
    %v4653 = vpack.c.b16 %v4589, %v4587
    %v4654 = vpack.c.b16 %v4590, %v4588
    %4719 = vmatpush.bf16.msra.mxu0 %v4605
    %4720 = vmatpush.bf16.msra.mxu0 %v4603
    %4721 = vmatpush.bf16.msra.mxu0 %v4601
    %4722 = vmatpush.bf16.msra.mxu0 %v4599
    %4723 = vmatpush.bf16.msra.mxu0 %v4597
    %4724 = vmatpush.bf16.msra.mxu0 %v4595
    %4725 = vmatpush.bf16.msra.mxu0 %v4593
    %4726 = vmatpush.bf16.msra.mxu0 %v4591
    %4727 = vmatmul.bf16.gmra.mxu0 %v4391
    %v4728 = vpop.f32.mrf.mxu0
    %v4729 = vadd.f32 0.0, %v4728
    %v4730 = vpop.f32.mrf.mxu0
    %4731 = vdwg.mxu0
    %4732 = vmatpush.bf16.msra.mxu0 %v4621
    %4733 = vmatpush.bf16.msra.mxu0 %v4619
    %4734 = vmatpush.bf16.msra.mxu0 %v4617
    %4735 = vmatpush.bf16.msra.mxu0 %v4615
    %4736 = vmatpush.bf16.msra.mxu0 %v4613
    %4737 = vmatpush.bf16.msra.mxu0 %v4611
    %4738 = vmatpush.bf16.msra.mxu0 %v4609
    %4739 = vmatpush.bf16.msra.mxu0 %v4607
    %4740 = vmatmul.bf16.gmra.mxu0 %v4392
    %v4741 = vpop.f32.mrf.mxu0
    %v4742 = vadd.f32 %v4729, %v4741
    %v4743 = vpop.f32.mrf.mxu0
    %4744 = vdwg.mxu0
    %4745 = vmatpush.bf16.msra.mxu0 %v4637
    %4746 = vmatpush.bf16.msra.mxu0 %v4635
    %4747 = vmatpush.bf16.msra.mxu0 %v4633
    %4748 = vmatpush.bf16.msra.mxu0 %v4631
    %4749 = vmatpush.bf16.msra.mxu0 %v4629
    %4750 = vmatpush.bf16.msra.mxu0 %v4627
    %4751 = vmatpush.bf16.msra.mxu0 %v4625
    %4752 = vmatpush.bf16.msra.mxu0 %v4623
    %4753 = vmatmul.bf16.gmra.mxu0 %v4393
    %v4754 = vpop.f32.mrf.mxu0
    %v4755 = vadd.f32 %v4742, %v4754
    %v4756 = vpop.f32.mrf.mxu0
    %4757 = vdwg.mxu0
    %4758 = vmatpush.bf16.msra.mxu0 %v4653
    %4759 = vmatpush.bf16.msra.mxu0 %v4651
    %4760 = vmatpush.bf16.msra.mxu0 %v4649
    %4761 = vmatpush.bf16.msra.mxu0 %v4647
    %4762 = vmatpush.bf16.msra.mxu0 %v4645
    %4763 = vmatpush.bf16.msra.mxu0 %v4643
    %4764 = vmatpush.bf16.msra.mxu0 %v4641
    %4765 = vmatpush.bf16.msra.mxu0 %v4639
    %4766 = vmatmul.bf16.gmra.mxu0 %v4394
    %v4767 = vpop.f32.mrf.mxu0
    %v4768 = vadd.f32 %v4755, %v4767
    %v4769 = vpop.f32.mrf.mxu0
    %4770 = vdwg.mxu0
    %4771 = vmatpush.bf16.msra.mxu0 %v4606
    %4772 = vmatpush.bf16.msra.mxu0 %v4604
    %4773 = vmatpush.bf16.msra.mxu0 %v4602
    %4774 = vmatpush.bf16.msra.mxu0 %v4600
    %4775 = vmatpush.bf16.msra.mxu0 %v4598
    %4776 = vmatpush.bf16.msra.mxu0 %v4596
    %4777 = vmatpush.bf16.msra.mxu0 %v4594
    %4778 = vmatpush.bf16.msra.mxu0 %v4592
    %4779 = vmatmul.bf16.gmra.mxu0 %v4391
    %v4780 = vpop.f32.mrf.mxu0
    %v4781 = vadd.f32 0.0, %v4780
    %v4782 = vpop.f32.mrf.mxu0
    %4783 = vdwg.mxu0
    %4784 = vmatpush.bf16.msra.mxu0 %v4622
    %4785 = vmatpush.bf16.msra.mxu0 %v4620
    %4786 = vmatpush.bf16.msra.mxu0 %v4618
    %4787 = vmatpush.bf16.msra.mxu0 %v4616
    %4788 = vmatpush.bf16.msra.mxu0 %v4614
    %4789 = vmatpush.bf16.msra.mxu0 %v4612
    %4790 = vmatpush.bf16.msra.mxu0 %v4610
    %4791 = vmatpush.bf16.msra.mxu0 %v4608
    %4792 = vmatmul.bf16.gmra.mxu0 %v4392
    %v4793 = vpop.f32.mrf.mxu0
    %v4794 = vadd.f32 %v4781, %v4793
    %v4795 = vpop.f32.mrf.mxu0
    %4796 = vdwg.mxu0
    %4797 = vmatpush.bf16.msra.mxu0 %v4638
    %4798 = vmatpush.bf16.msra.mxu0 %v4636
    %4799 = vmatpush.bf16.msra.mxu0 %v4634
    %4800 = vmatpush.bf16.msra.mxu0 %v4632
    %4801 = vmatpush.bf16.msra.mxu0 %v4630
    %4802 = vmatpush.bf16.msra.mxu0 %v4628
    %4803 = vmatpush.bf16.msra.mxu0 %v4626
    %4804 = vmatpush.bf16.msra.mxu0 %v4624
    %4805 = vmatmul.bf16.gmra.mxu0 %v4393
    %v4806 = vpop.f32.mrf.mxu0
    %v4807 = vadd.f32 %v4794, %v4806
    %v4808 = vpop.f32.mrf.mxu0
    %4809 = vdwg.mxu0
    %4810 = vmatpush.bf16.msra.mxu0 %v4654
    %4811 = vmatpush.bf16.msra.mxu0 %v4652
    %4812 = vmatpush.bf16.msra.mxu0 %v4650
    %4813 = vmatpush.bf16.msra.mxu0 %v4648
    %4814 = vmatpush.bf16.msra.mxu0 %v4646
    %4815 = vmatpush.bf16.msra.mxu0 %v4644
    %4816 = vmatpush.bf16.msra.mxu0 %v4642
    %4817 = vmatpush.bf16.msra.mxu0 %v4640
    %4818 = vmatmul.bf16.gmra.mxu0 %v4394
    %v4819 = vpop.f32.mrf.mxu0
    %v4820 = vadd.f32 %v4807, %v4819
    %v4821 = vpop.f32.mrf.mxu0
    %4822 = vdwg.mxu0
    %v4823 = vadd.f32 %v4313, %v4768
    %v4824 = vadd.f32 %v4314, %v4820
    %v4825 = vld [vmem:[#allocation16 + $0x800] sm:$0xff]
    %v4826 = vld [vmem:[#allocation16 + $0x808] sm:$0xff]
    %v4827 = vld [vmem:[#allocation16 + $0x810] sm:$0xff]
    %v4828 = vld [vmem:[#allocation16 + $0x818] sm:$0xff]
    %v4829 = vld [vmem:[#allocation16 + $0x820] sm:$0xff]
    %v4830 = vld [vmem:[#allocation16 + $0x828] sm:$0xff]
    %v4831 = vld [vmem:[#allocation16 + $0x830] sm:$0xff]
    %v4832 = vld [vmem:[#allocation16 + $0x838] sm:$0xff]
    %v4833 = vld [vmem:[#allocation16 + $0x840] sm:$0xff]
    %v4834 = vld [vmem:[#allocation16 + $0x848] sm:$0xff]
    %v4835 = vld [vmem:[#allocation16 + $0x850] sm:$0xff]
    %v4836 = vld [vmem:[#allocation16 + $0x858] sm:$0xff]
    %v4837 = vld [vmem:[#allocation16 + $0x860] sm:$0xff]
    %v4838 = vld [vmem:[#allocation16 + $0x868] sm:$0xff]
    %v4839 = vld [vmem:[#allocation16 + $0x870] sm:$0xff]
    %v4840 = vld [vmem:[#allocation16 + $0x878] sm:$0xff]
    %v4841 = vld [vmem:[#allocation16 + $0x880] sm:$0xff]
    %v4842 = vld [vmem:[#allocation16 + $0x888] sm:$0xff]
    %v4843 = vld [vmem:[#allocation16 + $0x890] sm:$0xff]
    %v4844 = vld [vmem:[#allocation16 + $0x898] sm:$0xff]
    %v4845 = vld [vmem:[#allocation16 + $0x8a0] sm:$0xff]
    %v4846 = vld [vmem:[#allocation16 + $0x8a8] sm:$0xff]
    %v4847 = vld [vmem:[#allocation16 + $0x8b0] sm:$0xff]
    %v4848 = vld [vmem:[#allocation16 + $0x8b8] sm:$0xff]
    %v4849 = vld [vmem:[#allocation16 + $0x8c0] sm:$0xff]
    %v4850 = vld [vmem:[#allocation16 + $0x8c8] sm:$0xff]
    %v4851 = vld [vmem:[#allocation16 + $0x8d0] sm:$0xff]
    %v4852 = vld [vmem:[#allocation16 + $0x8d8] sm:$0xff]
    %v4853 = vld [vmem:[#allocation16 + $0x8e0] sm:$0xff]
    %v4854 = vld [vmem:[#allocation16 + $0x8e8] sm:$0xff]
    %v4855 = vld [vmem:[#allocation16 + $0x8f0] sm:$0xff]
    %v4856 = vld [vmem:[#allocation16 + $0x8f8] sm:$0xff]
    %v4857 = vld [vmem:[#allocation16 + $0x900] sm:$0xff]
    %v4858 = vld [vmem:[#allocation16 + $0x908] sm:$0xff]
    %v4859 = vld [vmem:[#allocation16 + $0x910] sm:$0xff]
    %v4860 = vld [vmem:[#allocation16 + $0x918] sm:$0xff]
    %v4861 = vld [vmem:[#allocation16 + $0x920] sm:$0xff]
    %v4862 = vld [vmem:[#allocation16 + $0x928] sm:$0xff]
    %v4863 = vld [vmem:[#allocation16 + $0x930] sm:$0xff]
    %v4864 = vld [vmem:[#allocation16 + $0x938] sm:$0xff]
    %v4865 = vld [vmem:[#allocation16 + $0x940] sm:$0xff]
    %v4866 = vld [vmem:[#allocation16 + $0x948] sm:$0xff]
    %v4867 = vld [vmem:[#allocation16 + $0x950] sm:$0xff]
    %v4868 = vld [vmem:[#allocation16 + $0x958] sm:$0xff]
    %v4869 = vld [vmem:[#allocation16 + $0x960] sm:$0xff]
    %v4870 = vld [vmem:[#allocation16 + $0x968] sm:$0xff]
    %v4871 = vld [vmem:[#allocation16 + $0x970] sm:$0xff]
    %v4872 = vld [vmem:[#allocation16 + $0x978] sm:$0xff]
    %v4873 = vld [vmem:[#allocation16 + $0x980] sm:$0xff]
    %v4874 = vld [vmem:[#allocation16 + $0x988] sm:$0xff]
    %v4875 = vld [vmem:[#allocation16 + $0x990] sm:$0xff]
    %v4876 = vld [vmem:[#allocation16 + $0x998] sm:$0xff]
    %v4877 = vld [vmem:[#allocation16 + $0x9a0] sm:$0xff]
    %v4878 = vld [vmem:[#allocation16 + $0x9a8] sm:$0xff]
    %v4879 = vld [vmem:[#allocation16 + $0x9b0] sm:$0xff]
    %v4880 = vld [vmem:[#allocation16 + $0x9b8] sm:$0xff]
    %v4881 = vld [vmem:[#allocation16 + $0x9c0] sm:$0xff]
    %v4882 = vld [vmem:[#allocation16 + $0x9c8] sm:$0xff]
    %v4883 = vld [vmem:[#allocation16 + $0x9d0] sm:$0xff]
    %v4884 = vld [vmem:[#allocation16 + $0x9d8] sm:$0xff]
    %v4885 = vld [vmem:[#allocation16 + $0x9e0] sm:$0xff]
    %v4886 = vld [vmem:[#allocation16 + $0x9e8] sm:$0xff]
    %v4887 = vld [vmem:[#allocation16 + $0x9f0] sm:$0xff]
    %v4888 = vld [vmem:[#allocation16 + $0x9f8] sm:$0xff]
    %v4889 = vrot.slane %v2916, 4
    %v4890 = vrot.slane %v2920, 3
    %v4891 = vsel %vm2925, %v4890, %v4889
    %v4892 = vrot.slane %v2917, 4
    %v4893 = vrot.slane %v2921, 3
    %v4894 = vsel %vm2925, %v4893, %v4892
    %v4895 = vrot.slane %v2918, 4
    %v4896 = vrot.slane %v2922, 3
    %v4897 = vsel %vm2925, %v4896, %v4895
    %v4898 = vrot.slane %v2919, 4
    %v4899 = vrot.slane %v2923, 3
    %v4900 = vsel %vm2925, %v4899, %v4898
    %v4901 = vpack.c.b16 %v4891, %v4891
    %v4902 = vpack.c.b16 %v4894, %v4894
    %v4903 = vpack.c.b16 %v4897, %v4897
    %v4904 = vpack.c.b16 %v4900, %v4900
    %v4973 = vunpack.c.l.b16 %v4825
    %v4974 = vunpack.c.h.b16 %v4825
    %v4975 = vunpack.c.l.b16 %v4826
    %v4976 = vunpack.c.h.b16 %v4826
    %v4977 = vunpack.c.l.b16 %v4827
    %v4978 = vunpack.c.h.b16 %v4827
    %v4979 = vunpack.c.l.b16 %v4828
    %v4980 = vunpack.c.h.b16 %v4828
    %v4981 = vunpack.c.l.b16 %v4829
    %v4982 = vunpack.c.h.b16 %v4829
    %v4983 = vunpack.c.l.b16 %v4830
    %v4984 = vunpack.c.h.b16 %v4830
    %v4985 = vunpack.c.l.b16 %v4831
    %v4986 = vunpack.c.h.b16 %v4831
    %v4987 = vunpack.c.l.b16 %v4832
    %v4988 = vunpack.c.h.b16 %v4832
    %v4989 = vunpack.c.l.b16 %v4833
    %v4990 = vunpack.c.h.b16 %v4833
    %v4991 = vunpack.c.l.b16 %v4834
    %v4992 = vunpack.c.h.b16 %v4834
    %v4993 = vunpack.c.l.b16 %v4835
    %v4994 = vunpack.c.h.b16 %v4835
    %v4995 = vunpack.c.l.b16 %v4836
    %v4996 = vunpack.c.h.b16 %v4836
    %v4997 = vunpack.c.l.b16 %v4837
    %v4998 = vunpack.c.h.b16 %v4837
    %v4999 = vunpack.c.l.b16 %v4838
    %v5000 = vunpack.c.h.b16 %v4838
    %v5001 = vunpack.c.l.b16 %v4839
    %v5002 = vunpack.c.h.b16 %v4839
    %v5003 = vunpack.c.l.b16 %v4840
    %v5004 = vunpack.c.h.b16 %v4840
    %v5005 = vunpack.c.l.b16 %v4841
    %v5006 = vunpack.c.h.b16 %v4841
    %v5007 = vunpack.c.l.b16 %v4842
    %v5008 = vunpack.c.h.b16 %v4842
    %v5009 = vunpack.c.l.b16 %v4843
    %v5010 = vunpack.c.h.b16 %v4843
    %v5011 = vunpack.c.l.b16 %v4844
    %v5012 = vunpack.c.h.b16 %v4844
    %v5013 = vunpack.c.l.b16 %v4845
    %v5014 = vunpack.c.h.b16 %v4845
    %v5015 = vunpack.c.l.b16 %v4846
    %v5016 = vunpack.c.h.b16 %v4846
    %v5017 = vunpack.c.l.b16 %v4847
    %v5018 = vunpack.c.h.b16 %v4847
    %v5019 = vunpack.c.l.b16 %v4848
    %v5020 = vunpack.c.h.b16 %v4848
    %v5021 = vunpack.c.l.b16 %v4849
    %v5022 = vunpack.c.h.b16 %v4849
    %v5023 = vunpack.c.l.b16 %v4850
    %v5024 = vunpack.c.h.b16 %v4850
    %v5025 = vunpack.c.l.b16 %v4851
    %v5026 = vunpack.c.h.b16 %v4851
    %v5027 = vunpack.c.l.b16 %v4852
    %v5028 = vunpack.c.h.b16 %v4852
    %v5029 = vunpack.c.l.b16 %v4853
    %v5030 = vunpack.c.h.b16 %v4853
    %v5031 = vunpack.c.l.b16 %v4854
    %v5032 = vunpack.c.h.b16 %v4854
    %v5033 = vunpack.c.l.b16 %v4855
    %v5034 = vunpack.c.h.b16 %v4855
    %v5035 = vunpack.c.l.b16 %v4856
    %v5036 = vunpack.c.h.b16 %v4856
    %v5037 = vunpack.c.l.b16 %v4857
    %v5038 = vunpack.c.h.b16 %v4857
    %v5039 = vunpack.c.l.b16 %v4858
    %v5040 = vunpack.c.h.b16 %v4858
    %v5041 = vunpack.c.l.b16 %v4859
    %v5042 = vunpack.c.h.b16 %v4859
    %v5043 = vunpack.c.l.b16 %v4860
    %v5044 = vunpack.c.h.b16 %v4860
    %v5045 = vunpack.c.l.b16 %v4861
    %v5046 = vunpack.c.h.b16 %v4861
    %v5047 = vunpack.c.l.b16 %v4862
    %v5048 = vunpack.c.h.b16 %v4862
    %v5049 = vunpack.c.l.b16 %v4863
    %v5050 = vunpack.c.h.b16 %v4863
    %v5051 = vunpack.c.l.b16 %v4864
    %v5052 = vunpack.c.h.b16 %v4864
    %v5053 = vunpack.c.l.b16 %v4865
    %v5054 = vunpack.c.h.b16 %v4865
    %v5055 = vunpack.c.l.b16 %v4866
    %v5056 = vunpack.c.h.b16 %v4866
    %v5057 = vunpack.c.l.b16 %v4867
    %v5058 = vunpack.c.h.b16 %v4867
    %v5059 = vunpack.c.l.b16 %v4868
    %v5060 = vunpack.c.h.b16 %v4868
    %v5061 = vunpack.c.l.b16 %v4869
    %v5062 = vunpack.c.h.b16 %v4869
    %v5063 = vunpack.c.l.b16 %v4870
    %v5064 = vunpack.c.h.b16 %v4870
    %v5065 = vunpack.c.l.b16 %v4871
    %v5066 = vunpack.c.h.b16 %v4871
    %v5067 = vunpack.c.l.b16 %v4872
    %v5068 = vunpack.c.h.b16 %v4872
    %v5069 = vunpack.c.l.b16 %v4873
    %v5070 = vunpack.c.h.b16 %v4873
    %v5071 = vunpack.c.l.b16 %v4874
    %v5072 = vunpack.c.h.b16 %v4874
    %v5073 = vunpack.c.l.b16 %v4875
    %v5074 = vunpack.c.h.b16 %v4875
    %v5075 = vunpack.c.l.b16 %v4876
    %v5076 = vunpack.c.h.b16 %v4876
    %v5077 = vunpack.c.l.b16 %v4877
    %v5078 = vunpack.c.h.b16 %v4877
    %v5079 = vunpack.c.l.b16 %v4878
    %v5080 = vunpack.c.h.b16 %v4878
    %v5081 = vunpack.c.l.b16 %v4879
    %v5082 = vunpack.c.h.b16 %v4879
    %v5083 = vunpack.c.l.b16 %v4880
    %v5084 = vunpack.c.h.b16 %v4880
    %v5085 = vunpack.c.l.b16 %v4881
    %v5086 = vunpack.c.h.b16 %v4881
    %v5087 = vunpack.c.l.b16 %v4882
    %v5088 = vunpack.c.h.b16 %v4882
    %v5089 = vunpack.c.l.b16 %v4883
    %v5090 = vunpack.c.h.b16 %v4883
    %v5091 = vunpack.c.l.b16 %v4884
    %v5092 = vunpack.c.h.b16 %v4884
    %v5093 = vunpack.c.l.b16 %v4885
    %v5094 = vunpack.c.h.b16 %v4885
    %v5095 = vunpack.c.l.b16 %v4886
    %v5096 = vunpack.c.h.b16 %v4886
    %v5097 = vunpack.c.l.b16 %v4887
    %v5098 = vunpack.c.h.b16 %v4887
    %v5099 = vunpack.c.l.b16 %v4888
    %v5100 = vunpack.c.h.b16 %v4888
    %v5101 = vpack.c.b16 %v4975, %v4973
    %v5102 = vpack.c.b16 %v4976, %v4974
    %v5103 = vpack.c.b16 %v4979, %v4977
    %v5104 = vpack.c.b16 %v4980, %v4978
    %v5105 = vpack.c.b16 %v4983, %v4981
    %v5106 = vpack.c.b16 %v4984, %v4982
    %v5107 = vpack.c.b16 %v4987, %v4985
    %v5108 = vpack.c.b16 %v4988, %v4986
    %v5109 = vpack.c.b16 %v4991, %v4989
    %v5110 = vpack.c.b16 %v4992, %v4990
    %v5111 = vpack.c.b16 %v4995, %v4993
    %v5112 = vpack.c.b16 %v4996, %v4994
    %v5113 = vpack.c.b16 %v4999, %v4997
    %v5114 = vpack.c.b16 %v5000, %v4998
    %v5115 = vpack.c.b16 %v5003, %v5001
    %v5116 = vpack.c.b16 %v5004, %v5002
    %v5117 = vpack.c.b16 %v5007, %v5005
    %v5118 = vpack.c.b16 %v5008, %v5006
    %v5119 = vpack.c.b16 %v5011, %v5009
    %v5120 = vpack.c.b16 %v5012, %v5010
    %v5121 = vpack.c.b16 %v5015, %v5013
    %v5122 = vpack.c.b16 %v5016, %v5014
    %v5123 = vpack.c.b16 %v5019, %v5017
    %v5124 = vpack.c.b16 %v5020, %v5018
    %v5125 = vpack.c.b16 %v5023, %v5021
    %v5126 = vpack.c.b16 %v5024, %v5022
    %v5127 = vpack.c.b16 %v5027, %v5025
    %v5128 = vpack.c.b16 %v5028, %v5026
    %v5129 = vpack.c.b16 %v5031, %v5029
    %v5130 = vpack.c.b16 %v5032, %v5030
    %v5131 = vpack.c.b16 %v5035, %v5033
    %v5132 = vpack.c.b16 %v5036, %v5034
    %v5133 = vpack.c.b16 %v5039, %v5037
    %v5134 = vpack.c.b16 %v5040, %v5038
    %v5135 = vpack.c.b16 %v5043, %v5041
    %v5136 = vpack.c.b16 %v5044, %v5042
    %v5137 = vpack.c.b16 %v5047, %v5045
    %v5138 = vpack.c.b16 %v5048, %v5046
    %v5139 = vpack.c.b16 %v5051, %v5049
    %v5140 = vpack.c.b16 %v5052, %v5050
    %v5141 = vpack.c.b16 %v5055, %v5053
    %v5142 = vpack.c.b16 %v5056, %v5054
    %v5143 = vpack.c.b16 %v5059, %v5057
    %v5144 = vpack.c.b16 %v5060, %v5058
    %v5145 = vpack.c.b16 %v5063, %v5061
    %v5146 = vpack.c.b16 %v5064, %v5062
    %v5147 = vpack.c.b16 %v5067, %v5065
    %v5148 = vpack.c.b16 %v5068, %v5066
    %v5149 = vpack.c.b16 %v5071, %v5069
    %v5150 = vpack.c.b16 %v5072, %v5070
    %v5151 = vpack.c.b16 %v5075, %v5073
    %v5152 = vpack.c.b16 %v5076, %v5074
    %v5153 = vpack.c.b16 %v5079, %v5077
    %v5154 = vpack.c.b16 %v5080, %v5078
    %v5155 = vpack.c.b16 %v5083, %v5081
    %v5156 = vpack.c.b16 %v5084, %v5082
    %v5157 = vpack.c.b16 %v5087, %v5085
    %v5158 = vpack.c.b16 %v5088, %v5086
    %v5159 = vpack.c.b16 %v5091, %v5089
    %v5160 = vpack.c.b16 %v5092, %v5090
    %v5161 = vpack.c.b16 %v5095, %v5093
    %v5162 = vpack.c.b16 %v5096, %v5094
    %v5163 = vpack.c.b16 %v5099, %v5097
    %v5164 = vpack.c.b16 %v5100, %v5098
    %5229 = vmatpush.bf16.msra.mxu0 %v5115
    %5230 = vmatpush.bf16.msra.mxu0 %v5113
    %5231 = vmatpush.bf16.msra.mxu0 %v5111
    %5232 = vmatpush.bf16.msra.mxu0 %v5109
    %5233 = vmatpush.bf16.msra.mxu0 %v5107
    %5234 = vmatpush.bf16.msra.mxu0 %v5105
    %5235 = vmatpush.bf16.msra.mxu0 %v5103
    %5236 = vmatpush.bf16.msra.mxu0 %v5101
    %5237 = vmatmul.bf16.gmra.mxu0 %v4901
    %v5238 = vpop.f32.mrf.mxu0
    %v5239 = vadd.f32 0.0, %v5238
    %v5240 = vpop.f32.mrf.mxu0
    %5241 = vdwg.mxu0
    %5242 = vmatpush.bf16.msra.mxu0 %v5131
    %5243 = vmatpush.bf16.msra.mxu0 %v5129
    %5244 = vmatpush.bf16.msra.mxu0 %v5127
    %5245 = vmatpush.bf16.msra.mxu0 %v5125
    %5246 = vmatpush.bf16.msra.mxu0 %v5123
    %5247 = vmatpush.bf16.msra.mxu0 %v5121
    %5248 = vmatpush.bf16.msra.mxu0 %v5119
    %5249 = vmatpush.bf16.msra.mxu0 %v5117
    %5250 = vmatmul.bf16.gmra.mxu0 %v4902
    %v5251 = vpop.f32.mrf.mxu0
    %v5252 = vadd.f32 %v5239, %v5251
    %v5253 = vpop.f32.mrf.mxu0
    %5254 = vdwg.mxu0
    %5255 = vmatpush.bf16.msra.mxu0 %v5147
    %5256 = vmatpush.bf16.msra.mxu0 %v5145
    %5257 = vmatpush.bf16.msra.mxu0 %v5143
    %5258 = vmatpush.bf16.msra.mxu0 %v5141
    %5259 = vmatpush.bf16.msra.mxu0 %v5139
    %5260 = vmatpush.bf16.msra.mxu0 %v5137
    %5261 = vmatpush.bf16.msra.mxu0 %v5135
    %5262 = vmatpush.bf16.msra.mxu0 %v5133
    %5263 = vmatmul.bf16.gmra.mxu0 %v4903
    %v5264 = vpop.f32.mrf.mxu0
    %v5265 = vadd.f32 %v5252, %v5264
    %v5266 = vpop.f32.mrf.mxu0
    %5267 = vdwg.mxu0
    %5268 = vmatpush.bf16.msra.mxu0 %v5163
    %5269 = vmatpush.bf16.msra.mxu0 %v5161
    %5270 = vmatpush.bf16.msra.mxu0 %v5159
    %5271 = vmatpush.bf16.msra.mxu0 %v5157
    %5272 = vmatpush.bf16.msra.mxu0 %v5155
    %5273 = vmatpush.bf16.msra.mxu0 %v5153
    %5274 = vmatpush.bf16.msra.mxu0 %v5151
    %5275 = vmatpush.bf16.msra.mxu0 %v5149
    %5276 = vmatmul.bf16.gmra.mxu0 %v4904
    %v5277 = vpop.f32.mrf.mxu0
    %v5278 = vadd.f32 %v5265, %v5277
    %v5279 = vpop.f32.mrf.mxu0
    %5280 = vdwg.mxu0
    %5281 = vmatpush.bf16.msra.mxu0 %v5116
    %5282 = vmatpush.bf16.msra.mxu0 %v5114
    %5283 = vmatpush.bf16.msra.mxu0 %v5112
    %5284 = vmatpush.bf16.msra.mxu0 %v5110
    %5285 = vmatpush.bf16.msra.mxu0 %v5108
    %5286 = vmatpush.bf16.msra.mxu0 %v5106
    %5287 = vmatpush.bf16.msra.mxu0 %v5104
    %5288 = vmatpush.bf16.msra.mxu0 %v5102
    %5289 = vmatmul.bf16.gmra.mxu0 %v4901
    %v5290 = vpop.f32.mrf.mxu0
    %v5291 = vadd.f32 0.0, %v5290
    %v5292 = vpop.f32.mrf.mxu0
    %5293 = vdwg.mxu0
    %5294 = vmatpush.bf16.msra.mxu0 %v5132
    %5295 = vmatpush.bf16.msra.mxu0 %v5130
    %5296 = vmatpush.bf16.msra.mxu0 %v5128
    %5297 = vmatpush.bf16.msra.mxu0 %v5126
    %5298 = vmatpush.bf16.msra.mxu0 %v5124
    %5299 = vmatpush.bf16.msra.mxu0 %v5122
    %5300 = vmatpush.bf16.msra.mxu0 %v5120
    %5301 = vmatpush.bf16.msra.mxu0 %v5118
    %5302 = vmatmul.bf16.gmra.mxu0 %v4902
    %v5303 = vpop.f32.mrf.mxu0
    %v5304 = vadd.f32 %v5291, %v5303
    %v5305 = vpop.f32.mrf.mxu0
    %5306 = vdwg.mxu0
    %5307 = vmatpush.bf16.msra.mxu0 %v5148
    %5308 = vmatpush.bf16.msra.mxu0 %v5146
    %5309 = vmatpush.bf16.msra.mxu0 %v5144
    %5310 = vmatpush.bf16.msra.mxu0 %v5142
    %5311 = vmatpush.bf16.msra.mxu0 %v5140
    %5312 = vmatpush.bf16.msra.mxu0 %v5138
    %5313 = vmatpush.bf16.msra.mxu0 %v5136
    %5314 = vmatpush.bf16.msra.mxu0 %v5134
    %5315 = vmatmul.bf16.gmra.mxu0 %v4903
    %v5316 = vpop.f32.mrf.mxu0
    %v5317 = vadd.f32 %v5304, %v5316
    %v5318 = vpop.f32.mrf.mxu0
    %5319 = vdwg.mxu0
    %5320 = vmatpush.bf16.msra.mxu0 %v5164
    %5321 = vmatpush.bf16.msra.mxu0 %v5162
    %5322 = vmatpush.bf16.msra.mxu0 %v5160
    %5323 = vmatpush.bf16.msra.mxu0 %v5158
    %5324 = vmatpush.bf16.msra.mxu0 %v5156
    %5325 = vmatpush.bf16.msra.mxu0 %v5154
    %5326 = vmatpush.bf16.msra.mxu0 %v5152
    %5327 = vmatpush.bf16.msra.mxu0 %v5150
    %5328 = vmatmul.bf16.gmra.mxu0 %v4904
    %v5329 = vpop.f32.mrf.mxu0
    %v5330 = vadd.f32 %v5317, %v5329
    %v5331 = vpop.f32.mrf.mxu0
    %5332 = vdwg.mxu0
    %v5333 = vadd.f32 %v4823, %v5278
    %v5334 = vadd.f32 %v4824, %v5330
    %v5335 = vld [vmem:[#allocation16 + $0xa00] sm:$0xff]
    %v5336 = vld [vmem:[#allocation16 + $0xa08] sm:$0xff]
    %v5337 = vld [vmem:[#allocation16 + $0xa10] sm:$0xff]
    %v5338 = vld [vmem:[#allocation16 + $0xa18] sm:$0xff]
    %v5339 = vld [vmem:[#allocation16 + $0xa20] sm:$0xff]
    %v5340 = vld [vmem:[#allocation16 + $0xa28] sm:$0xff]
    %v5341 = vld [vmem:[#allocation16 + $0xa30] sm:$0xff]
    %v5342 = vld [vmem:[#allocation16 + $0xa38] sm:$0xff]
    %v5343 = vld [vmem:[#allocation16 + $0xa40] sm:$0xff]
    %v5344 = vld [vmem:[#allocation16 + $0xa48] sm:$0xff]
    %v5345 = vld [vmem:[#allocation16 + $0xa50] sm:$0xff]
    %v5346 = vld [vmem:[#allocation16 + $0xa58] sm:$0xff]
    %v5347 = vld [vmem:[#allocation16 + $0xa60] sm:$0xff]
    %v5348 = vld [vmem:[#allocation16 + $0xa68] sm:$0xff]
    %v5349 = vld [vmem:[#allocation16 + $0xa70] sm:$0xff]
    %v5350 = vld [vmem:[#allocation16 + $0xa78] sm:$0xff]
    %v5351 = vld [vmem:[#allocation16 + $0xa80] sm:$0xff]
    %v5352 = vld [vmem:[#allocation16 + $0xa88] sm:$0xff]
    %v5353 = vld [vmem:[#allocation16 + $0xa90] sm:$0xff]
    %v5354 = vld [vmem:[#allocation16 + $0xa98] sm:$0xff]
    %v5355 = vld [vmem:[#allocation16 + $0xaa0] sm:$0xff]
    %v5356 = vld [vmem:[#allocation16 + $0xaa8] sm:$0xff]
    %v5357 = vld [vmem:[#allocation16 + $0xab0] sm:$0xff]
    %v5358 = vld [vmem:[#allocation16 + $0xab8] sm:$0xff]
    %v5359 = vld [vmem:[#allocation16 + $0xac0] sm:$0xff]
    %v5360 = vld [vmem:[#allocation16 + $0xac8] sm:$0xff]
    %v5361 = vld [vmem:[#allocation16 + $0xad0] sm:$0xff]
    %v5362 = vld [vmem:[#allocation16 + $0xad8] sm:$0xff]
    %v5363 = vld [vmem:[#allocation16 + $0xae0] sm:$0xff]
    %v5364 = vld [vmem:[#allocation16 + $0xae8] sm:$0xff]
    %v5365 = vld [vmem:[#allocation16 + $0xaf0] sm:$0xff]
    %v5366 = vld [vmem:[#allocation16 + $0xaf8] sm:$0xff]
    %v5367 = vld [vmem:[#allocation16 + $0xb00] sm:$0xff]
    %v5368 = vld [vmem:[#allocation16 + $0xb08] sm:$0xff]
    %v5369 = vld [vmem:[#allocation16 + $0xb10] sm:$0xff]
    %v5370 = vld [vmem:[#allocation16 + $0xb18] sm:$0xff]
    %v5371 = vld [vmem:[#allocation16 + $0xb20] sm:$0xff]
    %v5372 = vld [vmem:[#allocation16 + $0xb28] sm:$0xff]
    %v5373 = vld [vmem:[#allocation16 + $0xb30] sm:$0xff]
    %v5374 = vld [vmem:[#allocation16 + $0xb38] sm:$0xff]
    %v5375 = vld [vmem:[#allocation16 + $0xb40] sm:$0xff]
    %v5376 = vld [vmem:[#allocation16 + $0xb48] sm:$0xff]
    %v5377 = vld [vmem:[#allocation16 + $0xb50] sm:$0xff]
    %v5378 = vld [vmem:[#allocation16 + $0xb58] sm:$0xff]
    %v5379 = vld [vmem:[#allocation16 + $0xb60] sm:$0xff]
    %v5380 = vld [vmem:[#allocation16 + $0xb68] sm:$0xff]
    %v5381 = vld [vmem:[#allocation16 + $0xb70] sm:$0xff]
    %v5382 = vld [vmem:[#allocation16 + $0xb78] sm:$0xff]
    %v5383 = vld [vmem:[#allocation16 + $0xb80] sm:$0xff]
    %v5384 = vld [vmem:[#allocation16 + $0xb88] sm:$0xff]
    %v5385 = vld [vmem:[#allocation16 + $0xb90] sm:$0xff]
    %v5386 = vld [vmem:[#allocation16 + $0xb98] sm:$0xff]
    %v5387 = vld [vmem:[#allocation16 + $0xba0] sm:$0xff]
    %v5388 = vld [vmem:[#allocation16 + $0xba8] sm:$0xff]
    %v5389 = vld [vmem:[#allocation16 + $0xbb0] sm:$0xff]
    %v5390 = vld [vmem:[#allocation16 + $0xbb8] sm:$0xff]
    %v5391 = vld [vmem:[#allocation16 + $0xbc0] sm:$0xff]
    %v5392 = vld [vmem:[#allocation16 + $0xbc8] sm:$0xff]
    %v5393 = vld [vmem:[#allocation16 + $0xbd0] sm:$0xff]
    %v5394 = vld [vmem:[#allocation16 + $0xbd8] sm:$0xff]
    %v5395 = vld [vmem:[#allocation16 + $0xbe0] sm:$0xff]
    %v5396 = vld [vmem:[#allocation16 + $0xbe8] sm:$0xff]
    %v5397 = vld [vmem:[#allocation16 + $0xbf0] sm:$0xff]
    %v5398 = vld [vmem:[#allocation16 + $0xbf8] sm:$0xff]
    %v5399 = vrot.slane %v2916, 5
    %v5400 = vrot.slane %v2920, 4
    %v5401 = vsel %vm2925, %v5400, %v5399
    %v5402 = vrot.slane %v2917, 5
    %v5403 = vrot.slane %v2921, 4
    %v5404 = vsel %vm2925, %v5403, %v5402
    %v5405 = vrot.slane %v2918, 5
    %v5406 = vrot.slane %v2922, 4
    %v5407 = vsel %vm2925, %v5406, %v5405
    %v5408 = vrot.slane %v2919, 5
    %v5409 = vrot.slane %v2923, 4
    %v5410 = vsel %vm2925, %v5409, %v5408
    %v5411 = vpack.c.b16 %v5401, %v5401
    %v5412 = vpack.c.b16 %v5404, %v5404
    %v5413 = vpack.c.b16 %v5407, %v5407
    %v5414 = vpack.c.b16 %v5410, %v5410
    %v5483 = vunpack.c.l.b16 %v5335
    %v5484 = vunpack.c.h.b16 %v5335
    %v5485 = vunpack.c.l.b16 %v5336
    %v5486 = vunpack.c.h.b16 %v5336
    %v5487 = vunpack.c.l.b16 %v5337
    %v5488 = vunpack.c.h.b16 %v5337
    %v5489 = vunpack.c.l.b16 %v5338
    %v5490 = vunpack.c.h.b16 %v5338
    %v5491 = vunpack.c.l.b16 %v5339
    %v5492 = vunpack.c.h.b16 %v5339
    %v5493 = vunpack.c.l.b16 %v5340
    %v5494 = vunpack.c.h.b16 %v5340
    %v5495 = vunpack.c.l.b16 %v5341
    %v5496 = vunpack.c.h.b16 %v5341
    %v5497 = vunpack.c.l.b16 %v5342
    %v5498 = vunpack.c.h.b16 %v5342
    %v5499 = vunpack.c.l.b16 %v5343
    %v5500 = vunpack.c.h.b16 %v5343
    %v5501 = vunpack.c.l.b16 %v5344
    %v5502 = vunpack.c.h.b16 %v5344
    %v5503 = vunpack.c.l.b16 %v5345
    %v5504 = vunpack.c.h.b16 %v5345
    %v5505 = vunpack.c.l.b16 %v5346
    %v5506 = vunpack.c.h.b16 %v5346
    %v5507 = vunpack.c.l.b16 %v5347
    %v5508 = vunpack.c.h.b16 %v5347
    %v5509 = vunpack.c.l.b16 %v5348
    %v5510 = vunpack.c.h.b16 %v5348
    %v5511 = vunpack.c.l.b16 %v5349
    %v5512 = vunpack.c.h.b16 %v5349
    %v5513 = vunpack.c.l.b16 %v5350
    %v5514 = vunpack.c.h.b16 %v5350
    %v5515 = vunpack.c.l.b16 %v5351
    %v5516 = vunpack.c.h.b16 %v5351
    %v5517 = vunpack.c.l.b16 %v5352
    %v5518 = vunpack.c.h.b16 %v5352
    %v5519 = vunpack.c.l.b16 %v5353
    %v5520 = vunpack.c.h.b16 %v5353
    %v5521 = vunpack.c.l.b16 %v5354
    %v5522 = vunpack.c.h.b16 %v5354
    %v5523 = vunpack.c.l.b16 %v5355
    %v5524 = vunpack.c.h.b16 %v5355
    %v5525 = vunpack.c.l.b16 %v5356
    %v5526 = vunpack.c.h.b16 %v5356
    %v5527 = vunpack.c.l.b16 %v5357
    %v5528 = vunpack.c.h.b16 %v5357
    %v5529 = vunpack.c.l.b16 %v5358
    %v5530 = vunpack.c.h.b16 %v5358
    %v5531 = vunpack.c.l.b16 %v5359
    %v5532 = vunpack.c.h.b16 %v5359
    %v5533 = vunpack.c.l.b16 %v5360
    %v5534 = vunpack.c.h.b16 %v5360
    %v5535 = vunpack.c.l.b16 %v5361
    %v5536 = vunpack.c.h.b16 %v5361
    %v5537 = vunpack.c.l.b16 %v5362
    %v5538 = vunpack.c.h.b16 %v5362
    %v5539 = vunpack.c.l.b16 %v5363
    %v5540 = vunpack.c.h.b16 %v5363
    %v5541 = vunpack.c.l.b16 %v5364
    %v5542 = vunpack.c.h.b16 %v5364
    %v5543 = vunpack.c.l.b16 %v5365
    %v5544 = vunpack.c.h.b16 %v5365
    %v5545 = vunpack.c.l.b16 %v5366
    %v5546 = vunpack.c.h.b16 %v5366
    %v5547 = vunpack.c.l.b16 %v5367
    %v5548 = vunpack.c.h.b16 %v5367
    %v5549 = vunpack.c.l.b16 %v5368
    %v5550 = vunpack.c.h.b16 %v5368
    %v5551 = vunpack.c.l.b16 %v5369
    %v5552 = vunpack.c.h.b16 %v5369
    %v5553 = vunpack.c.l.b16 %v5370
    %v5554 = vunpack.c.h.b16 %v5370
    %v5555 = vunpack.c.l.b16 %v5371
    %v5556 = vunpack.c.h.b16 %v5371
    %v5557 = vunpack.c.l.b16 %v5372
    %v5558 = vunpack.c.h.b16 %v5372
    %v5559 = vunpack.c.l.b16 %v5373
    %v5560 = vunpack.c.h.b16 %v5373
    %v5561 = vunpack.c.l.b16 %v5374
    %v5562 = vunpack.c.h.b16 %v5374
    %v5563 = vunpack.c.l.b16 %v5375
    %v5564 = vunpack.c.h.b16 %v5375
    %v5565 = vunpack.c.l.b16 %v5376
    %v5566 = vunpack.c.h.b16 %v5376
    %v5567 = vunpack.c.l.b16 %v5377
    %v5568 = vunpack.c.h.b16 %v5377
    %v5569 = vunpack.c.l.b16 %v5378
    %v5570 = vunpack.c.h.b16 %v5378
    %v5571 = vunpack.c.l.b16 %v5379
    %v5572 = vunpack.c.h.b16 %v5379
    %v5573 = vunpack.c.l.b16 %v5380
    %v5574 = vunpack.c.h.b16 %v5380
    %v5575 = vunpack.c.l.b16 %v5381
    %v5576 = vunpack.c.h.b16 %v5381
    %v5577 = vunpack.c.l.b16 %v5382
    %v5578 = vunpack.c.h.b16 %v5382
    %v5579 = vunpack.c.l.b16 %v5383
    %v5580 = vunpack.c.h.b16 %v5383
    %v5581 = vunpack.c.l.b16 %v5384
    %v5582 = vunpack.c.h.b16 %v5384
    %v5583 = vunpack.c.l.b16 %v5385
    %v5584 = vunpack.c.h.b16 %v5385
    %v5585 = vunpack.c.l.b16 %v5386
    %v5586 = vunpack.c.h.b16 %v5386
    %v5587 = vunpack.c.l.b16 %v5387
    %v5588 = vunpack.c.h.b16 %v5387
    %v5589 = vunpack.c.l.b16 %v5388
    %v5590 = vunpack.c.h.b16 %v5388
    %v5591 = vunpack.c.l.b16 %v5389
    %v5592 = vunpack.c.h.b16 %v5389
    %v5593 = vunpack.c.l.b16 %v5390
    %v5594 = vunpack.c.h.b16 %v5390
    %v5595 = vunpack.c.l.b16 %v5391
    %v5596 = vunpack.c.h.b16 %v5391
    %v5597 = vunpack.c.l.b16 %v5392
    %v5598 = vunpack.c.h.b16 %v5392
    %v5599 = vunpack.c.l.b16 %v5393
    %v5600 = vunpack.c.h.b16 %v5393
    %v5601 = vunpack.c.l.b16 %v5394
    %v5602 = vunpack.c.h.b16 %v5394
    %v5603 = vunpack.c.l.b16 %v5395
    %v5604 = vunpack.c.h.b16 %v5395
    %v5605 = vunpack.c.l.b16 %v5396
    %v5606 = vunpack.c.h.b16 %v5396
    %v5607 = vunpack.c.l.b16 %v5397
    %v5608 = vunpack.c.h.b16 %v5397
    %v5609 = vunpack.c.l.b16 %v5398
    %v5610 = vunpack.c.h.b16 %v5398
    %v5611 = vpack.c.b16 %v5485, %v5483
    %v5612 = vpack.c.b16 %v5486, %v5484
    %v5613 = vpack.c.b16 %v5489, %v5487
    %v5614 = vpack.c.b16 %v5490, %v5488
    %v5615 = vpack.c.b16 %v5493, %v5491
    %v5616 = vpack.c.b16 %v5494, %v5492
    %v5617 = vpack.c.b16 %v5497, %v5495
    %v5618 = vpack.c.b16 %v5498, %v5496
    %v5619 = vpack.c.b16 %v5501, %v5499
    %v5620 = vpack.c.b16 %v5502, %v5500
    %v5621 = vpack.c.b16 %v5505, %v5503
    %v5622 = vpack.c.b16 %v5506, %v5504
    %v5623 = vpack.c.b16 %v5509, %v5507
    %v5624 = vpack.c.b16 %v5510, %v5508
    %v5625 = vpack.c.b16 %v5513, %v5511
    %v5626 = vpack.c.b16 %v5514, %v5512
    %v5627 = vpack.c.b16 %v5517, %v5515
    %v5628 = vpack.c.b16 %v5518, %v5516
    %v5629 = vpack.c.b16 %v5521, %v5519
    %v5630 = vpack.c.b16 %v5522, %v5520
    %v5631 = vpack.c.b16 %v5525, %v5523
    %v5632 = vpack.c.b16 %v5526, %v5524
    %v5633 = vpack.c.b16 %v5529, %v5527
    %v5634 = vpack.c.b16 %v5530, %v5528
    %v5635 = vpack.c.b16 %v5533, %v5531
    %v5636 = vpack.c.b16 %v5534, %v5532
    %v5637 = vpack.c.b16 %v5537, %v5535
    %v5638 = vpack.c.b16 %v5538, %v5536
    %v5639 = vpack.c.b16 %v5541, %v5539
    %v5640 = vpack.c.b16 %v5542, %v5540
    %v5641 = vpack.c.b16 %v5545, %v5543
    %v5642 = vpack.c.b16 %v5546, %v5544
    %v5643 = vpack.c.b16 %v5549, %v5547
    %v5644 = vpack.c.b16 %v5550, %v5548
    %v5645 = vpack.c.b16 %v5553, %v5551
    %v5646 = vpack.c.b16 %v5554, %v5552
    %v5647 = vpack.c.b16 %v5557, %v5555
    %v5648 = vpack.c.b16 %v5558, %v5556
    %v5649 = vpack.c.b16 %v5561, %v5559
    %v5650 = vpack.c.b16 %v5562, %v5560
    %v5651 = vpack.c.b16 %v5565, %v5563
    %v5652 = vpack.c.b16 %v5566, %v5564
    %v5653 = vpack.c.b16 %v5569, %v5567
    %v5654 = vpack.c.b16 %v5570, %v5568
    %v5655 = vpack.c.b16 %v5573, %v5571
    %v5656 = vpack.c.b16 %v5574, %v5572
    %v5657 = vpack.c.b16 %v5577, %v5575
    %v5658 = vpack.c.b16 %v5578, %v5576
    %v5659 = vpack.c.b16 %v5581, %v5579
    %v5660 = vpack.c.b16 %v5582, %v5580
    %v5661 = vpack.c.b16 %v5585, %v5583
    %v5662 = vpack.c.b16 %v5586, %v5584
    %v5663 = vpack.c.b16 %v5589, %v5587
    %v5664 = vpack.c.b16 %v5590, %v5588
    %v5665 = vpack.c.b16 %v5593, %v5591
    %v5666 = vpack.c.b16 %v5594, %v5592
    %v5667 = vpack.c.b16 %v5597, %v5595
    %v5668 = vpack.c.b16 %v5598, %v5596
    %v5669 = vpack.c.b16 %v5601, %v5599
    %v5670 = vpack.c.b16 %v5602, %v5600
    %v5671 = vpack.c.b16 %v5605, %v5603
    %v5672 = vpack.c.b16 %v5606, %v5604
    %v5673 = vpack.c.b16 %v5609, %v5607
    %v5674 = vpack.c.b16 %v5610, %v5608
    %5739 = vmatpush.bf16.msra.mxu0 %v5625
    %5740 = vmatpush.bf16.msra.mxu0 %v5623
    %5741 = vmatpush.bf16.msra.mxu0 %v5621
    %5742 = vmatpush.bf16.msra.mxu0 %v5619
    %5743 = vmatpush.bf16.msra.mxu0 %v5617
    %5744 = vmatpush.bf16.msra.mxu0 %v5615
    %5745 = vmatpush.bf16.msra.mxu0 %v5613
    %5746 = vmatpush.bf16.msra.mxu0 %v5611
    %5747 = vmatmul.bf16.gmra.mxu0 %v5411
    %v5748 = vpop.f32.mrf.mxu0
    %v5749 = vadd.f32 0.0, %v5748
    %v5750 = vpop.f32.mrf.mxu0
    %5751 = vdwg.mxu0
    %5752 = vmatpush.bf16.msra.mxu0 %v5641
    %5753 = vmatpush.bf16.msra.mxu0 %v5639
    %5754 = vmatpush.bf16.msra.mxu0 %v5637
    %5755 = vmatpush.bf16.msra.mxu0 %v5635
    %5756 = vmatpush.bf16.msra.mxu0 %v5633
    %5757 = vmatpush.bf16.msra.mxu0 %v5631
    %5758 = vmatpush.bf16.msra.mxu0 %v5629
    %5759 = vmatpush.bf16.msra.mxu0 %v5627
    %5760 = vmatmul.bf16.gmra.mxu0 %v5412
    %v5761 = vpop.f32.mrf.mxu0
    %v5762 = vadd.f32 %v5749, %v5761
    %v5763 = vpop.f32.mrf.mxu0
    %5764 = vdwg.mxu0
    %5765 = vmatpush.bf16.msra.mxu0 %v5657
    %5766 = vmatpush.bf16.msra.mxu0 %v5655
    %5767 = vmatpush.bf16.msra.mxu0 %v5653
    %5768 = vmatpush.bf16.msra.mxu0 %v5651
    %5769 = vmatpush.bf16.msra.mxu0 %v5649
    %5770 = vmatpush.bf16.msra.mxu0 %v5647
    %5771 = vmatpush.bf16.msra.mxu0 %v5645
    %5772 = vmatpush.bf16.msra.mxu0 %v5643
    %5773 = vmatmul.bf16.gmra.mxu0 %v5413
    %v5774 = vpop.f32.mrf.mxu0
    %v5775 = vadd.f32 %v5762, %v5774
    %v5776 = vpop.f32.mrf.mxu0
    %5777 = vdwg.mxu0
    %5778 = vmatpush.bf16.msra.mxu0 %v5673
    %5779 = vmatpush.bf16.msra.mxu0 %v5671
    %5780 = vmatpush.bf16.msra.mxu0 %v5669
    %5781 = vmatpush.bf16.msra.mxu0 %v5667
    %5782 = vmatpush.bf16.msra.mxu0 %v5665
    %5783 = vmatpush.bf16.msra.mxu0 %v5663
    %5784 = vmatpush.bf16.msra.mxu0 %v5661
    %5785 = vmatpush.bf16.msra.mxu0 %v5659
    %5786 = vmatmul.bf16.gmra.mxu0 %v5414
    %v5787 = vpop.f32.mrf.mxu0
    %v5788 = vadd.f32 %v5775, %v5787
    %v5789 = vpop.f32.mrf.mxu0
    %5790 = vdwg.mxu0
    %5791 = vmatpush.bf16.msra.mxu0 %v5626
    %5792 = vmatpush.bf16.msra.mxu0 %v5624
    %5793 = vmatpush.bf16.msra.mxu0 %v5622
    %5794 = vmatpush.bf16.msra.mxu0 %v5620
    %5795 = vmatpush.bf16.msra.mxu0 %v5618
    %5796 = vmatpush.bf16.msra.mxu0 %v5616
    %5797 = vmatpush.bf16.msra.mxu0 %v5614
    %5798 = vmatpush.bf16.msra.mxu0 %v5612
    %5799 = vmatmul.bf16.gmra.mxu0 %v5411
    %v5800 = vpop.f32.mrf.mxu0
    %v5801 = vadd.f32 0.0, %v5800
    %v5802 = vpop.f32.mrf.mxu0
    %5803 = vdwg.mxu0
    %5804 = vmatpush.bf16.msra.mxu0 %v5642
    %5805 = vmatpush.bf16.msra.mxu0 %v5640
    %5806 = vmatpush.bf16.msra.mxu0 %v5638
    %5807 = vmatpush.bf16.msra.mxu0 %v5636
    %5808 = vmatpush.bf16.msra.mxu0 %v5634
    %5809 = vmatpush.bf16.msra.mxu0 %v5632
    %5810 = vmatpush.bf16.msra.mxu0 %v5630
    %5811 = vmatpush.bf16.msra.mxu0 %v5628
    %5812 = vmatmul.bf16.gmra.mxu0 %v5412
    %v5813 = vpop.f32.mrf.mxu0
    %v5814 = vadd.f32 %v5801, %v5813
    %v5815 = vpop.f32.mrf.mxu0
    %5816 = vdwg.mxu0
    %5817 = vmatpush.bf16.msra.mxu0 %v5658
    %5818 = vmatpush.bf16.msra.mxu0 %v5656
    %5819 = vmatpush.bf16.msra.mxu0 %v5654
    %5820 = vmatpush.bf16.msra.mxu0 %v5652
    %5821 = vmatpush.bf16.msra.mxu0 %v5650
    %5822 = vmatpush.bf16.msra.mxu0 %v5648
    %5823 = vmatpush.bf16.msra.mxu0 %v5646
    %5824 = vmatpush.bf16.msra.mxu0 %v5644
    %5825 = vmatmul.bf16.gmra.mxu0 %v5413
    %v5826 = vpop.f32.mrf.mxu0
    %v5827 = vadd.f32 %v5814, %v5826
    %v5828 = vpop.f32.mrf.mxu0
    %5829 = vdwg.mxu0
    %5830 = vmatpush.bf16.msra.mxu0 %v5674
    %5831 = vmatpush.bf16.msra.mxu0 %v5672
    %5832 = vmatpush.bf16.msra.mxu0 %v5670
    %5833 = vmatpush.bf16.msra.mxu0 %v5668
    %5834 = vmatpush.bf16.msra.mxu0 %v5666
    %5835 = vmatpush.bf16.msra.mxu0 %v5664
    %5836 = vmatpush.bf16.msra.mxu0 %v5662
    %5837 = vmatpush.bf16.msra.mxu0 %v5660
    %5838 = vmatmul.bf16.gmra.mxu0 %v5414
    %v5839 = vpop.f32.mrf.mxu0
    %v5840 = vadd.f32 %v5827, %v5839
    %v5841 = vpop.f32.mrf.mxu0
    %5842 = vdwg.mxu0
    %v5843 = vadd.f32 %v5333, %v5788
    %v5844 = vadd.f32 %v5334, %v5840
    %v5845 = vld [vmem:[#allocation16 + $0xc00] sm:$0xff]
    %v5846 = vld [vmem:[#allocation16 + $0xc08] sm:$0xff]
    %v5847 = vld [vmem:[#allocation16 + $0xc10] sm:$0xff]
    %v5848 = vld [vmem:[#allocation16 + $0xc18] sm:$0xff]
    %v5849 = vld [vmem:[#allocation16 + $0xc20] sm:$0xff]
    %v5850 = vld [vmem:[#allocation16 + $0xc28] sm:$0xff]
    %v5851 = vld [vmem:[#allocation16 + $0xc30] sm:$0xff]
    %v5852 = vld [vmem:[#allocation16 + $0xc38] sm:$0xff]
    %v5853 = vld [vmem:[#allocation16 + $0xc40] sm:$0xff]
    %v5854 = vld [vmem:[#allocation16 + $0xc48] sm:$0xff]
    %v5855 = vld [vmem:[#allocation16 + $0xc50] sm:$0xff]
    %v5856 = vld [vmem:[#allocation16 + $0xc58] sm:$0xff]
    %v5857 = vld [vmem:[#allocation16 + $0xc60] sm:$0xff]
    %v5858 = vld [vmem:[#allocation16 + $0xc68] sm:$0xff]
    %v5859 = vld [vmem:[#allocation16 + $0xc70] sm:$0xff]
    %v5860 = vld [vmem:[#allocation16 + $0xc78] sm:$0xff]
    %v5861 = vld [vmem:[#allocation16 + $0xc80] sm:$0xff]
    %v5862 = vld [vmem:[#allocation16 + $0xc88] sm:$0xff]
    %v5863 = vld [vmem:[#allocation16 + $0xc90] sm:$0xff]
    %v5864 = vld [vmem:[#allocation16 + $0xc98] sm:$0xff]
    %v5865 = vld [vmem:[#allocation16 + $0xca0] sm:$0xff]
    %v5866 = vld [vmem:[#allocation16 + $0xca8] sm:$0xff]
    %v5867 = vld [vmem:[#allocation16 + $0xcb0] sm:$0xff]
    %v5868 = vld [vmem:[#allocation16 + $0xcb8] sm:$0xff]
    %v5869 = vld [vmem:[#allocation16 + $0xcc0] sm:$0xff]
    %v5870 = vld [vmem:[#allocation16 + $0xcc8] sm:$0xff]
    %v5871 = vld [vmem:[#allocation16 + $0xcd0] sm:$0xff]
    %v5872 = vld [vmem:[#allocation16 + $0xcd8] sm:$0xff]
    %v5873 = vld [vmem:[#allocation16 + $0xce0] sm:$0xff]
    %v5874 = vld [vmem:[#allocation16 + $0xce8] sm:$0xff]
    %v5875 = vld [vmem:[#allocation16 + $0xcf0] sm:$0xff]
    %v5876 = vld [vmem:[#allocation16 + $0xcf8] sm:$0xff]
    %v5877 = vld [vmem:[#allocation16 + $0xd00] sm:$0xff]
    %v5878 = vld [vmem:[#allocation16 + $0xd08] sm:$0xff]
    %v5879 = vld [vmem:[#allocation16 + $0xd10] sm:$0xff]
    %v5880 = vld [vmem:[#allocation16 + $0xd18] sm:$0xff]
    %v5881 = vld [vmem:[#allocation16 + $0xd20] sm:$0xff]
    %v5882 = vld [vmem:[#allocation16 + $0xd28] sm:$0xff]
    %v5883 = vld [vmem:[#allocation16 + $0xd30] sm:$0xff]
    %v5884 = vld [vmem:[#allocation16 + $0xd38] sm:$0xff]
    %v5885 = vld [vmem:[#allocation16 + $0xd40] sm:$0xff]
    %v5886 = vld [vmem:[#allocation16 + $0xd48] sm:$0xff]
    %v5887 = vld [vmem:[#allocation16 + $0xd50] sm:$0xff]
    %v5888 = vld [vmem:[#allocation16 + $0xd58] sm:$0xff]
    %v5889 = vld [vmem:[#allocation16 + $0xd60] sm:$0xff]
    %v5890 = vld [vmem:[#allocation16 + $0xd68] sm:$0xff]
    %v5891 = vld [vmem:[#allocation16 + $0xd70] sm:$0xff]
    %v5892 = vld [vmem:[#allocation16 + $0xd78] sm:$0xff]
    %v5893 = vld [vmem:[#allocation16 + $0xd80] sm:$0xff]
    %v5894 = vld [vmem:[#allocation16 + $0xd88] sm:$0xff]
    %v5895 = vld [vmem:[#allocation16 + $0xd90] sm:$0xff]
    %v5896 = vld [vmem:[#allocation16 + $0xd98] sm:$0xff]
    %v5897 = vld [vmem:[#allocation16 + $0xda0] sm:$0xff]
    %v5898 = vld [vmem:[#allocation16 + $0xda8] sm:$0xff]
    %v5899 = vld [vmem:[#allocation16 + $0xdb0] sm:$0xff]
    %v5900 = vld [vmem:[#allocation16 + $0xdb8] sm:$0xff]
    %v5901 = vld [vmem:[#allocation16 + $0xdc0] sm:$0xff]
    %v5902 = vld [vmem:[#allocation16 + $0xdc8] sm:$0xff]
    %v5903 = vld [vmem:[#allocation16 + $0xdd0] sm:$0xff]
    %v5904 = vld [vmem:[#allocation16 + $0xdd8] sm:$0xff]
    %v5905 = vld [vmem:[#allocation16 + $0xde0] sm:$0xff]
    %v5906 = vld [vmem:[#allocation16 + $0xde8] sm:$0xff]
    %v5907 = vld [vmem:[#allocation16 + $0xdf0] sm:$0xff]
    %v5908 = vld [vmem:[#allocation16 + $0xdf8] sm:$0xff]
    %v5909 = vrot.slane %v2916, 6
    %v5910 = vrot.slane %v2920, 5
    %v5911 = vsel %vm2925, %v5910, %v5909
    %v5912 = vrot.slane %v2917, 6
    %v5913 = vrot.slane %v2921, 5
    %v5914 = vsel %vm2925, %v5913, %v5912
    %v5915 = vrot.slane %v2918, 6
    %v5916 = vrot.slane %v2922, 5
    %v5917 = vsel %vm2925, %v5916, %v5915
    %v5918 = vrot.slane %v2919, 6
    %v5919 = vrot.slane %v2923, 5
    %v5920 = vsel %vm2925, %v5919, %v5918
    %v5921 = vpack.c.b16 %v5911, %v5911
    %v5922 = vpack.c.b16 %v5914, %v5914
    %v5923 = vpack.c.b16 %v5917, %v5917
    %v5924 = vpack.c.b16 %v5920, %v5920
    %v5993 = vunpack.c.l.b16 %v5845
    %v5994 = vunpack.c.h.b16 %v5845
    %v5995 = vunpack.c.l.b16 %v5846
    %v5996 = vunpack.c.h.b16 %v5846
    %v5997 = vunpack.c.l.b16 %v5847
    %v5998 = vunpack.c.h.b16 %v5847
    %v5999 = vunpack.c.l.b16 %v5848
    %v6000 = vunpack.c.h.b16 %v5848
    %v6001 = vunpack.c.l.b16 %v5849
    %v6002 = vunpack.c.h.b16 %v5849
    %v6003 = vunpack.c.l.b16 %v5850
    %v6004 = vunpack.c.h.b16 %v5850
    %v6005 = vunpack.c.l.b16 %v5851
    %v6006 = vunpack.c.h.b16 %v5851
    %v6007 = vunpack.c.l.b16 %v5852
    %v6008 = vunpack.c.h.b16 %v5852
    %v6009 = vunpack.c.l.b16 %v5853
    %v6010 = vunpack.c.h.b16 %v5853
    %v6011 = vunpack.c.l.b16 %v5854
    %v6012 = vunpack.c.h.b16 %v5854
    %v6013 = vunpack.c.l.b16 %v5855
    %v6014 = vunpack.c.h.b16 %v5855
    %v6015 = vunpack.c.l.b16 %v5856
    %v6016 = vunpack.c.h.b16 %v5856
    %v6017 = vunpack.c.l.b16 %v5857
    %v6018 = vunpack.c.h.b16 %v5857
    %v6019 = vunpack.c.l.b16 %v5858
    %v6020 = vunpack.c.h.b16 %v5858
    %v6021 = vunpack.c.l.b16 %v5859
    %v6022 = vunpack.c.h.b16 %v5859
    %v6023 = vunpack.c.l.b16 %v5860
    %v6024 = vunpack.c.h.b16 %v5860
    %v6025 = vunpack.c.l.b16 %v5861
    %v6026 = vunpack.c.h.b16 %v5861
    %v6027 = vunpack.c.l.b16 %v5862
    %v6028 = vunpack.c.h.b16 %v5862
    %v6029 = vunpack.c.l.b16 %v5863
    %v6030 = vunpack.c.h.b16 %v5863
    %v6031 = vunpack.c.l.b16 %v5864
    %v6032 = vunpack.c.h.b16 %v5864
    %v6033 = vunpack.c.l.b16 %v5865
    %v6034 = vunpack.c.h.b16 %v5865
    %v6035 = vunpack.c.l.b16 %v5866
    %v6036 = vunpack.c.h.b16 %v5866
    %v6037 = vunpack.c.l.b16 %v5867
    %v6038 = vunpack.c.h.b16 %v5867
    %v6039 = vunpack.c.l.b16 %v5868
    %v6040 = vunpack.c.h.b16 %v5868
    %v6041 = vunpack.c.l.b16 %v5869
    %v6042 = vunpack.c.h.b16 %v5869
    %v6043 = vunpack.c.l.b16 %v5870
    %v6044 = vunpack.c.h.b16 %v5870
    %v6045 = vunpack.c.l.b16 %v5871
    %v6046 = vunpack.c.h.b16 %v5871
    %v6047 = vunpack.c.l.b16 %v5872
    %v6048 = vunpack.c.h.b16 %v5872
    %v6049 = vunpack.c.l.b16 %v5873
    %v6050 = vunpack.c.h.b16 %v5873
    %v6051 = vunpack.c.l.b16 %v5874
    %v6052 = vunpack.c.h.b16 %v5874
    %v6053 = vunpack.c.l.b16 %v5875
    %v6054 = vunpack.c.h.b16 %v5875
    %v6055 = vunpack.c.l.b16 %v5876
    %v6056 = vunpack.c.h.b16 %v5876
    %v6057 = vunpack.c.l.b16 %v5877
    %v6058 = vunpack.c.h.b16 %v5877
    %v6059 = vunpack.c.l.b16 %v5878
    %v6060 = vunpack.c.h.b16 %v5878
    %v6061 = vunpack.c.l.b16 %v5879
    %v6062 = vunpack.c.h.b16 %v5879
    %v6063 = vunpack.c.l.b16 %v5880
    %v6064 = vunpack.c.h.b16 %v5880
    %v6065 = vunpack.c.l.b16 %v5881
    %v6066 = vunpack.c.h.b16 %v5881
    %v6067 = vunpack.c.l.b16 %v5882
    %v6068 = vunpack.c.h.b16 %v5882
    %v6069 = vunpack.c.l.b16 %v5883
    %v6070 = vunpack.c.h.b16 %v5883
    %v6071 = vunpack.c.l.b16 %v5884
    %v6072 = vunpack.c.h.b16 %v5884
    %v6073 = vunpack.c.l.b16 %v5885
    %v6074 = vunpack.c.h.b16 %v5885
    %v6075 = vunpack.c.l.b16 %v5886
    %v6076 = vunpack.c.h.b16 %v5886
    %v6077 = vunpack.c.l.b16 %v5887
    %v6078 = vunpack.c.h.b16 %v5887
    %v6079 = vunpack.c.l.b16 %v5888
    %v6080 = vunpack.c.h.b16 %v5888
    %v6081 = vunpack.c.l.b16 %v5889
    %v6082 = vunpack.c.h.b16 %v5889
    %v6083 = vunpack.c.l.b16 %v5890
    %v6084 = vunpack.c.h.b16 %v5890
    %v6085 = vunpack.c.l.b16 %v5891
    %v6086 = vunpack.c.h.b16 %v5891
    %v6087 = vunpack.c.l.b16 %v5892
    %v6088 = vunpack.c.h.b16 %v5892
    %v6089 = vunpack.c.l.b16 %v5893
    %v6090 = vunpack.c.h.b16 %v5893
    %v6091 = vunpack.c.l.b16 %v5894
    %v6092 = vunpack.c.h.b16 %v5894
    %v6093 = vunpack.c.l.b16 %v5895
    %v6094 = vunpack.c.h.b16 %v5895
    %v6095 = vunpack.c.l.b16 %v5896
    %v6096 = vunpack.c.h.b16 %v5896
    %v6097 = vunpack.c.l.b16 %v5897
    %v6098 = vunpack.c.h.b16 %v5897
    %v6099 = vunpack.c.l.b16 %v5898
    %v6100 = vunpack.c.h.b16 %v5898
    %v6101 = vunpack.c.l.b16 %v5899
    %v6102 = vunpack.c.h.b16 %v5899
    %v6103 = vunpack.c.l.b16 %v5900
    %v6104 = vunpack.c.h.b16 %v5900
    %v6105 = vunpack.c.l.b16 %v5901
    %v6106 = vunpack.c.h.b16 %v5901
    %v6107 = vunpack.c.l.b16 %v5902
    %v6108 = vunpack.c.h.b16 %v5902
    %v6109 = vunpack.c.l.b16 %v5903
    %v6110 = vunpack.c.h.b16 %v5903
    %v6111 = vunpack.c.l.b16 %v5904
    %v6112 = vunpack.c.h.b16 %v5904
    %v6113 = vunpack.c.l.b16 %v5905
    %v6114 = vunpack.c.h.b16 %v5905
    %v6115 = vunpack.c.l.b16 %v5906
    %v6116 = vunpack.c.h.b16 %v5906
    %v6117 = vunpack.c.l.b16 %v5907
    %v6118 = vunpack.c.h.b16 %v5907
    %v6119 = vunpack.c.l.b16 %v5908
    %v6120 = vunpack.c.h.b16 %v5908
    %v6121 = vpack.c.b16 %v5995, %v5993
    %v6122 = vpack.c.b16 %v5996, %v5994
    %v6123 = vpack.c.b16 %v5999, %v5997
    %v6124 = vpack.c.b16 %v6000, %v5998
    %v6125 = vpack.c.b16 %v6003, %v6001
    %v6126 = vpack.c.b16 %v6004, %v6002
    %v6127 = vpack.c.b16 %v6007, %v6005
    %v6128 = vpack.c.b16 %v6008, %v6006
    %v6129 = vpack.c.b16 %v6011, %v6009
    %v6130 = vpack.c.b16 %v6012, %v6010
    %v6131 = vpack.c.b16 %v6015, %v6013
    %v6132 = vpack.c.b16 %v6016, %v6014
    %v6133 = vpack.c.b16 %v6019, %v6017
    %v6134 = vpack.c.b16 %v6020, %v6018
    %v6135 = vpack.c.b16 %v6023, %v6021
    %v6136 = vpack.c.b16 %v6024, %v6022
    %v6137 = vpack.c.b16 %v6027, %v6025
    %v6138 = vpack.c.b16 %v6028, %v6026
    %v6139 = vpack.c.b16 %v6031, %v6029
    %v6140 = vpack.c.b16 %v6032, %v6030
    %v6141 = vpack.c.b16 %v6035, %v6033
    %v6142 = vpack.c.b16 %v6036, %v6034
    %v6143 = vpack.c.b16 %v6039, %v6037
    %v6144 = vpack.c.b16 %v6040, %v6038
    %v6145 = vpack.c.b16 %v6043, %v6041
    %v6146 = vpack.c.b16 %v6044, %v6042
    %v6147 = vpack.c.b16 %v6047, %v6045
    %v6148 = vpack.c.b16 %v6048, %v6046
    %v6149 = vpack.c.b16 %v6051, %v6049
    %v6150 = vpack.c.b16 %v6052, %v6050
    %v6151 = vpack.c.b16 %v6055, %v6053
    %v6152 = vpack.c.b16 %v6056, %v6054
    %v6153 = vpack.c.b16 %v6059, %v6057
    %v6154 = vpack.c.b16 %v6060, %v6058
    %v6155 = vpack.c.b16 %v6063, %v6061
    %v6156 = vpack.c.b16 %v6064, %v6062
    %v6157 = vpack.c.b16 %v6067, %v6065
    %v6158 = vpack.c.b16 %v6068, %v6066
    %v6159 = vpack.c.b16 %v6071, %v6069
    %v6160 = vpack.c.b16 %v6072, %v6070
    %v6161 = vpack.c.b16 %v6075, %v6073
    %v6162 = vpack.c.b16 %v6076, %v6074
    %v6163 = vpack.c.b16 %v6079, %v6077
    %v6164 = vpack.c.b16 %v6080, %v6078
    %v6165 = vpack.c.b16 %v6083, %v6081
    %v6166 = vpack.c.b16 %v6084, %v6082
    %v6167 = vpack.c.b16 %v6087, %v6085
    %v6168 = vpack.c.b16 %v6088, %v6086
    %v6169 = vpack.c.b16 %v6091, %v6089
    %v6170 = vpack.c.b16 %v6092, %v6090
    %v6171 = vpack.c.b16 %v6095, %v6093
    %v6172 = vpack.c.b16 %v6096, %v6094
    %v6173 = vpack.c.b16 %v6099, %v6097
    %v6174 = vpack.c.b16 %v6100, %v6098
    %v6175 = vpack.c.b16 %v6103, %v6101
    %v6176 = vpack.c.b16 %v6104, %v6102
    %v6177 = vpack.c.b16 %v6107, %v6105
    %v6178 = vpack.c.b16 %v6108, %v6106
    %v6179 = vpack.c.b16 %v6111, %v6109
    %v6180 = vpack.c.b16 %v6112, %v6110
    %v6181 = vpack.c.b16 %v6115, %v6113
    %v6182 = vpack.c.b16 %v6116, %v6114
    %v6183 = vpack.c.b16 %v6119, %v6117
    %v6184 = vpack.c.b16 %v6120, %v6118
    %6249 = vmatpush.bf16.msra.mxu0 %v6135
    %6250 = vmatpush.bf16.msra.mxu0 %v6133
    %6251 = vmatpush.bf16.msra.mxu0 %v6131
    %6252 = vmatpush.bf16.msra.mxu0 %v6129
    %6253 = vmatpush.bf16.msra.mxu0 %v6127
    %6254 = vmatpush.bf16.msra.mxu0 %v6125
    %6255 = vmatpush.bf16.msra.mxu0 %v6123
    %6256 = vmatpush.bf16.msra.mxu0 %v6121
    %6257 = vmatmul.bf16.gmra.mxu0 %v5921
    %v6258 = vpop.f32.mrf.mxu0
    %v6259 = vadd.f32 0.0, %v6258
    %v6260 = vpop.f32.mrf.mxu0
    %6261 = vdwg.mxu0
    %6262 = vmatpush.bf16.msra.mxu0 %v6151
    %6263 = vmatpush.bf16.msra.mxu0 %v6149
    %6264 = vmatpush.bf16.msra.mxu0 %v6147
    %6265 = vmatpush.bf16.msra.mxu0 %v6145
    %6266 = vmatpush.bf16.msra.mxu0 %v6143
    %6267 = vmatpush.bf16.msra.mxu0 %v6141
    %6268 = vmatpush.bf16.msra.mxu0 %v6139
    %6269 = vmatpush.bf16.msra.mxu0 %v6137
    %6270 = vmatmul.bf16.gmra.mxu0 %v5922
    %v6271 = vpop.f32.mrf.mxu0
    %v6272 = vadd.f32 %v6259, %v6271
    %v6273 = vpop.f32.mrf.mxu0
    %6274 = vdwg.mxu0
    %6275 = vmatpush.bf16.msra.mxu0 %v6167
    %6276 = vmatpush.bf16.msra.mxu0 %v6165
    %6277 = vmatpush.bf16.msra.mxu0 %v6163
    %6278 = vmatpush.bf16.msra.mxu0 %v6161
    %6279 = vmatpush.bf16.msra.mxu0 %v6159
    %6280 = vmatpush.bf16.msra.mxu0 %v6157
    %6281 = vmatpush.bf16.msra.mxu0 %v6155
    %6282 = vmatpush.bf16.msra.mxu0 %v6153
    %6283 = vmatmul.bf16.gmra.mxu0 %v5923
    %v6284 = vpop.f32.mrf.mxu0
    %v6285 = vadd.f32 %v6272, %v6284
    %v6286 = vpop.f32.mrf.mxu0
    %6287 = vdwg.mxu0
    %6288 = vmatpush.bf16.msra.mxu0 %v6183
    %6289 = vmatpush.bf16.msra.mxu0 %v6181
    %6290 = vmatpush.bf16.msra.mxu0 %v6179
    %6291 = vmatpush.bf16.msra.mxu0 %v6177
    %6292 = vmatpush.bf16.msra.mxu0 %v6175
    %6293 = vmatpush.bf16.msra.mxu0 %v6173
    %6294 = vmatpush.bf16.msra.mxu0 %v6171
    %6295 = vmatpush.bf16.msra.mxu0 %v6169
    %6296 = vmatmul.bf16.gmra.mxu0 %v5924
    %v6297 = vpop.f32.mrf.mxu0
    %v6298 = vadd.f32 %v6285, %v6297
    %v6299 = vpop.f32.mrf.mxu0
    %6300 = vdwg.mxu0
    %6301 = vmatpush.bf16.msra.mxu0 %v6136
    %6302 = vmatpush.bf16.msra.mxu0 %v6134
    %6303 = vmatpush.bf16.msra.mxu0 %v6132
    %6304 = vmatpush.bf16.msra.mxu0 %v6130
    %6305 = vmatpush.bf16.msra.mxu0 %v6128
    %6306 = vmatpush.bf16.msra.mxu0 %v6126
    %6307 = vmatpush.bf16.msra.mxu0 %v6124
    %6308 = vmatpush.bf16.msra.mxu0 %v6122
    %6309 = vmatmul.bf16.gmra.mxu0 %v5921
    %v6310 = vpop.f32.mrf.mxu0
    %v6311 = vadd.f32 0.0, %v6310
    %v6312 = vpop.f32.mrf.mxu0
    %6313 = vdwg.mxu0
    %6314 = vmatpush.bf16.msra.mxu0 %v6152
    %6315 = vmatpush.bf16.msra.mxu0 %v6150
    %6316 = vmatpush.bf16.msra.mxu0 %v6148
    %6317 = vmatpush.bf16.msra.mxu0 %v6146
    %6318 = vmatpush.bf16.msra.mxu0 %v6144
    %6319 = vmatpush.bf16.msra.mxu0 %v6142
    %6320 = vmatpush.bf16.msra.mxu0 %v6140
    %6321 = vmatpush.bf16.msra.mxu0 %v6138
    %6322 = vmatmul.bf16.gmra.mxu0 %v5922
    %v6323 = vpop.f32.mrf.mxu0
    %v6324 = vadd.f32 %v6311, %v6323
    %v6325 = vpop.f32.mrf.mxu0
    %6326 = vdwg.mxu0
    %6327 = vmatpush.bf16.msra.mxu0 %v6168
    %6328 = vmatpush.bf16.msra.mxu0 %v6166
    %6329 = vmatpush.bf16.msra.mxu0 %v6164
    %6330 = vmatpush.bf16.msra.mxu0 %v6162
    %6331 = vmatpush.bf16.msra.mxu0 %v6160
    %6332 = vmatpush.bf16.msra.mxu0 %v6158
    %6333 = vmatpush.bf16.msra.mxu0 %v6156
    %6334 = vmatpush.bf16.msra.mxu0 %v6154
    %6335 = vmatmul.bf16.gmra.mxu0 %v5923
    %v6336 = vpop.f32.mrf.mxu0
    %v6337 = vadd.f32 %v6324, %v6336
    %v6338 = vpop.f32.mrf.mxu0
    %6339 = vdwg.mxu0
    %6340 = vmatpush.bf16.msra.mxu0 %v6184
    %6341 = vmatpush.bf16.msra.mxu0 %v6182
    %6342 = vmatpush.bf16.msra.mxu0 %v6180
    %6343 = vmatpush.bf16.msra.mxu0 %v6178
    %6344 = vmatpush.bf16.msra.mxu0 %v6176
    %6345 = vmatpush.bf16.msra.mxu0 %v6174
    %6346 = vmatpush.bf16.msra.mxu0 %v6172
    %6347 = vmatpush.bf16.msra.mxu0 %v6170
    %6348 = vmatmul.bf16.gmra.mxu0 %v5924
    %v6349 = vpop.f32.mrf.mxu0
    %v6350 = vadd.f32 %v6337, %v6349
    %v6351 = vpop.f32.mrf.mxu0
    %6352 = vdwg.mxu0
    %v6353 = vadd.f32 %v5843, %v6298
    %v6354 = vadd.f32 %v5844, %v6350
    %v6355 = vld [vmem:[#allocation16 + $0xe00] sm:$0xff]
    %v6356 = vld [vmem:[#allocation16 + $0xe08] sm:$0xff]
    %v6357 = vld [vmem:[#allocation16 + $0xe10] sm:$0xff]
    %v6358 = vld [vmem:[#allocation16 + $0xe18] sm:$0xff]
    %v6359 = vld [vmem:[#allocation16 + $0xe20] sm:$0xff]
    %v6360 = vld [vmem:[#allocation16 + $0xe28] sm:$0xff]
    %v6361 = vld [vmem:[#allocation16 + $0xe30] sm:$0xff]
    %v6362 = vld [vmem:[#allocation16 + $0xe38] sm:$0xff]
    %v6363 = vld [vmem:[#allocation16 + $0xe40] sm:$0xff]
    %v6364 = vld [vmem:[#allocation16 + $0xe48] sm:$0xff]
    %v6365 = vld [vmem:[#allocation16 + $0xe50] sm:$0xff]
    %v6366 = vld [vmem:[#allocation16 + $0xe58] sm:$0xff]
    %v6367 = vld [vmem:[#allocation16 + $0xe60] sm:$0xff]
    %v6368 = vld [vmem:[#allocation16 + $0xe68] sm:$0xff]
    %v6369 = vld [vmem:[#allocation16 + $0xe70] sm:$0xff]
    %v6370 = vld [vmem:[#allocation16 + $0xe78] sm:$0xff]
    %v6371 = vld [vmem:[#allocation16 + $0xe80] sm:$0xff]
    %v6372 = vld [vmem:[#allocation16 + $0xe88] sm:$0xff]
    %v6373 = vld [vmem:[#allocation16 + $0xe90] sm:$0xff]
    %v6374 = vld [vmem:[#allocation16 + $0xe98] sm:$0xff]
    %v6375 = vld [vmem:[#allocation16 + $0xea0] sm:$0xff]
    %v6376 = vld [vmem:[#allocation16 + $0xea8] sm:$0xff]
    %v6377 = vld [vmem:[#allocation16 + $0xeb0] sm:$0xff]
    %v6378 = vld [vmem:[#allocation16 + $0xeb8] sm:$0xff]
    %v6379 = vld [vmem:[#allocation16 + $0xec0] sm:$0xff]
    %v6380 = vld [vmem:[#allocation16 + $0xec8] sm:$0xff]
    %v6381 = vld [vmem:[#allocation16 + $0xed0] sm:$0xff]
    %v6382 = vld [vmem:[#allocation16 + $0xed8] sm:$0xff]
    %v6383 = vld [vmem:[#allocation16 + $0xee0] sm:$0xff]
    %v6384 = vld [vmem:[#allocation16 + $0xee8] sm:$0xff]
    %v6385 = vld [vmem:[#allocation16 + $0xef0] sm:$0xff]
    %v6386 = vld [vmem:[#allocation16 + $0xef8] sm:$0xff]
    %v6387 = vld [vmem:[#allocation16 + $0xf00] sm:$0xff]
    %v6388 = vld [vmem:[#allocation16 + $0xf08] sm:$0xff]
    %v6389 = vld [vmem:[#allocation16 + $0xf10] sm:$0xff]
    %v6390 = vld [vmem:[#allocation16 + $0xf18] sm:$0xff]
    %v6391 = vld [vmem:[#allocation16 + $0xf20] sm:$0xff]
    %v6392 = vld [vmem:[#allocation16 + $0xf28] sm:$0xff]
    %v6393 = vld [vmem:[#allocation16 + $0xf30] sm:$0xff]
    %v6394 = vld [vmem:[#allocation16 + $0xf38] sm:$0xff]
    %v6395 = vld [vmem:[#allocation16 + $0xf40] sm:$0xff]
    %v6396 = vld [vmem:[#allocation16 + $0xf48] sm:$0xff]
    %v6397 = vld [vmem:[#allocation16 + $0xf50] sm:$0xff]
    %v6398 = vld [vmem:[#allocation16 + $0xf58] sm:$0xff]
    %v6399 = vld [vmem:[#allocation16 + $0xf60] sm:$0xff]
    %v6400 = vld [vmem:[#allocation16 + $0xf68] sm:$0xff]
    %v6401 = vld [vmem:[#allocation16 + $0xf70] sm:$0xff]
    %v6402 = vld [vmem:[#allocation16 + $0xf78] sm:$0xff]
    %v6403 = vld [vmem:[#allocation16 + $0xf80] sm:$0xff]
    %v6404 = vld [vmem:[#allocation16 + $0xf88] sm:$0xff]
    %v6405 = vld [vmem:[#allocation16 + $0xf90] sm:$0xff]
    %v6406 = vld [vmem:[#allocation16 + $0xf98] sm:$0xff]
    %v6407 = vld [vmem:[#allocation16 + $0xfa0] sm:$0xff]
    %v6408 = vld [vmem:[#allocation16 + $0xfa8] sm:$0xff]
    %v6409 = vld [vmem:[#allocation16 + $0xfb0] sm:$0xff]
    %v6410 = vld [vmem:[#allocation16 + $0xfb8] sm:$0xff]
    %v6411 = vld [vmem:[#allocation16 + $0xfc0] sm:$0xff]
    %v6412 = vld [vmem:[#allocation16 + $0xfc8] sm:$0xff]
    %v6413 = vld [vmem:[#allocation16 + $0xfd0] sm:$0xff]
    %v6414 = vld [vmem:[#allocation16 + $0xfd8] sm:$0xff]
    %v6415 = vld [vmem:[#allocation16 + $0xfe0] sm:$0xff]
    %v6416 = vld [vmem:[#allocation16 + $0xfe8] sm:$0xff]
    %v6417 = vld [vmem:[#allocation16 + $0xff0] sm:$0xff]
    %v6418 = vld [vmem:[#allocation16 + $0xff8] sm:$0xff]
    %v6419 = vrot.slane %v2916, 7
    %v6420 = vrot.slane %v2920, 6
    %v6421 = vsel %vm2925, %v6420, %v6419
    %v6422 = vrot.slane %v2917, 7
    %v6423 = vrot.slane %v2921, 6
    %v6424 = vsel %vm2925, %v6423, %v6422
    %v6425 = vrot.slane %v2918, 7
    %v6426 = vrot.slane %v2922, 6
    %v6427 = vsel %vm2925, %v6426, %v6425
    %v6428 = vrot.slane %v2919, 7
    %v6429 = vrot.slane %v2923, 6
    %v6430 = vsel %vm2925, %v6429, %v6428
    %v6431 = vpack.c.b16 %v6421, %v6421
    %v6432 = vpack.c.b16 %v6424, %v6424
    %v6433 = vpack.c.b16 %v6427, %v6427
    %v6434 = vpack.c.b16 %v6430, %v6430
    %v6503 = vunpack.c.l.b16 %v6355
    %v6504 = vunpack.c.h.b16 %v6355
    %v6505 = vunpack.c.l.b16 %v6356
    %v6506 = vunpack.c.h.b16 %v6356
    %v6507 = vunpack.c.l.b16 %v6357
    %v6508 = vunpack.c.h.b16 %v6357
    %v6509 = vunpack.c.l.b16 %v6358
    %v6510 = vunpack.c.h.b16 %v6358
    %v6511 = vunpack.c.l.b16 %v6359
    %v6512 = vunpack.c.h.b16 %v6359
    %v6513 = vunpack.c.l.b16 %v6360
    %v6514 = vunpack.c.h.b16 %v6360
    %v6515 = vunpack.c.l.b16 %v6361
    %v6516 = vunpack.c.h.b16 %v6361
    %v6517 = vunpack.c.l.b16 %v6362
    %v6518 = vunpack.c.h.b16 %v6362
    %v6519 = vunpack.c.l.b16 %v6363
    %v6520 = vunpack.c.h.b16 %v6363
    %v6521 = vunpack.c.l.b16 %v6364
    %v6522 = vunpack.c.h.b16 %v6364
    %v6523 = vunpack.c.l.b16 %v6365
    %v6524 = vunpack.c.h.b16 %v6365
    %v6525 = vunpack.c.l.b16 %v6366
    %v6526 = vunpack.c.h.b16 %v6366
    %v6527 = vunpack.c.l.b16 %v6367
    %v6528 = vunpack.c.h.b16 %v6367
    %v6529 = vunpack.c.l.b16 %v6368
    %v6530 = vunpack.c.h.b16 %v6368
    %v6531 = vunpack.c.l.b16 %v6369
    %v6532 = vunpack.c.h.b16 %v6369
    %v6533 = vunpack.c.l.b16 %v6370
    %v6534 = vunpack.c.h.b16 %v6370
    %v6535 = vunpack.c.l.b16 %v6371
    %v6536 = vunpack.c.h.b16 %v6371
    %v6537 = vunpack.c.l.b16 %v6372
    %v6538 = vunpack.c.h.b16 %v6372
    %v6539 = vunpack.c.l.b16 %v6373
    %v6540 = vunpack.c.h.b16 %v6373
    %v6541 = vunpack.c.l.b16 %v6374
    %v6542 = vunpack.c.h.b16 %v6374
    %v6543 = vunpack.c.l.b16 %v6375
    %v6544 = vunpack.c.h.b16 %v6375
    %v6545 = vunpack.c.l.b16 %v6376
    %v6546 = vunpack.c.h.b16 %v6376
    %v6547 = vunpack.c.l.b16 %v6377
    %v6548 = vunpack.c.h.b16 %v6377
    %v6549 = vunpack.c.l.b16 %v6378
    %v6550 = vunpack.c.h.b16 %v6378
    %v6551 = vunpack.c.l.b16 %v6379
    %v6552 = vunpack.c.h.b16 %v6379
    %v6553 = vunpack.c.l.b16 %v6380
    %v6554 = vunpack.c.h.b16 %v6380
    %v6555 = vunpack.c.l.b16 %v6381
    %v6556 = vunpack.c.h.b16 %v6381
    %v6557 = vunpack.c.l.b16 %v6382
    %v6558 = vunpack.c.h.b16 %v6382
    %v6559 = vunpack.c.l.b16 %v6383
    %v6560 = vunpack.c.h.b16 %v6383
    %v6561 = vunpack.c.l.b16 %v6384
    %v6562 = vunpack.c.h.b16 %v6384
    %v6563 = vunpack.c.l.b16 %v6385
    %v6564 = vunpack.c.h.b16 %v6385
    %v6565 = vunpack.c.l.b16 %v6386
    %v6566 = vunpack.c.h.b16 %v6386
    %v6567 = vunpack.c.l.b16 %v6387
    %v6568 = vunpack.c.h.b16 %v6387
    %v6569 = vunpack.c.l.b16 %v6388
    %v6570 = vunpack.c.h.b16 %v6388
    %v6571 = vunpack.c.l.b16 %v6389
    %v6572 = vunpack.c.h.b16 %v6389
    %v6573 = vunpack.c.l.b16 %v6390
    %v6574 = vunpack.c.h.b16 %v6390
    %v6575 = vunpack.c.l.b16 %v6391
    %v6576 = vunpack.c.h.b16 %v6391
    %v6577 = vunpack.c.l.b16 %v6392
    %v6578 = vunpack.c.h.b16 %v6392
    %v6579 = vunpack.c.l.b16 %v6393
    %v6580 = vunpack.c.h.b16 %v6393
    %v6581 = vunpack.c.l.b16 %v6394
    %v6582 = vunpack.c.h.b16 %v6394
    %v6583 = vunpack.c.l.b16 %v6395
    %v6584 = vunpack.c.h.b16 %v6395
    %v6585 = vunpack.c.l.b16 %v6396
    %v6586 = vunpack.c.h.b16 %v6396
    %v6587 = vunpack.c.l.b16 %v6397
    %v6588 = vunpack.c.h.b16 %v6397
    %v6589 = vunpack.c.l.b16 %v6398
    %v6590 = vunpack.c.h.b16 %v6398
    %v6591 = vunpack.c.l.b16 %v6399
    %v6592 = vunpack.c.h.b16 %v6399
    %v6593 = vunpack.c.l.b16 %v6400
    %v6594 = vunpack.c.h.b16 %v6400
    %v6595 = vunpack.c.l.b16 %v6401
    %v6596 = vunpack.c.h.b16 %v6401
    %v6597 = vunpack.c.l.b16 %v6402
    %v6598 = vunpack.c.h.b16 %v6402
    %v6599 = vunpack.c.l.b16 %v6403
    %v6600 = vunpack.c.h.b16 %v6403
    %v6601 = vunpack.c.l.b16 %v6404
    %v6602 = vunpack.c.h.b16 %v6404
    %v6603 = vunpack.c.l.b16 %v6405
    %v6604 = vunpack.c.h.b16 %v6405
    %v6605 = vunpack.c.l.b16 %v6406
    %v6606 = vunpack.c.h.b16 %v6406
    %v6607 = vunpack.c.l.b16 %v6407
    %v6608 = vunpack.c.h.b16 %v6407
    %v6609 = vunpack.c.l.b16 %v6408
    %v6610 = vunpack.c.h.b16 %v6408
    %v6611 = vunpack.c.l.b16 %v6409
    %v6612 = vunpack.c.h.b16 %v6409
    %v6613 = vunpack.c.l.b16 %v6410
    %v6614 = vunpack.c.h.b16 %v6410
    %v6615 = vunpack.c.l.b16 %v6411
    %v6616 = vunpack.c.h.b16 %v6411
    %v6617 = vunpack.c.l.b16 %v6412
    %v6618 = vunpack.c.h.b16 %v6412
    %v6619 = vunpack.c.l.b16 %v6413
    %v6620 = vunpack.c.h.b16 %v6413
    %v6621 = vunpack.c.l.b16 %v6414
    %v6622 = vunpack.c.h.b16 %v6414
    %v6623 = vunpack.c.l.b16 %v6415
    %v6624 = vunpack.c.h.b16 %v6415
    %v6625 = vunpack.c.l.b16 %v6416
    %v6626 = vunpack.c.h.b16 %v6416
    %v6627 = vunpack.c.l.b16 %v6417
    %v6628 = vunpack.c.h.b16 %v6417
    %v6629 = vunpack.c.l.b16 %v6418
    %v6630 = vunpack.c.h.b16 %v6418
    %v6631 = vpack.c.b16 %v6505, %v6503
    %v6632 = vpack.c.b16 %v6506, %v6504
    %v6633 = vpack.c.b16 %v6509, %v6507
    %v6634 = vpack.c.b16 %v6510, %v6508
    %v6635 = vpack.c.b16 %v6513, %v6511
    %v6636 = vpack.c.b16 %v6514, %v6512
    %v6637 = vpack.c.b16 %v6517, %v6515
    %v6638 = vpack.c.b16 %v6518, %v6516
    %v6639 = vpack.c.b16 %v6521, %v6519
    %v6640 = vpack.c.b16 %v6522, %v6520
    %v6641 = vpack.c.b16 %v6525, %v6523
    %v6642 = vpack.c.b16 %v6526, %v6524
    %v6643 = vpack.c.b16 %v6529, %v6527
    %v6644 = vpack.c.b16 %v6530, %v6528
    %v6645 = vpack.c.b16 %v6533, %v6531
    %v6646 = vpack.c.b16 %v6534, %v6532
    %v6647 = vpack.c.b16 %v6537, %v6535
    %v6648 = vpack.c.b16 %v6538, %v6536
    %v6649 = vpack.c.b16 %v6541, %v6539
    %v6650 = vpack.c.b16 %v6542, %v6540
    %v6651 = vpack.c.b16 %v6545, %v6543
    %v6652 = vpack.c.b16 %v6546, %v6544
    %v6653 = vpack.c.b16 %v6549, %v6547
    %v6654 = vpack.c.b16 %v6550, %v6548
    %v6655 = vpack.c.b16 %v6553, %v6551
    %v6656 = vpack.c.b16 %v6554, %v6552
    %v6657 = vpack.c.b16 %v6557, %v6555
    %v6658 = vpack.c.b16 %v6558, %v6556
    %v6659 = vpack.c.b16 %v6561, %v6559
    %v6660 = vpack.c.b16 %v6562, %v6560
    %v6661 = vpack.c.b16 %v6565, %v6563
    %v6662 = vpack.c.b16 %v6566, %v6564
    %v6663 = vpack.c.b16 %v6569, %v6567
    %v6664 = vpack.c.b16 %v6570, %v6568
    %v6665 = vpack.c.b16 %v6573, %v6571
    %v6666 = vpack.c.b16 %v6574, %v6572
    %v6667 = vpack.c.b16 %v6577, %v6575
    %v6668 = vpack.c.b16 %v6578, %v6576
    %v6669 = vpack.c.b16 %v6581, %v6579
    %v6670 = vpack.c.b16 %v6582, %v6580
    %v6671 = vpack.c.b16 %v6585, %v6583
    %v6672 = vpack.c.b16 %v6586, %v6584
    %v6673 = vpack.c.b16 %v6589, %v6587
    %v6674 = vpack.c.b16 %v6590, %v6588
    %v6675 = vpack.c.b16 %v6593, %v6591
    %v6676 = vpack.c.b16 %v6594, %v6592
    %v6677 = vpack.c.b16 %v6597, %v6595
    %v6678 = vpack.c.b16 %v6598, %v6596
    %v6679 = vpack.c.b16 %v6601, %v6599
    %v6680 = vpack.c.b16 %v6602, %v6600
    %v6681 = vpack.c.b16 %v6605, %v6603
    %v6682 = vpack.c.b16 %v6606, %v6604
    %v6683 = vpack.c.b16 %v6609, %v6607
    %v6684 = vpack.c.b16 %v6610, %v6608
    %v6685 = vpack.c.b16 %v6613, %v6611
    %v6686 = vpack.c.b16 %v6614, %v6612
    %v6687 = vpack.c.b16 %v6617, %v6615
    %v6688 = vpack.c.b16 %v6618, %v6616
    %v6689 = vpack.c.b16 %v6621, %v6619
    %v6690 = vpack.c.b16 %v6622, %v6620
    %v6691 = vpack.c.b16 %v6625, %v6623
    %v6692 = vpack.c.b16 %v6626, %v6624
    %v6693 = vpack.c.b16 %v6629, %v6627
    %v6694 = vpack.c.b16 %v6630, %v6628
    %6759 = vmatpush.bf16.msra.mxu0 %v6645
    %6760 = vmatpush.bf16.msra.mxu0 %v6643
    %6761 = vmatpush.bf16.msra.mxu0 %v6641
    %6762 = vmatpush.bf16.msra.mxu0 %v6639
    %6763 = vmatpush.bf16.msra.mxu0 %v6637
    %6764 = vmatpush.bf16.msra.mxu0 %v6635
    %6765 = vmatpush.bf16.msra.mxu0 %v6633
    %6766 = vmatpush.bf16.msra.mxu0 %v6631
    %6767 = vmatmul.bf16.gmra.mxu0 %v6431
    %v6768 = vpop.f32.mrf.mxu0
    %v6769 = vadd.f32 0.0, %v6768
    %v6770 = vpop.f32.mrf.mxu0
    %6771 = vdwg.mxu0
    %6772 = vmatpush.bf16.msra.mxu0 %v6661
    %6773 = vmatpush.bf16.msra.mxu0 %v6659
    %6774 = vmatpush.bf16.msra.mxu0 %v6657
    %6775 = vmatpush.bf16.msra.mxu0 %v6655
    %6776 = vmatpush.bf16.msra.mxu0 %v6653
    %6777 = vmatpush.bf16.msra.mxu0 %v6651
    %6778 = vmatpush.bf16.msra.mxu0 %v6649
    %6779 = vmatpush.bf16.msra.mxu0 %v6647
    %6780 = vmatmul.bf16.gmra.mxu0 %v6432
    %v6781 = vpop.f32.mrf.mxu0
    %v6782 = vadd.f32 %v6769, %v6781
    %v6783 = vpop.f32.mrf.mxu0
    %6784 = vdwg.mxu0
    %6785 = vmatpush.bf16.msra.mxu0 %v6677
    %6786 = vmatpush.bf16.msra.mxu0 %v6675
    %6787 = vmatpush.bf16.msra.mxu0 %v6673
    %6788 = vmatpush.bf16.msra.mxu0 %v6671
    %6789 = vmatpush.bf16.msra.mxu0 %v6669
    %6790 = vmatpush.bf16.msra.mxu0 %v6667
    %6791 = vmatpush.bf16.msra.mxu0 %v6665
    %6792 = vmatpush.bf16.msra.mxu0 %v6663
    %6793 = vmatmul.bf16.gmra.mxu0 %v6433
    %v6794 = vpop.f32.mrf.mxu0
    %v6795 = vadd.f32 %v6782, %v6794
    %v6796 = vpop.f32.mrf.mxu0
    %6797 = vdwg.mxu0
    %6798 = vmatpush.bf16.msra.mxu0 %v6693
    %6799 = vmatpush.bf16.msra.mxu0 %v6691
    %6800 = vmatpush.bf16.msra.mxu0 %v6689
    %6801 = vmatpush.bf16.msra.mxu0 %v6687
    %6802 = vmatpush.bf16.msra.mxu0 %v6685
    %6803 = vmatpush.bf16.msra.mxu0 %v6683
    %6804 = vmatpush.bf16.msra.mxu0 %v6681
    %6805 = vmatpush.bf16.msra.mxu0 %v6679
    %6806 = vmatmul.bf16.gmra.mxu0 %v6434
    %v6807 = vpop.f32.mrf.mxu0
    %v6808 = vadd.f32 %v6795, %v6807
    %v6809 = vpop.f32.mrf.mxu0
    %6810 = vdwg.mxu0
    %6811 = vmatpush.bf16.msra.mxu0 %v6646
    %6812 = vmatpush.bf16.msra.mxu0 %v6644
    %6813 = vmatpush.bf16.msra.mxu0 %v6642
    %6814 = vmatpush.bf16.msra.mxu0 %v6640
    %6815 = vmatpush.bf16.msra.mxu0 %v6638
    %6816 = vmatpush.bf16.msra.mxu0 %v6636
    %6817 = vmatpush.bf16.msra.mxu0 %v6634
    %6818 = vmatpush.bf16.msra.mxu0 %v6632
    %6819 = vmatmul.bf16.gmra.mxu0 %v6431
    %v6820 = vpop.f32.mrf.mxu0
    %v6821 = vadd.f32 0.0, %v6820
    %v6822 = vpop.f32.mrf.mxu0
    %6823 = vdwg.mxu0
    %6824 = vmatpush.bf16.msra.mxu0 %v6662
    %6825 = vmatpush.bf16.msra.mxu0 %v6660
    %6826 = vmatpush.bf16.msra.mxu0 %v6658
    %6827 = vmatpush.bf16.msra.mxu0 %v6656
    %6828 = vmatpush.bf16.msra.mxu0 %v6654
    %6829 = vmatpush.bf16.msra.mxu0 %v6652
    %6830 = vmatpush.bf16.msra.mxu0 %v6650
    %6831 = vmatpush.bf16.msra.mxu0 %v6648
    %6832 = vmatmul.bf16.gmra.mxu0 %v6432
    %v6833 = vpop.f32.mrf.mxu0
    %v6834 = vadd.f32 %v6821, %v6833
    %v6835 = vpop.f32.mrf.mxu0
    %6836 = vdwg.mxu0
    %6837 = vmatpush.bf16.msra.mxu0 %v6678
    %6838 = vmatpush.bf16.msra.mxu0 %v6676
    %6839 = vmatpush.bf16.msra.mxu0 %v6674
    %6840 = vmatpush.bf16.msra.mxu0 %v6672
    %6841 = vmatpush.bf16.msra.mxu0 %v6670
    %6842 = vmatpush.bf16.msra.mxu0 %v6668
    %6843 = vmatpush.bf16.msra.mxu0 %v6666
    %6844 = vmatpush.bf16.msra.mxu0 %v6664
    %6845 = vmatmul.bf16.gmra.mxu0 %v6433
    %v6846 = vpop.f32.mrf.mxu0
    %v6847 = vadd.f32 %v6834, %v6846
    %v6848 = vpop.f32.mrf.mxu0
    %6849 = vdwg.mxu0
    %6850 = vmatpush.bf16.msra.mxu0 %v6694
    %6851 = vmatpush.bf16.msra.mxu0 %v6692
    %6852 = vmatpush.bf16.msra.mxu0 %v6690
    %6853 = vmatpush.bf16.msra.mxu0 %v6688
    %6854 = vmatpush.bf16.msra.mxu0 %v6686
    %6855 = vmatpush.bf16.msra.mxu0 %v6684
    %6856 = vmatpush.bf16.msra.mxu0 %v6682
    %6857 = vmatpush.bf16.msra.mxu0 %v6680
    %6858 = vmatmul.bf16.gmra.mxu0 %v6434
    %v6859 = vpop.f32.mrf.mxu0
    %v6860 = vadd.f32 %v6847, %v6859
    %v6861 = vpop.f32.mrf.mxu0
    %6862 = vdwg.mxu0
    %v6863 = vadd.f32 %v6353, %v6808
    %v6864 = vadd.f32 %v6354, %v6860
    %v6865 = vld [vmem:[#allocation16 + $0x1000] sm:$0xff]
    %v6866 = vld [vmem:[#allocation16 + $0x1008] sm:$0xff]
    %v6867 = vld [vmem:[#allocation16 + $0x1010] sm:$0xff]
    %v6868 = vld [vmem:[#allocation16 + $0x1018] sm:$0xff]
    %v6869 = vld [vmem:[#allocation16 + $0x1020] sm:$0xff]
    %v6870 = vld [vmem:[#allocation16 + $0x1028] sm:$0xff]
    %v6871 = vld [vmem:[#allocation16 + $0x1030] sm:$0xff]
    %v6872 = vld [vmem:[#allocation16 + $0x1038] sm:$0xff]
    %v6873 = vld [vmem:[#allocation16 + $0x1040] sm:$0xff]
    %v6874 = vld [vmem:[#allocation16 + $0x1048] sm:$0xff]
    %v6875 = vld [vmem:[#allocation16 + $0x1050] sm:$0xff]
    %v6876 = vld [vmem:[#allocation16 + $0x1058] sm:$0xff]
    %v6877 = vld [vmem:[#allocation16 + $0x1060] sm:$0xff]
    %v6878 = vld [vmem:[#allocation16 + $0x1068] sm:$0xff]
    %v6879 = vld [vmem:[#allocation16 + $0x1070] sm:$0xff]
    %v6880 = vld [vmem:[#allocation16 + $0x1078] sm:$0xff]
    %v6881 = vld [vmem:[#allocation16 + $0x1080] sm:$0xff]
    %v6882 = vld [vmem:[#allocation16 + $0x1088] sm:$0xff]
    %v6883 = vld [vmem:[#allocation16 + $0x1090] sm:$0xff]
    %v6884 = vld [vmem:[#allocation16 + $0x1098] sm:$0xff]
    %v6885 = vld [vmem:[#allocation16 + $0x10a0] sm:$0xff]
    %v6886 = vld [vmem:[#allocation16 + $0x10a8] sm:$0xff]
    %v6887 = vld [vmem:[#allocation16 + $0x10b0] sm:$0xff]
    %v6888 = vld [vmem:[#allocation16 + $0x10b8] sm:$0xff]
    %v6889 = vld [vmem:[#allocation16 + $0x10c0] sm:$0xff]
    %v6890 = vld [vmem:[#allocation16 + $0x10c8] sm:$0xff]
    %v6891 = vld [vmem:[#allocation16 + $0x10d0] sm:$0xff]
    %v6892 = vld [vmem:[#allocation16 + $0x10d8] sm:$0xff]
    %v6893 = vld [vmem:[#allocation16 + $0x10e0] sm:$0xff]
    %v6894 = vld [vmem:[#allocation16 + $0x10e8] sm:$0xff]
    %v6895 = vld [vmem:[#allocation16 + $0x10f0] sm:$0xff]
    %v6896 = vld [vmem:[#allocation16 + $0x10f8] sm:$0xff]
    %v6897 = vld [vmem:[#allocation16 + $0x1100] sm:$0xff]
    %v6898 = vld [vmem:[#allocation16 + $0x1108] sm:$0xff]
    %v6899 = vld [vmem:[#allocation16 + $0x1110] sm:$0xff]
    %v6900 = vld [vmem:[#allocation16 + $0x1118] sm:$0xff]
    %v6901 = vld [vmem:[#allocation16 + $0x1120] sm:$0xff]
    %v6902 = vld [vmem:[#allocation16 + $0x1128] sm:$0xff]
    %v6903 = vld [vmem:[#allocation16 + $0x1130] sm:$0xff]
    %v6904 = vld [vmem:[#allocation16 + $0x1138] sm:$0xff]
    %v6905 = vld [vmem:[#allocation16 + $0x1140] sm:$0xff]
    %v6906 = vld [vmem:[#allocation16 + $0x1148] sm:$0xff]
    %v6907 = vld [vmem:[#allocation16 + $0x1150] sm:$0xff]
    %v6908 = vld [vmem:[#allocation16 + $0x1158] sm:$0xff]
    %v6909 = vld [vmem:[#allocation16 + $0x1160] sm:$0xff]
    %v6910 = vld [vmem:[#allocation16 + $0x1168] sm:$0xff]
    %v6911 = vld [vmem:[#allocation16 + $0x1170] sm:$0xff]
    %v6912 = vld [vmem:[#allocation16 + $0x1178] sm:$0xff]
    %v6913 = vld [vmem:[#allocation16 + $0x1180] sm:$0xff]
    %v6914 = vld [vmem:[#allocation16 + $0x1188] sm:$0xff]
    %v6915 = vld [vmem:[#allocation16 + $0x1190] sm:$0xff]
    %v6916 = vld [vmem:[#allocation16 + $0x1198] sm:$0xff]
    %v6917 = vld [vmem:[#allocation16 + $0x11a0] sm:$0xff]
    %v6918 = vld [vmem:[#allocation16 + $0x11a8] sm:$0xff]
    %v6919 = vld [vmem:[#allocation16 + $0x11b0] sm:$0xff]
    %v6920 = vld [vmem:[#allocation16 + $0x11b8] sm:$0xff]
    %v6921 = vld [vmem:[#allocation16 + $0x11c0] sm:$0xff]
    %v6922 = vld [vmem:[#allocation16 + $0x11c8] sm:$0xff]
    %v6923 = vld [vmem:[#allocation16 + $0x11d0] sm:$0xff]
    %v6924 = vld [vmem:[#allocation16 + $0x11d8] sm:$0xff]
    %v6925 = vld [vmem:[#allocation16 + $0x11e0] sm:$0xff]
    %v6926 = vld [vmem:[#allocation16 + $0x11e8] sm:$0xff]
    %v6927 = vld [vmem:[#allocation16 + $0x11f0] sm:$0xff]
    %v6928 = vld [vmem:[#allocation16 + $0x11f8] sm:$0xff]
    %v6933 = vunpack.c.l.b16 %v2762
    %v6934 = vunpack.c.h.b16 %v2762
    %v6935 = vunpack.c.l.b16 %v2763
    %v6936 = vunpack.c.h.b16 %v2763
    %v6937 = vunpack.c.l.b16 %v2766
    %v6938 = vunpack.c.h.b16 %v2766
    %v6939 = vunpack.c.l.b16 %v2767
    %v6940 = vunpack.c.h.b16 %v2767
    %v6941 = vpack.c.b16 %v6933, %v6933
    %v6942 = vpack.c.b16 %v6934, %v6934
    %v6943 = vpack.c.b16 %v6935, %v6935
    %v6944 = vpack.c.b16 %v6936, %v6936
    %v6945 = vpack.c.b16 %v6937, %v6937
    %v6946 = vpack.c.b16 %v6938, %v6938
    %v6947 = vpack.c.b16 %v6939, %v6939
    %v6948 = vpack.c.b16 %v6940, %v6940
    %v6949 = vunpack.c.l.b16 %v6941
    %v6950 = vunpack.c.l.b16 %v6942
    %v6951 = vunpack.c.l.b16 %v6943
    %v6952 = vunpack.c.l.b16 %v6944
    %v6953 = vunpack.c.l.b16 %v6945
    %v6954 = vunpack.c.l.b16 %v6946
    %v6955 = vunpack.c.l.b16 %v6947
    %v6956 = vunpack.c.l.b16 %v6948
    %v6957 = vrot.slane %v6953, 7
    %v6958 = vsel %vm2925, %v6957, %v6949
    %v6959 = vrot.slane %v6954, 7
    %v6960 = vsel %vm2925, %v6959, %v6950
    %v6961 = vrot.slane %v6955, 7
    %v6962 = vsel %vm2925, %v6961, %v6951
    %v6963 = vrot.slane %v6956, 7
    %v6964 = vsel %vm2925, %v6963, %v6952
    %v6965 = vpack.c.b16 %v6958, %v6958
    %v6966 = vpack.c.b16 %v6960, %v6960
    %v6967 = vpack.c.b16 %v6962, %v6962
    %v6968 = vpack.c.b16 %v6964, %v6964
    %v7037 = vunpack.c.l.b16 %v6865
    %v7038 = vunpack.c.h.b16 %v6865
    %v7039 = vunpack.c.l.b16 %v6866
    %v7040 = vunpack.c.h.b16 %v6866
    %v7041 = vunpack.c.l.b16 %v6867
    %v7042 = vunpack.c.h.b16 %v6867
    %v7043 = vunpack.c.l.b16 %v6868
    %v7044 = vunpack.c.h.b16 %v6868
    %v7045 = vunpack.c.l.b16 %v6869
    %v7046 = vunpack.c.h.b16 %v6869
    %v7047 = vunpack.c.l.b16 %v6870
    %v7048 = vunpack.c.h.b16 %v6870
    %v7049 = vunpack.c.l.b16 %v6871
    %v7050 = vunpack.c.h.b16 %v6871
    %v7051 = vunpack.c.l.b16 %v6872
    %v7052 = vunpack.c.h.b16 %v6872
    %v7053 = vunpack.c.l.b16 %v6873
    %v7054 = vunpack.c.h.b16 %v6873
    %v7055 = vunpack.c.l.b16 %v6874
    %v7056 = vunpack.c.h.b16 %v6874
    %v7057 = vunpack.c.l.b16 %v6875
    %v7058 = vunpack.c.h.b16 %v6875
    %v7059 = vunpack.c.l.b16 %v6876
    %v7060 = vunpack.c.h.b16 %v6876
    %v7061 = vunpack.c.l.b16 %v6877
    %v7062 = vunpack.c.h.b16 %v6877
    %v7063 = vunpack.c.l.b16 %v6878
    %v7064 = vunpack.c.h.b16 %v6878
    %v7065 = vunpack.c.l.b16 %v6879
    %v7066 = vunpack.c.h.b16 %v6879
    %v7067 = vunpack.c.l.b16 %v6880
    %v7068 = vunpack.c.h.b16 %v6880
    %v7069 = vunpack.c.l.b16 %v6881
    %v7070 = vunpack.c.h.b16 %v6881
    %v7071 = vunpack.c.l.b16 %v6882
    %v7072 = vunpack.c.h.b16 %v6882
    %v7073 = vunpack.c.l.b16 %v6883
    %v7074 = vunpack.c.h.b16 %v6883
    %v7075 = vunpack.c.l.b16 %v6884
    %v7076 = vunpack.c.h.b16 %v6884
    %v7077 = vunpack.c.l.b16 %v6885
    %v7078 = vunpack.c.h.b16 %v6885
    %v7079 = vunpack.c.l.b16 %v6886
    %v7080 = vunpack.c.h.b16 %v6886
    %v7081 = vunpack.c.l.b16 %v6887
    %v7082 = vunpack.c.h.b16 %v6887
    %v7083 = vunpack.c.l.b16 %v6888
    %v7084 = vunpack.c.h.b16 %v6888
    %v7085 = vunpack.c.l.b16 %v6889
    %v7086 = vunpack.c.h.b16 %v6889
    %v7087 = vunpack.c.l.b16 %v6890
    %v7088 = vunpack.c.h.b16 %v6890
    %v7089 = vunpack.c.l.b16 %v6891
    %v7090 = vunpack.c.h.b16 %v6891
    %v7091 = vunpack.c.l.b16 %v6892
    %v7092 = vunpack.c.h.b16 %v6892
    %v7093 = vunpack.c.l.b16 %v6893
    %v7094 = vunpack.c.h.b16 %v6893
    %v7095 = vunpack.c.l.b16 %v6894
    %v7096 = vunpack.c.h.b16 %v6894
    %v7097 = vunpack.c.l.b16 %v6895
    %v7098 = vunpack.c.h.b16 %v6895
    %v7099 = vunpack.c.l.b16 %v6896
    %v7100 = vunpack.c.h.b16 %v6896
    %v7101 = vunpack.c.l.b16 %v6897
    %v7102 = vunpack.c.h.b16 %v6897
    %v7103 = vunpack.c.l.b16 %v6898
    %v7104 = vunpack.c.h.b16 %v6898
    %v7105 = vunpack.c.l.b16 %v6899
    %v7106 = vunpack.c.h.b16 %v6899
    %v7107 = vunpack.c.l.b16 %v6900
    %v7108 = vunpack.c.h.b16 %v6900
    %v7109 = vunpack.c.l.b16 %v6901
    %v7110 = vunpack.c.h.b16 %v6901
    %v7111 = vunpack.c.l.b16 %v6902
    %v7112 = vunpack.c.h.b16 %v6902
    %v7113 = vunpack.c.l.b16 %v6903
    %v7114 = vunpack.c.h.b16 %v6903
    %v7115 = vunpack.c.l.b16 %v6904
    %v7116 = vunpack.c.h.b16 %v6904
    %v7117 = vunpack.c.l.b16 %v6905
    %v7118 = vunpack.c.h.b16 %v6905
    %v7119 = vunpack.c.l.b16 %v6906
    %v7120 = vunpack.c.h.b16 %v6906
    %v7121 = vunpack.c.l.b16 %v6907
    %v7122 = vunpack.c.h.b16 %v6907
    %v7123 = vunpack.c.l.b16 %v6908
    %v7124 = vunpack.c.h.b16 %v6908
    %v7125 = vunpack.c.l.b16 %v6909
    %v7126 = vunpack.c.h.b16 %v6909
    %v7127 = vunpack.c.l.b16 %v6910
    %v7128 = vunpack.c.h.b16 %v6910
    %v7129 = vunpack.c.l.b16 %v6911
    %v7130 = vunpack.c.h.b16 %v6911
    %v7131 = vunpack.c.l.b16 %v6912
    %v7132 = vunpack.c.h.b16 %v6912
    %v7133 = vunpack.c.l.b16 %v6913
    %v7134 = vunpack.c.h.b16 %v6913
    %v7135 = vunpack.c.l.b16 %v6914
    %v7136 = vunpack.c.h.b16 %v6914
    %v7137 = vunpack.c.l.b16 %v6915
    %v7138 = vunpack.c.h.b16 %v6915
    %v7139 = vunpack.c.l.b16 %v6916
    %v7140 = vunpack.c.h.b16 %v6916
    %v7141 = vunpack.c.l.b16 %v6917
    %v7142 = vunpack.c.h.b16 %v6917
    %v7143 = vunpack.c.l.b16 %v6918
    %v7144 = vunpack.c.h.b16 %v6918
    %v7145 = vunpack.c.l.b16 %v6919
    %v7146 = vunpack.c.h.b16 %v6919
    %v7147 = vunpack.c.l.b16 %v6920
    %v7148 = vunpack.c.h.b16 %v6920
    %v7149 = vunpack.c.l.b16 %v6921
    %v7150 = vunpack.c.h.b16 %v6921
    %v7151 = vunpack.c.l.b16 %v6922
    %v7152 = vunpack.c.h.b16 %v6922
    %v7153 = vunpack.c.l.b16 %v6923
    %v7154 = vunpack.c.h.b16 %v6923
    %v7155 = vunpack.c.l.b16 %v6924
    %v7156 = vunpack.c.h.b16 %v6924
    %v7157 = vunpack.c.l.b16 %v6925
    %v7158 = vunpack.c.h.b16 %v6925
    %v7159 = vunpack.c.l.b16 %v6926
    %v7160 = vunpack.c.h.b16 %v6926
    %v7161 = vunpack.c.l.b16 %v6927
    %v7162 = vunpack.c.h.b16 %v6927
    %v7163 = vunpack.c.l.b16 %v6928
    %v7164 = vunpack.c.h.b16 %v6928
    %v7165 = vpack.c.b16 %v7039, %v7037
    %v7166 = vpack.c.b16 %v7040, %v7038
    %v7167 = vpack.c.b16 %v7043, %v7041
    %v7168 = vpack.c.b16 %v7044, %v7042
    %v7169 = vpack.c.b16 %v7047, %v7045
    %v7170 = vpack.c.b16 %v7048, %v7046
    %v7171 = vpack.c.b16 %v7051, %v7049
    %v7172 = vpack.c.b16 %v7052, %v7050
    %v7173 = vpack.c.b16 %v7055, %v7053
    %v7174 = vpack.c.b16 %v7056, %v7054
    %v7175 = vpack.c.b16 %v7059, %v7057
    %v7176 = vpack.c.b16 %v7060, %v7058
    %v7177 = vpack.c.b16 %v7063, %v7061
    %v7178 = vpack.c.b16 %v7064, %v7062
    %v7179 = vpack.c.b16 %v7067, %v7065
    %v7180 = vpack.c.b16 %v7068, %v7066
    %v7181 = vpack.c.b16 %v7071, %v7069
    %v7182 = vpack.c.b16 %v7072, %v7070
    %v7183 = vpack.c.b16 %v7075, %v7073
    %v7184 = vpack.c.b16 %v7076, %v7074
    %v7185 = vpack.c.b16 %v7079, %v7077
    %v7186 = vpack.c.b16 %v7080, %v7078
    %v7187 = vpack.c.b16 %v7083, %v7081
    %v7188 = vpack.c.b16 %v7084, %v7082
    %v7189 = vpack.c.b16 %v7087, %v7085
    %v7190 = vpack.c.b16 %v7088, %v7086
    %v7191 = vpack.c.b16 %v7091, %v7089
    %v7192 = vpack.c.b16 %v7092, %v7090
    %v7193 = vpack.c.b16 %v7095, %v7093
    %v7194 = vpack.c.b16 %v7096, %v7094
    %v7195 = vpack.c.b16 %v7099, %v7097
    %v7196 = vpack.c.b16 %v7100, %v7098
    %v7197 = vpack.c.b16 %v7103, %v7101
    %v7198 = vpack.c.b16 %v7104, %v7102
    %v7199 = vpack.c.b16 %v7107, %v7105
    %v7200 = vpack.c.b16 %v7108, %v7106
    %v7201 = vpack.c.b16 %v7111, %v7109
    %v7202 = vpack.c.b16 %v7112, %v7110
    %v7203 = vpack.c.b16 %v7115, %v7113
    %v7204 = vpack.c.b16 %v7116, %v7114
    %v7205 = vpack.c.b16 %v7119, %v7117
    %v7206 = vpack.c.b16 %v7120, %v7118
    %v7207 = vpack.c.b16 %v7123, %v7121
    %v7208 = vpack.c.b16 %v7124, %v7122
    %v7209 = vpack.c.b16 %v7127, %v7125
    %v7210 = vpack.c.b16 %v7128, %v7126
    %v7211 = vpack.c.b16 %v7131, %v7129
    %v7212 = vpack.c.b16 %v7132, %v7130
    %v7213 = vpack.c.b16 %v7135, %v7133
    %v7214 = vpack.c.b16 %v7136, %v7134
    %v7215 = vpack.c.b16 %v7139, %v7137
    %v7216 = vpack.c.b16 %v7140, %v7138
    %v7217 = vpack.c.b16 %v7143, %v7141
    %v7218 = vpack.c.b16 %v7144, %v7142
    %v7219 = vpack.c.b16 %v7147, %v7145
    %v7220 = vpack.c.b16 %v7148, %v7146
    %v7221 = vpack.c.b16 %v7151, %v7149
    %v7222 = vpack.c.b16 %v7152, %v7150
    %v7223 = vpack.c.b16 %v7155, %v7153
    %v7224 = vpack.c.b16 %v7156, %v7154
    %v7225 = vpack.c.b16 %v7159, %v7157
    %v7226 = vpack.c.b16 %v7160, %v7158
    %v7227 = vpack.c.b16 %v7163, %v7161
    %v7228 = vpack.c.b16 %v7164, %v7162
    %7293 = vmatpush.bf16.msra.mxu0 %v7179
    %7294 = vmatpush.bf16.msra.mxu0 %v7177
    %7295 = vmatpush.bf16.msra.mxu0 %v7175
    %7296 = vmatpush.bf16.msra.mxu0 %v7173
    %7297 = vmatpush.bf16.msra.mxu0 %v7171
    %7298 = vmatpush.bf16.msra.mxu0 %v7169
    %7299 = vmatpush.bf16.msra.mxu0 %v7167
    %7300 = vmatpush.bf16.msra.mxu0 %v7165
    %7301 = vmatmul.bf16.gmra.mxu0 %v6965
    %v7302 = vpop.f32.mrf.mxu0
    %v7303 = vadd.f32 0.0, %v7302
    %v7304 = vpop.f32.mrf.mxu0
    %7305 = vdwg.mxu0
    %7306 = vmatpush.bf16.msra.mxu0 %v7195
    %7307 = vmatpush.bf16.msra.mxu0 %v7193
    %7308 = vmatpush.bf16.msra.mxu0 %v7191
    %7309 = vmatpush.bf16.msra.mxu0 %v7189
    %7310 = vmatpush.bf16.msra.mxu0 %v7187
    %7311 = vmatpush.bf16.msra.mxu0 %v7185
    %7312 = vmatpush.bf16.msra.mxu0 %v7183
    %7313 = vmatpush.bf16.msra.mxu0 %v7181
    %7314 = vmatmul.bf16.gmra.mxu0 %v6966
    %v7315 = vpop.f32.mrf.mxu0
    %v7316 = vadd.f32 %v7303, %v7315
    %v7317 = vpop.f32.mrf.mxu0
    %7318 = vdwg.mxu0
    %7319 = vmatpush.bf16.msra.mxu0 %v7211
    %7320 = vmatpush.bf16.msra.mxu0 %v7209
    %7321 = vmatpush.bf16.msra.mxu0 %v7207
    %7322 = vmatpush.bf16.msra.mxu0 %v7205
    %7323 = vmatpush.bf16.msra.mxu0 %v7203
    %7324 = vmatpush.bf16.msra.mxu0 %v7201
    %7325 = vmatpush.bf16.msra.mxu0 %v7199
    %7326 = vmatpush.bf16.msra.mxu0 %v7197
    %7327 = vmatmul.bf16.gmra.mxu0 %v6967
    %v7328 = vpop.f32.mrf.mxu0
    %v7329 = vadd.f32 %v7316, %v7328
    %v7330 = vpop.f32.mrf.mxu0
    %7331 = vdwg.mxu0
    %7332 = vmatpush.bf16.msra.mxu0 %v7227
    %7333 = vmatpush.bf16.msra.mxu0 %v7225
    %7334 = vmatpush.bf16.msra.mxu0 %v7223
    %7335 = vmatpush.bf16.msra.mxu0 %v7221
    %7336 = vmatpush.bf16.msra.mxu0 %v7219
    %7337 = vmatpush.bf16.msra.mxu0 %v7217
    %7338 = vmatpush.bf16.msra.mxu0 %v7215
    %7339 = vmatpush.bf16.msra.mxu0 %v7213
    %7340 = vmatmul.bf16.gmra.mxu0 %v6968
    %v7341 = vpop.f32.mrf.mxu0
    %v7342 = vadd.f32 %v7329, %v7341
    %v7343 = vpop.f32.mrf.mxu0
    %7344 = vdwg.mxu0
    %7345 = vmatpush.bf16.msra.mxu0 %v7180
    %7346 = vmatpush.bf16.msra.mxu0 %v7178
    %7347 = vmatpush.bf16.msra.mxu0 %v7176
    %7348 = vmatpush.bf16.msra.mxu0 %v7174
    %7349 = vmatpush.bf16.msra.mxu0 %v7172
    %7350 = vmatpush.bf16.msra.mxu0 %v7170
    %7351 = vmatpush.bf16.msra.mxu0 %v7168
    %7352 = vmatpush.bf16.msra.mxu0 %v7166
    %7353 = vmatmul.bf16.gmra.mxu0 %v6965
    %v7354 = vpop.f32.mrf.mxu0
    %v7355 = vadd.f32 0.0, %v7354
    %v7356 = vpop.f32.mrf.mxu0
    %7357 = vdwg.mxu0
    %7358 = vmatpush.bf16.msra.mxu0 %v7196
    %7359 = vmatpush.bf16.msra.mxu0 %v7194
    %7360 = vmatpush.bf16.msra.mxu0 %v7192
    %7361 = vmatpush.bf16.msra.mxu0 %v7190
    %7362 = vmatpush.bf16.msra.mxu0 %v7188
    %7363 = vmatpush.bf16.msra.mxu0 %v7186
    %7364 = vmatpush.bf16.msra.mxu0 %v7184
    %7365 = vmatpush.bf16.msra.mxu0 %v7182
    %7366 = vmatmul.bf16.gmra.mxu0 %v6966
    %v7367 = vpop.f32.mrf.mxu0
    %v7368 = vadd.f32 %v7355, %v7367
    %v7369 = vpop.f32.mrf.mxu0
    %7370 = vdwg.mxu0
    %7371 = vmatpush.bf16.msra.mxu0 %v7212
    %7372 = vmatpush.bf16.msra.mxu0 %v7210
    %7373 = vmatpush.bf16.msra.mxu0 %v7208
    %7374 = vmatpush.bf16.msra.mxu0 %v7206
    %7375 = vmatpush.bf16.msra.mxu0 %v7204
    %7376 = vmatpush.bf16.msra.mxu0 %v7202
    %7377 = vmatpush.bf16.msra.mxu0 %v7200
    %7378 = vmatpush.bf16.msra.mxu0 %v7198
    %7379 = vmatmul.bf16.gmra.mxu0 %v6967
    %v7380 = vpop.f32.mrf.mxu0
    %v7381 = vadd.f32 %v7368, %v7380
    %v7382 = vpop.f32.mrf.mxu0
    %7383 = vdwg.mxu0
    %7384 = vmatpush.bf16.msra.mxu0 %v7228
    %7385 = vmatpush.bf16.msra.mxu0 %v7226
    %7386 = vmatpush.bf16.msra.mxu0 %v7224
    %7387 = vmatpush.bf16.msra.mxu0 %v7222
    %7388 = vmatpush.bf16.msra.mxu0 %v7220
    %7389 = vmatpush.bf16.msra.mxu0 %v7218
    %7390 = vmatpush.bf16.msra.mxu0 %v7216
    %7391 = vmatpush.bf16.msra.mxu0 %v7214
    %7392 = vmatmul.bf16.gmra.mxu0 %v6968
    %v7393 = vpop.f32.mrf.mxu0
    %v7394 = vadd.f32 %v7381, %v7393
    %v7395 = vpop.f32.mrf.mxu0
    %7396 = vdwg.mxu0
    %v7397 = vadd.f32 %v6863, %v7342
    %v7398 = vadd.f32 %v6864, %v7394
    %v7399 = vld [vmem:[#allocation16 + $0x1200] sm:$0xff]
    %v7400 = vld [vmem:[#allocation16 + $0x1208] sm:$0xff]
    %v7401 = vld [vmem:[#allocation16 + $0x1210] sm:$0xff]
    %v7402 = vld [vmem:[#allocation16 + $0x1218] sm:$0xff]
    %v7403 = vld [vmem:[#allocation16 + $0x1220] sm:$0xff]
    %v7404 = vld [vmem:[#allocation16 + $0x1228] sm:$0xff]
    %v7405 = vld [vmem:[#allocation16 + $0x1230] sm:$0xff]
    %v7406 = vld [vmem:[#allocation16 + $0x1238] sm:$0xff]
    %v7407 = vld [vmem:[#allocation16 + $0x1240] sm:$0xff]
    %v7408 = vld [vmem:[#allocation16 + $0x1248] sm:$0xff]
    %v7409 = vld [vmem:[#allocation16 + $0x1250] sm:$0xff]
    %v7410 = vld [vmem:[#allocation16 + $0x1258] sm:$0xff]
    %v7411 = vld [vmem:[#allocation16 + $0x1260] sm:$0xff]
    %v7412 = vld [vmem:[#allocation16 + $0x1268] sm:$0xff]
    %v7413 = vld [vmem:[#allocation16 + $0x1270] sm:$0xff]
    %v7414 = vld [vmem:[#allocation16 + $0x1278] sm:$0xff]
    %v7415 = vld [vmem:[#allocation16 + $0x1280] sm:$0xff]
    %v7416 = vld [vmem:[#allocation16 + $0x1288] sm:$0xff]
    %v7417 = vld [vmem:[#allocation16 + $0x1290] sm:$0xff]
    %v7418 = vld [vmem:[#allocation16 + $0x1298] sm:$0xff]
    %v7419 = vld [vmem:[#allocation16 + $0x12a0] sm:$0xff]
    %v7420 = vld [vmem:[#allocation16 + $0x12a8] sm:$0xff]
    %v7421 = vld [vmem:[#allocation16 + $0x12b0] sm:$0xff]
    %v7422 = vld [vmem:[#allocation16 + $0x12b8] sm:$0xff]
    %v7423 = vld [vmem:[#allocation16 + $0x12c0] sm:$0xff]
    %v7424 = vld [vmem:[#allocation16 + $0x12c8] sm:$0xff]
    %v7425 = vld [vmem:[#allocation16 + $0x12d0] sm:$0xff]
    %v7426 = vld [vmem:[#allocation16 + $0x12d8] sm:$0xff]
    %v7427 = vld [vmem:[#allocation16 + $0x12e0] sm:$0xff]
    %v7428 = vld [vmem:[#allocation16 + $0x12e8] sm:$0xff]
    %v7429 = vld [vmem:[#allocation16 + $0x12f0] sm:$0xff]
    %v7430 = vld [vmem:[#allocation16 + $0x12f8] sm:$0xff]
    %v7431 = vld [vmem:[#allocation16 + $0x1300] sm:$0xff]
    %v7432 = vld [vmem:[#allocation16 + $0x1308] sm:$0xff]
    %v7433 = vld [vmem:[#allocation16 + $0x1310] sm:$0xff]
    %v7434 = vld [vmem:[#allocation16 + $0x1318] sm:$0xff]
    %v7435 = vld [vmem:[#allocation16 + $0x1320] sm:$0xff]
    %v7436 = vld [vmem:[#allocation16 + $0x1328] sm:$0xff]
    %v7437 = vld [vmem:[#allocation16 + $0x1330] sm:$0xff]
    %v7438 = vld [vmem:[#allocation16 + $0x1338] sm:$0xff]
    %v7439 = vld [vmem:[#allocation16 + $0x1340] sm:$0xff]
    %v7440 = vld [vmem:[#allocation16 + $0x1348] sm:$0xff]
    %v7441 = vld [vmem:[#allocation16 + $0x1350] sm:$0xff]
    %v7442 = vld [vmem:[#allocation16 + $0x1358] sm:$0xff]
    %v7443 = vld [vmem:[#allocation16 + $0x1360] sm:$0xff]
    %v7444 = vld [vmem:[#allocation16 + $0x1368] sm:$0xff]
    %v7445 = vld [vmem:[#allocation16 + $0x1370] sm:$0xff]
    %v7446 = vld [vmem:[#allocation16 + $0x1378] sm:$0xff]
    %v7447 = vld [vmem:[#allocation16 + $0x1380] sm:$0xff]
    %v7448 = vld [vmem:[#allocation16 + $0x1388] sm:$0xff]
    %v7449 = vld [vmem:[#allocation16 + $0x1390] sm:$0xff]
    %v7450 = vld [vmem:[#allocation16 + $0x1398] sm:$0xff]
    %v7451 = vld [vmem:[#allocation16 + $0x13a0] sm:$0xff]
    %v7452 = vld [vmem:[#allocation16 + $0x13a8] sm:$0xff]
    %v7453 = vld [vmem:[#allocation16 + $0x13b0] sm:$0xff]
    %v7454 = vld [vmem:[#allocation16 + $0x13b8] sm:$0xff]
    %v7455 = vld [vmem:[#allocation16 + $0x13c0] sm:$0xff]
    %v7456 = vld [vmem:[#allocation16 + $0x13c8] sm:$0xff]
    %v7457 = vld [vmem:[#allocation16 + $0x13d0] sm:$0xff]
    %v7458 = vld [vmem:[#allocation16 + $0x13d8] sm:$0xff]
    %v7459 = vld [vmem:[#allocation16 + $0x13e0] sm:$0xff]
    %v7460 = vld [vmem:[#allocation16 + $0x13e8] sm:$0xff]
    %v7461 = vld [vmem:[#allocation16 + $0x13f0] sm:$0xff]
    %v7462 = vld [vmem:[#allocation16 + $0x13f8] sm:$0xff]
    %v7463 = vrot.slane %v6949, 1
    %v7464 = vsel %vm2925, %v6953, %v7463
    %v7465 = vrot.slane %v6950, 1
    %v7466 = vsel %vm2925, %v6954, %v7465
    %v7467 = vrot.slane %v6951, 1
    %v7468 = vsel %vm2925, %v6955, %v7467
    %v7469 = vrot.slane %v6952, 1
    %v7470 = vsel %vm2925, %v6956, %v7469
    %v7471 = vpack.c.b16 %v7464, %v7464
    %v7472 = vpack.c.b16 %v7466, %v7466
    %v7473 = vpack.c.b16 %v7468, %v7468
    %v7474 = vpack.c.b16 %v7470, %v7470
    %v7543 = vunpack.c.l.b16 %v7399
    %v7544 = vunpack.c.h.b16 %v7399
    %v7545 = vunpack.c.l.b16 %v7400
    %v7546 = vunpack.c.h.b16 %v7400
    %v7547 = vunpack.c.l.b16 %v7401
    %v7548 = vunpack.c.h.b16 %v7401
    %v7549 = vunpack.c.l.b16 %v7402
    %v7550 = vunpack.c.h.b16 %v7402
    %v7551 = vunpack.c.l.b16 %v7403
    %v7552 = vunpack.c.h.b16 %v7403
    %v7553 = vunpack.c.l.b16 %v7404
    %v7554 = vunpack.c.h.b16 %v7404
    %v7555 = vunpack.c.l.b16 %v7405
    %v7556 = vunpack.c.h.b16 %v7405
    %v7557 = vunpack.c.l.b16 %v7406
    %v7558 = vunpack.c.h.b16 %v7406
    %v7559 = vunpack.c.l.b16 %v7407
    %v7560 = vunpack.c.h.b16 %v7407
    %v7561 = vunpack.c.l.b16 %v7408
    %v7562 = vunpack.c.h.b16 %v7408
    %v7563 = vunpack.c.l.b16 %v7409
    %v7564 = vunpack.c.h.b16 %v7409
    %v7565 = vunpack.c.l.b16 %v7410
    %v7566 = vunpack.c.h.b16 %v7410
    %v7567 = vunpack.c.l.b16 %v7411
    %v7568 = vunpack.c.h.b16 %v7411
    %v7569 = vunpack.c.l.b16 %v7412
    %v7570 = vunpack.c.h.b16 %v7412
    %v7571 = vunpack.c.l.b16 %v7413
    %v7572 = vunpack.c.h.b16 %v7413
    %v7573 = vunpack.c.l.b16 %v7414
    %v7574 = vunpack.c.h.b16 %v7414
    %v7575 = vunpack.c.l.b16 %v7415
    %v7576 = vunpack.c.h.b16 %v7415
    %v7577 = vunpack.c.l.b16 %v7416
    %v7578 = vunpack.c.h.b16 %v7416
    %v7579 = vunpack.c.l.b16 %v7417
    %v7580 = vunpack.c.h.b16 %v7417
    %v7581 = vunpack.c.l.b16 %v7418
    %v7582 = vunpack.c.h.b16 %v7418
    %v7583 = vunpack.c.l.b16 %v7419
    %v7584 = vunpack.c.h.b16 %v7419
    %v7585 = vunpack.c.l.b16 %v7420
    %v7586 = vunpack.c.h.b16 %v7420
    %v7587 = vunpack.c.l.b16 %v7421
    %v7588 = vunpack.c.h.b16 %v7421
    %v7589 = vunpack.c.l.b16 %v7422
    %v7590 = vunpack.c.h.b16 %v7422
    %v7591 = vunpack.c.l.b16 %v7423
    %v7592 = vunpack.c.h.b16 %v7423
    %v7593 = vunpack.c.l.b16 %v7424
    %v7594 = vunpack.c.h.b16 %v7424
    %v7595 = vunpack.c.l.b16 %v7425
    %v7596 = vunpack.c.h.b16 %v7425
    %v7597 = vunpack.c.l.b16 %v7426
    %v7598 = vunpack.c.h.b16 %v7426
    %v7599 = vunpack.c.l.b16 %v7427
    %v7600 = vunpack.c.h.b16 %v7427
    %v7601 = vunpack.c.l.b16 %v7428
    %v7602 = vunpack.c.h.b16 %v7428
    %v7603 = vunpack.c.l.b16 %v7429
    %v7604 = vunpack.c.h.b16 %v7429
    %v7605 = vunpack.c.l.b16 %v7430
    %v7606 = vunpack.c.h.b16 %v7430
    %v7607 = vunpack.c.l.b16 %v7431
    %v7608 = vunpack.c.h.b16 %v7431
    %v7609 = vunpack.c.l.b16 %v7432
    %v7610 = vunpack.c.h.b16 %v7432
    %v7611 = vunpack.c.l.b16 %v7433
    %v7612 = vunpack.c.h.b16 %v7433
    %v7613 = vunpack.c.l.b16 %v7434
    %v7614 = vunpack.c.h.b16 %v7434
    %v7615 = vunpack.c.l.b16 %v7435
    %v7616 = vunpack.c.h.b16 %v7435
    %v7617 = vunpack.c.l.b16 %v7436
    %v7618 = vunpack.c.h.b16 %v7436
    %v7619 = vunpack.c.l.b16 %v7437
    %v7620 = vunpack.c.h.b16 %v7437
    %v7621 = vunpack.c.l.b16 %v7438
    %v7622 = vunpack.c.h.b16 %v7438
    %v7623 = vunpack.c.l.b16 %v7439
    %v7624 = vunpack.c.h.b16 %v7439
    %v7625 = vunpack.c.l.b16 %v7440
    %v7626 = vunpack.c.h.b16 %v7440
    %v7627 = vunpack.c.l.b16 %v7441
    %v7628 = vunpack.c.h.b16 %v7441
    %v7629 = vunpack.c.l.b16 %v7442
    %v7630 = vunpack.c.h.b16 %v7442
    %v7631 = vunpack.c.l.b16 %v7443
    %v7632 = vunpack.c.h.b16 %v7443
    %v7633 = vunpack.c.l.b16 %v7444
    %v7634 = vunpack.c.h.b16 %v7444
    %v7635 = vunpack.c.l.b16 %v7445
    %v7636 = vunpack.c.h.b16 %v7445
    %v7637 = vunpack.c.l.b16 %v7446
    %v7638 = vunpack.c.h.b16 %v7446
    %v7639 = vunpack.c.l.b16 %v7447
    %v7640 = vunpack.c.h.b16 %v7447
    %v7641 = vunpack.c.l.b16 %v7448
    %v7642 = vunpack.c.h.b16 %v7448
    %v7643 = vunpack.c.l.b16 %v7449
    %v7644 = vunpack.c.h.b16 %v7449
    %v7645 = vunpack.c.l.b16 %v7450
    %v7646 = vunpack.c.h.b16 %v7450
    %v7647 = vunpack.c.l.b16 %v7451
    %v7648 = vunpack.c.h.b16 %v7451
    %v7649 = vunpack.c.l.b16 %v7452
    %v7650 = vunpack.c.h.b16 %v7452
    %v7651 = vunpack.c.l.b16 %v7453
    %v7652 = vunpack.c.h.b16 %v7453
    %v7653 = vunpack.c.l.b16 %v7454
    %v7654 = vunpack.c.h.b16 %v7454
    %v7655 = vunpack.c.l.b16 %v7455
    %v7656 = vunpack.c.h.b16 %v7455
    %v7657 = vunpack.c.l.b16 %v7456
    %v7658 = vunpack.c.h.b16 %v7456
    %v7659 = vunpack.c.l.b16 %v7457
    %v7660 = vunpack.c.h.b16 %v7457
    %v7661 = vunpack.c.l.b16 %v7458
    %v7662 = vunpack.c.h.b16 %v7458
    %v7663 = vunpack.c.l.b16 %v7459
    %v7664 = vunpack.c.h.b16 %v7459
    %v7665 = vunpack.c.l.b16 %v7460
    %v7666 = vunpack.c.h.b16 %v7460
    %v7667 = vunpack.c.l.b16 %v7461
    %v7668 = vunpack.c.h.b16 %v7461
    %v7669 = vunpack.c.l.b16 %v7462
    %v7670 = vunpack.c.h.b16 %v7462
    %v7671 = vpack.c.b16 %v7545, %v7543
    %v7672 = vpack.c.b16 %v7546, %v7544
    %v7673 = vpack.c.b16 %v7549, %v7547
    %v7674 = vpack.c.b16 %v7550, %v7548
    %v7675 = vpack.c.b16 %v7553, %v7551
    %v7676 = vpack.c.b16 %v7554, %v7552
    %v7677 = vpack.c.b16 %v7557, %v7555
    %v7678 = vpack.c.b16 %v7558, %v7556
    %v7679 = vpack.c.b16 %v7561, %v7559
    %v7680 = vpack.c.b16 %v7562, %v7560
    %v7681 = vpack.c.b16 %v7565, %v7563
    %v7682 = vpack.c.b16 %v7566, %v7564
    %v7683 = vpack.c.b16 %v7569, %v7567
    %v7684 = vpack.c.b16 %v7570, %v7568
    %v7685 = vpack.c.b16 %v7573, %v7571
    %v7686 = vpack.c.b16 %v7574, %v7572
    %v7687 = vpack.c.b16 %v7577, %v7575
    %v7688 = vpack.c.b16 %v7578, %v7576
    %v7689 = vpack.c.b16 %v7581, %v7579
    %v7690 = vpack.c.b16 %v7582, %v7580
    %v7691 = vpack.c.b16 %v7585, %v7583
    %v7692 = vpack.c.b16 %v7586, %v7584
    %v7693 = vpack.c.b16 %v7589, %v7587
    %v7694 = vpack.c.b16 %v7590, %v7588
    %v7695 = vpack.c.b16 %v7593, %v7591
    %v7696 = vpack.c.b16 %v7594, %v7592
    %v7697 = vpack.c.b16 %v7597, %v7595
    %v7698 = vpack.c.b16 %v7598, %v7596
    %v7699 = vpack.c.b16 %v7601, %v7599
    %v7700 = vpack.c.b16 %v7602, %v7600
    %v7701 = vpack.c.b16 %v7605, %v7603
    %v7702 = vpack.c.b16 %v7606, %v7604
    %v7703 = vpack.c.b16 %v7609, %v7607
    %v7704 = vpack.c.b16 %v7610, %v7608
    %v7705 = vpack.c.b16 %v7613, %v7611
    %v7706 = vpack.c.b16 %v7614, %v7612
    %v7707 = vpack.c.b16 %v7617, %v7615
    %v7708 = vpack.c.b16 %v7618, %v7616
    %v7709 = vpack.c.b16 %v7621, %v7619
    %v7710 = vpack.c.b16 %v7622, %v7620
    %v7711 = vpack.c.b16 %v7625, %v7623
    %v7712 = vpack.c.b16 %v7626, %v7624
    %v7713 = vpack.c.b16 %v7629, %v7627
    %v7714 = vpack.c.b16 %v7630, %v7628
    %v7715 = vpack.c.b16 %v7633, %v7631
    %v7716 = vpack.c.b16 %v7634, %v7632
    %v7717 = vpack.c.b16 %v7637, %v7635
    %v7718 = vpack.c.b16 %v7638, %v7636
    %v7719 = vpack.c.b16 %v7641, %v7639
    %v7720 = vpack.c.b16 %v7642, %v7640
    %v7721 = vpack.c.b16 %v7645, %v7643
    %v7722 = vpack.c.b16 %v7646, %v7644
    %v7723 = vpack.c.b16 %v7649, %v7647
    %v7724 = vpack.c.b16 %v7650, %v7648
    %v7725 = vpack.c.b16 %v7653, %v7651
    %v7726 = vpack.c.b16 %v7654, %v7652
    %v7727 = vpack.c.b16 %v7657, %v7655
    %v7728 = vpack.c.b16 %v7658, %v7656
    %v7729 = vpack.c.b16 %v7661, %v7659
    %v7730 = vpack.c.b16 %v7662, %v7660
    %v7731 = vpack.c.b16 %v7665, %v7663
    %v7732 = vpack.c.b16 %v7666, %v7664
    %v7733 = vpack.c.b16 %v7669, %v7667
    %v7734 = vpack.c.b16 %v7670, %v7668
    %7799 = vmatpush.bf16.msra.mxu0 %v7685
    %7800 = vmatpush.bf16.msra.mxu0 %v7683
    %7801 = vmatpush.bf16.msra.mxu0 %v7681
    %7802 = vmatpush.bf16.msra.mxu0 %v7679
    %7803 = vmatpush.bf16.msra.mxu0 %v7677
    %7804 = vmatpush.bf16.msra.mxu0 %v7675
    %7805 = vmatpush.bf16.msra.mxu0 %v7673
    %7806 = vmatpush.bf16.msra.mxu0 %v7671
    %7807 = vmatmul.bf16.gmra.mxu0 %v7471
    %v7808 = vpop.f32.mrf.mxu0
    %v7809 = vadd.f32 0.0, %v7808
    %v7810 = vpop.f32.mrf.mxu0
    %7811 = vdwg.mxu0
    %7812 = vmatpush.bf16.msra.mxu0 %v7701
    %7813 = vmatpush.bf16.msra.mxu0 %v7699
    %7814 = vmatpush.bf16.msra.mxu0 %v7697
    %7815 = vmatpush.bf16.msra.mxu0 %v7695
    %7816 = vmatpush.bf16.msra.mxu0 %v7693
    %7817 = vmatpush.bf16.msra.mxu0 %v7691
    %7818 = vmatpush.bf16.msra.mxu0 %v7689
    %7819 = vmatpush.bf16.msra.mxu0 %v7687
    %7820 = vmatmul.bf16.gmra.mxu0 %v7472
    %v7821 = vpop.f32.mrf.mxu0
    %v7822 = vadd.f32 %v7809, %v7821
    %v7823 = vpop.f32.mrf.mxu0
    %7824 = vdwg.mxu0
    %7825 = vmatpush.bf16.msra.mxu0 %v7717
    %7826 = vmatpush.bf16.msra.mxu0 %v7715
    %7827 = vmatpush.bf16.msra.mxu0 %v7713
    %7828 = vmatpush.bf16.msra.mxu0 %v7711
    %7829 = vmatpush.bf16.msra.mxu0 %v7709
    %7830 = vmatpush.bf16.msra.mxu0 %v7707
    %7831 = vmatpush.bf16.msra.mxu0 %v7705
    %7832 = vmatpush.bf16.msra.mxu0 %v7703
    %7833 = vmatmul.bf16.gmra.mxu0 %v7473
    %v7834 = vpop.f32.mrf.mxu0
    %v7835 = vadd.f32 %v7822, %v7834
    %v7836 = vpop.f32.mrf.mxu0
    %7837 = vdwg.mxu0
    %7838 = vmatpush.bf16.msra.mxu0 %v7733
    %7839 = vmatpush.bf16.msra.mxu0 %v7731
    %7840 = vmatpush.bf16.msra.mxu0 %v7729
    %7841 = vmatpush.bf16.msra.mxu0 %v7727
    %7842 = vmatpush.bf16.msra.mxu0 %v7725
    %7843 = vmatpush.bf16.msra.mxu0 %v7723
    %7844 = vmatpush.bf16.msra.mxu0 %v7721
    %7845 = vmatpush.bf16.msra.mxu0 %v7719
    %7846 = vmatmul.bf16.gmra.mxu0 %v7474
    %v7847 = vpop.f32.mrf.mxu0
    %v7848 = vadd.f32 %v7835, %v7847
    %v7849 = vpop.f32.mrf.mxu0
    %7850 = vdwg.mxu0
    %7851 = vmatpush.bf16.msra.mxu0 %v7686
    %7852 = vmatpush.bf16.msra.mxu0 %v7684
    %7853 = vmatpush.bf16.msra.mxu0 %v7682
    %7854 = vmatpush.bf16.msra.mxu0 %v7680
    %7855 = vmatpush.bf16.msra.mxu0 %v7678
    %7856 = vmatpush.bf16.msra.mxu0 %v7676
    %7857 = vmatpush.bf16.msra.mxu0 %v7674
    %7858 = vmatpush.bf16.msra.mxu0 %v7672
    %7859 = vmatmul.bf16.gmra.mxu0 %v7471
    %v7860 = vpop.f32.mrf.mxu0
    %v7861 = vadd.f32 0.0, %v7860
    %v7862 = vpop.f32.mrf.mxu0
    %7863 = vdwg.mxu0
    %7864 = vmatpush.bf16.msra.mxu0 %v7702
    %7865 = vmatpush.bf16.msra.mxu0 %v7700
    %7866 = vmatpush.bf16.msra.mxu0 %v7698
    %7867 = vmatpush.bf16.msra.mxu0 %v7696
    %7868 = vmatpush.bf16.msra.mxu0 %v7694
    %7869 = vmatpush.bf16.msra.mxu0 %v7692
    %7870 = vmatpush.bf16.msra.mxu0 %v7690
    %7871 = vmatpush.bf16.msra.mxu0 %v7688
    %7872 = vmatmul.bf16.gmra.mxu0 %v7472
    %v7873 = vpop.f32.mrf.mxu0
    %v7874 = vadd.f32 %v7861, %v7873
    %v7875 = vpop.f32.mrf.mxu0
    %7876 = vdwg.mxu0
    %7877 = vmatpush.bf16.msra.mxu0 %v7718
    %7878 = vmatpush.bf16.msra.mxu0 %v7716
    %7879 = vmatpush.bf16.msra.mxu0 %v7714
    %7880 = vmatpush.bf16.msra.mxu0 %v7712
    %7881 = vmatpush.bf16.msra.mxu0 %v7710
    %7882 = vmatpush.bf16.msra.mxu0 %v7708
    %7883 = vmatpush.bf16.msra.mxu0 %v7706
    %7884 = vmatpush.bf16.msra.mxu0 %v7704
    %7885 = vmatmul.bf16.gmra.mxu0 %v7473
    %v7886 = vpop.f32.mrf.mxu0
    %v7887 = vadd.f32 %v7874, %v7886
    %v7888 = vpop.f32.mrf.mxu0
    %7889 = vdwg.mxu0
    %7890 = vmatpush.bf16.msra.mxu0 %v7734
    %7891 = vmatpush.bf16.msra.mxu0 %v7732
    %7892 = vmatpush.bf16.msra.mxu0 %v7730
    %7893 = vmatpush.bf16.msra.mxu0 %v7728
    %7894 = vmatpush.bf16.msra.mxu0 %v7726
    %7895 = vmatpush.bf16.msra.mxu0 %v7724
    %7896 = vmatpush.bf16.msra.mxu0 %v7722
    %7897 = vmatpush.bf16.msra.mxu0 %v7720
    %7898 = vmatmul.bf16.gmra.mxu0 %v7474
    %v7899 = vpop.f32.mrf.mxu0
    %v7900 = vadd.f32 %v7887, %v7899
    %v7901 = vpop.f32.mrf.mxu0
    %7902 = vdwg.mxu0
    %v7903 = vadd.f32 %v7397, %v7848
    %v7904 = vadd.f32 %v7398, %v7900
    %v7905 = vld [vmem:[#allocation17] sm:$0x3]
    %v7907 = vperm.slane %v7905, 0
    %v7908 = vperm.slane %v7905, 1
    %v7911 = vadd.f32 %v7903, %v7907
    %v7912 = vadd.f32 %v7904, %v7908
    %v7913 = vmax.f32 %v7911, 0.0
    %v7914 = vmax.f32 %v7912, 0.0
    %v7917 = vrot.slane %v7914, 6
    %vm7918 = vcmask 1041408
    %v7919 = vsel %vm7918, %v7913, %v7917
    %7921 = vst [vmem:[#allocation19] sm:$0xf] %v7919
    // Predicated region
    $region86: #{_lambda_.1} parent=1 // pred_check
      _
    $region87: #{_lambda_.1} parent=1 // pred_check_branch
      %7923 = sbr.rel (0) target = $region89
    $region88: #{_lambda_.1} parent=1 // pred_region
      %7925 = vsyncadd [#allocation4], 0
      %s7927 = sshll.u32 [#allocation19], 4
      %s7928 = int_to_ptr.vmem [resolvable:$true] %s7927
      %s7929 = sshll.u32 %s11, 4
      %s7930 = int_to_ptr.hbm [resolvable:$true] %s7929
      %7932 = dma.vmem_to_hbm [thread:$0]  %s7928, 64, %s7930, [#allocation4]
    $region89: #{_lambda_.1} parent=1 // pred_fallthru
      _
    // Predicated region
    $region90: #{_lambda_.1} parent=1 // pred_check
      _
    $region91: #{_lambda_.1} parent=1 // pred_check_branch
      %7934 = sbr.rel (0) target = $region93
    $region92: #{_lambda_.1} parent=1 // pred_region
      %7936 = dma.done [#allocation4], 64
    $region93: #{_lambda_.1} parent=1 // pred_fallthru
      _
    %7937 = vsyncpa [#allocation3], 1
    %7938 = vsyncpa [#allocation6], 1
    %7939 = vsyncpa [#allocation9], 1
    %7940 = vsyncpa [#allocation12], 1
    %7941 = vsyncpa [#allocation15], 1
    %7942 = vsyncpa [#allocation18], 1
    %7943 = vsyncpa [#allocation4], 1

</llo_original>
